<compile_context>
chip_gen: v7x
topology: tpu7x:2x2x1
jax: 0.10.0
libtpu: 0.0.40
codegen_flags: <defaults>
</compile_context>

<pallas_src>
import jax
import jax.numpy as jnp
from jax import lax
from jax.experimental import pallas as pl
from jax.experimental.pallas import tpu as pltpu

EPS = 1e-5


# ----------------------------------------------------------------------------
# generation-aware sizing
# ----------------------------------------------------------------------------
def _tpu_vmem_bytes():
    cap = 64 * 1024 * 1024                     # conservative default (v7x/TC)
    try:
        info = pltpu.get_tpu_info()
        c = int(getattr(info, "vmem_capacity_bytes", 0))
        if c > 0:
            cap = c
    except Exception:
        pass
    return cap


_VMEM_CAP = _tpu_vmem_bytes()
_VMEM_LIMIT = min((_VMEM_CAP * 3) // 4, 112 * 1024 * 1024)
_ROW_TARGET = 512 if _VMEM_CAP <= 64 * 1024 * 1024 else 1024


def _cparams():
    return pltpu.CompilerParams(dimension_semantics=("parallel",),
                                vmem_limit_bytes=_VMEM_LIMIT)


def _row_tile(m, target=None):
    """Largest multiple-of-16 (preferred, bf16 tile) or multiple-of-8 divisor
    of m that is <= target and leaves >= 2 grid steps when m allows it
    (keeps v7x's two TensorCores busy and preserves double-buffering)."""
    if target is None:
        target = _ROW_TARGET
    cap = min(target, m)
    if m >= 32:
        cap = min(cap, m // 2)
    for step in (16, 8):
        if m % step:
            continue
        t = (cap // step) * step
        while t >= step:
            if m % t == 0:
                return t
            t -= step
    # TODO(synk): masked tail tiles for row counts with no 8-aligned divisor.
    return m


def _write_stats(st_ref, z):
    """Write this tile's partial (sum, sumsq) into a (2, C) stats block."""
    st_ref[pl.ds(0, 1), :] = jnp.sum(z, axis=0, keepdims=True)
    st_ref[pl.ds(1, 1), :] = jnp.sum(z * z, axis=0, keepdims=True)


# ----------------------------------------------------------------------------
# kernels
# ----------------------------------------------------------------------------
def _stats_kernel(x_ref, st_ref):
    _write_stats(st_ref, x_ref[...].astype(jnp.float32))


def _stage1_kernel(xs_ref, s1_ref, b1_ref, w1_ref, h1_ref, st_ref):
    x = xs_ref[...]                                              # (TM, Cin) f32
    h = jnp.maximum(x * s1_ref[...] + b1_ref[...], 0.0)          # BN1 + ReLU
    z = jnp.dot(h.astype(jnp.bfloat16), w1_ref[...],
                preferred_element_type=jnp.float32)              # 1x1 conv
    zb = z.astype(h1_ref.dtype)
    h1_ref[...] = zb
    _write_stats(st_ref, zb.astype(jnp.float32))                 # BN2 partials


def _make_stage2_kernel(w2_dim, cmid, mimg, pad_rows):
    def kernel(h1_ref, s2_ref, b2_ref, w3_ref, ml_ref, mr_ref,
               h2_ref, st_ref, a_scr):
        z1 = h1_ref[...].astype(jnp.float32)                     # (mimg, Cmid)
        a = jnp.maximum(z1 * s2_ref[...] + b2_ref[...], 0.0)     # BN2 + ReLU
        # Keep `a` in a VMEM scratch with `pad_rows` zero rows above/below so
        # every (dy, dx) tap of the padded 3x3 conv is a shifted slice of the
        # scratch; horizontal image-boundary wrap is killed with lane-broadcast
        # masks.  No HBM im2col, all 9 MACs stay on the resident tile.
        # (f32 scratch keeps the unaligned sublane slices simple; at real
        #  channel counts a bf16 scratch would halve its footprint.)
        a_scr[pl.ds(0, pad_rows), :] = jnp.zeros((pad_rows, cmid), jnp.float32)
        a_scr[pl.ds(pad_rows + mimg, pad_rows), :] = jnp.zeros((pad_rows, cmid),
                                                               jnp.float32)
        a_scr[pl.ds(pad_rows, mimg), :] = a
        acc = jnp.zeros((mimg, cmid), jnp.float32)
        for dy in (-1, 0, 1):
            for dx in (-1, 0, 1):
                s = dy * w2_dim + dx
                shifted = a_scr[pl.ds(pad_rows + s, mimg), :]
                if dx == 1:
                    shifted = shifted * mr_ref[...]
                elif dx == -1:
                    shifted = shifted * ml_ref[...]
                tap = (dy + 1) * 3 + (dx + 1)
                acc = acc + jnp.dot(shifted.astype(jnp.bfloat16), w3_ref[tap],
                                    preferred_element_type=jnp.float32)
        zb = acc.astype(h2_ref.dtype)
        h2_ref[...] = zb
        _write_stats(st_ref, zb.astype(jnp.float32))             # BN3 partials

    return kernel


def _stage3_conv_kernel(h2_ref, xs_ref, s3_ref, b3_ref, w4_ref, bc4_ref,
                        ws_ref, bs_ref, out_ref):
    a = jnp.maximum(h2_ref[...].astype(jnp.float32) * s3_ref[...] + b3_ref[...],
                    0.0)                                         # BN3 + ReLU
    main = jnp.dot(a.astype(jnp.bfloat16), w4_ref[...],
                   preferred_element_type=jnp.float32) + bc4_ref[...]
    sc = jnp.dot(xs_ref[...].astype(jnp.bfloat16), ws_ref[...],
                 preferred_element_type=jnp.float32) + bs_ref[...]
    out_ref[...] = main + sc


def _stage3_id_kernel(h2_ref, xs_ref, s3_ref, b3_ref, w4_ref, bc4_ref, out_ref):
    a = jnp.maximum(h2_ref[...].astype(jnp.float32) * s3_ref[...] + b3_ref[...],
                    0.0)                                         # BN3 + ReLU
    main = jnp.dot(a.astype(jnp.bfloat16), w4_ref[...],
                   preferred_element_type=jnp.float32) + bc4_ref[...]
    out_ref[...] = main + xs_ref[...]                            # identity sc


# ----------------------------------------------------------------------------
# pallas_call wrappers (one per pass)
# ----------------------------------------------------------------------------
def _channel_stats(x2d):
    m, c = x2d.shape
    tm = _row_tile(m)
    nt = m // tm
    stat = pl.pallas_call(
        _stats_kernel,
        out_shape=jax.ShapeDtypeStruct((nt, 2, c), jnp.float32),
        grid=(nt,),
        in_specs=[pl.BlockSpec((tm, c), lambda i: (i, 0))],
        out_specs=pl.BlockSpec((None, 2, c), lambda i: (i, 0, 0)),
        compiler_params=_cparams(),
    )(x2d)
    tot = jnp.sum(stat, axis=0)
    return tot[0:1, :], tot[1:2, :]


def _stage1(xsub2d, scale1, shift1, w1b):
    m2, cin = xsub2d.shape
    cmid = w1b.shape[1]
    tm = _row_tile(m2)
    nt = m2 // tm
    h1, stat = pl.pallas_call(
        _stage1_kernel,
        out_shape=(jax.ShapeDtypeStruct((m2, cmid), jnp.bfloat16),
                   jax.ShapeDtypeStruct((nt, 2, cmid), jnp.float32)),
        grid=(nt,),
        in_specs=[pl.BlockSpec((tm, cin), lambda i: (i, 0)),
                  pl.BlockSpec((1, cin), lambda i: (0, 0)),
                  pl.BlockSpec((1, cin), lambda i: (0, 0)),
                  pl.BlockSpec((cin, cmid), lambda i: (0, 0))],
        out_specs=(pl.BlockSpec((tm, cmid), lambda i: (i, 0)),
                   pl.BlockSpec((None, 2, cmid), lambda i: (i, 0, 0))),
        compiler_params=_cparams(),
    )(xsub2d, scale1, shift1, w1b)
    tot = jnp.sum(stat, axis=0)
    return h1, tot[0:1, :], tot[1:2, :]


def _stage2(h1_3d, scale2, shift2, w3b, h2_dim, w2_dim):
    # TODO(synk): band-tile each image over row-bands (+1-row halo via manual
    # DMA) so very large feature maps stay inside v7x's 64 MiB VMEM.
    n, mimg, cmid = h1_3d.shape
    pad_rows = (w2_dim + 8) // 8 * 8                 # >= w2_dim + 1, 8-aligned
    col = jnp.arange(mimg, dtype=jnp.int32) % w2_dim
    mask_l = (col != 0).astype(jnp.float32).reshape(mimg, 1)
    mask_r = (col != w2_dim - 1).astype(jnp.float32).reshape(mimg, 1)
    kernel = _make_stage2_kernel(w2_dim, cmid, mimg, pad_rows)
    h2, stat = pl.pallas_call(
        kernel,
        out_shape=(jax.ShapeDtypeStruct((n, mimg, cmid), jnp.bfloat16),
                   jax.ShapeDtypeStruct((n, 2, cmid), jnp.float32)),
        grid=(n,),
        in_specs=[pl.BlockSpec((None, mimg, cmid), lambda i: (i, 0, 0)),
                  pl.BlockSpec((1, cmid), lambda i: (0, 0)),
                  pl.BlockSpec((1, cmid), lambda i: (0, 0)),
                  pl.BlockSpec((9, cmid, cmid), lambda i: (0, 0, 0)),
                  pl.BlockSpec((mimg, 1), lambda i: (0, 0)),
                  pl.BlockSpec((mimg, 1), lambda i: (0, 0))],
        out_specs=(pl.BlockSpec((None, mimg, cmid), lambda i: (i, 0, 0)),
                   pl.BlockSpec((None, 2, cmid), lambda i: (i, 0, 0))),
        scratch_shapes=[pltpu.VMEM((mimg + 2 * pad_rows, cmid), jnp.float32)],
        compiler_params=_cparams(),
    )(h1_3d, scale2, shift2, w3b, mask_l, mask_r)
    tot = jnp.sum(stat, axis=0)
    return h2, tot[0:1, :], tot[1:2, :]


def _stage3(h2_2d, xsub2d, scale3, shift3, w4b, bc4, wsb, bsr):
    m2, cmid = h2_2d.shape
    cin = xsub2d.shape[1]
    cout = w4b.shape[1]
    tm = _row_tile(m2)
    nt = m2 // tm
    base_specs = [pl.BlockSpec((tm, cmid), lambda i: (i, 0)),
                  pl.BlockSpec((tm, cin), lambda i: (i, 0)),
                  pl.BlockSpec((1, cmid), lambda i: (0, 0)),
                  pl.BlockSpec((1, cmid), lambda i: (0, 0)),
                  pl.BlockSpec((cmid, cout), lambda i: (0, 0)),
                  pl.BlockSpec((1, cout), lambda i: (0, 0))]
    if wsb is None:
        kernel = _stage3_id_kernel
        in_specs = base_specs
        args = (h2_2d, xsub2d, scale3, shift3, w4b, bc4)
    else:
        kernel = _stage3_conv_kernel
        in_specs = base_specs + [pl.BlockSpec((cin, cout), lambda i: (0, 0)),
                                 pl.BlockSpec((1, cout), lambda i: (0, 0))]
        args = (h2_2d, xsub2d, scale3, shift3, w4b, bc4, wsb, bsr)
    return pl.pallas_call(
        kernel,
        out_shape=jax.ShapeDtypeStruct((m2, cout), jnp.float32),
        grid=(nt,),
        in_specs=in_specs,
        out_specs=pl.BlockSpec((tm, cout), lambda i: (i, 0)),
        compiler_params=_cparams(),
    )(*args)


# ----------------------------------------------------------------------------
# full forward pass
# ----------------------------------------------------------------------------
def residual_bottleneck_block(x_nchw, p, downsample):
    f32, bf16 = jnp.float32, jnp.bfloat16
    n, cin, hin, win = x_nchw.shape
    cmid = p["w1"].shape[1]
    cout = p["w4"].shape[1]
    stride = 2 if downsample else 1
    identity_sc = (cin == cout) and (not downsample)

    x = jnp.transpose(x_nchw, (0, 2, 3, 1)).astype(f32)          # NHWC (I/O only)
    xs = x if stride == 1 else x[:, ::stride, ::stride, :]
    h2_dim, w2_dim = xs.shape[1], xs.shape[2]
    m1, m2 = n * hin * win, n * h2_dim * w2_dim
    mimg = h2_dim * w2_dim

    xfull2d = x.reshape(m1, cin)            # free reshapes (row-major NHWC)
    xsub2d = xs.reshape(m2, cin)

    # parameters at their true channel counts (full-block specs are legal)
    g1 = p["g1"].reshape(1, cin).astype(f32)
    be1 = p["be1"].reshape(1, cin).astype(f32)
    g2 = p["g2"].reshape(1, cmid).astype(f32)
    be2 = p["be2"].reshape(1, cmid).astype(f32)
    g3 = p["g3"].reshape(1, cmid).astype(f32)
    be3 = p["be3"].reshape(1, cmid).astype(f32)
    w1b = p["w1"].astype(bf16)                                   # (Cin, Cmid)
    w3b = p["w3"].astype(bf16).reshape(9, cmid, cmid)            # HWIO -> taps
    w4b = p["w4"].astype(bf16)                                   # (Cmid, Cout)
    bc4 = p["bc4"].reshape(1, cout).astype(f32)
    # bc1 / bc3 (conv biases feeding BN2 / BN3) are intentionally dropped:
    # a constant bias is exactly cancelled by the batch-stat mean subtraction.
    # (Exact only for training-mode BN; eval-mode running stats would differ.)

    # ---- pass A: BN1 statistics over the full input (all N*H*W pixels) -----
    sx, qx = _channel_stats(xfull2d)
    mu1 = sx / m1
    var1 = jnp.maximum(qx / m1 - mu1 * mu1, 0.0)
    scale1 = g1 * lax.rsqrt(var1 + EPS)
    shift1 = be1 - mu1 * scale1

    # ---- pass B: BN1 -> ReLU -> strided 1x1 conv; BN2 partial stats --------
    h1, s1, q1 = _stage1(xsub2d, scale1, shift1, w1b)
    mu2 = s1 / m2
    var2 = jnp.maximum(q1 / m2 - mu2 * mu2, 0.0)
    scale2 = g2 * lax.rsqrt(var2 + EPS)
    shift2 = be2 - mu2 * scale2

    # ---- pass C: BN2 -> ReLU -> 3x3 conv (in-VMEM shifted matmuls) ---------
    h2, s2, q2 = _stage2(h1.reshape(n, mimg, cmid), scale2, shift2, w3b,
                         h2_dim, w2_dim)
    mu3 = s2 / m2
    var3 = jnp.maximum(q2 / m2 - mu3 * mu3, 0.0)
    scale3 = g3 * lax.rsqrt(var3 + EPS)
    shift3 = be3 - mu3 * scale3

    # ---- pass D: BN3 -> ReLU -> 1x1 conv (+bias) + shortcut ----------------
    if identity_sc:
        wsb, bsr = None, None
    else:
        wsb = p["ws"].astype(bf16)                               # (Cin, Cout)
        bsr = p["bs"].reshape(1, cout).astype(f32)
    out2d = _stage3(h2.reshape(m2, cmid), xsub2d, scale3, shift3,
                    w4b, bc4, wsb, bsr)                          # (m2, Cout)

    out = out2d.reshape(n, h2_dim, w2_dim, cout)                 # free reshape
    return jnp.transpose(out, (0, 3, 1, 2))                      # back to NCHW


# ----------------------------------------------------------------------------
# pure-JAX reference (training-mode BN, identical semantics) for verification
# ----------------------------------------------------------------------------
def ref_forward(x_nchw, p, downsample):
    x = jnp.transpose(x_nchw, (0, 2, 3, 1)).astype(jnp.float32)
    s = 2 if downsample else 1
    cin = x.shape[-1]
    cmid = p["w1"].shape[1]
    cout = p["w4"].shape[1]

    def bn(v, g, b):
        mu = jnp.mean(v, axis=(0, 1, 2), keepdims=True)
        var = jnp.mean((v - mu) ** 2, axis=(0, 1, 2), keepdims=True)
        return (v - mu) * (g.reshape(1, 1, 1, -1) * lax.rsqrt(var + EPS)) \
            + b.reshape(1, 1, 1, -1)

    def conv(v, w, stride, pad):
        return lax.conv_general_dilated(
            v, w, (stride, stride), pad,
            dimension_numbers=("NHWC", "HWIO", "NHWC"),
            precision=lax.Precision.HIGHEST)

    h = jax.nn.relu(bn(x, p["g1"], p["be1"]))
    h = conv(h, p["w1"].reshape(1, 1, cin, cmid), s, "VALID") \
        + p["bc1"].reshape(1, 1, 1, -1)
    h = jax.nn.relu(bn(h, p["g2"], p["be2"]))
    h = conv(h, p["w3"], 1, ((1, 1), (1, 1))) + p["bc3"].reshape(1, 1, 1, -1)
    h = jax.nn.relu(bn(h, p["g3"], p["be3"]))
    main = conv(h, p["w4"].reshape(1, 1, cmid, cout), 1, "VALID") \
        + p["bc4"].reshape(1, 1, 1, -1)

    if cin == cout and not downsample:
        sc = x
    else:
        sc = conv(x, p["ws"].reshape(1, 1, cin, cout), s, "VALID") \
            + p["bs"].reshape(1, 1, 1, -1)
    return jnp.transpose(main + sc, (0, 3, 1, 2))


# ----------------------------------------------------------------------------
# test harness
# ----------------------------------------------------------------------------
def _make_params(key, cin, cout, downsample):
    cmid = cout // 4
    ks = jax.random.split(key, 16)
    f32 = jnp.float32

    def nrm(k, shape, scale=1.0):
        return scale * jax.random.normal(k, shape, f32)

    p = {
        "g1": jax.random.uniform(ks[0], (cin,), f32, 0.5, 1.5),
        "be1": nrm(ks[1], (cin,), 0.1),
        "w1": nrm(ks[2], (cin, cmid), cin ** -0.5),
        "bc1": nrm(ks[3], (cmid,), 0.05),
        "g2": jax.random.uniform(ks[4], (cmid,), f32, 0.5, 1.5),
        "be2": nrm(ks[5], (cmid,), 0.1),
        "w3": nrm(ks[6], (3, 3, cmid, cmid), (9 * cmid) ** -0.5),   # HWIO
        "bc3": nrm(ks[7], (cmid,), 0.05),
        "g3": jax.random.uniform(ks[8], (cmid,), f32, 0.5, 1.5),
        "be3": nrm(ks[9], (cmid,), 0.1),
        "w4": nrm(ks[10], (cmid, cout), cmid ** -0.5),
        "bc4": nrm(ks[11], (cout,), 0.05),
    }
    if not (cin == cout and not downsample):
        p["ws"] = nrm(ks[12], (cin, cout), cin ** -0.5)
        p["bs"] = nrm(ks[13], (cout,), 0.05)
    return p


if __name__ == "__main__":
    # (Cin, Cout, downsample): covers identity, 1x1-conv and strided-conv
    # shortcut branches of the module.
    configs = [
        (16, 16, False),
        (4, 16, False),
        (4, 16, True),
    ]
    n, hin, win = 2, 16, 16
    root = jax.random.PRNGKey(0)
    fwd = jax.jit(residual_bottleneck_block, static_argnums=2)

    for idx, (cin, cout, ds) in enumerate(configs):
        kp, kx = jax.random.split(jax.random.fold_in(root, idx))
        p = _make_params(kp, cin, cout, ds)
        x = jax.random.normal(kx, (n, cin, hin, win), jnp.float32)

        out = jax.block_until_ready(fwd(x, p, ds))
        ref = ref_forward(x, p, ds)
        assert out.shape == ref.shape, (out.shape, ref.shape)
        # bf16 MXU operands + bf16 inter-stage activations vs f32 reference.
        if not jnp.allclose(out, ref, atol=5e-2, rtol=5e-2):
            err = jnp.max(jnp.abs(out - ref))
            raise AssertionError(
                f"Pallas mismatch (Cin={cin}, Cout={cout}, downsample={ds}): "
                f"max abs err = {err}")
    print("KERNEL_OK")
</pallas_src>

<mosaic_0001>
module attributes {stable_mosaic.version = 11 : i64} {
  func.func @_stats_kernel(%arg0: i32, %arg1: memref<256x16xf32, #tpu.memory_space<vmem>>, %arg2: memref<1x2x16xf32, #tpu.memory_space<vmem>>) attributes {dimension_semantics = [#tpu.dimension_semantics<parallel>], iteration_bounds = array<i64: 2>, scalar_prefetch = 0 : i64, scratch_operands = 0 : i64, tpu.core_type = #tpu.core_type<tc>, window_params = [{transform_indices = @transform_0, window_bounds = array<i64: 256, 16>}, {transform_indices = @transform_1, window_bounds = array<i64: 1, 2, 16>}]} {
    %c0 = arith.constant 0 : index
    %c0_0 = arith.constant 0 : index
    %0 = vector.load %arg1[%c0, %c0_0] : memref<256x16xf32, #tpu.memory_space<vmem>>, vector<256x16xf32>
    %cst = arith.constant dense<0.000000e+00> : vector<16xf32>
    %1 = vector.multi_reduction <add>, %0, %cst [0] : vector<256x16xf32> to vector<16xf32>
    %2 = vector.shape_cast %1 : vector<16xf32> to vector<1x16xf32>
    %c0_1 = arith.constant 0 : index
    %c0_2 = arith.constant 0 : index
    %c0_3 = arith.constant 0 : index
    %3 = vector.load %arg2[%c0_1, %c0_2, %c0_3] : memref<1x2x16xf32, #tpu.memory_space<vmem>>, vector<1x1x16xf32>
    %4 = vector.shape_cast %3 : vector<1x1x16xf32> to vector<1x16xf32>
    %5 = vector.shape_cast %2 : vector<1x16xf32> to vector<1x1x16xf32>
    tpu.vector_store %arg2[%c0_1, %c0_2, %c0_3], %5 {strides = array<i32>} : memref<1x2x16xf32, #tpu.memory_space<vmem>>, vector<1x1x16xf32>,
    %6 = arith.mulf %0, %0 : vector<256x16xf32>
    %cst_4 = arith.constant dense<0.000000e+00> : vector<16xf32>
    %7 = vector.multi_reduction <add>, %6, %cst_4 [0] : vector<256x16xf32> to vector<16xf32>
    %8 = vector.shape_cast %7 : vector<16xf32> to vector<1x16xf32>
    %c0_5 = arith.constant 0 : index
    %c1 = arith.constant 1 : index
    %c0_6 = arith.constant 0 : index
    %9 = vector.load %arg2[%c0_5, %c1, %c0_6] : memref<1x2x16xf32, #tpu.memory_space<vmem>>, vector<1x1x16xf32>
    %10 = vector.shape_cast %9 : vector<1x1x16xf32> to vector<1x16xf32>
    %11 = vector.shape_cast %8 : vector<1x16xf32> to vector<1x1x16xf32>
    tpu.vector_store %arg2[%c0_5, %c1, %c0_6], %11 {strides = array<i32>} : memref<1x2x16xf32, #tpu.memory_space<vmem>>, vector<1x1x16xf32>,
    return
  }
  func.func @transform_0(%arg0: i32) -> (i32, i32) {
    %c0_i32 = arith.constant 0 : i32
    %c0_i32_0 = arith.constant 0 : i32
    return %arg0, %c0_i32 : i32, i32
  }
  func.func @transform_1(%arg0: i32) -> (i32, i32, i32) {
    %c0_i32 = arith.constant 0 : i32
    %c0_i32_0 = arith.constant 0 : i32
    %c0_i32_1 = arith.constant 0 : i32
    return %arg0, %c0_i32, %c0_i32_0 : i32, i32, i32
  }
}

module attributes {stable_mosaic.version = 11 : i64} {
  func.func @_stage1_kernel(%arg0: i32, %arg1: memref<256x16xf32, #tpu.memory_space<vmem>>, %arg2: memref<1x16xf32, #tpu.memory_space<vmem>>, %arg3: memref<1x16xf32, #tpu.memory_space<vmem>>, %arg4: memref<16x4xbf16, #tpu.memory_space<vmem>>, %arg5: memref<256x4xbf16, #tpu.memory_space<vmem>>, %arg6: memref<1x2x4xf32, #tpu.memory_space<vmem>>) attributes {dimension_semantics = [#tpu.dimension_semantics<parallel>], iteration_bounds = array<i64: 2>, scalar_prefetch = 0 : i64, scratch_operands = 0 : i64, tpu.core_type = #tpu.core_type<tc>, window_params = [{transform_indices = @transform_0, window_bounds = array<i64: 256, 16>}, {pipeline_mode = #tpu.pipeline_mode<synchronous>, transform_indices = @transform_1, window_bounds = array<i64: 1, 16>}, {pipeline_mode = #tpu.pipeline_mode<synchronous>, transform_indices = @transform_2, window_bounds = array<i64: 1, 16>}, {pipeline_mode = #tpu.pipeline_mode<synchronous>, transform_indices = @transform_3, window_bounds = array<i64: 16, 4>}, {transform_indices = @transform_4, window_bounds = array<i64: 256, 4>}, {transform_indices = @transform_5, window_bounds = array<i64: 1, 2, 4>}]} {
    %c0 = arith.constant 0 : index
    %c0_0 = arith.constant 0 : index
    %0 = vector.load %arg1[%c0, %c0_0] : memref<256x16xf32, #tpu.memory_space<vmem>>, vector<256x16xf32>
    %c0_1 = arith.constant 0 : index
    %c0_2 = arith.constant 0 : index
    %1 = vector.load %arg2[%c0_1, %c0_2] : memref<1x16xf32, #tpu.memory_space<vmem>>, vector<1x16xf32>
    %2 = vector.broadcast %1 : vector<1x16xf32> to vector<256x16xf32>
    %3 = arith.mulf %0, %2 : vector<256x16xf32>
    %c0_3 = arith.constant 0 : index
    %c0_4 = arith.constant 0 : index
    %4 = vector.load %arg3[%c0_3, %c0_4] : memref<1x16xf32, #tpu.memory_space<vmem>>, vector<1x16xf32>
    %5 = vector.broadcast %4 : vector<1x16xf32> to vector<256x16xf32>
    %6 = arith.addf %3, %5 : vector<256x16xf32>
    %cst = arith.constant 0.000000e+00 : f32
    %7 = vector.broadcast %cst : f32 to vector<256x16xf32>
    %8 = arith.maximumf %6, %7 : vector<256x16xf32>
    %9 = arith.truncf %8 : vector<256x16xf32> to vector<256x16xbf16>
    %c0_5 = arith.constant 0 : index
    %c0_6 = arith.constant 0 : index
    %10 = vector.load %arg4[%c0_5, %c0_6] : memref<16x4xbf16, #tpu.memory_space<vmem>>, vector<16x4xbf16>
    %cst_7 = arith.constant dense<0.000000e+00> : vector<256x4xf32>
    %11 = tpu.matmul %9, %10, %cst_7 {dimension_numbers = #tpu.dot_dimension_numbers<[1], [0], [0], [1], [0, 0, 1, 1], [], []>} : vector<256x16xbf16>, vector<16x4xbf16>, vector<256x4xf32> -> vector<256x4xf32>
    %12 = arith.truncf %11 : vector<256x4xf32> to vector<256x4xbf16>
    %c0_8 = arith.constant 0 : index
    %c0_9 = arith.constant 0 : index
    %13 = vector.load %arg5[%c0_8, %c0_9] : memref<256x4xbf16, #tpu.memory_space<vmem>>, vector<256x4xbf16>
    tpu.vector_store %arg5[%c0_8, %c0_9], %12 {strides = array<i32>} : memref<256x4xbf16, #tpu.memory_space<vmem>>, vector<256x4xbf16>,
    %14 = arith.extf %12 : vector<256x4xbf16> to vector<256x4xf32>
    %cst_10 = arith.constant dense<0.000000e+00> : vector<4xf32>
    %15 = vector.multi_reduction <add>, %14, %cst_10 [0] : vector<256x4xf32> to vector<4xf32>
    %16 = vector.shape_cast %15 : vector<4xf32> to vector<1x4xf32>
    %c0_11 = arith.constant 0 : index
    %c0_12 = arith.constant 0 : index
    %c0_13 = arith.constant 0 : index
    %17 = vector.load %arg6[%c0_11, %c0_12, %c0_13] : memref<1x2x4xf32, #tpu.memory_space<vmem>>, vector<1x1x4xf32>
    %18 = vector.shape_cast %17 : vector<1x1x4xf32> to vector<1x4xf32>
    %19 = vector.shape_cast %16 : vector<1x4xf32> to vector<1x1x4xf32>
    tpu.vector_store %arg6[%c0_11, %c0_12, %c0_13], %19 {strides = array<i32>} : memref<1x2x4xf32, #tpu.memory_space<vmem>>, vector<1x1x4xf32>,
    %20 = arith.mulf %14, %14 : vector<256x4xf32>
    %cst_14 = arith.constant dense<0.000000e+00> : vector<4xf32>
    %21 = vector.multi_reduction <add>, %20, %cst_14 [0] : vector<256x4xf32> to vector<4xf32>
    %22 = vector.shape_cast %21 : vector<4xf32> to vector<1x4xf32>
    %c0_15 = arith.constant 0 : index
    %c1 = arith.constant 1 : index
    %c0_16 = arith.constant 0 : index
    %23 = vector.load %arg6[%c0_15, %c1, %c0_16] : memref<1x2x4xf32, #tpu.memory_space<vmem>>, vector<1x1x4xf32>
    %24 = vector.shape_cast %23 : vector<1x1x4xf32> to vector<1x4xf32>
    %25 = vector.shape_cast %22 : vector<1x4xf32> to vector<1x1x4xf32>
    tpu.vector_store %arg6[%c0_15, %c1, %c0_16], %25 {strides = array<i32>} : memref<1x2x4xf32, #tpu.memory_space<vmem>>, vector<1x1x4xf32>,
    return
  }
  func.func @transform_0(%arg0: i32) -> (i32, i32) {
    %c0_i32 = arith.constant 0 : i32
    %c0_i32_0 = arith.constant 0 : i32
    return %arg0, %c0_i32 : i32, i32
  }
  func.func @transform_1(%arg0: i32) -> (i32, i32) {
    %c0_i32 = arith.constant 0 : i32
    %c0_i32_0 = arith.constant 0 : i32
    %c0_i32_1 = arith.constant 0 : i32
    return %c0_i32, %c0_i32_0 : i32, i32
  }
  func.func @transform_2(%arg0: i32) -> (i32, i32) {
    %c0_i32 = arith.constant 0 : i32
    %c0_i32_0 = arith.constant 0 : i32
    %c0_i32_1 = arith.constant 0 : i32
    return %c0_i32, %c0_i32_0 : i32, i32
  }
  func.func @transform_3(%arg0: i32) -> (i32, i32) {
    %c0_i32 = arith.constant 0 : i32
    %c0_i32_0 = arith.constant 0 : i32
    %c0_i32_1 = arith.constant 0 : i32
    return %c0_i32, %c0_i32_0 : i32, i32
  }
  func.func @transform_4(%arg0: i32) -> (i32, i32) {
    %c0_i32 = arith.constant 0 : i32
    %c0_i32_0 = arith.constant 0 : i32
    return %arg0, %c0_i32 : i32, i32
  }
  func.func @transform_5(%arg0: i32) -> (i32, i32, i32) {
    %c0_i32 = arith.constant 0 : i32
    %c0_i32_0 = arith.constant 0 : i32
    %c0_i32_1 = arith.constant 0 : i32
    return %arg0, %c0_i32, %c0_i32_0 : i32, i32, i32
  }
}

module attributes {stable_mosaic.version = 11 : i64} {
  func.func @kernel(%arg0: i32, %arg1: memref<1x256x4xbf16, #tpu.memory_space<vmem>>, %arg2: memref<1x4xf32, #tpu.memory_space<vmem>>, %arg3: memref<1x4xf32, #tpu.memory_space<vmem>>, %arg4: memref<9x4x4xbf16, #tpu.memory_space<vmem>>, %arg5: memref<256x1xf32, #tpu.memory_space<vmem>>, %arg6: memref<256x1xf32, #tpu.memory_space<vmem>>, %arg7: memref<1x256x4xbf16, #tpu.memory_space<vmem>>, %arg8: memref<1x2x4xf32, #tpu.memory_space<vmem>>, %arg9: memref<304x4xf32, #tpu.memory_space<vmem>>) attributes {dimension_semantics = [#tpu.dimension_semantics<parallel>], iteration_bounds = array<i64: 2>, scalar_prefetch = 0 : i64, scratch_operands = 1 : i64, tpu.core_type = #tpu.core_type<tc>, window_params = [{transform_indices = @transform_0, window_bounds = array<i64: 1, 256, 4>}, {pipeline_mode = #tpu.pipeline_mode<synchronous>, transform_indices = @transform_1, window_bounds = array<i64: 1, 4>}, {pipeline_mode = #tpu.pipeline_mode<synchronous>, transform_indices = @transform_2, window_bounds = array<i64: 1, 4>}, {pipeline_mode = #tpu.pipeline_mode<synchronous>, transform_indices = @transform_3, window_bounds = array<i64: 9, 4, 4>}, {pipeline_mode = #tpu.pipeline_mode<synchronous>, transform_indices = @transform_4, window_bounds = array<i64: 256, 1>}, {pipeline_mode = #tpu.pipeline_mode<synchronous>, transform_indices = @transform_5, window_bounds = array<i64: 256, 1>}, {transform_indices = @transform_6, window_bounds = array<i64: 1, 256, 4>}, {transform_indices = @transform_7, window_bounds = array<i64: 1, 2, 4>}]} {
    %c0 = arith.constant 0 : index
    %c0_0 = arith.constant 0 : index
    %c0_1 = arith.constant 0 : index
    %0 = vector.load %arg1[%c0, %c0_0, %c0_1] : memref<1x256x4xbf16, #tpu.memory_space<vmem>>, vector<1x256x4xbf16>
    %1 = vector.shape_cast %0 : vector<1x256x4xbf16> to vector<256x4xbf16>
    %2 = arith.extf %1 : vector<256x4xbf16> to vector<256x4xf32>
    %c0_2 = arith.constant 0 : index
    %c0_3 = arith.constant 0 : index
    %3 = vector.load %arg2[%c0_2, %c0_3] : memref<1x4xf32, #tpu.memory_space<vmem>>, vector<1x4xf32>
    %4 = vector.broadcast %3 : vector<1x4xf32> to vector<256x4xf32>
    %5 = arith.mulf %2, %4 : vector<256x4xf32>
    %c0_4 = arith.constant 0 : index
    %c0_5 = arith.constant 0 : index
    %6 = vector.load %arg3[%c0_4, %c0_5] : memref<1x4xf32, #tpu.memory_space<vmem>>, vector<1x4xf32>
    %7 = vector.broadcast %6 : vector<1x4xf32> to vector<256x4xf32>
    %8 = arith.addf %5, %7 : vector<256x4xf32>
    %cst = arith.constant 0.000000e+00 : f32
    %9 = vector.broadcast %cst : f32 to vector<256x4xf32>
    %10 = arith.maximumf %8, %9 : vector<256x4xf32>
    %cst_6 = arith.constant 0.000000e+00 : f32
    %11 = vector.broadcast %cst_6 : f32 to vector<24x4xf32>
    %c0_7 = arith.constant 0 : index
    %c0_8 = arith.constant 0 : index
    %12 = vector.load %arg9[%c0_7, %c0_8] : memref<304x4xf32, #tpu.memory_space<vmem>>, vector<24x4xf32>
    tpu.vector_store %arg9[%c0_7, %c0_8], %11 {strides = array<i32>} : memref<304x4xf32, #tpu.memory_space<vmem>>, vector<24x4xf32>,
    %cst_9 = arith.constant 0.000000e+00 : f32
    %13 = vector.broadcast %cst_9 : f32 to vector<24x4xf32>
    %c280 = arith.constant 280 : index
    %c0_10 = arith.constant 0 : index
    %14 = vector.load %arg9[%c280, %c0_10] : memref<304x4xf32, #tpu.memory_space<vmem>>, vector<24x4xf32>
    tpu.vector_store %arg9[%c280, %c0_10], %13 {strides = array<i32>} : memref<304x4xf32, #tpu.memory_space<vmem>>, vector<24x4xf32>,
    %c24 = arith.constant 24 : index
    %c0_11 = arith.constant 0 : index
    %15 = vector.load %arg9[%c24, %c0_11] : memref<304x4xf32, #tpu.memory_space<vmem>>, vector<256x4xf32>
    tpu.vector_store %arg9[%c24, %c0_11], %10 {strides = array<i32>} : memref<304x4xf32, #tpu.memory_space<vmem>>, vector<256x4xf32>,
    %cst_12 = arith.constant 0.000000e+00 : f32
    %16 = vector.broadcast %cst_12 : f32 to vector<256x4xf32>
    %c7 = arith.constant 7 : index
    %c0_13 = arith.constant 0 : index
    %17 = vector.load %arg9[%c7, %c0_13] : memref<304x4xf32, #tpu.memory_space<vmem>>, vector<256x4xf32>
    %c0_14 = arith.constant 0 : index
    %c0_15 = arith.constant 0 : index
    %18 = vector.load %arg5[%c0_14, %c0_15] : memref<256x1xf32, #tpu.memory_space<vmem>>, vector<256x1xf32>
    %19 = vector.broadcast %18 : vector<256x1xf32> to vector<256x4xf32>
    %20 = arith.mulf %17, %19 : vector<256x4xf32>
    %21 = arith.truncf %20 : vector<256x4xf32> to vector<256x4xbf16>
    %c0_16 = arith.constant 0 : index
    %c0_17 = arith.constant 0 : index
    %c0_18 = arith.constant 0 : index
    %22 = vector.load %arg4[%c0_16, %c0_17, %c0_18] : memref<9x4x4xbf16, #tpu.memory_space<vmem>>, vector<1x4x4xbf16>
    %23 = vector.shape_cast %22 : vector<1x4x4xbf16> to vector<4x4xbf16>
    %cst_19 = arith.constant dense<0.000000e+00> : vector<256x4xf32>
    %24 = tpu.matmul %21, %23, %cst_19 {dimension_numbers = #tpu.dot_dimension_numbers<[1], [0], [0], [1], [0, 0, 1, 1], [], []>} : vector<256x4xbf16>, vector<4x4xbf16>, vector<256x4xf32> -> vector<256x4xf32>
    %25 = arith.addf %16, %24 : vector<256x4xf32>
    %c8 = arith.constant 8 : index
    %c0_20 = arith.constant 0 : index
    %26 = vector.load %arg9[%c8, %c0_20] : memref<304x4xf32, #tpu.memory_space<vmem>>, vector<256x4xf32>
    %27 = arith.truncf %26 : vector<256x4xf32> to vector<256x4xbf16>
    %c1 = arith.constant 1 : index
    %c0_21 = arith.constant 0 : index
    %c0_22 = arith.constant 0 : index
    %28 = vector.load %arg4[%c1, %c0_21, %c0_22] : memref<9x4x4xbf16, #tpu.memory_space<vmem>>, vector<1x4x4xbf16>
    %29 = vector.shape_cast %28 : vector<1x4x4xbf16> to vector<4x4xbf16>
    %cst_23 = arith.constant dense<0.000000e+00> : vector<256x4xf32>
    %30 = tpu.matmul %27, %29, %cst_23 {dimension_numbers = #tpu.dot_dimension_numbers<[1], [0], [0], [1], [0, 0, 1, 1], [], []>} : vector<256x4xbf16>, vector<4x4xbf16>, vector<256x4xf32> -> vector<256x4xf32>
    %31 = arith.addf %25, %30 : vector<256x4xf32>
    %c9 = arith.constant 9 : index
    %c0_24 = arith.constant 0 : index
    %32 = vector.load %arg9[%c9, %c0_24] : memref<304x4xf32, #tpu.memory_space<vmem>>, vector<256x4xf32>
    %c0_25 = arith.constant 0 : index
    %c0_26 = arith.constant 0 : index
    %33 = vector.load %arg6[%c0_25, %c0_26] : memref<256x1xf32, #tpu.memory_space<vmem>>, vector<256x1xf32>
    %34 = vector.broadcast %33 : vector<256x1xf32> to vector<256x4xf32>
    %35 = arith.mulf %32, %34 : vector<256x4xf32>
    %36 = arith.truncf %35 : vector<256x4xf32> to vector<256x4xbf16>
    %c2 = arith.constant 2 : index
    %c0_27 = arith.constant 0 : index
    %c0_28 = arith.constant 0 : index
    %37 = vector.load %arg4[%c2, %c0_27, %c0_28] : memref<9x4x4xbf16, #tpu.memory_space<vmem>>, vector<1x4x4xbf16>
    %38 = vector.shape_cast %37 : vector<1x4x4xbf16> to vector<4x4xbf16>
    %cst_29 = arith.constant dense<0.000000e+00> : vector<256x4xf32>
    %39 = tpu.matmul %36, %38, %cst_29 {dimension_numbers = #tpu.dot_dimension_numbers<[1], [0], [0], [1], [0, 0, 1, 1], [], []>} : vector<256x4xbf16>, vector<4x4xbf16>, vector<256x4xf32> -> vector<256x4xf32>
    %40 = arith.addf %31, %39 : vector<256x4xf32>
    %c23 = arith.constant 23 : index
    %c0_30 = arith.constant 0 : index
    %41 = vector.load %arg9[%c23, %c0_30] : memref<304x4xf32, #tpu.memory_space<vmem>>, vector<256x4xf32>
    %c0_31 = arith.constant 0 : index
    %c0_32 = arith.constant 0 : index
    %42 = vector.load %arg5[%c0_31, %c0_32] : memref<256x1xf32, #tpu.memory_space<vmem>>, vector<256x1xf32>
    %43 = vector.broadcast %42 : vector<256x1xf32> to vector<256x4xf32>
    %44 = arith.mulf %41, %43 : vector<256x4xf32>
    %45 = arith.truncf %44 : vector<256x4xf32> to vector<256x4xbf16>
    %c3 = arith.constant 3 : index
    %c0_33 = arith.constant 0 : index
    %c0_34 = arith.constant 0 : index
    %46 = vector.load %arg4[%c3, %c0_33, %c0_34] : memref<9x4x4xbf16, #tpu.memory_space<vmem>>, vector<1x4x4xbf16>
    %47 = vector.shape_cast %46 : vector<1x4x4xbf16> to vector<4x4xbf16>
    %cst_35 = arith.constant dense<0.000000e+00> : vector<256x4xf32>
    %48 = tpu.matmul %45, %47, %cst_35 {dimension_numbers = #tpu.dot_dimension_numbers<[1], [0], [0], [1], [0, 0, 1, 1], [], []>} : vector<256x4xbf16>, vector<4x4xbf16>, vector<256x4xf32> -> vector<256x4xf32>
    %49 = arith.addf %40, %48 : vector<256x4xf32>
    %c24_36 = arith.constant 24 : index
    %c0_37 = arith.constant 0 : index
    %50 = vector.load %arg9[%c24_36, %c0_37] : memref<304x4xf32, #tpu.memory_space<vmem>>, vector<256x4xf32>
    %51 = arith.truncf %50 : vector<256x4xf32> to vector<256x4xbf16>
    %c4 = arith.constant 4 : index
    %c0_38 = arith.constant 0 : index
    %c0_39 = arith.constant 0 : index
    %52 = vector.load %arg4[%c4, %c0_38, %c0_39] : memref<9x4x4xbf16, #tpu.memory_space<vmem>>, vector<1x4x4xbf16>
    %53 = vector.shape_cast %52 : vector<1x4x4xbf16> to vector<4x4xbf16>
    %cst_40 = arith.constant dense<0.000000e+00> : vector<256x4xf32>
    %54 = tpu.matmul %51, %53, %cst_40 {dimension_numbers = #tpu.dot_dimension_numbers<[1], [0], [0], [1], [0, 0, 1, 1], [], []>} : vector<256x4xbf16>, vector<4x4xbf16>, vector<256x4xf32> -> vector<256x4xf32>
    %55 = arith.addf %49, %54 : vector<256x4xf32>
    %c25 = arith.constant 25 : index
    %c0_41 = arith.constant 0 : index
    %56 = vector.load %arg9[%c25, %c0_41] : memref<304x4xf32, #tpu.memory_space<vmem>>, vector<256x4xf32>
    %c0_42 = arith.constant 0 : index
    %c0_43 = arith.constant 0 : index
    %57 = vector.load %arg6[%c0_42, %c0_43] : memref<256x1xf32, #tpu.memory_space<vmem>>, vector<256x1xf32>
    %58 = vector.broadcast %57 : vector<256x1xf32> to vector<256x4xf32>
    %59 = arith.mulf %56, %58 : vector<256x4xf32>
    %60 = arith.truncf %59 : vector<256x4xf32> to vector<256x4xbf16>
    %c5 = arith.constant 5 : index
    %c0_44 = arith.constant 0 : index
    %c0_45 = arith.constant 0 : index
    %61 = vector.load %arg4[%c5, %c0_44, %c0_45] : memref<9x4x4xbf16, #tpu.memory_space<vmem>>, vector<1x4x4xbf16>
    %62 = vector.shape_cast %61 : vector<1x4x4xbf16> to vector<4x4xbf16>
    %cst_46 = arith.constant dense<0.000000e+00> : vector<256x4xf32>
    %63 = tpu.matmul %60, %62, %cst_46 {dimension_numbers = #tpu.dot_dimension_numbers<[1], [0], [0], [1], [0, 0, 1, 1], [], []>} : vector<256x4xbf16>, vector<4x4xbf16>, vector<256x4xf32> -> vector<256x4xf32>
    %64 = arith.addf %55, %63 : vector<256x4xf32>
    %c39 = arith.constant 39 : index
    %c0_47 = arith.constant 0 : index
    %65 = vector.load %arg9[%c39, %c0_47] : memref<304x4xf32, #tpu.memory_space<vmem>>, vector<256x4xf32>
    %c0_48 = arith.constant 0 : index
    %c0_49 = arith.constant 0 : index
    %66 = vector.load %arg5[%c0_48, %c0_49] : memref<256x1xf32, #tpu.memory_space<vmem>>, vector<256x1xf32>
    %67 = vector.broadcast %66 : vector<256x1xf32> to vector<256x4xf32>
    %68 = arith.mulf %65, %67 : vector<256x4xf32>
    %69 = arith.truncf %68 : vector<256x4xf32> to vector<256x4xbf16>
    %c6 = arith.constant 6 : index
    %c0_50 = arith.constant 0 : index
    %c0_51 = arith.constant 0 : index
    %70 = vector.load %arg4[%c6, %c0_50, %c0_51] : memref<9x4x4xbf16, #tpu.memory_space<vmem>>, vector<1x4x4xbf16>
    %71 = vector.shape_cast %70 : vector<1x4x4xbf16> to vector<4x4xbf16>
    %cst_52 = arith.constant dense<0.000000e+00> : vector<256x4xf32>
    %72 = tpu.matmul %69, %71, %cst_52 {dimension_numbers = #tpu.dot_dimension_numbers<[1], [0], [0], [1], [0, 0, 1, 1], [], []>} : vector<256x4xbf16>, vector<4x4xbf16>, vector<256x4xf32> -> vector<256x4xf32>
    %73 = arith.addf %64, %72 : vector<256x4xf32>
    %c40 = arith.constant 40 : index
    %c0_53 = arith.constant 0 : index
    %74 = vector.load %arg9[%c40, %c0_53] : memref<304x4xf32, #tpu.memory_space<vmem>>, vector<256x4xf32>
    %75 = arith.truncf %74 : vector<256x4xf32> to vector<256x4xbf16>
    %c7_54 = arith.constant 7 : index
    %c0_55 = arith.constant 0 : index
    %c0_56 = arith.constant 0 : index
    %76 = vector.load %arg4[%c7_54, %c0_55, %c0_56] : memref<9x4x4xbf16, #tpu.memory_space<vmem>>, vector<1x4x4xbf16>
    %77 = vector.shape_cast %76 : vector<1x4x4xbf16> to vector<4x4xbf16>
    %cst_57 = arith.constant dense<0.000000e+00> : vector<256x4xf32>
    %78 = tpu.matmul %75, %77, %cst_57 {dimension_numbers = #tpu.dot_dimension_numbers<[1], [0], [0], [1], [0, 0, 1, 1], [], []>} : vector<256x4xbf16>, vector<4x4xbf16>, vector<256x4xf32> -> vector<256x4xf32>
    %79 = arith.addf %73, %78 : vector<256x4xf32>
    %c41 = arith.constant 41 : index
    %c0_58 = arith.constant 0 : index
    %80 = vector.load %arg9[%c41, %c0_58] : memref<304x4xf32, #tpu.memory_space<vmem>>, vector<256x4xf32>
    %c0_59 = arith.constant 0 : index
    %c0_60 = arith.constant 0 : index
    %81 = vector.load %arg6[%c0_59, %c0_60] : memref<256x1xf32, #tpu.memory_space<vmem>>, vector<256x1xf32>
    %82 = vector.broadcast %81 : vector<256x1xf32> to vector<256x4xf32>
    %83 = arith.mulf %80, %82 : vector<256x4xf32>
    %84 = arith.truncf %83 : vector<256x4xf32> to vector<256x4xbf16>
    %c8_61 = arith.constant 8 : index
    %c0_62 = arith.constant 0 : index
    %c0_63 = arith.constant 0 : index
    %85 = vector.load %arg4[%c8_61, %c0_62, %c0_63] : memref<9x4x4xbf16, #tpu.memory_space<vmem>>, vector<1x4x4xbf16>
    %86 = vector.shape_cast %85 : vector<1x4x4xbf16> to vector<4x4xbf16>
    %cst_64 = arith.constant dense<0.000000e+00> : vector<256x4xf32>
    %87 = tpu.matmul %84, %86, %cst_64 {dimension_numbers = #tpu.dot_dimension_numbers<[1], [0], [0], [1], [0, 0, 1, 1], [], []>} : vector<256x4xbf16>, vector<4x4xbf16>, vector<256x4xf32> -> vector<256x4xf32>
    %88 = arith.addf %79, %87 : vector<256x4xf32>
    %89 = arith.truncf %88 : vector<256x4xf32> to vector<256x4xbf16>
    %c0_65 = arith.constant 0 : index
    %c0_66 = arith.constant 0 : index
    %c0_67 = arith.constant 0 : index
    %90 = vector.load %arg7[%c0_65, %c0_66, %c0_67] : memref<1x256x4xbf16, #tpu.memory_space<vmem>>, vector<1x256x4xbf16>
    %91 = vector.shape_cast %90 : vector<1x256x4xbf16> to vector<256x4xbf16>
    %92 = vector.shape_cast %89 : vector<256x4xbf16> to vector<1x256x4xbf16>
    tpu.vector_store %arg7[%c0_65, %c0_66, %c0_67], %92 {strides = array<i32>} : memref<1x256x4xbf16, #tpu.memory_space<vmem>>, vector<1x256x4xbf16>,
    %93 = arith.extf %89 : vector<256x4xbf16> to vector<256x4xf32>
    %cst_68 = arith.constant dense<0.000000e+00> : vector<4xf32>
    %94 = vector.multi_reduction <add>, %93, %cst_68 [0] : vector<256x4xf32> to vector<4xf32>
    %95 = vector.shape_cast %94 : vector<4xf32> to vector<1x4xf32>
    %c0_69 = arith.constant 0 : index
    %c0_70 = arith.constant 0 : index
    %c0_71 = arith.constant 0 : index
    %96 = vector.load %arg8[%c0_69, %c0_70, %c0_71] : memref<1x2x4xf32, #tpu.memory_space<vmem>>, vector<1x1x4xf32>
    %97 = vector.shape_cast %96 : vector<1x1x4xf32> to vector<1x4xf32>
    %98 = vector.shape_cast %95 : vector<1x4xf32> to vector<1x1x4xf32>
    tpu.vector_store %arg8[%c0_69, %c0_70, %c0_71], %98 {strides = array<i32>} : memref<1x2x4xf32, #tpu.memory_space<vmem>>, vector<1x1x4xf32>,
    %99 = arith.mulf %93, %93 : vector<256x4xf32>
    %cst_72 = arith.constant dense<0.000000e+00> : vector<4xf32>
    %100 = vector.multi_reduction <add>, %99, %cst_72 [0] : vector<256x4xf32> to vector<4xf32>
    %101 = vector.shape_cast %100 : vector<4xf32> to vector<1x4xf32>
    %c0_73 = arith.constant 0 : index
    %c1_74 = arith.constant 1 : index
    %c0_75 = arith.constant 0 : index
    %102 = vector.load %arg8[%c0_73, %c1_74, %c0_75] : memref<1x2x4xf32, #tpu.memory_space<vmem>>, vector<1x1x4xf32>
    %103 = vector.shape_cast %102 : vector<1x1x4xf32> to vector<1x4xf32>
    %104 = vector.shape_cast %101 : vector<1x4xf32> to vector<1x1x4xf32>
    tpu.vector_store %arg8[%c0_73, %c1_74, %c0_75], %104 {strides = array<i32>} : memref<1x2x4xf32, #tpu.memory_space<vmem>>, vector<1x1x4xf32>,
    return
  }
  func.func @transform_0(%arg0: i32) -> (i32, i32, i32) {
    %c0_i32 = arith.constant 0 : i32
    %c0_i32_0 = arith.constant 0 : i32
    %c0_i32_1 = arith.constant 0 : i32
    return %arg0, %c0_i32, %c0_i32_0 : i32, i32, i32
  }
  func.func @transform_1(%arg0: i32) -> (i32, i32) {
    %c0_i32 = arith.constant 0 : i32
    %c0_i32_0 = arith.constant 0 : i32
    %c0_i32_1 = arith.constant 0 : i32
    return %c0_i32, %c0_i32_0 : i32, i32
  }
  func.func @transform_2(%arg0: i32) -> (i32, i32) {
    %c0_i32 = arith.constant 0 : i32
    %c0_i32_0 = arith.constant 0 : i32
    %c0_i32_1 = arith.constant 0 : i32
    return %c0_i32, %c0_i32_0 : i32, i32
  }
  func.func @transform_3(%arg0: i32) -> (i32, i32, i32) {
    %c0_i32 = arith.constant 0 : i32
    %c0_i32_0 = arith.constant 0 : i32
    %c0_i32_1 = arith.constant 0 : i32
    %c0_i32_2 = arith.constant 0 : i32
    return %c0_i32, %c0_i32_0, %c0_i32_1 : i32, i32, i32
  }
  func.func @transform_4(%arg0: i32) -> (i32, i32) {
    %c0_i32 = arith.constant 0 : i32
    %c0_i32_0 = arith.constant 0 : i32
    %c0_i32_1 = arith.constant 0 : i32
    return %c0_i32, %c0_i32_0 : i32, i32
  }
  func.func @transform_5(%arg0: i32) -> (i32, i32) {
    %c0_i32 = arith.constant 0 : i32
    %c0_i32_0 = arith.constant 0 : i32
    %c0_i32_1 = arith.constant 0 : i32
    return %c0_i32, %c0_i32_0 : i32, i32
  }
  func.func @transform_6(%arg0: i32) -> (i32, i32, i32) {
    %c0_i32 = arith.constant 0 : i32
    %c0_i32_0 = arith.constant 0 : i32
    %c0_i32_1 = arith.constant 0 : i32
    return %arg0, %c0_i32, %c0_i32_0 : i32, i32, i32
  }
  func.func @transform_7(%arg0: i32) -> (i32, i32, i32) {
    %c0_i32 = arith.constant 0 : i32
    %c0_i32_0 = arith.constant 0 : i32
    %c0_i32_1 = arith.constant 0 : i32
    return %arg0, %c0_i32, %c0_i32_0 : i32, i32, i32
  }
}

module attributes {stable_mosaic.version = 11 : i64} {
  func.func @_stage3_id_kernel(%arg0: i32, %arg1: memref<256x4xbf16, #tpu.memory_space<vmem>>, %arg2: memref<256x16xf32, #tpu.memory_space<vmem>>, %arg3: memref<1x4xf32, #tpu.memory_space<vmem>>, %arg4: memref<1x4xf32, #tpu.memory_space<vmem>>, %arg5: memref<4x16xbf16, #tpu.memory_space<vmem>>, %arg6: memref<1x16xf32, #tpu.memory_space<vmem>>, %arg7: memref<256x16xf32, #tpu.memory_space<vmem>>) attributes {dimension_semantics = [#tpu.dimension_semantics<parallel>], iteration_bounds = array<i64: 2>, scalar_prefetch = 0 : i64, scratch_operands = 0 : i64, tpu.core_type = #tpu.core_type<tc>, window_params = [{transform_indices = @transform_0, window_bounds = array<i64: 256, 4>}, {transform_indices = @transform_1, window_bounds = array<i64: 256, 16>}, {pipeline_mode = #tpu.pipeline_mode<synchronous>, transform_indices = @transform_2, window_bounds = array<i64: 1, 4>}, {pipeline_mode = #tpu.pipeline_mode<synchronous>, transform_indices = @transform_3, window_bounds = array<i64: 1, 4>}, {pipeline_mode = #tpu.pipeline_mode<synchronous>, transform_indices = @transform_4, window_bounds = array<i64: 4, 16>}, {pipeline_mode = #tpu.pipeline_mode<synchronous>, transform_indices = @transform_5, window_bounds = array<i64: 1, 16>}, {transform_indices = @transform_6, window_bounds = array<i64: 256, 16>}]} {
    %c0 = arith.constant 0 : index
    %c0_0 = arith.constant 0 : index
    %0 = vector.load %arg1[%c0, %c0_0] : memref<256x4xbf16, #tpu.memory_space<vmem>>, vector<256x4xbf16>
    %1 = arith.extf %0 : vector<256x4xbf16> to vector<256x4xf32>
    %c0_1 = arith.constant 0 : index
    %c0_2 = arith.constant 0 : index
    %2 = vector.load %arg3[%c0_1, %c0_2] : memref<1x4xf32, #tpu.memory_space<vmem>>, vector<1x4xf32>
    %3 = vector.broadcast %2 : vector<1x4xf32> to vector<256x4xf32>
    %4 = arith.mulf %1, %3 : vector<256x4xf32>
    %c0_3 = arith.constant 0 : index
    %c0_4 = arith.constant 0 : index
    %5 = vector.load %arg4[%c0_3, %c0_4] : memref<1x4xf32, #tpu.memory_space<vmem>>, vector<1x4xf32>
    %6 = vector.broadcast %5 : vector<1x4xf32> to vector<256x4xf32>
    %7 = arith.addf %4, %6 : vector<256x4xf32>
    %cst = arith.constant 0.000000e+00 : f32
    %8 = vector.broadcast %cst : f32 to vector<256x4xf32>
    %9 = arith.maximumf %7, %8 : vector<256x4xf32>
    %10 = arith.truncf %9 : vector<256x4xf32> to vector<256x4xbf16>
    %c0_5 = arith.constant 0 : index
    %c0_6 = arith.constant 0 : index
    %11 = vector.load %arg5[%c0_5, %c0_6] : memref<4x16xbf16, #tpu.memory_space<vmem>>, vector<4x16xbf16>
    %cst_7 = arith.constant dense<0.000000e+00> : vector<256x16xf32>
    %12 = tpu.matmul %10, %11, %cst_7 {dimension_numbers = #tpu.dot_dimension_numbers<[1], [0], [0], [1], [0, 0, 1, 1], [], []>} : vector<256x4xbf16>, vector<4x16xbf16>, vector<256x16xf32> -> vector<256x16xf32>
    %c0_8 = arith.constant 0 : index
    %c0_9 = arith.constant 0 : index
    %13 = vector.load %arg6[%c0_8, %c0_9] : memref<1x16xf32, #tpu.memory_space<vmem>>, vector<1x16xf32>
    %14 = vector.broadcast %13 : vector<1x16xf32> to vector<256x16xf32>
    %15 = arith.addf %12, %14 : vector<256x16xf32>
    %c0_10 = arith.constant 0 : index
    %c0_11 = arith.constant 0 : index
    %16 = vector.load %arg2[%c0_10, %c0_11] : memref<256x16xf32, #tpu.memory_space<vmem>>, vector<256x16xf32>
    %17 = arith.addf %15, %16 : vector<256x16xf32>
    %c0_12 = arith.constant 0 : index
    %c0_13 = arith.constant 0 : index
    %18 = vector.load %arg7[%c0_12, %c0_13] : memref<256x16xf32, #tpu.memory_space<vmem>>, vector<256x16xf32>
    tpu.vector_store %arg7[%c0_12, %c0_13], %17 {strides = array<i32>} : memref<256x16xf32, #tpu.memory_space<vmem>>, vector<256x16xf32>,
    return
  }
  func.func @transform_0(%arg0: i32) -> (i32, i32) {
    %c0_i32 = arith.constant 0 : i32
    %c0_i32_0 = arith.constant 0 : i32
    return %arg0, %c0_i32 : i32, i32
  }
  func.func @transform_1(%arg0: i32) -> (i32, i32) {
    %c0_i32 = arith.constant 0 : i32
    %c0_i32_0 = arith.constant 0 : i32
    return %arg0, %c0_i32 : i32, i32
  }
  func.func @transform_2(%arg0: i32) -> (i32, i32) {
    %c0_i32 = arith.constant 0 : i32
    %c0_i32_0 = arith.constant 0 : i32
    %c0_i32_1 = arith.constant 0 : i32
    return %c0_i32, %c0_i32_0 : i32, i32
  }
  func.func @transform_3(%arg0: i32) -> (i32, i32) {
    %c0_i32 = arith.constant 0 : i32
    %c0_i32_0 = arith.constant 0 : i32
    %c0_i32_1 = arith.constant 0 : i32
    return %c0_i32, %c0_i32_0 : i32, i32
  }
  func.func @transform_4(%arg0: i32) -> (i32, i32) {
    %c0_i32 = arith.constant 0 : i32
    %c0_i32_0 = arith.constant 0 : i32
    %c0_i32_1 = arith.constant 0 : i32
    return %c0_i32, %c0_i32_0 : i32, i32
  }
  func.func @transform_5(%arg0: i32) -> (i32, i32) {
    %c0_i32 = arith.constant 0 : i32
    %c0_i32_0 = arith.constant 0 : i32
    %c0_i32_1 = arith.constant 0 : i32
    return %c0_i32, %c0_i32_0 : i32, i32
  }
  func.func @transform_6(%arg0: i32) -> (i32, i32) {
    %c0_i32 = arith.constant 0 : i32
    %c0_i32_0 = arith.constant 0 : i32
    return %arg0, %c0_i32 : i32, i32
  }
}

</mosaic_0001>

<llo_original>
// kernel: residual_bottleneck_block.4
$region0: #{residual_bottleneck_block.4}
  #allocation0 [shape = 'u32[]', space=smem, size = 0x4, offset = 0x4, fixed_abs, tag = 'smem constant byte address 0x4 - core index']
  #allocation1 [shape = 'u32[144,128]{1,0:T(1,128)}', space=vmem, size = 0x12000, scoped, tag = 'internal scratch']
  %s0 = inlined_call_operand.vmem [shape: f32[512,16], index: 0, kind: input, shape index: {}]
  %s1 = inlined_call_operand.vmem [shape: f32[2,2,16], index: 1, kind: output, shape index: {}]
  %s2 = sld [smem:[#allocation0]]
  $region37: #{residual_bottleneck_block.4} parent=0
    _
  %s4 = ssub.s32 1, %s2
  %s5 = scalar_select 0, %s4, %s2
  loop: start=0, step=1, limit=4
  $region2: #{residual_bottleneck_block.4} parent=0 // loop_pre_header
    _
  $region3: #{residual_bottleneck_block.4} parent=0 // loop_header
    %s7 = sphi 0, %s11
    %p8 = scmp.ge.s32.totalorder %s7, 4
    %s17 = sphi 0, %s19
    %s20 = sphi 0, %s17
    %s21 = sphi 0, %s20
    %s37 = sphi 0, %s21
    %s43 = sphi 0, %s45
    %s46 = sphi 0, %s43
    %s47 = sphi 0, %s46
    %s63 = sphi 0, %s47
  $region4: #{residual_bottleneck_block.4} parent=0 // loop_header_branch
    %10 = sbr.rel (%p8) target = $region8
  $region5: #{residual_bottleneck_block.4} parent=0 // loop_body
    %s12 = ssub.s32 %s7, 1
    %s13 = ssub.s32 %s7, 2
    %s14 = sadd.s32 %s7, 1
    %s15 = ssub.s32 %s7, %s14
    %p16 = scmp.eq.s32.totalorder %s15, 0
    %s18 = sadd.s32 %s17, 1
    %s19 = scalar_select %p16, %s17, %s18
    %p22 = pneg %p16
    %p23 = scmp.eq.s32.totalorder %s7, 1
    %p24 = por %p22, %p23
    %p25 = scmp.ne.s32.totalorder %s17, %s20
    %p26 = scmp.eq.s32.totalorder %s7, 0
    %p27 = por %p25, %p26
    %p28 = scmp.ne.s32.totalorder %s17, %s20
    %p29 = scmp.eq.s32.totalorder %s12, 1
    %p30 = por %p28, %p29
    %p31 = scmp.ne.s32.totalorder %s20, %s21
    %p32 = scmp.eq.s32.totalorder %s12, 0
    %p33 = por %p31, %p32
    %p34 = scmp.ne.s32.totalorder %s20, %s21
    %p35 = scmp.eq.s32.totalorder %s13, 1
    %p36 = por %p34, %p35
    %p38 = scmp.ne.s32.totalorder %s21, %s37
    %p39 = scmp.eq.s32.totalorder %s13, 0
    %p40 = por %p38, %p39
    %s41 = ssub.s32 %s7, %s14
    %p42 = scmp.eq.s32.totalorder %s41, 0
    %s44 = sadd.s32 %s43, 1
    %s45 = scalar_select %p42, %s43, %s44
    %p48 = pneg %p42
    %p49 = scmp.eq.s32.totalorder %s7, 1
    %p50 = por %p48, %p49
    %p51 = scmp.ne.s32.totalorder %s43, %s46
    %p52 = scmp.eq.s32.totalorder %s7, 0
    %p53 = por %p51, %p52
    %p54 = scmp.ne.s32.totalorder %s43, %s46
    %p55 = scmp.eq.s32.totalorder %s12, 1
    %p56 = por %p54, %p55
    %p57 = scmp.ne.s32.totalorder %s46, %s47
    %p58 = scmp.eq.s32.totalorder %s12, 0
    %p59 = por %p57, %p58
    %p60 = scmp.ne.s32.totalorder %s46, %s47
    %p61 = scmp.eq.s32.totalorder %s13, 1
    %p62 = por %p60, %p61
    %p64 = scmp.ne.s32.totalorder %s47, %s63
    %p65 = scmp.eq.s32.totalorder %s13, 0
    %p66 = por %p64, %p65
    %p67 = scmp.le.s32.totalorder 1, %s7
    %p68 = scmp.lt.s32.totalorder %s7, 3
    %p69 = pnand %p67, %p68
    %p70 = pneg %p69
    // Predicated region
    $region9: #{residual_bottleneck_block.4} parent=5 // pred_check
      _
    $region10: #{residual_bottleneck_block.4} parent=5 // pred_check_branch
      %72 = sbr.rel (%p69) target = $region12
    $region11: #{residual_bottleneck_block.4} parent=5 // pred_region
      %s73 = ssub.s32 %s7, 1
    $region12: #{residual_bottleneck_block.4} parent=5 // pred_fallthru
      _
    %p74 = scmp.lt.s32.totalorder %s7, 2
    // Predicated region
    $region13: #{residual_bottleneck_block.4} parent=5 // pred_check
      %p75 = pneg %p74
    $region14: #{residual_bottleneck_block.4} parent=5 // pred_check_branch
      %77 = sbr.rel (%p75) target = $region16
    $region15: #{residual_bottleneck_block.4} parent=5 // pred_region
      // Predicated region
      $region17: #{residual_bottleneck_block.4} parent=15 // pred_check
        %p78 = pneg %p27
      $region18: #{residual_bottleneck_block.4} parent=15 // pred_check_branch
        %80 = sbr.rel (%p78) target = $region20
      $region19: #{residual_bottleneck_block.4} parent=15 // pred_region
        %s81 = smul.u32 32, %s7
        %p82 = scmp.lt.s32.totalorder %s81, 63
        %s83 = scalar_select %p82, %s81, 63
        %s84 = smul.addr %s83, 8
        %s85 = scalar_lea.vmem %s0, %s84
        %s86 = smul.u32 32, %s7
      $region20: #{residual_bottleneck_block.4} parent=15 // pred_fallthru
        _
    $region16: #{residual_bottleneck_block.4} parent=5 // pred_fallthru
      _
    %p87 = scmp.le.s32.totalorder 1, %s7
    %p88 = scmp.lt.s32.totalorder %s7, 3
    %p89 = pnand %p87, %p88
    %p90 = pneg %p89
    // Predicated region
    $region21: #{residual_bottleneck_block.4} parent=5 // pred_check
      _
    $region22: #{residual_bottleneck_block.4} parent=5 // pred_check_branch
      %92 = sbr.rel (%p89) target = $region24
    $region23: #{residual_bottleneck_block.4} parent=5 // pred_region
      %s93 = ssub.s32 %s7, 1
      %s94 = smul.u32 32, %s12
      %p95 = scmp.lt.s32.totalorder %s94, 63
      %s96 = scalar_select %p95, %s94, 63
      %s97 = smul.addr %s96, 8
      %s98 = scalar_lea.vmem %s0, %s97
      %p99 = pneg %p33
      %p100 = pneg %p30
      %p101 = pneg %p59
      %p102 = pneg %p56
      %p103 = scmp.lt.s32.totalorder %s12, 1
      %s104 = scalar_select %p103, %s12, 1
      %s105 = smul.addr %s104, 2
      %s106 = scalar_lea.vmem %s1, %s105
      %s107 = smul.u32 32, %s12
      %p108 = scmp.lt.s32.totalorder %s107, 63
      %s109 = scalar_select %p108, %s107, 63
      %s110 = smul.addr %s109, 8
      %s111 = scalar_lea.vmem %s0, %s110
      %s112 = smul.u32 32, %s12
      %p113 = scmp.lt.s32.totalorder %s12, 1
      %s114 = scalar_select %p113, %s12, 1
      %s115 = smul.addr %s114, 2
      %s116 = scalar_lea.vmem %s1, %s115
      %v117 = vld [vmem:[%s111] sm:$0xff]
      %v118 = vld [vmem:[%s111 + $0x8] sm:$0xff]
      %v119 = vld [vmem:[%s111 + $0x10] sm:$0xff]
      %v120 = vld [vmem:[%s111 + $0x18] sm:$0xff]
      %v121 = vld [vmem:[%s111 + $0x20] sm:$0xff]
      %v122 = vld [vmem:[%s111 + $0x28] sm:$0xff]
      %v123 = vld [vmem:[%s111 + $0x30] sm:$0xff]
      %v124 = vld [vmem:[%s111 + $0x38] sm:$0xff]
      %v125 = vld [vmem:[%s111 + $0x40] sm:$0xff]
      %v126 = vld [vmem:[%s111 + $0x48] sm:$0xff]
      %v127 = vld [vmem:[%s111 + $0x50] sm:$0xff]
      %v128 = vld [vmem:[%s111 + $0x58] sm:$0xff]
      %v129 = vld [vmem:[%s111 + $0x60] sm:$0xff]
      %v130 = vld [vmem:[%s111 + $0x68] sm:$0xff]
      %v131 = vld [vmem:[%s111 + $0x70] sm:$0xff]
      %v132 = vld [vmem:[%s111 + $0x78] sm:$0xff]
      %v133 = vld [vmem:[%s111 + $0x80] sm:$0xff]
      %v134 = vld [vmem:[%s111 + $0x88] sm:$0xff]
      %v135 = vld [vmem:[%s111 + $0x90] sm:$0xff]
      %v136 = vld [vmem:[%s111 + $0x98] sm:$0xff]
      %v137 = vld [vmem:[%s111 + $0xa0] sm:$0xff]
      %v138 = vld [vmem:[%s111 + $0xa8] sm:$0xff]
      %v139 = vld [vmem:[%s111 + $0xb0] sm:$0xff]
      %v140 = vld [vmem:[%s111 + $0xb8] sm:$0xff]
      %v141 = vld [vmem:[%s111 + $0xc0] sm:$0xff]
      %v142 = vld [vmem:[%s111 + $0xc8] sm:$0xff]
      %v143 = vld [vmem:[%s111 + $0xd0] sm:$0xff]
      %v144 = vld [vmem:[%s111 + $0xd8] sm:$0xff]
      %v145 = vld [vmem:[%s111 + $0xe0] sm:$0xff]
      %v146 = vld [vmem:[%s111 + $0xe8] sm:$0xff]
      %v147 = vld [vmem:[%s111 + $0xf0] sm:$0xff]
      %v148 = vld [vmem:[%s111 + $0xf8] sm:$0xff]
      %vm149 = vcmask 130048
      %v150 = vsel %vm149, %v117, 0.0
      %v151 = vsel %vm149, %v118, 0.0
      %v152 = vadd.f32 %v150, %v151
      %v153 = vsel %vm149, %v119, 0.0
      %v154 = vadd.f32 %v152, %v153
      %v155 = vsel %vm149, %v120, 0.0
      %v156 = vadd.f32 %v154, %v155
      %v157 = vsel %vm149, %v121, 0.0
      %v158 = vadd.f32 %v156, %v157
      %v159 = vsel %vm149, %v122, 0.0
      %v160 = vadd.f32 %v158, %v159
      %v161 = vsel %vm149, %v123, 0.0
      %v162 = vadd.f32 %v160, %v161
      %v163 = vsel %vm149, %v124, 0.0
      %v164 = vadd.f32 %v162, %v163
      %v165 = vsel %vm149, %v125, 0.0
      %v166 = vadd.f32 %v164, %v165
      %v167 = vsel %vm149, %v126, 0.0
      %v168 = vadd.f32 %v166, %v167
      %v169 = vsel %vm149, %v127, 0.0
      %v170 = vadd.f32 %v168, %v169
      %v171 = vsel %vm149, %v128, 0.0
      %v172 = vadd.f32 %v170, %v171
      %v173 = vsel %vm149, %v129, 0.0
      %v174 = vadd.f32 %v172, %v173
      %v175 = vsel %vm149, %v130, 0.0
      %v176 = vadd.f32 %v174, %v175
      %v177 = vsel %vm149, %v131, 0.0
      %v178 = vadd.f32 %v176, %v177
      %v179 = vsel %vm149, %v132, 0.0
      %v180 = vadd.f32 %v178, %v179
      %v181 = vsel %vm149, %v133, 0.0
      %v182 = vadd.f32 %v180, %v181
      %v183 = vsel %vm149, %v134, 0.0
      %v184 = vadd.f32 %v182, %v183
      %v185 = vsel %vm149, %v135, 0.0
      %v186 = vadd.f32 %v184, %v185
      %v187 = vsel %vm149, %v136, 0.0
      %v188 = vadd.f32 %v186, %v187
      %v189 = vsel %vm149, %v137, 0.0
      %v190 = vadd.f32 %v188, %v189
      %v191 = vsel %vm149, %v138, 0.0
      %v192 = vadd.f32 %v190, %v191
      %v193 = vsel %vm149, %v139, 0.0
      %v194 = vadd.f32 %v192, %v193
      %v195 = vsel %vm149, %v140, 0.0
      %v196 = vadd.f32 %v194, %v195
      %v197 = vsel %vm149, %v141, 0.0
      %v198 = vadd.f32 %v196, %v197
      %v199 = vsel %vm149, %v142, 0.0
      %v200 = vadd.f32 %v198, %v199
      %v201 = vsel %vm149, %v143, 0.0
      %v202 = vadd.f32 %v200, %v201
      %v203 = vsel %vm149, %v144, 0.0
      %v204 = vadd.f32 %v202, %v203
      %v205 = vsel %vm149, %v145, 0.0
      %v206 = vadd.f32 %v204, %v205
      %v207 = vsel %vm149, %v146, 0.0
      %v208 = vadd.f32 %v206, %v207
      %v209 = vsel %vm149, %v147, 0.0
      %v210 = vadd.f32 %v208, %v209
      %v211 = vsel %vm149, %v148, 0.0
      %v212 = vadd.f32 %v210, %v211
      %v213 = vrot.slane %v212, 4
      %v214 = vadd.f32 %v212, %v213
      %v215 = vrot.slane %v214, 2
      %v216 = vadd.f32 %v214, %v215
      %v217 = vrot.slane %v216, 1
      %v218 = vadd.f32 %v216, %v217
      %vm219 = vcmask 122880
      %220 = vst.msk [vmem:[%s116] sm:$0x1] %vm219, %v218
      %v221 = vmul.f32 %v117, %v117
      %v222 = vmul.f32 %v118, %v118
      %v223 = vmul.f32 %v119, %v119
      %v224 = vmul.f32 %v120, %v120
      %v225 = vmul.f32 %v121, %v121
      %v226 = vmul.f32 %v122, %v122
      %v227 = vmul.f32 %v123, %v123
      %v228 = vmul.f32 %v124, %v124
      %v229 = vmul.f32 %v125, %v125
      %v230 = vmul.f32 %v126, %v126
      %v231 = vmul.f32 %v127, %v127
      %v232 = vmul.f32 %v128, %v128
      %v233 = vmul.f32 %v129, %v129
      %v234 = vmul.f32 %v130, %v130
      %v235 = vmul.f32 %v131, %v131
      %v236 = vmul.f32 %v132, %v132
      %v237 = vmul.f32 %v133, %v133
      %v238 = vmul.f32 %v134, %v134
      %v239 = vmul.f32 %v135, %v135
      %v240 = vmul.f32 %v136, %v136
      %v241 = vmul.f32 %v137, %v137
      %v242 = vmul.f32 %v138, %v138
      %v243 = vmul.f32 %v139, %v139
      %v244 = vmul.f32 %v140, %v140
      %v245 = vmul.f32 %v141, %v141
      %v246 = vmul.f32 %v142, %v142
      %v247 = vmul.f32 %v143, %v143
      %v248 = vmul.f32 %v144, %v144
      %v249 = vmul.f32 %v145, %v145
      %v250 = vmul.f32 %v146, %v146
      %v251 = vmul.f32 %v147, %v147
      %v252 = vmul.f32 %v148, %v148
      %v253 = vsel %vm149, %v221, 0.0
      %v254 = vsel %vm149, %v222, 0.0
      %v255 = vadd.f32 %v253, %v254
      %v256 = vsel %vm149, %v223, 0.0
      %v257 = vadd.f32 %v255, %v256
      %v258 = vsel %vm149, %v224, 0.0
      %v259 = vadd.f32 %v257, %v258
      %v260 = vsel %vm149, %v225, 0.0
      %v261 = vadd.f32 %v259, %v260
      %v262 = vsel %vm149, %v226, 0.0
      %v263 = vadd.f32 %v261, %v262
      %v264 = vsel %vm149, %v227, 0.0
      %v265 = vadd.f32 %v263, %v264
      %v266 = vsel %vm149, %v228, 0.0
      %v267 = vadd.f32 %v265, %v266
      %v268 = vsel %vm149, %v229, 0.0
      %v269 = vadd.f32 %v267, %v268
      %v270 = vsel %vm149, %v230, 0.0
      %v271 = vadd.f32 %v269, %v270
      %v272 = vsel %vm149, %v231, 0.0
      %v273 = vadd.f32 %v271, %v272
      %v274 = vsel %vm149, %v232, 0.0
      %v275 = vadd.f32 %v273, %v274
      %v276 = vsel %vm149, %v233, 0.0
      %v277 = vadd.f32 %v275, %v276
      %v278 = vsel %vm149, %v234, 0.0
      %v279 = vadd.f32 %v277, %v278
      %v280 = vsel %vm149, %v235, 0.0
      %v281 = vadd.f32 %v279, %v280
      %v282 = vsel %vm149, %v236, 0.0
      %v283 = vadd.f32 %v281, %v282
      %v284 = vsel %vm149, %v237, 0.0
      %v285 = vadd.f32 %v283, %v284
      %v286 = vsel %vm149, %v238, 0.0
      %v287 = vadd.f32 %v285, %v286
      %v288 = vsel %vm149, %v239, 0.0
      %v289 = vadd.f32 %v287, %v288
      %v290 = vsel %vm149, %v240, 0.0
      %v291 = vadd.f32 %v289, %v290
      %v292 = vsel %vm149, %v241, 0.0
      %v293 = vadd.f32 %v291, %v292
      %v294 = vsel %vm149, %v242, 0.0
      %v295 = vadd.f32 %v293, %v294
      %v296 = vsel %vm149, %v243, 0.0
      %v297 = vadd.f32 %v295, %v296
      %v298 = vsel %vm149, %v244, 0.0
      %v299 = vadd.f32 %v297, %v298
      %v300 = vsel %vm149, %v245, 0.0
      %v301 = vadd.f32 %v299, %v300
      %v302 = vsel %vm149, %v246, 0.0
      %v303 = vadd.f32 %v301, %v302
      %v304 = vsel %vm149, %v247, 0.0
      %v305 = vadd.f32 %v303, %v304
      %v306 = vsel %vm149, %v248, 0.0
      %v307 = vadd.f32 %v305, %v306
      %v308 = vsel %vm149, %v249, 0.0
      %v309 = vadd.f32 %v307, %v308
      %v310 = vsel %vm149, %v250, 0.0
      %v311 = vadd.f32 %v309, %v310
      %v312 = vsel %vm149, %v251, 0.0
      %v313 = vadd.f32 %v311, %v312
      %v314 = vsel %vm149, %v252, 0.0
      %v315 = vadd.f32 %v313, %v314
      %v316 = vrot.slane %v315, 4
      %v317 = vadd.f32 %v315, %v316
      %v318 = vrot.slane %v317, 2
      %v319 = vadd.f32 %v317, %v318
      %v320 = vrot.slane %v319, 1
      %v321 = vadd.f32 %v319, %v320
      %322 = vst.msk [vmem:[%s116 + $0x1] sm:$0x1] %vm219, %v321
      %p323 = scmp.lt.s32.totalorder %s12, 1
      %s324 = scalar_select %p323, %s12, 1
      %s325 = smul.addr %s324, 2
      %s326 = scalar_lea.vmem %s1, %s325
      // Predicated region
      $region25: #{residual_bottleneck_block.4} parent=23 // pred_check
        %p327 = pneg %p56
      $region26: #{residual_bottleneck_block.4} parent=23 // pred_check_branch
        %329 = sbr.rel (%p327) target = $region28
      $region27: #{residual_bottleneck_block.4} parent=23 // pred_region
        _
      $region28: #{residual_bottleneck_block.4} parent=23 // pred_fallthru
        _
    $region24: #{residual_bottleneck_block.4} parent=5 // pred_fallthru
      _
    %p330 = scmp.le.s32.totalorder 2, %s7
    // Predicated region
    $region29: #{residual_bottleneck_block.4} parent=5 // pred_check
      %p331 = pneg %p330
    $region30: #{residual_bottleneck_block.4} parent=5 // pred_check_branch
      %333 = sbr.rel (%p331) target = $region32
    $region31: #{residual_bottleneck_block.4} parent=5 // pred_region
      %s334 = ssub.s32 %s7, 2
      // Predicated region
      $region33: #{residual_bottleneck_block.4} parent=31 // pred_check
        %p335 = pneg %p62
      $region34: #{residual_bottleneck_block.4} parent=31 // pred_check_branch
        %337 = sbr.rel (%p335) target = $region36
      $region35: #{residual_bottleneck_block.4} parent=31 // pred_region
        %p338 = scmp.lt.s32.totalorder %s13, 1
        %s339 = scalar_select %p338, %s13, 1
        %s340 = smul.addr %s339, 2
        %s341 = scalar_lea.vmem %s1, %s340
      $region36: #{residual_bottleneck_block.4} parent=31 // pred_fallthru
        _
    $region32: #{residual_bottleneck_block.4} parent=5 // pred_fallthru
      _
  $region6: #{residual_bottleneck_block.4} parent=0 // loop_footer
    %s11 = sadd.s32 1, %s7
  $region7: #{residual_bottleneck_block.4} parent=0 // loop_footer_branch
    %6 = sbr.rel target = $region3
  $region8: #{residual_bottleneck_block.4} parent=0 // loop_exit
    _

// kernel: residual_bottleneck_block.5
$region0: #{residual_bottleneck_block.5}
  #allocation0 [shape = 'u32[]', space=smem, size = 0x4, offset = 0x4, fixed_abs, tag = 'smem constant byte address 0x4 - core index']
  #allocation1 [shape = 'u32[144,128]{1,0:T(1,128)}', space=vmem, size = 0x12000, scoped, tag = 'internal scratch']
  %s0 = inlined_call_operand.vmem [shape: f32[512,16], index: 0, kind: input, shape index: {}]
  %s1 = inlined_call_operand.vmem [shape: f32[1,16], index: 1, kind: input, shape index: {}]
  %s2 = inlined_call_operand.vmem [shape: f32[1,16], index: 2, kind: input, shape index: {}]
  %s3 = inlined_call_operand.vmem [shape: bf16[16,4], index: 3, kind: input, shape index: {}]
  %s4 = inlined_call_operand.vmem [shape: bf16[512,4], index: 4, kind: output, shape index: {0}]
  %s5 = inlined_call_operand.vmem [shape: f32[2,2,4], index: 5, kind: output, shape index: {1}]
  %6 = xla_tuple %s4, %s5
  %s7 = sld [smem:[#allocation0]]
  $region57: #{residual_bottleneck_block.5} parent=0
    _
  %s9 = ssub.s32 1, %s7
  %s10 = scalar_select 0, %s9, %s7
  loop: start=0, step=1, limit=4
  $region2: #{residual_bottleneck_block.5} parent=0 // loop_pre_header
    _
  $region3: #{residual_bottleneck_block.5} parent=0 // loop_header
    %s12 = sphi 0, %s16
    %p13 = scmp.ge.s32.totalorder %s12, 4
    %s22 = sphi 0, %s24
    %s25 = sphi 0, %s22
    %s26 = sphi 0, %s25
    %s42 = sphi 0, %s26
    %s46 = sphi 0, %s46
    %s48 = sphi 0, %s46
    %s49 = sphi 0, %s48
    %s63 = sphi 0, %s49
    %s67 = sphi 0, %s67
    %s69 = sphi 0, %s67
    %s70 = sphi 0, %s69
    %s84 = sphi 0, %s70
    %s88 = sphi 0, %s88
    %s90 = sphi 0, %s88
    %s91 = sphi 0, %s90
    %s105 = sphi 0, %s91
    %s111 = sphi 0, %s113
    %s114 = sphi 0, %s111
    %s115 = sphi 0, %s114
    %s131 = sphi 0, %s115
    %s137 = sphi 0, %s139
    %s140 = sphi 0, %s137
    %s141 = sphi 0, %s140
    %s157 = sphi 0, %s141
  $region4: #{residual_bottleneck_block.5} parent=0 // loop_header_branch
    %15 = sbr.rel (%p13) target = $region8
  $region5: #{residual_bottleneck_block.5} parent=0 // loop_body
    %s17 = ssub.s32 %s12, 1
    %s18 = ssub.s32 %s12, 2
    %s19 = sadd.s32 %s12, 1
    %s20 = ssub.s32 %s12, %s19
    %p21 = scmp.eq.s32.totalorder %s20, 0
    %s23 = sadd.s32 %s22, 1
    %s24 = scalar_select %p21, %s22, %s23
    %p27 = pneg %p21
    %p28 = scmp.eq.s32.totalorder %s12, 1
    %p29 = por %p27, %p28
    %p30 = scmp.ne.s32.totalorder %s22, %s25
    %p31 = scmp.eq.s32.totalorder %s12, 0
    %p32 = por %p30, %p31
    %p33 = scmp.ne.s32.totalorder %s22, %s25
    %p34 = scmp.eq.s32.totalorder %s17, 1
    %p35 = por %p33, %p34
    %p36 = scmp.ne.s32.totalorder %s25, %s26
    %p37 = scmp.eq.s32.totalorder %s17, 0
    %p38 = por %p36, %p37
    %p39 = scmp.ne.s32.totalorder %s25, %s26
    %p40 = scmp.eq.s32.totalorder %s18, 1
    %p41 = por %p39, %p40
    %p43 = scmp.ne.s32.totalorder %s26, %s42
    %p44 = scmp.eq.s32.totalorder %s18, 0
    %p45 = por %p43, %p44
    %s47 = sadd.s32 %s46, 1
    %p50 = scmp.eq.s32.totalorder %s12, 1
    %p51 = scmp.ne.s32.totalorder %s46, %s48
    %p52 = scmp.eq.s32.totalorder %s12, 0
    %p53 = por %p51, %p52
    %p54 = scmp.ne.s32.totalorder %s46, %s48
    %p55 = scmp.eq.s32.totalorder %s17, 1
    %p56 = por %p54, %p55
    %p57 = scmp.ne.s32.totalorder %s48, %s49
    %p58 = scmp.eq.s32.totalorder %s17, 0
    %p59 = por %p57, %p58
    %p60 = scmp.ne.s32.totalorder %s48, %s49
    %p61 = scmp.eq.s32.totalorder %s18, 1
    %p62 = por %p60, %p61
    %p64 = scmp.ne.s32.totalorder %s49, %s63
    %p65 = scmp.eq.s32.totalorder %s18, 0
    %p66 = por %p64, %p65
    %s68 = sadd.s32 %s67, 1
    %p71 = scmp.eq.s32.totalorder %s12, 1
    %p72 = scmp.ne.s32.totalorder %s67, %s69
    %p73 = scmp.eq.s32.totalorder %s12, 0
    %p74 = por %p72, %p73
    %p75 = scmp.ne.s32.totalorder %s67, %s69
    %p76 = scmp.eq.s32.totalorder %s17, 1
    %p77 = por %p75, %p76
    %p78 = scmp.ne.s32.totalorder %s69, %s70
    %p79 = scmp.eq.s32.totalorder %s17, 0
    %p80 = por %p78, %p79
    %p81 = scmp.ne.s32.totalorder %s69, %s70
    %p82 = scmp.eq.s32.totalorder %s18, 1
    %p83 = por %p81, %p82
    %p85 = scmp.ne.s32.totalorder %s70, %s84
    %p86 = scmp.eq.s32.totalorder %s18, 0
    %p87 = por %p85, %p86
    %s89 = sadd.s32 %s88, 1
    %p92 = scmp.eq.s32.totalorder %s12, 1
    %p93 = scmp.ne.s32.totalorder %s88, %s90
    %p94 = scmp.eq.s32.totalorder %s12, 0
    %p95 = por %p93, %p94
    %p96 = scmp.ne.s32.totalorder %s88, %s90
    %p97 = scmp.eq.s32.totalorder %s17, 1
    %p98 = por %p96, %p97
    %p99 = scmp.ne.s32.totalorder %s90, %s91
    %p100 = scmp.eq.s32.totalorder %s17, 0
    %p101 = por %p99, %p100
    %p102 = scmp.ne.s32.totalorder %s90, %s91
    %p103 = scmp.eq.s32.totalorder %s18, 1
    %p104 = por %p102, %p103
    %p106 = scmp.ne.s32.totalorder %s91, %s105
    %p107 = scmp.eq.s32.totalorder %s18, 0
    %p108 = por %p106, %p107
    %s109 = ssub.s32 %s12, %s19
    %p110 = scmp.eq.s32.totalorder %s109, 0
    %s112 = sadd.s32 %s111, 1
    %s113 = scalar_select %p110, %s111, %s112
    %p116 = pneg %p110
    %p117 = scmp.eq.s32.totalorder %s12, 1
    %p118 = por %p116, %p117
    %p119 = scmp.ne.s32.totalorder %s111, %s114
    %p120 = scmp.eq.s32.totalorder %s12, 0
    %p121 = por %p119, %p120
    %p122 = scmp.ne.s32.totalorder %s111, %s114
    %p123 = scmp.eq.s32.totalorder %s17, 1
    %p124 = por %p122, %p123
    %p125 = scmp.ne.s32.totalorder %s114, %s115
    %p126 = scmp.eq.s32.totalorder %s17, 0
    %p127 = por %p125, %p126
    %p128 = scmp.ne.s32.totalorder %s114, %s115
    %p129 = scmp.eq.s32.totalorder %s18, 1
    %p130 = por %p128, %p129
    %p132 = scmp.ne.s32.totalorder %s115, %s131
    %p133 = scmp.eq.s32.totalorder %s18, 0
    %p134 = por %p132, %p133
    %s135 = ssub.s32 %s12, %s19
    %p136 = scmp.eq.s32.totalorder %s135, 0
    %s138 = sadd.s32 %s137, 1
    %s139 = scalar_select %p136, %s137, %s138
    %p142 = pneg %p136
    %p143 = scmp.eq.s32.totalorder %s12, 1
    %p144 = por %p142, %p143
    %p145 = scmp.ne.s32.totalorder %s137, %s140
    %p146 = scmp.eq.s32.totalorder %s12, 0
    %p147 = por %p145, %p146
    %p148 = scmp.ne.s32.totalorder %s137, %s140
    %p149 = scmp.eq.s32.totalorder %s17, 1
    %p150 = por %p148, %p149
    %p151 = scmp.ne.s32.totalorder %s140, %s141
    %p152 = scmp.eq.s32.totalorder %s17, 0
    %p153 = por %p151, %p152
    %p154 = scmp.ne.s32.totalorder %s140, %s141
    %p155 = scmp.eq.s32.totalorder %s18, 1
    %p156 = por %p154, %p155
    %p158 = scmp.ne.s32.totalorder %s141, %s157
    %p159 = scmp.eq.s32.totalorder %s18, 0
    %p160 = por %p158, %p159
    %p161 = scmp.le.s32.totalorder 1, %s12
    %p162 = scmp.lt.s32.totalorder %s12, 3
    %p163 = pnand %p161, %p162
    %p164 = pneg %p163
    // Predicated region
    $region9: #{residual_bottleneck_block.5} parent=5 // pred_check
      _
    $region10: #{residual_bottleneck_block.5} parent=5 // pred_check_branch
      %166 = sbr.rel (%p163) target = $region12
    $region11: #{residual_bottleneck_block.5} parent=5 // pred_region
      %s167 = ssub.s32 %s12, 1
      // Predicated region
      $region13: #{residual_bottleneck_block.5} parent=11 // pred_check
        %p168 = pneg %p59
      $region14: #{residual_bottleneck_block.5} parent=11 // pred_check_branch
        %170 = sbr.rel (%p168) target = $region16
      $region15: #{residual_bottleneck_block.5} parent=11 // pred_region
        _
      $region16: #{residual_bottleneck_block.5} parent=11 // pred_fallthru
        _
      // Predicated region
      $region17: #{residual_bottleneck_block.5} parent=11 // pred_check
        %p171 = pneg %p80
      $region18: #{residual_bottleneck_block.5} parent=11 // pred_check_branch
        %173 = sbr.rel (%p171) target = $region20
      $region19: #{residual_bottleneck_block.5} parent=11 // pred_region
        _
      $region20: #{residual_bottleneck_block.5} parent=11 // pred_fallthru
        _
      // Predicated region
      $region21: #{residual_bottleneck_block.5} parent=11 // pred_check
        %p174 = pneg %p101
      $region22: #{residual_bottleneck_block.5} parent=11 // pred_check_branch
        %176 = sbr.rel (%p174) target = $region24
      $region23: #{residual_bottleneck_block.5} parent=11 // pred_region
        _
      $region24: #{residual_bottleneck_block.5} parent=11 // pred_fallthru
        _
    $region12: #{residual_bottleneck_block.5} parent=5 // pred_fallthru
      _
    %p177 = scmp.lt.s32.totalorder %s12, 2
    // Predicated region
    $region25: #{residual_bottleneck_block.5} parent=5 // pred_check
      %p178 = pneg %p177
    $region26: #{residual_bottleneck_block.5} parent=5 // pred_check_branch
      %180 = sbr.rel (%p178) target = $region28
    $region27: #{residual_bottleneck_block.5} parent=5 // pred_region
      // Predicated region
      $region29: #{residual_bottleneck_block.5} parent=27 // pred_check
        %p181 = pneg %p32
      $region30: #{residual_bottleneck_block.5} parent=27 // pred_check_branch
        %183 = sbr.rel (%p181) target = $region32
      $region31: #{residual_bottleneck_block.5} parent=27 // pred_region
        %s184 = smul.u32 32, %s12
        %p185 = scmp.lt.s32.totalorder %s184, 63
        %s186 = scalar_select %p185, %s184, 63
        %s187 = smul.addr %s186, 8
        %s188 = scalar_lea.vmem %s0, %s187
        %s189 = smul.u32 32, %s12
      $region32: #{residual_bottleneck_block.5} parent=27 // pred_fallthru
        _
    $region28: #{residual_bottleneck_block.5} parent=5 // pred_fallthru
      _
    %p190 = scmp.le.s32.totalorder 1, %s12
    %p191 = scmp.lt.s32.totalorder %s12, 3
    %p192 = pnand %p190, %p191
    %p193 = pneg %p192
    // Predicated region
    $region33: #{residual_bottleneck_block.5} parent=5 // pred_check
      _
    $region34: #{residual_bottleneck_block.5} parent=5 // pred_check_branch
      %195 = sbr.rel (%p192) target = $region36
    $region35: #{residual_bottleneck_block.5} parent=5 // pred_region
      %s196 = ssub.s32 %s12, 1
      %s197 = smul.u32 32, %s17
      %p198 = scmp.lt.s32.totalorder %s197, 63
      %s199 = scalar_select %p198, %s197, 63
      %s200 = smul.addr %s199, 8
      %s201 = scalar_lea.vmem %s0, %s200
      %p202 = pneg %p38
      %p203 = pneg %p35
      %p204 = pneg %p59
      %p205 = pneg %p56
      %p206 = pneg %p80
      %p207 = pneg %p77
      %p208 = pneg %p101
      %p209 = pneg %p98
      %p210 = pneg %p127
      %p211 = pneg %p124
      %s212 = smul.u32 32, %s17
      %p213 = scmp.lt.s32.totalorder %s212, 63
      %s214 = scalar_select %p213, %s212, 63
      %s215 = smul.addr %s214, 4
      %s216 = scalar_lea.vmem %s4, %s215
      %p217 = pneg %p153
      %p218 = pneg %p150
      %p219 = scmp.lt.s32.totalorder %s17, 1
      %s220 = scalar_select %p219, %s17, 1
      %s221 = smul.addr %s220, 2
      %s222 = scalar_lea.vmem %s5, %s221
      %s223 = smul.u32 32, %s17
      %p224 = scmp.lt.s32.totalorder %s223, 63
      %s225 = scalar_select %p224, %s223, 63
      %s226 = smul.addr %s225, 8
      %s227 = scalar_lea.vmem %s0, %s226
      %s228 = smul.u32 32, %s17
      %s229 = smul.u32 32, %s17
      %p230 = scmp.lt.s32.totalorder %s229, 63
      %s231 = scalar_select %p230, %s229, 63
      %s232 = smul.addr %s231, 4
      %s233 = scalar_lea.vmem %s4, %s232
      %s234 = smul.u32 32, %s17
      %p235 = scmp.lt.s32.totalorder %s17, 1
      %s236 = scalar_select %p235, %s17, 1
      %s237 = smul.addr %s236, 2
      %s238 = scalar_lea.vmem %s5, %s237
      %v240 = vld [vmem:[%s227] sm:$0xff]
      %v241 = vld [vmem:[%s227 + $0x8] sm:$0xff]
      %v242 = vld [vmem:[%s227 + $0x10] sm:$0xff]
      %v243 = vld [vmem:[%s227 + $0x18] sm:$0xff]
      %v244 = vld [vmem:[%s227 + $0x20] sm:$0xff]
      %v245 = vld [vmem:[%s227 + $0x28] sm:$0xff]
      %v246 = vld [vmem:[%s227 + $0x30] sm:$0xff]
      %v247 = vld [vmem:[%s227 + $0x38] sm:$0xff]
      %v248 = vld [vmem:[%s227 + $0x40] sm:$0xff]
      %v249 = vld [vmem:[%s227 + $0x48] sm:$0xff]
      %v250 = vld [vmem:[%s227 + $0x50] sm:$0xff]
      %v251 = vld [vmem:[%s227 + $0x58] sm:$0xff]
      %v252 = vld [vmem:[%s227 + $0x60] sm:$0xff]
      %v253 = vld [vmem:[%s227 + $0x68] sm:$0xff]
      %v254 = vld [vmem:[%s227 + $0x70] sm:$0xff]
      %v255 = vld [vmem:[%s227 + $0x78] sm:$0xff]
      %v256 = vld [vmem:[%s227 + $0x80] sm:$0xff]
      %v257 = vld [vmem:[%s227 + $0x88] sm:$0xff]
      %v258 = vld [vmem:[%s227 + $0x90] sm:$0xff]
      %v259 = vld [vmem:[%s227 + $0x98] sm:$0xff]
      %v260 = vld [vmem:[%s227 + $0xa0] sm:$0xff]
      %v261 = vld [vmem:[%s227 + $0xa8] sm:$0xff]
      %v262 = vld [vmem:[%s227 + $0xb0] sm:$0xff]
      %v263 = vld [vmem:[%s227 + $0xb8] sm:$0xff]
      %v264 = vld [vmem:[%s227 + $0xc0] sm:$0xff]
      %v265 = vld [vmem:[%s227 + $0xc8] sm:$0xff]
      %v266 = vld [vmem:[%s227 + $0xd0] sm:$0xff]
      %v267 = vld [vmem:[%s227 + $0xd8] sm:$0xff]
      %v268 = vld [vmem:[%s227 + $0xe0] sm:$0xff]
      %v269 = vld [vmem:[%s227 + $0xe8] sm:$0xff]
      %v270 = vld [vmem:[%s227 + $0xf0] sm:$0xff]
      %v271 = vld [vmem:[%s227 + $0xf8] sm:$0xff]
      %v272 = vld [vmem:[%s1] sm:$0x1]
      %v274 = vlaneseq
      %v275 = vshrl.u32 %v274, 7
      %v276 = vsub.s32 0, %v275
      %v277 = vrot.slane %v272, %v276
      %v279 = vmul.f32 %v240, %v277
      %v280 = vmul.f32 %v241, %v277
      %v281 = vmul.f32 %v242, %v277
      %v282 = vmul.f32 %v243, %v277
      %v283 = vmul.f32 %v244, %v277
      %v284 = vmul.f32 %v245, %v277
      %v285 = vmul.f32 %v246, %v277
      %v286 = vmul.f32 %v247, %v277
      %v287 = vmul.f32 %v248, %v277
      %v288 = vmul.f32 %v249, %v277
      %v289 = vmul.f32 %v250, %v277
      %v290 = vmul.f32 %v251, %v277
      %v291 = vmul.f32 %v252, %v277
      %v292 = vmul.f32 %v253, %v277
      %v293 = vmul.f32 %v254, %v277
      %v294 = vmul.f32 %v255, %v277
      %v295 = vmul.f32 %v256, %v277
      %v296 = vmul.f32 %v257, %v277
      %v297 = vmul.f32 %v258, %v277
      %v298 = vmul.f32 %v259, %v277
      %v299 = vmul.f32 %v260, %v277
      %v300 = vmul.f32 %v261, %v277
      %v301 = vmul.f32 %v262, %v277
      %v302 = vmul.f32 %v263, %v277
      %v303 = vmul.f32 %v264, %v277
      %v304 = vmul.f32 %v265, %v277
      %v305 = vmul.f32 %v266, %v277
      %v306 = vmul.f32 %v267, %v277
      %v307 = vmul.f32 %v268, %v277
      %v308 = vmul.f32 %v269, %v277
      %v309 = vmul.f32 %v270, %v277
      %v310 = vmul.f32 %v271, %v277
      %v311 = vld [vmem:[%s2] sm:$0x1]
      %v313 = vlaneseq
      %v314 = vshrl.u32 %v313, 7
      %v315 = vsub.s32 0, %v314
      %v316 = vrot.slane %v311, %v315
      %v318 = vadd.f32 %v279, %v316
      %v319 = vadd.f32 %v280, %v316
      %v320 = vadd.f32 %v281, %v316
      %v321 = vadd.f32 %v282, %v316
      %v322 = vadd.f32 %v283, %v316
      %v323 = vadd.f32 %v284, %v316
      %v324 = vadd.f32 %v285, %v316
      %v325 = vadd.f32 %v286, %v316
      %v326 = vadd.f32 %v287, %v316
      %v327 = vadd.f32 %v288, %v316
      %v328 = vadd.f32 %v289, %v316
      %v329 = vadd.f32 %v290, %v316
      %v330 = vadd.f32 %v291, %v316
      %v331 = vadd.f32 %v292, %v316
      %v332 = vadd.f32 %v293, %v316
      %v333 = vadd.f32 %v294, %v316
      %v334 = vadd.f32 %v295, %v316
      %v335 = vadd.f32 %v296, %v316
      %v336 = vadd.f32 %v297, %v316
      %v337 = vadd.f32 %v298, %v316
      %v338 = vadd.f32 %v299, %v316
      %v339 = vadd.f32 %v300, %v316
      %v340 = vadd.f32 %v301, %v316
      %v341 = vadd.f32 %v302, %v316
      %v342 = vadd.f32 %v303, %v316
      %v343 = vadd.f32 %v304, %v316
      %v344 = vadd.f32 %v305, %v316
      %v345 = vadd.f32 %v306, %v316
      %v346 = vadd.f32 %v307, %v316
      %v347 = vadd.f32 %v308, %v316
      %v348 = vadd.f32 %v309, %v316
      %v349 = vadd.f32 %v310, %v316
      %v350 = vmax.f32 %v318, 0.0
      %v351 = vmax.f32 %v319, 0.0
      %v352 = vmax.f32 %v320, 0.0
      %v353 = vmax.f32 %v321, 0.0
      %v354 = vmax.f32 %v322, 0.0
      %v355 = vmax.f32 %v323, 0.0
      %v356 = vmax.f32 %v324, 0.0
      %v357 = vmax.f32 %v325, 0.0
      %v358 = vmax.f32 %v326, 0.0
      %v359 = vmax.f32 %v327, 0.0
      %v360 = vmax.f32 %v328, 0.0
      %v361 = vmax.f32 %v329, 0.0
      %v362 = vmax.f32 %v330, 0.0
      %v363 = vmax.f32 %v331, 0.0
      %v364 = vmax.f32 %v332, 0.0
      %v365 = vmax.f32 %v333, 0.0
      %v366 = vmax.f32 %v334, 0.0
      %v367 = vmax.f32 %v335, 0.0
      %v368 = vmax.f32 %v336, 0.0
      %v369 = vmax.f32 %v337, 0.0
      %v370 = vmax.f32 %v338, 0.0
      %v371 = vmax.f32 %v339, 0.0
      %v372 = vmax.f32 %v340, 0.0
      %v373 = vmax.f32 %v341, 0.0
      %v374 = vmax.f32 %v342, 0.0
      %v375 = vmax.f32 %v343, 0.0
      %v376 = vmax.f32 %v344, 0.0
      %v377 = vmax.f32 %v345, 0.0
      %v378 = vmax.f32 %v346, 0.0
      %v379 = vmax.f32 %v347, 0.0
      %v380 = vmax.f32 %v348, 0.0
      %v381 = vmax.f32 %v349, 0.0
      %v382 = vpack.c.bf16 %v351, %v350
      %v383 = vpack.c.bf16 %v353, %v352
      %v384 = vpack.c.bf16 %v355, %v354
      %v385 = vpack.c.bf16 %v357, %v356
      %v386 = vpack.c.bf16 %v359, %v358
      %v387 = vpack.c.bf16 %v361, %v360
      %v388 = vpack.c.bf16 %v363, %v362
      %v389 = vpack.c.bf16 %v365, %v364
      %v390 = vpack.c.bf16 %v367, %v366
      %v391 = vpack.c.bf16 %v369, %v368
      %v392 = vpack.c.bf16 %v371, %v370
      %v393 = vpack.c.bf16 %v373, %v372
      %v394 = vpack.c.bf16 %v375, %v374
      %v395 = vpack.c.bf16 %v377, %v376
      %v396 = vpack.c.bf16 %v379, %v378
      %v397 = vpack.c.bf16 %v381, %v380
      %v398 = vld [vmem:[%s3] sm:$0xf]
      %v399 = vld [vmem:[%s3 + $0x4] sm:$0xf]
      %v402 = vunpack.c.l.b16 %v398
      %v403 = vunpack.c.l.b16 %v399
      %v404 = vpack.c.b16 %v403, %v402
      %vm406 = vcmask 130048
      %v408 = vsel %vm406, %v382, 0
      %v411 = vsel %vm406, %v383, 0
      %v414 = vsel %vm406, %v384, 0
      %v417 = vsel %vm406, %v385, 0
      %v420 = vsel %vm406, %v386, 0
      %v423 = vsel %vm406, %v387, 0
      %v426 = vsel %vm406, %v388, 0
      %v429 = vsel %vm406, %v389, 0
      %v432 = vsel %vm406, %v390, 0
      %v435 = vsel %vm406, %v391, 0
      %v438 = vsel %vm406, %v392, 0
      %v441 = vsel %vm406, %v393, 0
      %v444 = vsel %vm406, %v394, 0
      %v447 = vsel %vm406, %v395, 0
      %v450 = vsel %vm406, %v396, 0
      %v453 = vsel %vm406, %v397, 0
      %455 = vmatprep.subr.bf16.mxu0 0
      %456 = vmatpush1.bf16.msra.mxu0 %v404
      %457 = vmatprep.subr.bf16.mxu0 0
      %458 = vmatpush1.bf16.msra.mxu0 0
      %459 = vmatprep.subr.bf16.mxu0 0
      %460 = vmatpush1.bf16.msra.mxu0 0
      %461 = vmatprep.subr.bf16.mxu0 0
      %462 = vmatpush1.bf16.msra.mxu0 0
      %463 = vmatprep.subr.bf16.mxu0 0
      %464 = vmatpush1.bf16.msra.mxu0 0
      %465 = vmatprep.subr.bf16.mxu0 0
      %466 = vmatpush1.bf16.msra.mxu0 0
      %467 = vmatprep.subr.bf16.mxu0 0
      %468 = vmatpush1.bf16.msra.mxu0 0
      %469 = vmatprep.subr.bf16.mxu0 0
      %470 = vmatpush1.bf16.msra.mxu0 0
      %471 = vmatprep.subr.bf16.mxu0 0
      %472 = vmatpush1.bf16.msra.mxu0 0
      %473 = vmatprep.subr.bf16.mxu0 0
      %474 = vmatpush1.bf16.msra.mxu0 0
      %475 = vmatprep.subr.bf16.mxu0 0
      %476 = vmatpush1.bf16.msra.mxu0 0
      %477 = vmatprep.subr.bf16.mxu0 0
      %478 = vmatpush1.bf16.msra.mxu0 0
      %479 = vmatprep.subr.bf16.mxu0 0
      %480 = vmatpush1.bf16.msra.mxu0 0
      %481 = vmatprep.subr.bf16.mxu0 0
      %482 = vmatpush1.bf16.msra.mxu0 0
      %483 = vmatprep.subr.bf16.mxu0 0
      %484 = vmatpush1.bf16.msra.mxu0 0
      %485 = vmatprep.subr.bf16.mxu0 0
      %486 = vmatpush1.bf16.msra.mxu0 0
      %487 = vmatprep.mubr.bf16.mxu0 0
      %488 = vmatmul.mubr.bf16.gmra.mrb[0].mxu0 %v408
      %v489 = vpop.f32.mrb[0].mxu0
      %v490 = vadd.f32 0.0, %v489
      %v491 = vpop.f32.mrb[0].mxu0
      %v492 = vpop.f32.mrb[0].mxu0
      %v493 = vadd.f32 0.0, %v492
      %v494 = vpop.f32.mrb[0].mxu0
      %495 = vmatprep.mubr.bf16.mxu0 0
      %496 = vmatmul.mubr.bf16.gmra.mrb[0].mxu0 %v411
      %v497 = vpop.f32.mrb[0].mxu0
      %v498 = vadd.f32 0.0, %v497
      %v499 = vpop.f32.mrb[0].mxu0
      %v500 = vpop.f32.mrb[0].mxu0
      %v501 = vadd.f32 0.0, %v500
      %v502 = vpop.f32.mrb[0].mxu0
      %503 = vmatprep.mubr.bf16.mxu0 0
      %504 = vmatmul.mubr.bf16.gmra.mrb[0].mxu0 %v414
      %v505 = vpop.f32.mrb[0].mxu0
      %v506 = vadd.f32 0.0, %v505
      %v507 = vpop.f32.mrb[0].mxu0
      %v508 = vpop.f32.mrb[0].mxu0
      %v509 = vadd.f32 0.0, %v508
      %v510 = vpop.f32.mrb[0].mxu0
      %511 = vmatprep.mubr.bf16.mxu0 0
      %512 = vmatmul.mubr.bf16.gmra.mrb[0].mxu0 %v417
      %v513 = vpop.f32.mrb[0].mxu0
      %v514 = vadd.f32 0.0, %v513
      %v515 = vpop.f32.mrb[0].mxu0
      %v516 = vpop.f32.mrb[0].mxu0
      %v517 = vadd.f32 0.0, %v516
      %v518 = vpop.f32.mrb[0].mxu0
      %519 = vmatprep.mubr.bf16.mxu0 0
      %520 = vmatmul.mubr.bf16.gmra.mrb[0].mxu0 %v420
      %v521 = vpop.f32.mrb[0].mxu0
      %v522 = vadd.f32 0.0, %v521
      %v523 = vpop.f32.mrb[0].mxu0
      %v524 = vpop.f32.mrb[0].mxu0
      %v525 = vadd.f32 0.0, %v524
      %v526 = vpop.f32.mrb[0].mxu0
      %527 = vmatprep.mubr.bf16.mxu0 0
      %528 = vmatmul.mubr.bf16.gmra.mrb[0].mxu0 %v423
      %v529 = vpop.f32.mrb[0].mxu0
      %v530 = vadd.f32 0.0, %v529
      %v531 = vpop.f32.mrb[0].mxu0
      %v532 = vpop.f32.mrb[0].mxu0
      %v533 = vadd.f32 0.0, %v532
      %v534 = vpop.f32.mrb[0].mxu0
      %535 = vmatprep.mubr.bf16.mxu0 0
      %536 = vmatmul.mubr.bf16.gmra.mrb[0].mxu0 %v426
      %v537 = vpop.f32.mrb[0].mxu0
      %v538 = vadd.f32 0.0, %v537
      %v539 = vpop.f32.mrb[0].mxu0
      %v540 = vpop.f32.mrb[0].mxu0
      %v541 = vadd.f32 0.0, %v540
      %v542 = vpop.f32.mrb[0].mxu0
      %543 = vmatprep.mubr.bf16.mxu0 0
      %544 = vmatmul.mubr.bf16.gmra.mrb[0].mxu0 %v429
      %v545 = vpop.f32.mrb[0].mxu0
      %v546 = vadd.f32 0.0, %v545
      %v547 = vpop.f32.mrb[0].mxu0
      %v548 = vpop.f32.mrb[0].mxu0
      %v549 = vadd.f32 0.0, %v548
      %v550 = vpop.f32.mrb[0].mxu0
      %551 = vmatprep.mubr.bf16.mxu0 0
      %552 = vmatmul.mubr.bf16.gmra.mrb[0].mxu0 %v432
      %v553 = vpop.f32.mrb[0].mxu0
      %v554 = vadd.f32 0.0, %v553
      %v555 = vpop.f32.mrb[0].mxu0
      %v556 = vpop.f32.mrb[0].mxu0
      %v557 = vadd.f32 0.0, %v556
      %v558 = vpop.f32.mrb[0].mxu0
      %559 = vmatprep.mubr.bf16.mxu0 0
      %560 = vmatmul.mubr.bf16.gmra.mrb[0].mxu0 %v435
      %v561 = vpop.f32.mrb[0].mxu0
      %v562 = vadd.f32 0.0, %v561
      %v563 = vpop.f32.mrb[0].mxu0
      %v564 = vpop.f32.mrb[0].mxu0
      %v565 = vadd.f32 0.0, %v564
      %v566 = vpop.f32.mrb[0].mxu0
      %567 = vmatprep.mubr.bf16.mxu0 0
      %568 = vmatmul.mubr.bf16.gmra.mrb[0].mxu0 %v438
      %v569 = vpop.f32.mrb[0].mxu0
      %v570 = vadd.f32 0.0, %v569
      %v571 = vpop.f32.mrb[0].mxu0
      %v572 = vpop.f32.mrb[0].mxu0
      %v573 = vadd.f32 0.0, %v572
      %v574 = vpop.f32.mrb[0].mxu0
      %575 = vmatprep.mubr.bf16.mxu0 0
      %576 = vmatmul.mubr.bf16.gmra.mrb[0].mxu0 %v441
      %v577 = vpop.f32.mrb[0].mxu0
      %v578 = vadd.f32 0.0, %v577
      %v579 = vpop.f32.mrb[0].mxu0
      %v580 = vpop.f32.mrb[0].mxu0
      %v581 = vadd.f32 0.0, %v580
      %v582 = vpop.f32.mrb[0].mxu0
      %583 = vmatprep.mubr.bf16.mxu0 0
      %584 = vmatmul.mubr.bf16.gmra.mrb[0].mxu0 %v444
      %v585 = vpop.f32.mrb[0].mxu0
      %v586 = vadd.f32 0.0, %v585
      %v587 = vpop.f32.mrb[0].mxu0
      %v588 = vpop.f32.mrb[0].mxu0
      %v589 = vadd.f32 0.0, %v588
      %v590 = vpop.f32.mrb[0].mxu0
      %591 = vmatprep.mubr.bf16.mxu0 0
      %592 = vmatmul.mubr.bf16.gmra.mrb[0].mxu0 %v447
      %v593 = vpop.f32.mrb[0].mxu0
      %v594 = vadd.f32 0.0, %v593
      %v595 = vpop.f32.mrb[0].mxu0
      %v596 = vpop.f32.mrb[0].mxu0
      %v597 = vadd.f32 0.0, %v596
      %v598 = vpop.f32.mrb[0].mxu0
      %599 = vmatprep.mubr.bf16.mxu0 0
      %600 = vmatmul.mubr.bf16.gmra.mrb[0].mxu0 %v450
      %v601 = vpop.f32.mrb[0].mxu0
      %v602 = vadd.f32 0.0, %v601
      %v603 = vpop.f32.mrb[0].mxu0
      %v604 = vpop.f32.mrb[0].mxu0
      %v605 = vadd.f32 0.0, %v604
      %v606 = vpop.f32.mrb[0].mxu0
      %607 = vmatprep.mubr.bf16.mxu0 0
      %608 = vmatmul.mubr.bf16.gmra.mrb[0].mxu0 %v453
      %v609 = vpop.f32.mrb[0].mxu0
      %v610 = vadd.f32 0.0, %v609
      %v611 = vpop.f32.mrb[0].mxu0
      %v612 = vpop.f32.mrb[0].mxu0
      %v613 = vadd.f32 0.0, %v612
      %v614 = vpop.f32.mrb[0].mxu0
      %615 = vdwg.mxu0
      %v616 = vpack.c.bf16 %v493, %v490
      %v617 = vpack.c.bf16 %v501, %v498
      %v618 = vpack.c.bf16 %v509, %v506
      %v619 = vpack.c.bf16 %v517, %v514
      %v620 = vpack.c.bf16 %v525, %v522
      %v621 = vpack.c.bf16 %v533, %v530
      %v622 = vpack.c.bf16 %v541, %v538
      %v623 = vpack.c.bf16 %v549, %v546
      %v624 = vpack.c.bf16 %v557, %v554
      %v625 = vpack.c.bf16 %v565, %v562
      %v626 = vpack.c.bf16 %v573, %v570
      %v627 = vpack.c.bf16 %v581, %v578
      %v628 = vpack.c.bf16 %v589, %v586
      %v629 = vpack.c.bf16 %v597, %v594
      %v630 = vpack.c.bf16 %v605, %v602
      %v631 = vpack.c.bf16 %v613, %v610
      %v648 = vunpack.c.l.b16 %v616
      %v649 = vunpack.c.h.b16 %v616
      %v650 = vunpack.c.l.b16 %v617
      %v651 = vunpack.c.h.b16 %v617
      %v652 = vunpack.c.l.b16 %v618
      %v653 = vunpack.c.h.b16 %v618
      %v654 = vunpack.c.l.b16 %v619
      %v655 = vunpack.c.h.b16 %v619
      %v656 = vunpack.c.l.b16 %v620
      %v657 = vunpack.c.h.b16 %v620
      %v658 = vunpack.c.l.b16 %v621
      %v659 = vunpack.c.h.b16 %v621
      %v660 = vunpack.c.l.b16 %v622
      %v661 = vunpack.c.h.b16 %v622
      %v662 = vunpack.c.l.b16 %v623
      %v663 = vunpack.c.h.b16 %v623
      %v664 = vunpack.c.l.b16 %v624
      %v665 = vunpack.c.h.b16 %v624
      %v666 = vunpack.c.l.b16 %v625
      %v667 = vunpack.c.h.b16 %v625
      %v668 = vunpack.c.l.b16 %v626
      %v669 = vunpack.c.h.b16 %v626
      %v670 = vunpack.c.l.b16 %v627
      %v671 = vunpack.c.h.b16 %v627
      %v672 = vunpack.c.l.b16 %v628
      %v673 = vunpack.c.h.b16 %v628
      %v674 = vunpack.c.l.b16 %v629
      %v675 = vunpack.c.h.b16 %v629
      %v676 = vunpack.c.l.b16 %v630
      %v677 = vunpack.c.h.b16 %v630
      %v678 = vunpack.c.l.b16 %v631
      %v679 = vunpack.c.h.b16 %v631
      %v680 = vpack.c.b16 %v648, %v648
      %v681 = vpack.c.b16 %v649, %v649
      %v682 = vpack.c.b16 %v650, %v650
      %v683 = vpack.c.b16 %v651, %v651
      %v684 = vpack.c.b16 %v652, %v652
      %v685 = vpack.c.b16 %v653, %v653
      %v686 = vpack.c.b16 %v654, %v654
      %v687 = vpack.c.b16 %v655, %v655
      %v688 = vpack.c.b16 %v656, %v656
      %v689 = vpack.c.b16 %v657, %v657
      %v690 = vpack.c.b16 %v658, %v658
      %v691 = vpack.c.b16 %v659, %v659
      %v692 = vpack.c.b16 %v660, %v660
      %v693 = vpack.c.b16 %v661, %v661
      %v694 = vpack.c.b16 %v662, %v662
      %v695 = vpack.c.b16 %v663, %v663
      %v696 = vpack.c.b16 %v664, %v664
      %v697 = vpack.c.b16 %v665, %v665
      %v698 = vpack.c.b16 %v666, %v666
      %v699 = vpack.c.b16 %v667, %v667
      %v700 = vpack.c.b16 %v668, %v668
      %v701 = vpack.c.b16 %v669, %v669
      %v702 = vpack.c.b16 %v670, %v670
      %v703 = vpack.c.b16 %v671, %v671
      %v704 = vpack.c.b16 %v672, %v672
      %v705 = vpack.c.b16 %v673, %v673
      %v706 = vpack.c.b16 %v674, %v674
      %v707 = vpack.c.b16 %v675, %v675
      %v708 = vpack.c.b16 %v676, %v676
      %v709 = vpack.c.b16 %v677, %v677
      %v710 = vpack.c.b16 %v678, %v678
      %v711 = vpack.c.b16 %v679, %v679
      %vm744 = vcmask 27648
      %745 = vst.msk [vmem:[%s233] sm:$0xf] %vm744, %v680
      %746 = vst.msk [vmem:[%s233 + $0x4] sm:$0xf] %vm744, %v681
      %747 = vst.msk [vmem:[%s233 + $0x8] sm:$0xf] %vm744, %v682
      %748 = vst.msk [vmem:[%s233 + $0xc] sm:$0xf] %vm744, %v683
      %749 = vst.msk [vmem:[%s233 + $0x10] sm:$0xf] %vm744, %v684
      %750 = vst.msk [vmem:[%s233 + $0x14] sm:$0xf] %vm744, %v685
      %751 = vst.msk [vmem:[%s233 + $0x18] sm:$0xf] %vm744, %v686
      %752 = vst.msk [vmem:[%s233 + $0x1c] sm:$0xf] %vm744, %v687
      %753 = vst.msk [vmem:[%s233 + $0x20] sm:$0xf] %vm744, %v688
      %754 = vst.msk [vmem:[%s233 + $0x24] sm:$0xf] %vm744, %v689
      %755 = vst.msk [vmem:[%s233 + $0x28] sm:$0xf] %vm744, %v690
      %756 = vst.msk [vmem:[%s233 + $0x2c] sm:$0xf] %vm744, %v691
      %757 = vst.msk [vmem:[%s233 + $0x30] sm:$0xf] %vm744, %v692
      %758 = vst.msk [vmem:[%s233 + $0x34] sm:$0xf] %vm744, %v693
      %759 = vst.msk [vmem:[%s233 + $0x38] sm:$0xf] %vm744, %v694
      %760 = vst.msk [vmem:[%s233 + $0x3c] sm:$0xf] %vm744, %v695
      %761 = vst.msk [vmem:[%s233 + $0x40] sm:$0xf] %vm744, %v696
      %762 = vst.msk [vmem:[%s233 + $0x44] sm:$0xf] %vm744, %v697
      %763 = vst.msk [vmem:[%s233 + $0x48] sm:$0xf] %vm744, %v698
      %764 = vst.msk [vmem:[%s233 + $0x4c] sm:$0xf] %vm744, %v699
      %765 = vst.msk [vmem:[%s233 + $0x50] sm:$0xf] %vm744, %v700
      %766 = vst.msk [vmem:[%s233 + $0x54] sm:$0xf] %vm744, %v701
      %767 = vst.msk [vmem:[%s233 + $0x58] sm:$0xf] %vm744, %v702
      %768 = vst.msk [vmem:[%s233 + $0x5c] sm:$0xf] %vm744, %v703
      %769 = vst.msk [vmem:[%s233 + $0x60] sm:$0xf] %vm744, %v704
      %770 = vst.msk [vmem:[%s233 + $0x64] sm:$0xf] %vm744, %v705
      %771 = vst.msk [vmem:[%s233 + $0x68] sm:$0xf] %vm744, %v706
      %772 = vst.msk [vmem:[%s233 + $0x6c] sm:$0xf] %vm744, %v707
      %773 = vst.msk [vmem:[%s233 + $0x70] sm:$0xf] %vm744, %v708
      %774 = vst.msk [vmem:[%s233 + $0x74] sm:$0xf] %vm744, %v709
      %775 = vst.msk [vmem:[%s233 + $0x78] sm:$0xf] %vm744, %v710
      %776 = vst.msk [vmem:[%s233 + $0x7c] sm:$0xf] %vm744, %v711
      %v777 = vunpack.c.l.bf16 %v616
      %v778 = vunpack.c.h.bf16 %v616
      %v779 = vunpack.c.l.bf16 %v617
      %v780 = vunpack.c.h.bf16 %v617
      %v781 = vunpack.c.l.bf16 %v618
      %v782 = vunpack.c.h.bf16 %v618
      %v783 = vunpack.c.l.bf16 %v619
      %v784 = vunpack.c.h.bf16 %v619
      %v785 = vunpack.c.l.bf16 %v620
      %v786 = vunpack.c.h.bf16 %v620
      %v787 = vunpack.c.l.bf16 %v621
      %v788 = vunpack.c.h.bf16 %v621
      %v789 = vunpack.c.l.bf16 %v622
      %v790 = vunpack.c.h.bf16 %v622
      %v791 = vunpack.c.l.bf16 %v623
      %v792 = vunpack.c.h.bf16 %v623
      %v793 = vunpack.c.l.bf16 %v624
      %v794 = vunpack.c.h.bf16 %v624
      %v795 = vunpack.c.l.bf16 %v625
      %v796 = vunpack.c.h.bf16 %v625
      %v797 = vunpack.c.l.bf16 %v626
      %v798 = vunpack.c.h.bf16 %v626
      %v799 = vunpack.c.l.bf16 %v627
      %v800 = vunpack.c.h.bf16 %v627
      %v801 = vunpack.c.l.bf16 %v628
      %v802 = vunpack.c.h.bf16 %v628
      %v803 = vunpack.c.l.bf16 %v629
      %v804 = vunpack.c.h.bf16 %v629
      %v805 = vunpack.c.l.bf16 %v630
      %v806 = vunpack.c.h.bf16 %v630
      %v807 = vunpack.c.l.bf16 %v631
      %v808 = vunpack.c.h.bf16 %v631
      %vm809 = vcmask 31744
      %v810 = vsel %vm809, %v777, 0.0
      %v811 = vsel %vm809, %v778, 0.0
      %v812 = vadd.f32 %v810, %v811
      %v813 = vsel %vm809, %v779, 0.0
      %v814 = vadd.f32 %v812, %v813
      %v815 = vsel %vm809, %v780, 0.0
      %v816 = vadd.f32 %v814, %v815
      %v817 = vsel %vm809, %v781, 0.0
      %v818 = vadd.f32 %v816, %v817
      %v819 = vsel %vm809, %v782, 0.0
      %v820 = vadd.f32 %v818, %v819
      %v821 = vsel %vm809, %v783, 0.0
      %v822 = vadd.f32 %v820, %v821
      %v823 = vsel %vm809, %v784, 0.0
      %v824 = vadd.f32 %v822, %v823
      %v825 = vsel %vm809, %v785, 0.0
      %v826 = vadd.f32 %v824, %v825
      %v827 = vsel %vm809, %v786, 0.0
      %v828 = vadd.f32 %v826, %v827
      %v829 = vsel %vm809, %v787, 0.0
      %v830 = vadd.f32 %v828, %v829
      %v831 = vsel %vm809, %v788, 0.0
      %v832 = vadd.f32 %v830, %v831
      %v833 = vsel %vm809, %v789, 0.0
      %v834 = vadd.f32 %v832, %v833
      %v835 = vsel %vm809, %v790, 0.0
      %v836 = vadd.f32 %v834, %v835
      %v837 = vsel %vm809, %v791, 0.0
      %v838 = vadd.f32 %v836, %v837
      %v839 = vsel %vm809, %v792, 0.0
      %v840 = vadd.f32 %v838, %v839
      %v841 = vsel %vm809, %v793, 0.0
      %v842 = vadd.f32 %v840, %v841
      %v843 = vsel %vm809, %v794, 0.0
      %v844 = vadd.f32 %v842, %v843
      %v845 = vsel %vm809, %v795, 0.0
      %v846 = vadd.f32 %v844, %v845
      %v847 = vsel %vm809, %v796, 0.0
      %v848 = vadd.f32 %v846, %v847
      %v849 = vsel %vm809, %v797, 0.0
      %v850 = vadd.f32 %v848, %v849
      %v851 = vsel %vm809, %v798, 0.0
      %v852 = vadd.f32 %v850, %v851
      %v853 = vsel %vm809, %v799, 0.0
      %v854 = vadd.f32 %v852, %v853
      %v855 = vsel %vm809, %v800, 0.0
      %v856 = vadd.f32 %v854, %v855
      %v857 = vsel %vm809, %v801, 0.0
      %v858 = vadd.f32 %v856, %v857
      %v859 = vsel %vm809, %v802, 0.0
      %v860 = vadd.f32 %v858, %v859
      %v861 = vsel %vm809, %v803, 0.0
      %v862 = vadd.f32 %v860, %v861
      %v863 = vsel %vm809, %v804, 0.0
      %v864 = vadd.f32 %v862, %v863
      %v865 = vsel %vm809, %v805, 0.0
      %v866 = vadd.f32 %v864, %v865
      %v867 = vsel %vm809, %v806, 0.0
      %v868 = vadd.f32 %v866, %v867
      %v869 = vsel %vm809, %v807, 0.0
      %v870 = vadd.f32 %v868, %v869
      %v871 = vsel %vm809, %v808, 0.0
      %v872 = vadd.f32 %v870, %v871
      %v873 = vrot.slane %v872, 4
      %v874 = vadd.f32 %v872, %v873
      %v875 = vrot.slane %v874, 2
      %v876 = vadd.f32 %v874, %v875
      %v877 = vrot.slane %v876, 1
      %v878 = vadd.f32 %v876, %v877
      %vm879 = vcmask 24576
      %880 = vst.msk [vmem:[%s238] sm:$0x1] %vm879, %v878
      %v881 = vmul.f32 %v777, %v777
      %v882 = vmul.f32 %v778, %v778
      %v883 = vmul.f32 %v779, %v779
      %v884 = vmul.f32 %v780, %v780
      %v885 = vmul.f32 %v781, %v781
      %v886 = vmul.f32 %v782, %v782
      %v887 = vmul.f32 %v783, %v783
      %v888 = vmul.f32 %v784, %v784
      %v889 = vmul.f32 %v785, %v785
      %v890 = vmul.f32 %v786, %v786
      %v891 = vmul.f32 %v787, %v787
      %v892 = vmul.f32 %v788, %v788
      %v893 = vmul.f32 %v789, %v789
      %v894 = vmul.f32 %v790, %v790
      %v895 = vmul.f32 %v791, %v791
      %v896 = vmul.f32 %v792, %v792
      %v897 = vmul.f32 %v793, %v793
      %v898 = vmul.f32 %v794, %v794
      %v899 = vmul.f32 %v795, %v795
      %v900 = vmul.f32 %v796, %v796
      %v901 = vmul.f32 %v797, %v797
      %v902 = vmul.f32 %v798, %v798
      %v903 = vmul.f32 %v799, %v799
      %v904 = vmul.f32 %v800, %v800
      %v905 = vmul.f32 %v801, %v801
      %v906 = vmul.f32 %v802, %v802
      %v907 = vmul.f32 %v803, %v803
      %v908 = vmul.f32 %v804, %v804
      %v909 = vmul.f32 %v805, %v805
      %v910 = vmul.f32 %v806, %v806
      %v911 = vmul.f32 %v807, %v807
      %v912 = vmul.f32 %v808, %v808
      %v913 = vsel %vm809, %v881, 0.0
      %v914 = vsel %vm809, %v882, 0.0
      %v915 = vadd.f32 %v913, %v914
      %v916 = vsel %vm809, %v883, 0.0
      %v917 = vadd.f32 %v915, %v916
      %v918 = vsel %vm809, %v884, 0.0
      %v919 = vadd.f32 %v917, %v918
      %v920 = vsel %vm809, %v885, 0.0
      %v921 = vadd.f32 %v919, %v920
      %v922 = vsel %vm809, %v886, 0.0
      %v923 = vadd.f32 %v921, %v922
      %v924 = vsel %vm809, %v887, 0.0
      %v925 = vadd.f32 %v923, %v924
      %v926 = vsel %vm809, %v888, 0.0
      %v927 = vadd.f32 %v925, %v926
      %v928 = vsel %vm809, %v889, 0.0
      %v929 = vadd.f32 %v927, %v928
      %v930 = vsel %vm809, %v890, 0.0
      %v931 = vadd.f32 %v929, %v930
      %v932 = vsel %vm809, %v891, 0.0
      %v933 = vadd.f32 %v931, %v932
      %v934 = vsel %vm809, %v892, 0.0
      %v935 = vadd.f32 %v933, %v934
      %v936 = vsel %vm809, %v893, 0.0
      %v937 = vadd.f32 %v935, %v936
      %v938 = vsel %vm809, %v894, 0.0
      %v939 = vadd.f32 %v937, %v938
      %v940 = vsel %vm809, %v895, 0.0
      %v941 = vadd.f32 %v939, %v940
      %v942 = vsel %vm809, %v896, 0.0
      %v943 = vadd.f32 %v941, %v942
      %v944 = vsel %vm809, %v897, 0.0
      %v945 = vadd.f32 %v943, %v944
      %v946 = vsel %vm809, %v898, 0.0
      %v947 = vadd.f32 %v945, %v946
      %v948 = vsel %vm809, %v899, 0.0
      %v949 = vadd.f32 %v947, %v948
      %v950 = vsel %vm809, %v900, 0.0
      %v951 = vadd.f32 %v949, %v950
      %v952 = vsel %vm809, %v901, 0.0
      %v953 = vadd.f32 %v951, %v952
      %v954 = vsel %vm809, %v902, 0.0
      %v955 = vadd.f32 %v953, %v954
      %v956 = vsel %vm809, %v903, 0.0
      %v957 = vadd.f32 %v955, %v956
      %v958 = vsel %vm809, %v904, 0.0
      %v959 = vadd.f32 %v957, %v958
      %v960 = vsel %vm809, %v905, 0.0
      %v961 = vadd.f32 %v959, %v960
      %v962 = vsel %vm809, %v906, 0.0
      %v963 = vadd.f32 %v961, %v962
      %v964 = vsel %vm809, %v907, 0.0
      %v965 = vadd.f32 %v963, %v964
      %v966 = vsel %vm809, %v908, 0.0
      %v967 = vadd.f32 %v965, %v966
      %v968 = vsel %vm809, %v909, 0.0
      %v969 = vadd.f32 %v967, %v968
      %v970 = vsel %vm809, %v910, 0.0
      %v971 = vadd.f32 %v969, %v970
      %v972 = vsel %vm809, %v911, 0.0
      %v973 = vadd.f32 %v971, %v972
      %v974 = vsel %vm809, %v912, 0.0
      %v975 = vadd.f32 %v973, %v974
      %v976 = vrot.slane %v975, 4
      %v977 = vadd.f32 %v975, %v976
      %v978 = vrot.slane %v977, 2
      %v979 = vadd.f32 %v977, %v978
      %v980 = vrot.slane %v979, 1
      %v981 = vadd.f32 %v979, %v980
      %982 = vst.msk [vmem:[%s238 + $0x1] sm:$0x1] %vm879, %v981
      %s983 = smul.u32 32, %s17
      %p984 = scmp.lt.s32.totalorder %s983, 63
      %s985 = scalar_select %p984, %s983, 63
      %s986 = smul.addr %s985, 4
      %s987 = scalar_lea.vmem %s4, %s986
      %p988 = scmp.lt.s32.totalorder %s17, 1
      %s989 = scalar_select %p988, %s17, 1
      %s990 = smul.addr %s989, 2
      %s991 = scalar_lea.vmem %s5, %s990
      // Predicated region
      $region37: #{residual_bottleneck_block.5} parent=35 // pred_check
        %p992 = pneg %p124
      $region38: #{residual_bottleneck_block.5} parent=35 // pred_check_branch
        %994 = sbr.rel (%p992) target = $region40
      $region39: #{residual_bottleneck_block.5} parent=35 // pred_region
        %s995 = smul.u32 32, %s17
      $region40: #{residual_bottleneck_block.5} parent=35 // pred_fallthru
        _
      // Predicated region
      $region41: #{residual_bottleneck_block.5} parent=35 // pred_check
        %p996 = pneg %p150
      $region42: #{residual_bottleneck_block.5} parent=35 // pred_check_branch
        %998 = sbr.rel (%p996) target = $region44
      $region43: #{residual_bottleneck_block.5} parent=35 // pred_region
        _
      $region44: #{residual_bottleneck_block.5} parent=35 // pred_fallthru
        _
    $region36: #{residual_bottleneck_block.5} parent=5 // pred_fallthru
      _
    %p999 = scmp.le.s32.totalorder 2, %s12
    // Predicated region
    $region45: #{residual_bottleneck_block.5} parent=5 // pred_check
      %p1000 = pneg %p999
    $region46: #{residual_bottleneck_block.5} parent=5 // pred_check_branch
      %1002 = sbr.rel (%p1000) target = $region48
    $region47: #{residual_bottleneck_block.5} parent=5 // pred_region
      %s1003 = ssub.s32 %s12, 2
      // Predicated region
      $region49: #{residual_bottleneck_block.5} parent=47 // pred_check
        %p1004 = pneg %p130
      $region50: #{residual_bottleneck_block.5} parent=47 // pred_check_branch
        %1006 = sbr.rel (%p1004) target = $region52
      $region51: #{residual_bottleneck_block.5} parent=47 // pred_region
        %s1007 = smul.u32 32, %s18
        %p1008 = scmp.lt.s32.totalorder %s1007, 63
        %s1009 = scalar_select %p1008, %s1007, 63
        %s1010 = smul.addr %s1009, 4
        %s1011 = scalar_lea.vmem %s4, %s1010
      $region52: #{residual_bottleneck_block.5} parent=47 // pred_fallthru
        _
      // Predicated region
      $region53: #{residual_bottleneck_block.5} parent=47 // pred_check
        %p1012 = pneg %p156
      $region54: #{residual_bottleneck_block.5} parent=47 // pred_check_branch
        %1014 = sbr.rel (%p1012) target = $region56
      $region55: #{residual_bottleneck_block.5} parent=47 // pred_region
        %p1015 = scmp.lt.s32.totalorder %s18, 1
        %s1016 = scalar_select %p1015, %s18, 1
        %s1017 = smul.addr %s1016, 2
        %s1018 = scalar_lea.vmem %s5, %s1017
      $region56: #{residual_bottleneck_block.5} parent=47 // pred_fallthru
        _
    $region48: #{residual_bottleneck_block.5} parent=5 // pred_fallthru
      _
  $region6: #{residual_bottleneck_block.5} parent=0 // loop_footer
    %s16 = sadd.s32 1, %s12
  $region7: #{residual_bottleneck_block.5} parent=0 // loop_footer_branch
    %11 = sbr.rel target = $region3
  $region8: #{residual_bottleneck_block.5} parent=0 // loop_exit
    _

// kernel: residual_bottleneck_block.7
$region0: #{residual_bottleneck_block.7}
  #allocation0 [shape = 'u32[]', space=smem, size = 0x4, offset = 0x4, fixed_abs, tag = 'smem constant byte address 0x4 - core index']
  #allocation1 [shape = 'u32[144,128]{1,0:T(1,128)}', space=vmem, size = 0x12000, scoped, tag = 'internal scratch']
  %s0 = inlined_call_operand.vmem [shape: bf16[512,4], index: 0, kind: input, shape index: {}]
  %s1 = inlined_call_operand.vmem [shape: f32[512,16], index: 1, kind: input, shape index: {}]
  %s2 = inlined_call_operand.vmem [shape: f32[1,4], index: 2, kind: input, shape index: {}]
  %s3 = inlined_call_operand.vmem [shape: f32[1,4], index: 3, kind: input, shape index: {}]
  %s4 = inlined_call_operand.vmem [shape: bf16[4,16], index: 4, kind: input, shape index: {}]
  %s5 = inlined_call_operand.vmem [shape: f32[1,16], index: 5, kind: input, shape index: {}]
  %s6 = inlined_call_operand.vmem [shape: f32[512,16], index: 6, kind: output, shape index: {}]
  %s7 = sld [smem:[#allocation0]]
  $region57: #{residual_bottleneck_block.7} parent=0
    _
  %s9 = ssub.s32 1, %s7
  %s10 = scalar_select 0, %s9, %s7
  loop: start=0, step=1, limit=4
  $region2: #{residual_bottleneck_block.7} parent=0 // loop_pre_header
    _
  $region3: #{residual_bottleneck_block.7} parent=0 // loop_header
    %s12 = sphi 0, %s16
    %p13 = scmp.ge.s32.totalorder %s12, 4
    %s22 = sphi 0, %s24
    %s25 = sphi 0, %s22
    %s26 = sphi 0, %s25
    %s42 = sphi 0, %s26
    %s48 = sphi 0, %s50
    %s51 = sphi 0, %s48
    %s52 = sphi 0, %s51
    %s68 = sphi 0, %s52
    %s72 = sphi 0, %s72
    %s74 = sphi 0, %s72
    %s75 = sphi 0, %s74
    %s89 = sphi 0, %s75
    %s93 = sphi 0, %s93
    %s95 = sphi 0, %s93
    %s96 = sphi 0, %s95
    %s110 = sphi 0, %s96
    %s114 = sphi 0, %s114
    %s116 = sphi 0, %s114
    %s117 = sphi 0, %s116
    %s131 = sphi 0, %s117
    %s135 = sphi 0, %s135
    %s137 = sphi 0, %s135
    %s138 = sphi 0, %s137
    %s152 = sphi 0, %s138
    %s158 = sphi 0, %s160
    %s161 = sphi 0, %s158
    %s162 = sphi 0, %s161
    %s178 = sphi 0, %s162
  $region4: #{residual_bottleneck_block.7} parent=0 // loop_header_branch
    %15 = sbr.rel (%p13) target = $region8
  $region5: #{residual_bottleneck_block.7} parent=0 // loop_body
    %s17 = ssub.s32 %s12, 1
    %s18 = ssub.s32 %s12, 2
    %s19 = sadd.s32 %s12, 1
    %s20 = ssub.s32 %s12, %s19
    %p21 = scmp.eq.s32.totalorder %s20, 0
    %s23 = sadd.s32 %s22, 1
    %s24 = scalar_select %p21, %s22, %s23
    %p27 = pneg %p21
    %p28 = scmp.eq.s32.totalorder %s12, 1
    %p29 = por %p27, %p28
    %p30 = scmp.ne.s32.totalorder %s22, %s25
    %p31 = scmp.eq.s32.totalorder %s12, 0
    %p32 = por %p30, %p31
    %p33 = scmp.ne.s32.totalorder %s22, %s25
    %p34 = scmp.eq.s32.totalorder %s17, 1
    %p35 = por %p33, %p34
    %p36 = scmp.ne.s32.totalorder %s25, %s26
    %p37 = scmp.eq.s32.totalorder %s17, 0
    %p38 = por %p36, %p37
    %p39 = scmp.ne.s32.totalorder %s25, %s26
    %p40 = scmp.eq.s32.totalorder %s18, 1
    %p41 = por %p39, %p40
    %p43 = scmp.ne.s32.totalorder %s26, %s42
    %p44 = scmp.eq.s32.totalorder %s18, 0
    %p45 = por %p43, %p44
    %s46 = ssub.s32 %s12, %s19
    %p47 = scmp.eq.s32.totalorder %s46, 0
    %s49 = sadd.s32 %s48, 1
    %s50 = scalar_select %p47, %s48, %s49
    %p53 = pneg %p47
    %p54 = scmp.eq.s32.totalorder %s12, 1
    %p55 = por %p53, %p54
    %p56 = scmp.ne.s32.totalorder %s48, %s51
    %p57 = scmp.eq.s32.totalorder %s12, 0
    %p58 = por %p56, %p57
    %p59 = scmp.ne.s32.totalorder %s48, %s51
    %p60 = scmp.eq.s32.totalorder %s17, 1
    %p61 = por %p59, %p60
    %p62 = scmp.ne.s32.totalorder %s51, %s52
    %p63 = scmp.eq.s32.totalorder %s17, 0
    %p64 = por %p62, %p63
    %p65 = scmp.ne.s32.totalorder %s51, %s52
    %p66 = scmp.eq.s32.totalorder %s18, 1
    %p67 = por %p65, %p66
    %p69 = scmp.ne.s32.totalorder %s52, %s68
    %p70 = scmp.eq.s32.totalorder %s18, 0
    %p71 = por %p69, %p70
    %s73 = sadd.s32 %s72, 1
    %p76 = scmp.eq.s32.totalorder %s12, 1
    %p77 = scmp.ne.s32.totalorder %s72, %s74
    %p78 = scmp.eq.s32.totalorder %s12, 0
    %p79 = por %p77, %p78
    %p80 = scmp.ne.s32.totalorder %s72, %s74
    %p81 = scmp.eq.s32.totalorder %s17, 1
    %p82 = por %p80, %p81
    %p83 = scmp.ne.s32.totalorder %s74, %s75
    %p84 = scmp.eq.s32.totalorder %s17, 0
    %p85 = por %p83, %p84
    %p86 = scmp.ne.s32.totalorder %s74, %s75
    %p87 = scmp.eq.s32.totalorder %s18, 1
    %p88 = por %p86, %p87
    %p90 = scmp.ne.s32.totalorder %s75, %s89
    %p91 = scmp.eq.s32.totalorder %s18, 0
    %p92 = por %p90, %p91
    %s94 = sadd.s32 %s93, 1
    %p97 = scmp.eq.s32.totalorder %s12, 1
    %p98 = scmp.ne.s32.totalorder %s93, %s95
    %p99 = scmp.eq.s32.totalorder %s12, 0
    %p100 = por %p98, %p99
    %p101 = scmp.ne.s32.totalorder %s93, %s95
    %p102 = scmp.eq.s32.totalorder %s17, 1
    %p103 = por %p101, %p102
    %p104 = scmp.ne.s32.totalorder %s95, %s96
    %p105 = scmp.eq.s32.totalorder %s17, 0
    %p106 = por %p104, %p105
    %p107 = scmp.ne.s32.totalorder %s95, %s96
    %p108 = scmp.eq.s32.totalorder %s18, 1
    %p109 = por %p107, %p108
    %p111 = scmp.ne.s32.totalorder %s96, %s110
    %p112 = scmp.eq.s32.totalorder %s18, 0
    %p113 = por %p111, %p112
    %s115 = sadd.s32 %s114, 1
    %p118 = scmp.eq.s32.totalorder %s12, 1
    %p119 = scmp.ne.s32.totalorder %s114, %s116
    %p120 = scmp.eq.s32.totalorder %s12, 0
    %p121 = por %p119, %p120
    %p122 = scmp.ne.s32.totalorder %s114, %s116
    %p123 = scmp.eq.s32.totalorder %s17, 1
    %p124 = por %p122, %p123
    %p125 = scmp.ne.s32.totalorder %s116, %s117
    %p126 = scmp.eq.s32.totalorder %s17, 0
    %p127 = por %p125, %p126
    %p128 = scmp.ne.s32.totalorder %s116, %s117
    %p129 = scmp.eq.s32.totalorder %s18, 1
    %p130 = por %p128, %p129
    %p132 = scmp.ne.s32.totalorder %s117, %s131
    %p133 = scmp.eq.s32.totalorder %s18, 0
    %p134 = por %p132, %p133
    %s136 = sadd.s32 %s135, 1
    %p139 = scmp.eq.s32.totalorder %s12, 1
    %p140 = scmp.ne.s32.totalorder %s135, %s137
    %p141 = scmp.eq.s32.totalorder %s12, 0
    %p142 = por %p140, %p141
    %p143 = scmp.ne.s32.totalorder %s135, %s137
    %p144 = scmp.eq.s32.totalorder %s17, 1
    %p145 = por %p143, %p144
    %p146 = scmp.ne.s32.totalorder %s137, %s138
    %p147 = scmp.eq.s32.totalorder %s17, 0
    %p148 = por %p146, %p147
    %p149 = scmp.ne.s32.totalorder %s137, %s138
    %p150 = scmp.eq.s32.totalorder %s18, 1
    %p151 = por %p149, %p150
    %p153 = scmp.ne.s32.totalorder %s138, %s152
    %p154 = scmp.eq.s32.totalorder %s18, 0
    %p155 = por %p153, %p154
    %s156 = ssub.s32 %s12, %s19
    %p157 = scmp.eq.s32.totalorder %s156, 0
    %s159 = sadd.s32 %s158, 1
    %s160 = scalar_select %p157, %s158, %s159
    %p163 = pneg %p157
    %p164 = scmp.eq.s32.totalorder %s12, 1
    %p165 = por %p163, %p164
    %p166 = scmp.ne.s32.totalorder %s158, %s161
    %p167 = scmp.eq.s32.totalorder %s12, 0
    %p168 = por %p166, %p167
    %p169 = scmp.ne.s32.totalorder %s158, %s161
    %p170 = scmp.eq.s32.totalorder %s17, 1
    %p171 = por %p169, %p170
    %p172 = scmp.ne.s32.totalorder %s161, %s162
    %p173 = scmp.eq.s32.totalorder %s17, 0
    %p174 = por %p172, %p173
    %p175 = scmp.ne.s32.totalorder %s161, %s162
    %p176 = scmp.eq.s32.totalorder %s18, 1
    %p177 = por %p175, %p176
    %p179 = scmp.ne.s32.totalorder %s162, %s178
    %p180 = scmp.eq.s32.totalorder %s18, 0
    %p181 = por %p179, %p180
    %p182 = scmp.le.s32.totalorder 1, %s12
    %p183 = scmp.lt.s32.totalorder %s12, 3
    %p184 = pnand %p182, %p183
    %p185 = pneg %p184
    // Predicated region
    $region9: #{residual_bottleneck_block.7} parent=5 // pred_check
      _
    $region10: #{residual_bottleneck_block.7} parent=5 // pred_check_branch
      %187 = sbr.rel (%p184) target = $region12
    $region11: #{residual_bottleneck_block.7} parent=5 // pred_region
      %s188 = ssub.s32 %s12, 1
      // Predicated region
      $region13: #{residual_bottleneck_block.7} parent=11 // pred_check
        %p189 = pneg %p85
      $region14: #{residual_bottleneck_block.7} parent=11 // pred_check_branch
        %191 = sbr.rel (%p189) target = $region16
      $region15: #{residual_bottleneck_block.7} parent=11 // pred_region
        _
      $region16: #{residual_bottleneck_block.7} parent=11 // pred_fallthru
        _
      // Predicated region
      $region17: #{residual_bottleneck_block.7} parent=11 // pred_check
        %p192 = pneg %p106
      $region18: #{residual_bottleneck_block.7} parent=11 // pred_check_branch
        %194 = sbr.rel (%p192) target = $region20
      $region19: #{residual_bottleneck_block.7} parent=11 // pred_region
        _
      $region20: #{residual_bottleneck_block.7} parent=11 // pred_fallthru
        _
      // Predicated region
      $region21: #{residual_bottleneck_block.7} parent=11 // pred_check
        %p195 = pneg %p127
      $region22: #{residual_bottleneck_block.7} parent=11 // pred_check_branch
        %197 = sbr.rel (%p195) target = $region24
      $region23: #{residual_bottleneck_block.7} parent=11 // pred_region
        _
      $region24: #{residual_bottleneck_block.7} parent=11 // pred_fallthru
        _
      // Predicated region
      $region25: #{residual_bottleneck_block.7} parent=11 // pred_check
        %p198 = pneg %p148
      $region26: #{residual_bottleneck_block.7} parent=11 // pred_check_branch
        %200 = sbr.rel (%p198) target = $region28
      $region27: #{residual_bottleneck_block.7} parent=11 // pred_region
        _
      $region28: #{residual_bottleneck_block.7} parent=11 // pred_fallthru
        _
    $region12: #{residual_bottleneck_block.7} parent=5 // pred_fallthru
      _
    %p201 = scmp.lt.s32.totalorder %s12, 2
    // Predicated region
    $region29: #{residual_bottleneck_block.7} parent=5 // pred_check
      %p202 = pneg %p201
    $region30: #{residual_bottleneck_block.7} parent=5 // pred_check_branch
      %204 = sbr.rel (%p202) target = $region32
    $region31: #{residual_bottleneck_block.7} parent=5 // pred_region
      // Predicated region
      $region33: #{residual_bottleneck_block.7} parent=31 // pred_check
        %p205 = pneg %p32
      $region34: #{residual_bottleneck_block.7} parent=31 // pred_check_branch
        %207 = sbr.rel (%p205) target = $region36
      $region35: #{residual_bottleneck_block.7} parent=31 // pred_region
        %s208 = smul.u32 32, %s12
        %p209 = scmp.lt.s32.totalorder %s208, 63
        %s210 = scalar_select %p209, %s208, 63
        %s211 = smul.addr %s210, 4
        %s212 = scalar_lea.vmem %s0, %s211
        %s213 = smul.u32 32, %s12
      $region36: #{residual_bottleneck_block.7} parent=31 // pred_fallthru
        _
      // Predicated region
      $region37: #{residual_bottleneck_block.7} parent=31 // pred_check
        %p214 = pneg %p58
      $region38: #{residual_bottleneck_block.7} parent=31 // pred_check_branch
        %216 = sbr.rel (%p214) target = $region40
      $region39: #{residual_bottleneck_block.7} parent=31 // pred_region
        %s217 = smul.u32 32, %s12
        %p218 = scmp.lt.s32.totalorder %s217, 63
        %s219 = scalar_select %p218, %s217, 63
        %s220 = smul.addr %s219, 8
        %s221 = scalar_lea.vmem %s1, %s220
        %s222 = smul.u32 32, %s12
      $region40: #{residual_bottleneck_block.7} parent=31 // pred_fallthru
        _
    $region32: #{residual_bottleneck_block.7} parent=5 // pred_fallthru
      _
    %p223 = scmp.le.s32.totalorder 1, %s12
    %p224 = scmp.lt.s32.totalorder %s12, 3
    %p225 = pnand %p223, %p224
    %p226 = pneg %p225
    // Predicated region
    $region41: #{residual_bottleneck_block.7} parent=5 // pred_check
      _
    $region42: #{residual_bottleneck_block.7} parent=5 // pred_check_branch
      %228 = sbr.rel (%p225) target = $region44
    $region43: #{residual_bottleneck_block.7} parent=5 // pred_region
      %s229 = ssub.s32 %s12, 1
      %s230 = smul.u32 32, %s17
      %p231 = scmp.lt.s32.totalorder %s230, 63
      %s232 = scalar_select %p231, %s230, 63
      %s233 = smul.addr %s232, 4
      %s234 = scalar_lea.vmem %s0, %s233
      %p235 = pneg %p38
      %p236 = pneg %p35
      %s237 = smul.u32 32, %s17
      %p238 = scmp.lt.s32.totalorder %s237, 63
      %s239 = scalar_select %p238, %s237, 63
      %s240 = smul.addr %s239, 8
      %s241 = scalar_lea.vmem %s1, %s240
      %p242 = pneg %p64
      %p243 = pneg %p61
      %p244 = pneg %p85
      %p245 = pneg %p82
      %p246 = pneg %p106
      %p247 = pneg %p103
      %p248 = pneg %p127
      %p249 = pneg %p124
      %p250 = pneg %p148
      %p251 = pneg %p145
      %p252 = pneg %p174
      %p253 = pneg %p171
      %s254 = smul.u32 32, %s17
      %p255 = scmp.lt.s32.totalorder %s254, 63
      %s256 = scalar_select %p255, %s254, 63
      %s257 = smul.addr %s256, 8
      %s258 = scalar_lea.vmem %s6, %s257
      %s259 = smul.u32 32, %s17
      %p260 = scmp.lt.s32.totalorder %s259, 63
      %s261 = scalar_select %p260, %s259, 63
      %s262 = smul.addr %s261, 4
      %s263 = scalar_lea.vmem %s0, %s262
      %s264 = smul.u32 32, %s17
      %s265 = smul.u32 32, %s17
      %p266 = scmp.lt.s32.totalorder %s265, 63
      %s267 = scalar_select %p266, %s265, 63
      %s268 = smul.addr %s267, 8
      %s269 = scalar_lea.vmem %s1, %s268
      %s270 = smul.u32 32, %s17
      %s271 = smul.u32 32, %s17
      %p272 = scmp.lt.s32.totalorder %s271, 63
      %s273 = scalar_select %p272, %s271, 63
      %s274 = smul.addr %s273, 8
      %s275 = scalar_lea.vmem %s6, %s274
      %s276 = smul.u32 32, %s17
      %v278 = vld [vmem:[%s263] sm:$0xf]
      %v279 = vld [vmem:[%s263 + $0x4] sm:$0xf]
      %v280 = vld [vmem:[%s263 + $0x8] sm:$0xf]
      %v281 = vld [vmem:[%s263 + $0xc] sm:$0xf]
      %v282 = vld [vmem:[%s263 + $0x10] sm:$0xf]
      %v283 = vld [vmem:[%s263 + $0x14] sm:$0xf]
      %v284 = vld [vmem:[%s263 + $0x18] sm:$0xf]
      %v285 = vld [vmem:[%s263 + $0x1c] sm:$0xf]
      %v286 = vld [vmem:[%s263 + $0x20] sm:$0xf]
      %v287 = vld [vmem:[%s263 + $0x24] sm:$0xf]
      %v288 = vld [vmem:[%s263 + $0x28] sm:$0xf]
      %v289 = vld [vmem:[%s263 + $0x2c] sm:$0xf]
      %v290 = vld [vmem:[%s263 + $0x30] sm:$0xf]
      %v291 = vld [vmem:[%s263 + $0x34] sm:$0xf]
      %v292 = vld [vmem:[%s263 + $0x38] sm:$0xf]
      %v293 = vld [vmem:[%s263 + $0x3c] sm:$0xf]
      %v294 = vld [vmem:[%s263 + $0x40] sm:$0xf]
      %v295 = vld [vmem:[%s263 + $0x44] sm:$0xf]
      %v296 = vld [vmem:[%s263 + $0x48] sm:$0xf]
      %v297 = vld [vmem:[%s263 + $0x4c] sm:$0xf]
      %v298 = vld [vmem:[%s263 + $0x50] sm:$0xf]
      %v299 = vld [vmem:[%s263 + $0x54] sm:$0xf]
      %v300 = vld [vmem:[%s263 + $0x58] sm:$0xf]
      %v301 = vld [vmem:[%s263 + $0x5c] sm:$0xf]
      %v302 = vld [vmem:[%s263 + $0x60] sm:$0xf]
      %v303 = vld [vmem:[%s263 + $0x64] sm:$0xf]
      %v304 = vld [vmem:[%s263 + $0x68] sm:$0xf]
      %v305 = vld [vmem:[%s263 + $0x6c] sm:$0xf]
      %v306 = vld [vmem:[%s263 + $0x70] sm:$0xf]
      %v307 = vld [vmem:[%s263 + $0x74] sm:$0xf]
      %v308 = vld [vmem:[%s263 + $0x78] sm:$0xf]
      %v309 = vld [vmem:[%s263 + $0x7c] sm:$0xf]
      %v310 = vunpack.c.l.bf16 %v278
      %v311 = vunpack.c.l.bf16 %v279
      %v312 = vunpack.c.l.bf16 %v280
      %v313 = vunpack.c.l.bf16 %v281
      %v314 = vunpack.c.l.bf16 %v282
      %v315 = vunpack.c.l.bf16 %v283
      %v316 = vunpack.c.l.bf16 %v284
      %v317 = vunpack.c.l.bf16 %v285
      %v318 = vunpack.c.l.bf16 %v286
      %v319 = vunpack.c.l.bf16 %v287
      %v320 = vunpack.c.l.bf16 %v288
      %v321 = vunpack.c.l.bf16 %v289
      %v322 = vunpack.c.l.bf16 %v290
      %v323 = vunpack.c.l.bf16 %v291
      %v324 = vunpack.c.l.bf16 %v292
      %v325 = vunpack.c.l.bf16 %v293
      %v326 = vunpack.c.l.bf16 %v294
      %v327 = vunpack.c.l.bf16 %v295
      %v328 = vunpack.c.l.bf16 %v296
      %v329 = vunpack.c.l.bf16 %v297
      %v330 = vunpack.c.l.bf16 %v298
      %v331 = vunpack.c.l.bf16 %v299
      %v332 = vunpack.c.l.bf16 %v300
      %v333 = vunpack.c.l.bf16 %v301
      %v334 = vunpack.c.l.bf16 %v302
      %v335 = vunpack.c.l.bf16 %v303
      %v336 = vunpack.c.l.bf16 %v304
      %v337 = vunpack.c.l.bf16 %v305
      %v338 = vunpack.c.l.bf16 %v306
      %v339 = vunpack.c.l.bf16 %v307
      %v340 = vunpack.c.l.bf16 %v308
      %v341 = vunpack.c.l.bf16 %v309
      %v342 = vld [vmem:[%s2] sm:$0x1]
      %v344 = vlaneseq
      %v345 = vshrl.u32 %v344, 7
      %v346 = vsub.s32 0, %v345
      %v347 = vrot.slane %v342, %v346
      %v349 = vmul.f32 %v310, %v347
      %v350 = vmul.f32 %v311, %v347
      %v351 = vmul.f32 %v312, %v347
      %v352 = vmul.f32 %v313, %v347
      %v353 = vmul.f32 %v314, %v347
      %v354 = vmul.f32 %v315, %v347
      %v355 = vmul.f32 %v316, %v347
      %v356 = vmul.f32 %v317, %v347
      %v357 = vmul.f32 %v318, %v347
      %v358 = vmul.f32 %v319, %v347
      %v359 = vmul.f32 %v320, %v347
      %v360 = vmul.f32 %v321, %v347
      %v361 = vmul.f32 %v322, %v347
      %v362 = vmul.f32 %v323, %v347
      %v363 = vmul.f32 %v324, %v347
      %v364 = vmul.f32 %v325, %v347
      %v365 = vmul.f32 %v326, %v347
      %v366 = vmul.f32 %v327, %v347
      %v367 = vmul.f32 %v328, %v347
      %v368 = vmul.f32 %v329, %v347
      %v369 = vmul.f32 %v330, %v347
      %v370 = vmul.f32 %v331, %v347
      %v371 = vmul.f32 %v332, %v347
      %v372 = vmul.f32 %v333, %v347
      %v373 = vmul.f32 %v334, %v347
      %v374 = vmul.f32 %v335, %v347
      %v375 = vmul.f32 %v336, %v347
      %v376 = vmul.f32 %v337, %v347
      %v377 = vmul.f32 %v338, %v347
      %v378 = vmul.f32 %v339, %v347
      %v379 = vmul.f32 %v340, %v347
      %v380 = vmul.f32 %v341, %v347
      %v381 = vld [vmem:[%s3] sm:$0x1]
      %v383 = vlaneseq
      %v384 = vshrl.u32 %v383, 7
      %v385 = vsub.s32 0, %v384
      %v386 = vrot.slane %v381, %v385
      %v388 = vadd.f32 %v349, %v386
      %v389 = vadd.f32 %v350, %v386
      %v390 = vadd.f32 %v351, %v386
      %v391 = vadd.f32 %v352, %v386
      %v392 = vadd.f32 %v353, %v386
      %v393 = vadd.f32 %v354, %v386
      %v394 = vadd.f32 %v355, %v386
      %v395 = vadd.f32 %v356, %v386
      %v396 = vadd.f32 %v357, %v386
      %v397 = vadd.f32 %v358, %v386
      %v398 = vadd.f32 %v359, %v386
      %v399 = vadd.f32 %v360, %v386
      %v400 = vadd.f32 %v361, %v386
      %v401 = vadd.f32 %v362, %v386
      %v402 = vadd.f32 %v363, %v386
      %v403 = vadd.f32 %v364, %v386
      %v404 = vadd.f32 %v365, %v386
      %v405 = vadd.f32 %v366, %v386
      %v406 = vadd.f32 %v367, %v386
      %v407 = vadd.f32 %v368, %v386
      %v408 = vadd.f32 %v369, %v386
      %v409 = vadd.f32 %v370, %v386
      %v410 = vadd.f32 %v371, %v386
      %v411 = vadd.f32 %v372, %v386
      %v412 = vadd.f32 %v373, %v386
      %v413 = vadd.f32 %v374, %v386
      %v414 = vadd.f32 %v375, %v386
      %v415 = vadd.f32 %v376, %v386
      %v416 = vadd.f32 %v377, %v386
      %v417 = vadd.f32 %v378, %v386
      %v418 = vadd.f32 %v379, %v386
      %v419 = vadd.f32 %v380, %v386
      %v420 = vmax.f32 %v388, 0.0
      %v421 = vmax.f32 %v389, 0.0
      %v422 = vmax.f32 %v390, 0.0
      %v423 = vmax.f32 %v391, 0.0
      %v424 = vmax.f32 %v392, 0.0
      %v425 = vmax.f32 %v393, 0.0
      %v426 = vmax.f32 %v394, 0.0
      %v427 = vmax.f32 %v395, 0.0
      %v428 = vmax.f32 %v396, 0.0
      %v429 = vmax.f32 %v397, 0.0
      %v430 = vmax.f32 %v398, 0.0
      %v431 = vmax.f32 %v399, 0.0
      %v432 = vmax.f32 %v400, 0.0
      %v433 = vmax.f32 %v401, 0.0
      %v434 = vmax.f32 %v402, 0.0
      %v435 = vmax.f32 %v403, 0.0
      %v436 = vmax.f32 %v404, 0.0
      %v437 = vmax.f32 %v405, 0.0
      %v438 = vmax.f32 %v406, 0.0
      %v439 = vmax.f32 %v407, 0.0
      %v440 = vmax.f32 %v408, 0.0
      %v441 = vmax.f32 %v409, 0.0
      %v442 = vmax.f32 %v410, 0.0
      %v443 = vmax.f32 %v411, 0.0
      %v444 = vmax.f32 %v412, 0.0
      %v445 = vmax.f32 %v413, 0.0
      %v446 = vmax.f32 %v414, 0.0
      %v447 = vmax.f32 %v415, 0.0
      %v448 = vmax.f32 %v416, 0.0
      %v449 = vmax.f32 %v417, 0.0
      %v450 = vmax.f32 %v418, 0.0
      %v451 = vmax.f32 %v419, 0.0
      %v452 = vpack.c.bf16 %v421, %v420
      %v453 = vpack.c.bf16 %v423, %v422
      %v454 = vpack.c.bf16 %v425, %v424
      %v455 = vpack.c.bf16 %v427, %v426
      %v456 = vpack.c.bf16 %v429, %v428
      %v457 = vpack.c.bf16 %v431, %v430
      %v458 = vpack.c.bf16 %v433, %v432
      %v459 = vpack.c.bf16 %v435, %v434
      %v460 = vpack.c.bf16 %v437, %v436
      %v461 = vpack.c.bf16 %v439, %v438
      %v462 = vpack.c.bf16 %v441, %v440
      %v463 = vpack.c.bf16 %v443, %v442
      %v464 = vpack.c.bf16 %v445, %v444
      %v465 = vpack.c.bf16 %v447, %v446
      %v466 = vpack.c.bf16 %v449, %v448
      %v467 = vpack.c.bf16 %v451, %v450
      %v468 = vld [vmem:[%s4] sm:$0x3]
      %v469 = vld [vmem:[%s5] sm:$0x1]
      %v471 = vlaneseq
      %v472 = vshrl.u32 %v471, 7
      %v473 = vsub.s32 0, %v472
      %v474 = vrot.slane %v469, %v473
      %vm476 = vcmask 31744
      %v478 = vsel %vm476, %v452, 0
      %v481 = vsel %vm476, %v453, 0
      %v484 = vsel %vm476, %v454, 0
      %v487 = vsel %vm476, %v455, 0
      %v490 = vsel %vm476, %v456, 0
      %v493 = vsel %vm476, %v457, 0
      %v496 = vsel %vm476, %v458, 0
      %v499 = vsel %vm476, %v459, 0
      %v502 = vsel %vm476, %v460, 0
      %v505 = vsel %vm476, %v461, 0
      %v508 = vsel %vm476, %v462, 0
      %v511 = vsel %vm476, %v463, 0
      %v514 = vsel %vm476, %v464, 0
      %v517 = vsel %vm476, %v465, 0
      %v520 = vsel %vm476, %v466, 0
      %v523 = vsel %vm476, %v467, 0
      %vm525 = vcmask 1041408
      %v527 = vsel %vm525, %v468, 0
      %529 = vmatprep.subr.bf16.mxu0 0
      %530 = vmatpush1.bf16.msra.mxu0 %v527
      %531 = vmatprep.subr.bf16.mxu0 0
      %532 = vmatpush1.bf16.msra.mxu0 0
      %533 = vmatprep.subr.bf16.mxu0 0
      %534 = vmatpush1.bf16.msra.mxu0 0
      %535 = vmatprep.subr.bf16.mxu0 0
      %536 = vmatpush1.bf16.msra.mxu0 0
      %537 = vmatprep.subr.bf16.mxu0 0
      %538 = vmatpush1.bf16.msra.mxu0 0
      %539 = vmatprep.subr.bf16.mxu0 0
      %540 = vmatpush1.bf16.msra.mxu0 0
      %541 = vmatprep.subr.bf16.mxu0 0
      %542 = vmatpush1.bf16.msra.mxu0 0
      %543 = vmatprep.subr.bf16.mxu0 0
      %544 = vmatpush1.bf16.msra.mxu0 0
      %545 = vmatprep.subr.bf16.mxu0 0
      %546 = vmatpush1.bf16.msra.mxu0 0
      %547 = vmatprep.subr.bf16.mxu0 0
      %548 = vmatpush1.bf16.msra.mxu0 0
      %549 = vmatprep.subr.bf16.mxu0 0
      %550 = vmatpush1.bf16.msra.mxu0 0
      %551 = vmatprep.subr.bf16.mxu0 0
      %552 = vmatpush1.bf16.msra.mxu0 0
      %553 = vmatprep.subr.bf16.mxu0 0
      %554 = vmatpush1.bf16.msra.mxu0 0
      %555 = vmatprep.subr.bf16.mxu0 0
      %556 = vmatpush1.bf16.msra.mxu0 0
      %557 = vmatprep.subr.bf16.mxu0 0
      %558 = vmatpush1.bf16.msra.mxu0 0
      %559 = vmatprep.subr.bf16.mxu0 0
      %560 = vmatpush1.bf16.msra.mxu0 0
      %561 = vmatprep.mubr.bf16.mxu0 0
      %562 = vmatmul.mubr.bf16.gmra.mrb[0].mxu0 %v478
      %v563 = vpop.f32.mrb[0].mxu0
      %v564 = vadd.f32 %v474, %v563
      %v565 = vpop.f32.mrb[0].mxu0
      %v566 = vpop.f32.mrb[0].mxu0
      %v567 = vadd.f32 %v474, %v566
      %v568 = vpop.f32.mrb[0].mxu0
      %569 = vmatprep.mubr.bf16.mxu0 0
      %570 = vmatmul.mubr.bf16.gmra.mrb[0].mxu0 %v481
      %v571 = vpop.f32.mrb[0].mxu0
      %v572 = vadd.f32 %v474, %v571
      %v573 = vpop.f32.mrb[0].mxu0
      %v574 = vpop.f32.mrb[0].mxu0
      %v575 = vadd.f32 %v474, %v574
      %v576 = vpop.f32.mrb[0].mxu0
      %577 = vmatprep.mubr.bf16.mxu0 0
      %578 = vmatmul.mubr.bf16.gmra.mrb[0].mxu0 %v484
      %v579 = vpop.f32.mrb[0].mxu0
      %v580 = vadd.f32 %v474, %v579
      %v581 = vpop.f32.mrb[0].mxu0
      %v582 = vpop.f32.mrb[0].mxu0
      %v583 = vadd.f32 %v474, %v582
      %v584 = vpop.f32.mrb[0].mxu0
      %585 = vmatprep.mubr.bf16.mxu0 0
      %586 = vmatmul.mubr.bf16.gmra.mrb[0].mxu0 %v487
      %v587 = vpop.f32.mrb[0].mxu0
      %v588 = vadd.f32 %v474, %v587
      %v589 = vpop.f32.mrb[0].mxu0
      %v590 = vpop.f32.mrb[0].mxu0
      %v591 = vadd.f32 %v474, %v590
      %v592 = vpop.f32.mrb[0].mxu0
      %593 = vmatprep.mubr.bf16.mxu0 0
      %594 = vmatmul.mubr.bf16.gmra.mrb[0].mxu0 %v490
      %v595 = vpop.f32.mrb[0].mxu0
      %v596 = vadd.f32 %v474, %v595
      %v597 = vpop.f32.mrb[0].mxu0
      %v598 = vpop.f32.mrb[0].mxu0
      %v599 = vadd.f32 %v474, %v598
      %v600 = vpop.f32.mrb[0].mxu0
      %601 = vmatprep.mubr.bf16.mxu0 0
      %602 = vmatmul.mubr.bf16.gmra.mrb[0].mxu0 %v493
      %v603 = vpop.f32.mrb[0].mxu0
      %v604 = vadd.f32 %v474, %v603
      %v605 = vpop.f32.mrb[0].mxu0
      %v606 = vpop.f32.mrb[0].mxu0
      %v607 = vadd.f32 %v474, %v606
      %v608 = vpop.f32.mrb[0].mxu0
      %609 = vmatprep.mubr.bf16.mxu0 0
      %610 = vmatmul.mubr.bf16.gmra.mrb[0].mxu0 %v496
      %v611 = vpop.f32.mrb[0].mxu0
      %v612 = vadd.f32 %v474, %v611
      %v613 = vpop.f32.mrb[0].mxu0
      %v614 = vpop.f32.mrb[0].mxu0
      %v615 = vadd.f32 %v474, %v614
      %v616 = vpop.f32.mrb[0].mxu0
      %617 = vmatprep.mubr.bf16.mxu0 0
      %618 = vmatmul.mubr.bf16.gmra.mrb[0].mxu0 %v499
      %v619 = vpop.f32.mrb[0].mxu0
      %v620 = vadd.f32 %v474, %v619
      %v621 = vpop.f32.mrb[0].mxu0
      %v622 = vpop.f32.mrb[0].mxu0
      %v623 = vadd.f32 %v474, %v622
      %v624 = vpop.f32.mrb[0].mxu0
      %625 = vmatprep.mubr.bf16.mxu0 0
      %626 = vmatmul.mubr.bf16.gmra.mrb[0].mxu0 %v502
      %v627 = vpop.f32.mrb[0].mxu0
      %v628 = vadd.f32 %v474, %v627
      %v629 = vpop.f32.mrb[0].mxu0
      %v630 = vpop.f32.mrb[0].mxu0
      %v631 = vadd.f32 %v474, %v630
      %v632 = vpop.f32.mrb[0].mxu0
      %633 = vmatprep.mubr.bf16.mxu0 0
      %634 = vmatmul.mubr.bf16.gmra.mrb[0].mxu0 %v505
      %v635 = vpop.f32.mrb[0].mxu0
      %v636 = vadd.f32 %v474, %v635
      %v637 = vpop.f32.mrb[0].mxu0
      %v638 = vpop.f32.mrb[0].mxu0
      %v639 = vadd.f32 %v474, %v638
      %v640 = vpop.f32.mrb[0].mxu0
      %641 = vmatprep.mubr.bf16.mxu0 0
      %642 = vmatmul.mubr.bf16.gmra.mrb[0].mxu0 %v508
      %v643 = vpop.f32.mrb[0].mxu0
      %v644 = vadd.f32 %v474, %v643
      %v645 = vpop.f32.mrb[0].mxu0
      %v646 = vpop.f32.mrb[0].mxu0
      %v647 = vadd.f32 %v474, %v646
      %v648 = vpop.f32.mrb[0].mxu0
      %649 = vmatprep.mubr.bf16.mxu0 0
      %650 = vmatmul.mubr.bf16.gmra.mrb[0].mxu0 %v511
      %v651 = vpop.f32.mrb[0].mxu0
      %v652 = vadd.f32 %v474, %v651
      %v653 = vpop.f32.mrb[0].mxu0
      %v654 = vpop.f32.mrb[0].mxu0
      %v655 = vadd.f32 %v474, %v654
      %v656 = vpop.f32.mrb[0].mxu0
      %657 = vmatprep.mubr.bf16.mxu0 0
      %658 = vmatmul.mubr.bf16.gmra.mrb[0].mxu0 %v514
      %v659 = vpop.f32.mrb[0].mxu0
      %v660 = vadd.f32 %v474, %v659
      %v661 = vpop.f32.mrb[0].mxu0
      %v662 = vpop.f32.mrb[0].mxu0
      %v663 = vadd.f32 %v474, %v662
      %v664 = vpop.f32.mrb[0].mxu0
      %665 = vmatprep.mubr.bf16.mxu0 0
      %666 = vmatmul.mubr.bf16.gmra.mrb[0].mxu0 %v517
      %v667 = vpop.f32.mrb[0].mxu0
      %v668 = vadd.f32 %v474, %v667
      %v669 = vpop.f32.mrb[0].mxu0
      %v670 = vpop.f32.mrb[0].mxu0
      %v671 = vadd.f32 %v474, %v670
      %v672 = vpop.f32.mrb[0].mxu0
      %673 = vmatprep.mubr.bf16.mxu0 0
      %674 = vmatmul.mubr.bf16.gmra.mrb[0].mxu0 %v520
      %v675 = vpop.f32.mrb[0].mxu0
      %v676 = vadd.f32 %v474, %v675
      %v677 = vpop.f32.mrb[0].mxu0
      %v678 = vpop.f32.mrb[0].mxu0
      %v679 = vadd.f32 %v474, %v678
      %v680 = vpop.f32.mrb[0].mxu0
      %681 = vmatprep.mubr.bf16.mxu0 0
      %682 = vmatmul.mubr.bf16.gmra.mrb[0].mxu0 %v523
      %v683 = vpop.f32.mrb[0].mxu0
      %v684 = vadd.f32 %v474, %v683
      %v685 = vpop.f32.mrb[0].mxu0
      %v686 = vpop.f32.mrb[0].mxu0
      %v687 = vadd.f32 %v474, %v686
      %v688 = vpop.f32.mrb[0].mxu0
      %689 = vdwg.mxu0
      %v690 = vld [vmem:[%s269] sm:$0xff]
      %v691 = vld [vmem:[%s269 + $0x8] sm:$0xff]
      %v692 = vld [vmem:[%s269 + $0x10] sm:$0xff]
      %v693 = vld [vmem:[%s269 + $0x18] sm:$0xff]
      %v694 = vld [vmem:[%s269 + $0x20] sm:$0xff]
      %v695 = vld [vmem:[%s269 + $0x28] sm:$0xff]
      %v696 = vld [vmem:[%s269 + $0x30] sm:$0xff]
      %v697 = vld [vmem:[%s269 + $0x38] sm:$0xff]
      %v698 = vld [vmem:[%s269 + $0x40] sm:$0xff]
      %v699 = vld [vmem:[%s269 + $0x48] sm:$0xff]
      %v700 = vld [vmem:[%s269 + $0x50] sm:$0xff]
      %v701 = vld [vmem:[%s269 + $0x58] sm:$0xff]
      %v702 = vld [vmem:[%s269 + $0x60] sm:$0xff]
      %v703 = vld [vmem:[%s269 + $0x68] sm:$0xff]
      %v704 = vld [vmem:[%s269 + $0x70] sm:$0xff]
      %v705 = vld [vmem:[%s269 + $0x78] sm:$0xff]
      %v706 = vld [vmem:[%s269 + $0x80] sm:$0xff]
      %v707 = vld [vmem:[%s269 + $0x88] sm:$0xff]
      %v708 = vld [vmem:[%s269 + $0x90] sm:$0xff]
      %v709 = vld [vmem:[%s269 + $0x98] sm:$0xff]
      %v710 = vld [vmem:[%s269 + $0xa0] sm:$0xff]
      %v711 = vld [vmem:[%s269 + $0xa8] sm:$0xff]
      %v712 = vld [vmem:[%s269 + $0xb0] sm:$0xff]
      %v713 = vld [vmem:[%s269 + $0xb8] sm:$0xff]
      %v714 = vld [vmem:[%s269 + $0xc0] sm:$0xff]
      %v715 = vld [vmem:[%s269 + $0xc8] sm:$0xff]
      %v716 = vld [vmem:[%s269 + $0xd0] sm:$0xff]
      %v717 = vld [vmem:[%s269 + $0xd8] sm:$0xff]
      %v718 = vld [vmem:[%s269 + $0xe0] sm:$0xff]
      %v719 = vld [vmem:[%s269 + $0xe8] sm:$0xff]
      %v720 = vld [vmem:[%s269 + $0xf0] sm:$0xff]
      %v721 = vld [vmem:[%s269 + $0xf8] sm:$0xff]
      %v722 = vadd.f32 %v564, %v690
      %v723 = vadd.f32 %v567, %v691
      %v724 = vadd.f32 %v572, %v692
      %v725 = vadd.f32 %v575, %v693
      %v726 = vadd.f32 %v580, %v694
      %v727 = vadd.f32 %v583, %v695
      %v728 = vadd.f32 %v588, %v696
      %v729 = vadd.f32 %v591, %v697
      %v730 = vadd.f32 %v596, %v698
      %v731 = vadd.f32 %v599, %v699
      %v732 = vadd.f32 %v604, %v700
      %v733 = vadd.f32 %v607, %v701
      %v734 = vadd.f32 %v612, %v702
      %v735 = vadd.f32 %v615, %v703
      %v736 = vadd.f32 %v620, %v704
      %v737 = vadd.f32 %v623, %v705
      %v738 = vadd.f32 %v628, %v706
      %v739 = vadd.f32 %v631, %v707
      %v740 = vadd.f32 %v636, %v708
      %v741 = vadd.f32 %v639, %v709
      %v742 = vadd.f32 %v644, %v710
      %v743 = vadd.f32 %v647, %v711
      %v744 = vadd.f32 %v652, %v712
      %v745 = vadd.f32 %v655, %v713
      %v746 = vadd.f32 %v660, %v714
      %v747 = vadd.f32 %v663, %v715
      %v748 = vadd.f32 %v668, %v716
      %v749 = vadd.f32 %v671, %v717
      %v750 = vadd.f32 %v676, %v718
      %v751 = vadd.f32 %v679, %v719
      %v752 = vadd.f32 %v684, %v720
      %v753 = vadd.f32 %v687, %v721
      %vm754 = vcmask 130048
      %755 = vst.msk [vmem:[%s275] sm:$0xff] %vm754, %v722
      %756 = vst.msk [vmem:[%s275 + $0x8] sm:$0xff] %vm754, %v723
      %757 = vst.msk [vmem:[%s275 + $0x10] sm:$0xff] %vm754, %v724
      %758 = vst.msk [vmem:[%s275 + $0x18] sm:$0xff] %vm754, %v725
      %759 = vst.msk [vmem:[%s275 + $0x20] sm:$0xff] %vm754, %v726
      %760 = vst.msk [vmem:[%s275 + $0x28] sm:$0xff] %vm754, %v727
      %761 = vst.msk [vmem:[%s275 + $0x30] sm:$0xff] %vm754, %v728
      %762 = vst.msk [vmem:[%s275 + $0x38] sm:$0xff] %vm754, %v729
      %763 = vst.msk [vmem:[%s275 + $0x40] sm:$0xff] %vm754, %v730
      %764 = vst.msk [vmem:[%s275 + $0x48] sm:$0xff] %vm754, %v731
      %765 = vst.msk [vmem:[%s275 + $0x50] sm:$0xff] %vm754, %v732
      %766 = vst.msk [vmem:[%s275 + $0x58] sm:$0xff] %vm754, %v733
      %767 = vst.msk [vmem:[%s275 + $0x60] sm:$0xff] %vm754, %v734
      %768 = vst.msk [vmem:[%s275 + $0x68] sm:$0xff] %vm754, %v735
      %769 = vst.msk [vmem:[%s275 + $0x70] sm:$0xff] %vm754, %v736
      %770 = vst.msk [vmem:[%s275 + $0x78] sm:$0xff] %vm754, %v737
      %771 = vst.msk [vmem:[%s275 + $0x80] sm:$0xff] %vm754, %v738
      %772 = vst.msk [vmem:[%s275 + $0x88] sm:$0xff] %vm754, %v739
      %773 = vst.msk [vmem:[%s275 + $0x90] sm:$0xff] %vm754, %v740
      %774 = vst.msk [vmem:[%s275 + $0x98] sm:$0xff] %vm754, %v741
      %775 = vst.msk [vmem:[%s275 + $0xa0] sm:$0xff] %vm754, %v742
      %776 = vst.msk [vmem:[%s275 + $0xa8] sm:$0xff] %vm754, %v743
      %777 = vst.msk [vmem:[%s275 + $0xb0] sm:$0xff] %vm754, %v744
      %778 = vst.msk [vmem:[%s275 + $0xb8] sm:$0xff] %vm754, %v745
      %779 = vst.msk [vmem:[%s275 + $0xc0] sm:$0xff] %vm754, %v746
      %780 = vst.msk [vmem:[%s275 + $0xc8] sm:$0xff] %vm754, %v747
      %781 = vst.msk [vmem:[%s275 + $0xd0] sm:$0xff] %vm754, %v748
      %782 = vst.msk [vmem:[%s275 + $0xd8] sm:$0xff] %vm754, %v749
      %783 = vst.msk [vmem:[%s275 + $0xe0] sm:$0xff] %vm754, %v750
      %784 = vst.msk [vmem:[%s275 + $0xe8] sm:$0xff] %vm754, %v751
      %785 = vst.msk [vmem:[%s275 + $0xf0] sm:$0xff] %vm754, %v752
      %786 = vst.msk [vmem:[%s275 + $0xf8] sm:$0xff] %vm754, %v753
      %s787 = smul.u32 32, %s17
      %p788 = scmp.lt.s32.totalorder %s787, 63
      %s789 = scalar_select %p788, %s787, 63
      %s790 = smul.addr %s789, 8
      %s791 = scalar_lea.vmem %s6, %s790
      // Predicated region
      $region45: #{residual_bottleneck_block.7} parent=43 // pred_check
        %p792 = pneg %p171
      $region46: #{residual_bottleneck_block.7} parent=43 // pred_check_branch
        %794 = sbr.rel (%p792) target = $region48
      $region47: #{residual_bottleneck_block.7} parent=43 // pred_region
        %s795 = smul.u32 32, %s17
      $region48: #{residual_bottleneck_block.7} parent=43 // pred_fallthru
        _
    $region44: #{residual_bottleneck_block.7} parent=5 // pred_fallthru
      _
    %p796 = scmp.le.s32.totalorder 2, %s12
    // Predicated region
    $region49: #{residual_bottleneck_block.7} parent=5 // pred_check
      %p797 = pneg %p796
    $region50: #{residual_bottleneck_block.7} parent=5 // pred_check_branch
      %799 = sbr.rel (%p797) target = $region52
    $region51: #{residual_bottleneck_block.7} parent=5 // pred_region
      %s800 = ssub.s32 %s12, 2
      // Predicated region
      $region53: #{residual_bottleneck_block.7} parent=51 // pred_check
        %p801 = pneg %p177
      $region54: #{residual_bottleneck_block.7} parent=51 // pred_check_branch
        %803 = sbr.rel (%p801) target = $region56
      $region55: #{residual_bottleneck_block.7} parent=51 // pred_region
        %s804 = smul.u32 32, %s18
        %p805 = scmp.lt.s32.totalorder %s804, 63
        %s806 = scalar_select %p805, %s804, 63
        %s807 = smul.addr %s806, 8
        %s808 = scalar_lea.vmem %s6, %s807
      $region56: #{residual_bottleneck_block.7} parent=51 // pred_fallthru
        _
    $region52: #{residual_bottleneck_block.7} parent=5 // pred_fallthru
      _
  $region6: #{residual_bottleneck_block.7} parent=0 // loop_footer
    %s16 = sadd.s32 1, %s12
  $region7: #{residual_bottleneck_block.7} parent=0 // loop_footer_branch
    %11 = sbr.rel target = $region3
  $region8: #{residual_bottleneck_block.7} parent=0 // loop_exit
    _

// kernel: residual_bottleneck_block.6
$region0: #{residual_bottleneck_block.6}
  #allocation0 [shape = 'u32[]', space=smem, size = 0x4, offset = 0x4, fixed_abs, tag = 'smem constant byte address 0x4 - core index']
  #allocation1 [shape = 'u32[144,128]{1,0:T(1,128)}', space=vmem, size = 0x12000, scoped, tag = 'internal scratch']
  #allocation2 [shape = 'f32[304,4]{1,0:T(8,128)}', space=vmem, size = 0x26000, scoped, tag = 'scratch operand']
  %s0 = inlined_call_operand.vmem [shape: bf16[2,256,4], index: 0, kind: input, shape index: {}]
  %s1 = inlined_call_operand.vmem [shape: f32[1,4], index: 1, kind: input, shape index: {}]
  %s2 = inlined_call_operand.vmem [shape: f32[1,4], index: 2, kind: input, shape index: {}]
  %s3 = inlined_call_operand.vmem [shape: bf16[9,4,4], index: 3, kind: input, shape index: {}]
  %s4 = inlined_call_operand.vmem [shape: f32[256,1], index: 4, kind: input, shape index: {}]
  %s5 = inlined_call_operand.vmem [shape: f32[256,1], index: 5, kind: input, shape index: {}]
  %s6 = inlined_call_operand.vmem [shape: bf16[2,256,4], index: 6, kind: output, shape index: {0}]
  %s7 = inlined_call_operand.vmem [shape: f32[2,2,4], index: 7, kind: output, shape index: {1}]
  %8 = xla_tuple %s6, %s7
  %s9 = sld [smem:[#allocation0]]
  $region65: #{residual_bottleneck_block.6} parent=0
    _
  %s11 = ssub.s32 1, %s9
  %s12 = scalar_select 0, %s11, %s9
  loop: start=0, step=1, limit=4
  $region2: #{residual_bottleneck_block.6} parent=0 // loop_pre_header
    _
  $region3: #{residual_bottleneck_block.6} parent=0 // loop_header
    %s14 = sphi 0, %s18
    %p15 = scmp.ge.s32.totalorder %s14, 4
    %s24 = sphi 0, %s26
    %s27 = sphi 0, %s24
    %s28 = sphi 0, %s27
    %s44 = sphi 0, %s28
    %s48 = sphi 0, %s48
    %s50 = sphi 0, %s48
    %s51 = sphi 0, %s50
    %s65 = sphi 0, %s51
    %s69 = sphi 0, %s69
    %s71 = sphi 0, %s69
    %s72 = sphi 0, %s71
    %s86 = sphi 0, %s72
    %s90 = sphi 0, %s90
    %s92 = sphi 0, %s90
    %s93 = sphi 0, %s92
    %s107 = sphi 0, %s93
    %s111 = sphi 0, %s111
    %s113 = sphi 0, %s111
    %s114 = sphi 0, %s113
    %s128 = sphi 0, %s114
    %s132 = sphi 0, %s132
    %s134 = sphi 0, %s132
    %s135 = sphi 0, %s134
    %s149 = sphi 0, %s135
    %s155 = sphi 0, %s157
    %s158 = sphi 0, %s155
    %s159 = sphi 0, %s158
    %s175 = sphi 0, %s159
    %s181 = sphi 0, %s183
    %s184 = sphi 0, %s181
    %s185 = sphi 0, %s184
    %s201 = sphi 0, %s185
  $region4: #{residual_bottleneck_block.6} parent=0 // loop_header_branch
    %17 = sbr.rel (%p15) target = $region8
  $region5: #{residual_bottleneck_block.6} parent=0 // loop_body
    %s19 = ssub.s32 %s14, 1
    %s20 = ssub.s32 %s14, 2
    %s21 = sadd.s32 %s14, 1
    %s22 = ssub.s32 %s14, %s21
    %p23 = scmp.eq.s32.totalorder %s22, 0
    %s25 = sadd.s32 %s24, 1
    %s26 = scalar_select %p23, %s24, %s25
    %p29 = pneg %p23
    %p30 = scmp.eq.s32.totalorder %s14, 1
    %p31 = por %p29, %p30
    %p32 = scmp.ne.s32.totalorder %s24, %s27
    %p33 = scmp.eq.s32.totalorder %s14, 0
    %p34 = por %p32, %p33
    %p35 = scmp.ne.s32.totalorder %s24, %s27
    %p36 = scmp.eq.s32.totalorder %s19, 1
    %p37 = por %p35, %p36
    %p38 = scmp.ne.s32.totalorder %s27, %s28
    %p39 = scmp.eq.s32.totalorder %s19, 0
    %p40 = por %p38, %p39
    %p41 = scmp.ne.s32.totalorder %s27, %s28
    %p42 = scmp.eq.s32.totalorder %s20, 1
    %p43 = por %p41, %p42
    %p45 = scmp.ne.s32.totalorder %s28, %s44
    %p46 = scmp.eq.s32.totalorder %s20, 0
    %p47 = por %p45, %p46
    %s49 = sadd.s32 %s48, 1
    %p52 = scmp.eq.s32.totalorder %s14, 1
    %p53 = scmp.ne.s32.totalorder %s48, %s50
    %p54 = scmp.eq.s32.totalorder %s14, 0
    %p55 = por %p53, %p54
    %p56 = scmp.ne.s32.totalorder %s48, %s50
    %p57 = scmp.eq.s32.totalorder %s19, 1
    %p58 = por %p56, %p57
    %p59 = scmp.ne.s32.totalorder %s50, %s51
    %p60 = scmp.eq.s32.totalorder %s19, 0
    %p61 = por %p59, %p60
    %p62 = scmp.ne.s32.totalorder %s50, %s51
    %p63 = scmp.eq.s32.totalorder %s20, 1
    %p64 = por %p62, %p63
    %p66 = scmp.ne.s32.totalorder %s51, %s65
    %p67 = scmp.eq.s32.totalorder %s20, 0
    %p68 = por %p66, %p67
    %s70 = sadd.s32 %s69, 1
    %p73 = scmp.eq.s32.totalorder %s14, 1
    %p74 = scmp.ne.s32.totalorder %s69, %s71
    %p75 = scmp.eq.s32.totalorder %s14, 0
    %p76 = por %p74, %p75
    %p77 = scmp.ne.s32.totalorder %s69, %s71
    %p78 = scmp.eq.s32.totalorder %s19, 1
    %p79 = por %p77, %p78
    %p80 = scmp.ne.s32.totalorder %s71, %s72
    %p81 = scmp.eq.s32.totalorder %s19, 0
    %p82 = por %p80, %p81
    %p83 = scmp.ne.s32.totalorder %s71, %s72
    %p84 = scmp.eq.s32.totalorder %s20, 1
    %p85 = por %p83, %p84
    %p87 = scmp.ne.s32.totalorder %s72, %s86
    %p88 = scmp.eq.s32.totalorder %s20, 0
    %p89 = por %p87, %p88
    %s91 = sadd.s32 %s90, 1
    %p94 = scmp.eq.s32.totalorder %s14, 1
    %p95 = scmp.ne.s32.totalorder %s90, %s92
    %p96 = scmp.eq.s32.totalorder %s14, 0
    %p97 = por %p95, %p96
    %p98 = scmp.ne.s32.totalorder %s90, %s92
    %p99 = scmp.eq.s32.totalorder %s19, 1
    %p100 = por %p98, %p99
    %p101 = scmp.ne.s32.totalorder %s92, %s93
    %p102 = scmp.eq.s32.totalorder %s19, 0
    %p103 = por %p101, %p102
    %p104 = scmp.ne.s32.totalorder %s92, %s93
    %p105 = scmp.eq.s32.totalorder %s20, 1
    %p106 = por %p104, %p105
    %p108 = scmp.ne.s32.totalorder %s93, %s107
    %p109 = scmp.eq.s32.totalorder %s20, 0
    %p110 = por %p108, %p109
    %s112 = sadd.s32 %s111, 1
    %p115 = scmp.eq.s32.totalorder %s14, 1
    %p116 = scmp.ne.s32.totalorder %s111, %s113
    %p117 = scmp.eq.s32.totalorder %s14, 0
    %p118 = por %p116, %p117
    %p119 = scmp.ne.s32.totalorder %s111, %s113
    %p120 = scmp.eq.s32.totalorder %s19, 1
    %p121 = por %p119, %p120
    %p122 = scmp.ne.s32.totalorder %s113, %s114
    %p123 = scmp.eq.s32.totalorder %s19, 0
    %p124 = por %p122, %p123
    %p125 = scmp.ne.s32.totalorder %s113, %s114
    %p126 = scmp.eq.s32.totalorder %s20, 1
    %p127 = por %p125, %p126
    %p129 = scmp.ne.s32.totalorder %s114, %s128
    %p130 = scmp.eq.s32.totalorder %s20, 0
    %p131 = por %p129, %p130
    %s133 = sadd.s32 %s132, 1
    %p136 = scmp.eq.s32.totalorder %s14, 1
    %p137 = scmp.ne.s32.totalorder %s132, %s134
    %p138 = scmp.eq.s32.totalorder %s14, 0
    %p139 = por %p137, %p138
    %p140 = scmp.ne.s32.totalorder %s132, %s134
    %p141 = scmp.eq.s32.totalorder %s19, 1
    %p142 = por %p140, %p141
    %p143 = scmp.ne.s32.totalorder %s134, %s135
    %p144 = scmp.eq.s32.totalorder %s19, 0
    %p145 = por %p143, %p144
    %p146 = scmp.ne.s32.totalorder %s134, %s135
    %p147 = scmp.eq.s32.totalorder %s20, 1
    %p148 = por %p146, %p147
    %p150 = scmp.ne.s32.totalorder %s135, %s149
    %p151 = scmp.eq.s32.totalorder %s20, 0
    %p152 = por %p150, %p151
    %s153 = ssub.s32 %s14, %s21
    %p154 = scmp.eq.s32.totalorder %s153, 0
    %s156 = sadd.s32 %s155, 1
    %s157 = scalar_select %p154, %s155, %s156
    %p160 = pneg %p154
    %p161 = scmp.eq.s32.totalorder %s14, 1
    %p162 = por %p160, %p161
    %p163 = scmp.ne.s32.totalorder %s155, %s158
    %p164 = scmp.eq.s32.totalorder %s14, 0
    %p165 = por %p163, %p164
    %p166 = scmp.ne.s32.totalorder %s155, %s158
    %p167 = scmp.eq.s32.totalorder %s19, 1
    %p168 = por %p166, %p167
    %p169 = scmp.ne.s32.totalorder %s158, %s159
    %p170 = scmp.eq.s32.totalorder %s19, 0
    %p171 = por %p169, %p170
    %p172 = scmp.ne.s32.totalorder %s158, %s159
    %p173 = scmp.eq.s32.totalorder %s20, 1
    %p174 = por %p172, %p173
    %p176 = scmp.ne.s32.totalorder %s159, %s175
    %p177 = scmp.eq.s32.totalorder %s20, 0
    %p178 = por %p176, %p177
    %s179 = ssub.s32 %s14, %s21
    %p180 = scmp.eq.s32.totalorder %s179, 0
    %s182 = sadd.s32 %s181, 1
    %s183 = scalar_select %p180, %s181, %s182
    %p186 = pneg %p180
    %p187 = scmp.eq.s32.totalorder %s14, 1
    %p188 = por %p186, %p187
    %p189 = scmp.ne.s32.totalorder %s181, %s184
    %p190 = scmp.eq.s32.totalorder %s14, 0
    %p191 = por %p189, %p190
    %p192 = scmp.ne.s32.totalorder %s181, %s184
    %p193 = scmp.eq.s32.totalorder %s19, 1
    %p194 = por %p192, %p193
    %p195 = scmp.ne.s32.totalorder %s184, %s185
    %p196 = scmp.eq.s32.totalorder %s19, 0
    %p197 = por %p195, %p196
    %p198 = scmp.ne.s32.totalorder %s184, %s185
    %p199 = scmp.eq.s32.totalorder %s20, 1
    %p200 = por %p198, %p199
    %p202 = scmp.ne.s32.totalorder %s185, %s201
    %p203 = scmp.eq.s32.totalorder %s20, 0
    %p204 = por %p202, %p203
    %p205 = scmp.le.s32.totalorder 1, %s14
    %p206 = scmp.lt.s32.totalorder %s14, 3
    %p207 = pnand %p205, %p206
    %p208 = pneg %p207
    // Predicated region
    $region9: #{residual_bottleneck_block.6} parent=5 // pred_check
      _
    $region10: #{residual_bottleneck_block.6} parent=5 // pred_check_branch
      %210 = sbr.rel (%p207) target = $region12
    $region11: #{residual_bottleneck_block.6} parent=5 // pred_region
      %s211 = ssub.s32 %s14, 1
      // Predicated region
      $region13: #{residual_bottleneck_block.6} parent=11 // pred_check
        %p212 = pneg %p61
      $region14: #{residual_bottleneck_block.6} parent=11 // pred_check_branch
        %214 = sbr.rel (%p212) target = $region16
      $region15: #{residual_bottleneck_block.6} parent=11 // pred_region
        _
      $region16: #{residual_bottleneck_block.6} parent=11 // pred_fallthru
        _
      // Predicated region
      $region17: #{residual_bottleneck_block.6} parent=11 // pred_check
        %p215 = pneg %p82
      $region18: #{residual_bottleneck_block.6} parent=11 // pred_check_branch
        %217 = sbr.rel (%p215) target = $region20
      $region19: #{residual_bottleneck_block.6} parent=11 // pred_region
        _
      $region20: #{residual_bottleneck_block.6} parent=11 // pred_fallthru
        _
      // Predicated region
      $region21: #{residual_bottleneck_block.6} parent=11 // pred_check
        %p218 = pneg %p103
      $region22: #{residual_bottleneck_block.6} parent=11 // pred_check_branch
        %220 = sbr.rel (%p218) target = $region24
      $region23: #{residual_bottleneck_block.6} parent=11 // pred_region
        _
      $region24: #{residual_bottleneck_block.6} parent=11 // pred_fallthru
        _
      // Predicated region
      $region25: #{residual_bottleneck_block.6} parent=11 // pred_check
        %p221 = pneg %p124
      $region26: #{residual_bottleneck_block.6} parent=11 // pred_check_branch
        %223 = sbr.rel (%p221) target = $region28
      $region27: #{residual_bottleneck_block.6} parent=11 // pred_region
        _
      $region28: #{residual_bottleneck_block.6} parent=11 // pred_fallthru
        _
      // Predicated region
      $region29: #{residual_bottleneck_block.6} parent=11 // pred_check
        %p224 = pneg %p145
      $region30: #{residual_bottleneck_block.6} parent=11 // pred_check_branch
        %226 = sbr.rel (%p224) target = $region32
      $region31: #{residual_bottleneck_block.6} parent=11 // pred_region
        _
      $region32: #{residual_bottleneck_block.6} parent=11 // pred_fallthru
        _
    $region12: #{residual_bottleneck_block.6} parent=5 // pred_fallthru
      _
    %p227 = scmp.lt.s32.totalorder %s14, 2
    // Predicated region
    $region33: #{residual_bottleneck_block.6} parent=5 // pred_check
      %p228 = pneg %p227
    $region34: #{residual_bottleneck_block.6} parent=5 // pred_check_branch
      %230 = sbr.rel (%p228) target = $region36
    $region35: #{residual_bottleneck_block.6} parent=5 // pred_region
      // Predicated region
      $region37: #{residual_bottleneck_block.6} parent=35 // pred_check
        %p231 = pneg %p34
      $region38: #{residual_bottleneck_block.6} parent=35 // pred_check_branch
        %233 = sbr.rel (%p231) target = $region40
      $region39: #{residual_bottleneck_block.6} parent=35 // pred_region
        %p234 = scmp.lt.s32.totalorder %s14, 1
        %s235 = scalar_select %p234, %s14, 1
        %s236 = smul.addr %s235, 32
        %s237 = smul.addr %s236, 4
        %s238 = scalar_lea.vmem %s0, %s237
      $region40: #{residual_bottleneck_block.6} parent=35 // pred_fallthru
        _
    $region36: #{residual_bottleneck_block.6} parent=5 // pred_fallthru
      _
    %p239 = scmp.le.s32.totalorder 1, %s14
    %p240 = scmp.lt.s32.totalorder %s14, 3
    %p241 = pnand %p239, %p240
    %p242 = pneg %p241
    // Predicated region
    $region41: #{residual_bottleneck_block.6} parent=5 // pred_check
      _
    $region42: #{residual_bottleneck_block.6} parent=5 // pred_check_branch
      %244 = sbr.rel (%p241) target = $region44
    $region43: #{residual_bottleneck_block.6} parent=5 // pred_region
      %s245 = ssub.s32 %s14, 1
      %p246 = scmp.lt.s32.totalorder %s19, 1
      %s247 = scalar_select %p246, %s19, 1
      %s248 = smul.addr %s247, 32
      %s249 = smul.addr %s248, 4
      %s250 = scalar_lea.vmem %s0, %s249
      %p251 = pneg %p40
      %p252 = pneg %p37
      %p253 = pneg %p61
      %p254 = pneg %p58
      %p255 = pneg %p82
      %p256 = pneg %p79
      %p257 = pneg %p103
      %p258 = pneg %p100
      %p259 = pneg %p124
      %p260 = pneg %p121
      %p261 = pneg %p145
      %p262 = pneg %p142
      %p263 = pneg %p171
      %p264 = pneg %p168
      %p265 = scmp.lt.s32.totalorder %s19, 1
      %s266 = scalar_select %p265, %s19, 1
      %s267 = smul.addr %s266, 32
      %s268 = smul.addr %s267, 4
      %s269 = scalar_lea.vmem %s6, %s268
      %p270 = pneg %p197
      %p271 = pneg %p194
      %p272 = scmp.lt.s32.totalorder %s19, 1
      %s273 = scalar_select %p272, %s19, 1
      %s274 = smul.addr %s273, 2
      %s275 = scalar_lea.vmem %s7, %s274
      %p276 = scmp.lt.s32.totalorder %s19, 1
      %s277 = scalar_select %p276, %s19, 1
      %s278 = smul.addr %s277, 32
      %s279 = smul.addr %s278, 4
      %s280 = scalar_lea.vmem %s0, %s279
      %p281 = scmp.lt.s32.totalorder %s19, 1
      %s282 = scalar_select %p281, %s19, 1
      %s283 = smul.addr %s282, 32
      %s284 = smul.addr %s283, 4
      %s285 = scalar_lea.vmem %s6, %s284
      %p286 = scmp.lt.s32.totalorder %s19, 1
      %s287 = scalar_select %p286, %s19, 1
      %s288 = smul.addr %s287, 2
      %s289 = scalar_lea.vmem %s7, %s288
      %v291 = vld [vmem:[%s280] sm:$0xf]
      %v292 = vld [vmem:[%s280 + $0x4] sm:$0xf]
      %v293 = vld [vmem:[%s280 + $0x8] sm:$0xf]
      %v294 = vld [vmem:[%s280 + $0xc] sm:$0xf]
      %v295 = vld [vmem:[%s280 + $0x10] sm:$0xf]
      %v296 = vld [vmem:[%s280 + $0x14] sm:$0xf]
      %v297 = vld [vmem:[%s280 + $0x18] sm:$0xf]
      %v298 = vld [vmem:[%s280 + $0x1c] sm:$0xf]
      %v299 = vld [vmem:[%s280 + $0x20] sm:$0xf]
      %v300 = vld [vmem:[%s280 + $0x24] sm:$0xf]
      %v301 = vld [vmem:[%s280 + $0x28] sm:$0xf]
      %v302 = vld [vmem:[%s280 + $0x2c] sm:$0xf]
      %v303 = vld [vmem:[%s280 + $0x30] sm:$0xf]
      %v304 = vld [vmem:[%s280 + $0x34] sm:$0xf]
      %v305 = vld [vmem:[%s280 + $0x38] sm:$0xf]
      %v306 = vld [vmem:[%s280 + $0x3c] sm:$0xf]
      %v307 = vld [vmem:[%s280 + $0x40] sm:$0xf]
      %v308 = vld [vmem:[%s280 + $0x44] sm:$0xf]
      %v309 = vld [vmem:[%s280 + $0x48] sm:$0xf]
      %v310 = vld [vmem:[%s280 + $0x4c] sm:$0xf]
      %v311 = vld [vmem:[%s280 + $0x50] sm:$0xf]
      %v312 = vld [vmem:[%s280 + $0x54] sm:$0xf]
      %v313 = vld [vmem:[%s280 + $0x58] sm:$0xf]
      %v314 = vld [vmem:[%s280 + $0x5c] sm:$0xf]
      %v315 = vld [vmem:[%s280 + $0x60] sm:$0xf]
      %v316 = vld [vmem:[%s280 + $0x64] sm:$0xf]
      %v317 = vld [vmem:[%s280 + $0x68] sm:$0xf]
      %v318 = vld [vmem:[%s280 + $0x6c] sm:$0xf]
      %v319 = vld [vmem:[%s280 + $0x70] sm:$0xf]
      %v320 = vld [vmem:[%s280 + $0x74] sm:$0xf]
      %v321 = vld [vmem:[%s280 + $0x78] sm:$0xf]
      %v322 = vld [vmem:[%s280 + $0x7c] sm:$0xf]
      %v323 = vunpack.c.l.bf16 %v291
      %v324 = vunpack.c.l.bf16 %v292
      %v325 = vunpack.c.l.bf16 %v293
      %v326 = vunpack.c.l.bf16 %v294
      %v327 = vunpack.c.l.bf16 %v295
      %v328 = vunpack.c.l.bf16 %v296
      %v329 = vunpack.c.l.bf16 %v297
      %v330 = vunpack.c.l.bf16 %v298
      %v331 = vunpack.c.l.bf16 %v299
      %v332 = vunpack.c.l.bf16 %v300
      %v333 = vunpack.c.l.bf16 %v301
      %v334 = vunpack.c.l.bf16 %v302
      %v335 = vunpack.c.l.bf16 %v303
      %v336 = vunpack.c.l.bf16 %v304
      %v337 = vunpack.c.l.bf16 %v305
      %v338 = vunpack.c.l.bf16 %v306
      %v339 = vunpack.c.l.bf16 %v307
      %v340 = vunpack.c.l.bf16 %v308
      %v341 = vunpack.c.l.bf16 %v309
      %v342 = vunpack.c.l.bf16 %v310
      %v343 = vunpack.c.l.bf16 %v311
      %v344 = vunpack.c.l.bf16 %v312
      %v345 = vunpack.c.l.bf16 %v313
      %v346 = vunpack.c.l.bf16 %v314
      %v347 = vunpack.c.l.bf16 %v315
      %v348 = vunpack.c.l.bf16 %v316
      %v349 = vunpack.c.l.bf16 %v317
      %v350 = vunpack.c.l.bf16 %v318
      %v351 = vunpack.c.l.bf16 %v319
      %v352 = vunpack.c.l.bf16 %v320
      %v353 = vunpack.c.l.bf16 %v321
      %v354 = vunpack.c.l.bf16 %v322
      %v355 = vld [vmem:[%s1] sm:$0x1]
      %v357 = vlaneseq
      %v358 = vshrl.u32 %v357, 7
      %v359 = vsub.s32 0, %v358
      %v360 = vrot.slane %v355, %v359
      %v362 = vmul.f32 %v323, %v360
      %v363 = vmul.f32 %v324, %v360
      %v364 = vmul.f32 %v325, %v360
      %v365 = vmul.f32 %v326, %v360
      %v366 = vmul.f32 %v327, %v360
      %v367 = vmul.f32 %v328, %v360
      %v368 = vmul.f32 %v329, %v360
      %v369 = vmul.f32 %v330, %v360
      %v370 = vmul.f32 %v331, %v360
      %v371 = vmul.f32 %v332, %v360
      %v372 = vmul.f32 %v333, %v360
      %v373 = vmul.f32 %v334, %v360
      %v374 = vmul.f32 %v335, %v360
      %v375 = vmul.f32 %v336, %v360
      %v376 = vmul.f32 %v337, %v360
      %v377 = vmul.f32 %v338, %v360
      %v378 = vmul.f32 %v339, %v360
      %v379 = vmul.f32 %v340, %v360
      %v380 = vmul.f32 %v341, %v360
      %v381 = vmul.f32 %v342, %v360
      %v382 = vmul.f32 %v343, %v360
      %v383 = vmul.f32 %v344, %v360
      %v384 = vmul.f32 %v345, %v360
      %v385 = vmul.f32 %v346, %v360
      %v386 = vmul.f32 %v347, %v360
      %v387 = vmul.f32 %v348, %v360
      %v388 = vmul.f32 %v349, %v360
      %v389 = vmul.f32 %v350, %v360
      %v390 = vmul.f32 %v351, %v360
      %v391 = vmul.f32 %v352, %v360
      %v392 = vmul.f32 %v353, %v360
      %v393 = vmul.f32 %v354, %v360
      %v394 = vld [vmem:[%s2] sm:$0x1]
      %v396 = vlaneseq
      %v397 = vshrl.u32 %v396, 7
      %v398 = vsub.s32 0, %v397
      %v399 = vrot.slane %v394, %v398
      %v401 = vadd.f32 %v362, %v399
      %v402 = vadd.f32 %v363, %v399
      %v403 = vadd.f32 %v364, %v399
      %v404 = vadd.f32 %v365, %v399
      %v405 = vadd.f32 %v366, %v399
      %v406 = vadd.f32 %v367, %v399
      %v407 = vadd.f32 %v368, %v399
      %v408 = vadd.f32 %v369, %v399
      %v409 = vadd.f32 %v370, %v399
      %v410 = vadd.f32 %v371, %v399
      %v411 = vadd.f32 %v372, %v399
      %v412 = vadd.f32 %v373, %v399
      %v413 = vadd.f32 %v374, %v399
      %v414 = vadd.f32 %v375, %v399
      %v415 = vadd.f32 %v376, %v399
      %v416 = vadd.f32 %v377, %v399
      %v417 = vadd.f32 %v378, %v399
      %v418 = vadd.f32 %v379, %v399
      %v419 = vadd.f32 %v380, %v399
      %v420 = vadd.f32 %v381, %v399
      %v421 = vadd.f32 %v382, %v399
      %v422 = vadd.f32 %v383, %v399
      %v423 = vadd.f32 %v384, %v399
      %v424 = vadd.f32 %v385, %v399
      %v425 = vadd.f32 %v386, %v399
      %v426 = vadd.f32 %v387, %v399
      %v427 = vadd.f32 %v388, %v399
      %v428 = vadd.f32 %v389, %v399
      %v429 = vadd.f32 %v390, %v399
      %v430 = vadd.f32 %v391, %v399
      %v431 = vadd.f32 %v392, %v399
      %v432 = vadd.f32 %v393, %v399
      %v433 = vmax.f32 %v401, 0.0
      %v434 = vmax.f32 %v402, 0.0
      %v435 = vmax.f32 %v403, 0.0
      %v436 = vmax.f32 %v404, 0.0
      %v437 = vmax.f32 %v405, 0.0
      %v438 = vmax.f32 %v406, 0.0
      %v439 = vmax.f32 %v407, 0.0
      %v440 = vmax.f32 %v408, 0.0
      %v441 = vmax.f32 %v409, 0.0
      %v442 = vmax.f32 %v410, 0.0
      %v443 = vmax.f32 %v411, 0.0
      %v444 = vmax.f32 %v412, 0.0
      %v445 = vmax.f32 %v413, 0.0
      %v446 = vmax.f32 %v414, 0.0
      %v447 = vmax.f32 %v415, 0.0
      %v448 = vmax.f32 %v416, 0.0
      %v449 = vmax.f32 %v417, 0.0
      %v450 = vmax.f32 %v418, 0.0
      %v451 = vmax.f32 %v419, 0.0
      %v452 = vmax.f32 %v420, 0.0
      %v453 = vmax.f32 %v421, 0.0
      %v454 = vmax.f32 %v422, 0.0
      %v455 = vmax.f32 %v423, 0.0
      %v456 = vmax.f32 %v424, 0.0
      %v457 = vmax.f32 %v425, 0.0
      %v458 = vmax.f32 %v426, 0.0
      %v459 = vmax.f32 %v427, 0.0
      %v460 = vmax.f32 %v428, 0.0
      %v461 = vmax.f32 %v429, 0.0
      %v462 = vmax.f32 %v430, 0.0
      %v463 = vmax.f32 %v431, 0.0
      %v464 = vmax.f32 %v432, 0.0
      %vm465 = vcmask 31744
      %466 = vst.msk [vmem:[#allocation2] sm:$0xff] %vm465, 0.0
      %467 = vst.msk [vmem:[#allocation2 + $0x8] sm:$0xff] %vm465, 0.0
      %468 = vst.msk [vmem:[#allocation2 + $0x10] sm:$0xff] %vm465, 0.0
      %469 = vst.msk [vmem:[#allocation2 + $0x118] sm:$0xff] %vm465, 0.0
      %470 = vst.msk [vmem:[#allocation2 + $0x120] sm:$0xff] %vm465, 0.0
      %471 = vst.msk [vmem:[#allocation2 + $0x128] sm:$0xff] %vm465, 0.0
      %472 = vst.msk [vmem:[#allocation2 + $0x18] sm:$0xff] %vm465, %v433
      %473 = vst.msk [vmem:[#allocation2 + $0x20] sm:$0xff] %vm465, %v434
      %474 = vst.msk [vmem:[#allocation2 + $0x28] sm:$0xff] %vm465, %v435
      %475 = vst.msk [vmem:[#allocation2 + $0x30] sm:$0xff] %vm465, %v436
      %476 = vst.msk [vmem:[#allocation2 + $0x38] sm:$0xff] %vm465, %v437
      %477 = vst.msk [vmem:[#allocation2 + $0x40] sm:$0xff] %vm465, %v438
      %478 = vst.msk [vmem:[#allocation2 + $0x48] sm:$0xff] %vm465, %v439
      %479 = vst.msk [vmem:[#allocation2 + $0x50] sm:$0xff] %vm465, %v440
      %480 = vst.msk [vmem:[#allocation2 + $0x58] sm:$0xff] %vm465, %v441
      %481 = vst.msk [vmem:[#allocation2 + $0x60] sm:$0xff] %vm465, %v442
      %482 = vst.msk [vmem:[#allocation2 + $0x68] sm:$0xff] %vm465, %v443
      %483 = vst.msk [vmem:[#allocation2 + $0x70] sm:$0xff] %vm465, %v444
      %484 = vst.msk [vmem:[#allocation2 + $0x78] sm:$0xff] %vm465, %v445
      %485 = vst.msk [vmem:[#allocation2 + $0x80] sm:$0xff] %vm465, %v446
      %486 = vst.msk [vmem:[#allocation2 + $0x88] sm:$0xff] %vm465, %v447
      %487 = vst.msk [vmem:[#allocation2 + $0x90] sm:$0xff] %vm465, %v448
      %488 = vst.msk [vmem:[#allocation2 + $0x98] sm:$0xff] %vm465, %v449
      %489 = vst.msk [vmem:[#allocation2 + $0xa0] sm:$0xff] %vm465, %v450
      %490 = vst.msk [vmem:[#allocation2 + $0xa8] sm:$0xff] %vm465, %v451
      %491 = vst.msk [vmem:[#allocation2 + $0xb0] sm:$0xff] %vm465, %v452
      %492 = vst.msk [vmem:[#allocation2 + $0xb8] sm:$0xff] %vm465, %v453
      %493 = vst.msk [vmem:[#allocation2 + $0xc0] sm:$0xff] %vm465, %v454
      %494 = vst.msk [vmem:[#allocation2 + $0xc8] sm:$0xff] %vm465, %v455
      %495 = vst.msk [vmem:[#allocation2 + $0xd0] sm:$0xff] %vm465, %v456
      %496 = vst.msk [vmem:[#allocation2 + $0xd8] sm:$0xff] %vm465, %v457
      %497 = vst.msk [vmem:[#allocation2 + $0xe0] sm:$0xff] %vm465, %v458
      %498 = vst.msk [vmem:[#allocation2 + $0xe8] sm:$0xff] %vm465, %v459
      %499 = vst.msk [vmem:[#allocation2 + $0xf0] sm:$0xff] %vm465, %v460
      %500 = vst.msk [vmem:[#allocation2 + $0xf8] sm:$0xff] %vm465, %v461
      %501 = vst.msk [vmem:[#allocation2 + $0x100] sm:$0xff] %vm465, %v462
      %502 = vst.msk [vmem:[#allocation2 + $0x108] sm:$0xff] %vm465, %v463
      %503 = vst.msk [vmem:[#allocation2 + $0x110] sm:$0xff] %vm465, %v464
      %v504 = vld [vmem:[#allocation2 + $0x7] sm:$0xff]
      %v505 = vld [vmem:[#allocation2 + $0xf] sm:$0xff]
      %v506 = vld [vmem:[#allocation2 + $0x17] sm:$0xff]
      %v507 = vld [vmem:[#allocation2 + $0x1f] sm:$0xff]
      %v508 = vld [vmem:[#allocation2 + $0x27] sm:$0xff]
      %v509 = vld [vmem:[#allocation2 + $0x2f] sm:$0xff]
      %v510 = vld [vmem:[#allocation2 + $0x37] sm:$0xff]
      %v511 = vld [vmem:[#allocation2 + $0x3f] sm:$0xff]
      %v512 = vld [vmem:[#allocation2 + $0x47] sm:$0xff]
      %v513 = vld [vmem:[#allocation2 + $0x4f] sm:$0xff]
      %v514 = vld [vmem:[#allocation2 + $0x57] sm:$0xff]
      %v515 = vld [vmem:[#allocation2 + $0x5f] sm:$0xff]
      %v516 = vld [vmem:[#allocation2 + $0x67] sm:$0xff]
      %v517 = vld [vmem:[#allocation2 + $0x6f] sm:$0xff]
      %v518 = vld [vmem:[#allocation2 + $0x77] sm:$0xff]
      %v519 = vld [vmem:[#allocation2 + $0x7f] sm:$0xff]
      %v520 = vld [vmem:[#allocation2 + $0x87] sm:$0xff]
      %v521 = vld [vmem:[#allocation2 + $0x8f] sm:$0xff]
      %v522 = vld [vmem:[#allocation2 + $0x97] sm:$0xff]
      %v523 = vld [vmem:[#allocation2 + $0x9f] sm:$0xff]
      %v524 = vld [vmem:[#allocation2 + $0xa7] sm:$0xff]
      %v525 = vld [vmem:[#allocation2 + $0xaf] sm:$0xff]
      %v526 = vld [vmem:[#allocation2 + $0xb7] sm:$0xff]
      %v527 = vld [vmem:[#allocation2 + $0xbf] sm:$0xff]
      %v528 = vld [vmem:[#allocation2 + $0xc7] sm:$0xff]
      %v529 = vld [vmem:[#allocation2 + $0xcf] sm:$0xff]
      %v530 = vld [vmem:[#allocation2 + $0xd7] sm:$0xff]
      %v531 = vld [vmem:[#allocation2 + $0xdf] sm:$0xff]
      %v532 = vld [vmem:[#allocation2 + $0xe7] sm:$0xff]
      %v533 = vld [vmem:[#allocation2 + $0xef] sm:$0xff]
      %v534 = vld [vmem:[#allocation2 + $0xf7] sm:$0xff]
      %v535 = vld [vmem:[#allocation2 + $0xff] sm:$0xff]
      %v536 = vld [vmem:[%s4] sm:$0xff]
      %v537 = vld [vmem:[%s4 + $0x8] sm:$0xff]
      %v538 = vld [vmem:[%s4 + $0x10] sm:$0xff]
      %v539 = vld [vmem:[%s4 + $0x18] sm:$0xff]
      %v540 = vld [vmem:[%s4 + $0x20] sm:$0xff]
      %v541 = vld [vmem:[%s4 + $0x28] sm:$0xff]
      %v542 = vld [vmem:[%s4 + $0x30] sm:$0xff]
      %v543 = vld [vmem:[%s4 + $0x38] sm:$0xff]
      %v544 = vld [vmem:[%s4 + $0x40] sm:$0xff]
      %v545 = vld [vmem:[%s4 + $0x48] sm:$0xff]
      %v546 = vld [vmem:[%s4 + $0x50] sm:$0xff]
      %v547 = vld [vmem:[%s4 + $0x58] sm:$0xff]
      %v548 = vld [vmem:[%s4 + $0x60] sm:$0xff]
      %v549 = vld [vmem:[%s4 + $0x68] sm:$0xff]
      %v550 = vld [vmem:[%s4 + $0x70] sm:$0xff]
      %v551 = vld [vmem:[%s4 + $0x78] sm:$0xff]
      %v552 = vld [vmem:[%s4 + $0x80] sm:$0xff]
      %v553 = vld [vmem:[%s4 + $0x88] sm:$0xff]
      %v554 = vld [vmem:[%s4 + $0x90] sm:$0xff]
      %v555 = vld [vmem:[%s4 + $0x98] sm:$0xff]
      %v556 = vld [vmem:[%s4 + $0xa0] sm:$0xff]
      %v557 = vld [vmem:[%s4 + $0xa8] sm:$0xff]
      %v558 = vld [vmem:[%s4 + $0xb0] sm:$0xff]
      %v559 = vld [vmem:[%s4 + $0xb8] sm:$0xff]
      %v560 = vld [vmem:[%s4 + $0xc0] sm:$0xff]
      %v561 = vld [vmem:[%s4 + $0xc8] sm:$0xff]
      %v562 = vld [vmem:[%s4 + $0xd0] sm:$0xff]
      %v563 = vld [vmem:[%s4 + $0xd8] sm:$0xff]
      %v564 = vld [vmem:[%s4 + $0xe0] sm:$0xff]
      %v565 = vld [vmem:[%s4 + $0xe8] sm:$0xff]
      %v566 = vld [vmem:[%s4 + $0xf0] sm:$0xff]
      %v567 = vld [vmem:[%s4 + $0xf8] sm:$0xff]
      %569 = vset.pattern.permute.xlu0 0
      %570 = vperm.xlu0 %569, %v536
      %v571 = vpop.permute.xlu0 %570
      %574 = vset.pattern.permute.xlu0 0
      %575 = vperm.xlu0 %574, %v537
      %v576 = vpop.permute.xlu0 %575
      %579 = vset.pattern.permute.xlu0 0
      %580 = vperm.xlu0 %579, %v538
      %v581 = vpop.permute.xlu0 %580
      %584 = vset.pattern.permute.xlu0 0
      %585 = vperm.xlu0 %584, %v539
      %v586 = vpop.permute.xlu0 %585
      %589 = vset.pattern.permute.xlu0 0
      %590 = vperm.xlu0 %589, %v540
      %v591 = vpop.permute.xlu0 %590
      %594 = vset.pattern.permute.xlu0 0
      %595 = vperm.xlu0 %594, %v541
      %v596 = vpop.permute.xlu0 %595
      %599 = vset.pattern.permute.xlu0 0
      %600 = vperm.xlu0 %599, %v542
      %v601 = vpop.permute.xlu0 %600
      %604 = vset.pattern.permute.xlu0 0
      %605 = vperm.xlu0 %604, %v543
      %v606 = vpop.permute.xlu0 %605
      %609 = vset.pattern.permute.xlu0 0
      %610 = vperm.xlu0 %609, %v544
      %v611 = vpop.permute.xlu0 %610
      %614 = vset.pattern.permute.xlu0 0
      %615 = vperm.xlu0 %614, %v545
      %v616 = vpop.permute.xlu0 %615
      %619 = vset.pattern.permute.xlu0 0
      %620 = vperm.xlu0 %619, %v546
      %v621 = vpop.permute.xlu0 %620
      %624 = vset.pattern.permute.xlu0 0
      %625 = vperm.xlu0 %624, %v547
      %v626 = vpop.permute.xlu0 %625
      %629 = vset.pattern.permute.xlu0 0
      %630 = vperm.xlu0 %629, %v548
      %v631 = vpop.permute.xlu0 %630
      %634 = vset.pattern.permute.xlu0 0
      %635 = vperm.xlu0 %634, %v549
      %v636 = vpop.permute.xlu0 %635
      %639 = vset.pattern.permute.xlu0 0
      %640 = vperm.xlu0 %639, %v550
      %v641 = vpop.permute.xlu0 %640
      %644 = vset.pattern.permute.xlu0 0
      %645 = vperm.xlu0 %644, %v551
      %v646 = vpop.permute.xlu0 %645
      %649 = vset.pattern.permute.xlu0 0
      %650 = vperm.xlu0 %649, %v552
      %v651 = vpop.permute.xlu0 %650
      %654 = vset.pattern.permute.xlu0 0
      %655 = vperm.xlu0 %654, %v553
      %v656 = vpop.permute.xlu0 %655
      %659 = vset.pattern.permute.xlu0 0
      %660 = vperm.xlu0 %659, %v554
      %v661 = vpop.permute.xlu0 %660
      %664 = vset.pattern.permute.xlu0 0
      %665 = vperm.xlu0 %664, %v555
      %v666 = vpop.permute.xlu0 %665
      %669 = vset.pattern.permute.xlu0 0
      %670 = vperm.xlu0 %669, %v556
      %v671 = vpop.permute.xlu0 %670
      %674 = vset.pattern.permute.xlu0 0
      %675 = vperm.xlu0 %674, %v557
      %v676 = vpop.permute.xlu0 %675
      %679 = vset.pattern.permute.xlu0 0
      %680 = vperm.xlu0 %679, %v558
      %v681 = vpop.permute.xlu0 %680
      %684 = vset.pattern.permute.xlu0 0
      %685 = vperm.xlu0 %684, %v559
      %v686 = vpop.permute.xlu0 %685
      %689 = vset.pattern.permute.xlu0 0
      %690 = vperm.xlu0 %689, %v560
      %v691 = vpop.permute.xlu0 %690
      %694 = vset.pattern.permute.xlu0 0
      %695 = vperm.xlu0 %694, %v561
      %v696 = vpop.permute.xlu0 %695
      %699 = vset.pattern.permute.xlu0 0
      %700 = vperm.xlu0 %699, %v562
      %v701 = vpop.permute.xlu0 %700
      %704 = vset.pattern.permute.xlu0 0
      %705 = vperm.xlu0 %704, %v563
      %v706 = vpop.permute.xlu0 %705
      %709 = vset.pattern.permute.xlu0 0
      %710 = vperm.xlu0 %709, %v564
      %v711 = vpop.permute.xlu0 %710
      %714 = vset.pattern.permute.xlu0 0
      %715 = vperm.xlu0 %714, %v565
      %v716 = vpop.permute.xlu0 %715
      %719 = vset.pattern.permute.xlu0 0
      %720 = vperm.xlu0 %719, %v566
      %v721 = vpop.permute.xlu0 %720
      %724 = vset.pattern.permute.xlu0 0
      %725 = vperm.xlu0 %724, %v567
      %v726 = vpop.permute.xlu0 %725
      %v728 = vmul.f32 %v504, %v571
      %v729 = vmul.f32 %v505, %v576
      %v730 = vmul.f32 %v506, %v581
      %v731 = vmul.f32 %v507, %v586
      %v732 = vmul.f32 %v508, %v591
      %v733 = vmul.f32 %v509, %v596
      %v734 = vmul.f32 %v510, %v601
      %v735 = vmul.f32 %v511, %v606
      %v736 = vmul.f32 %v512, %v611
      %v737 = vmul.f32 %v513, %v616
      %v738 = vmul.f32 %v514, %v621
      %v739 = vmul.f32 %v515, %v626
      %v740 = vmul.f32 %v516, %v631
      %v741 = vmul.f32 %v517, %v636
      %v742 = vmul.f32 %v518, %v641
      %v743 = vmul.f32 %v519, %v646
      %v744 = vmul.f32 %v520, %v651
      %v745 = vmul.f32 %v521, %v656
      %v746 = vmul.f32 %v522, %v661
      %v747 = vmul.f32 %v523, %v666
      %v748 = vmul.f32 %v524, %v671
      %v749 = vmul.f32 %v525, %v676
      %v750 = vmul.f32 %v526, %v681
      %v751 = vmul.f32 %v527, %v686
      %v752 = vmul.f32 %v528, %v691
      %v753 = vmul.f32 %v529, %v696
      %v754 = vmul.f32 %v530, %v701
      %v755 = vmul.f32 %v531, %v706
      %v756 = vmul.f32 %v532, %v711
      %v757 = vmul.f32 %v533, %v716
      %v758 = vmul.f32 %v534, %v721
      %v759 = vmul.f32 %v535, %v726
      %v760 = vpack.c.bf16 %v729, %v728
      %v761 = vpack.c.bf16 %v731, %v730
      %v762 = vpack.c.bf16 %v733, %v732
      %v763 = vpack.c.bf16 %v735, %v734
      %v764 = vpack.c.bf16 %v737, %v736
      %v765 = vpack.c.bf16 %v739, %v738
      %v766 = vpack.c.bf16 %v741, %v740
      %v767 = vpack.c.bf16 %v743, %v742
      %v768 = vpack.c.bf16 %v745, %v744
      %v769 = vpack.c.bf16 %v747, %v746
      %v770 = vpack.c.bf16 %v749, %v748
      %v771 = vpack.c.bf16 %v751, %v750
      %v772 = vpack.c.bf16 %v753, %v752
      %v773 = vpack.c.bf16 %v755, %v754
      %v774 = vpack.c.bf16 %v757, %v756
      %v775 = vpack.c.bf16 %v759, %v758
      %v776 = vld [vmem:[%s3] sm:$0x3]
      %v777 = vld [vmem:[#allocation2 + $0x8] sm:$0xff]
      %v778 = vld [vmem:[#allocation2 + $0x10] sm:$0xff]
      %v779 = vld [vmem:[#allocation2 + $0x18] sm:$0xff]
      %v780 = vld [vmem:[#allocation2 + $0x20] sm:$0xff]
      %v781 = vld [vmem:[#allocation2 + $0x28] sm:$0xff]
      %v782 = vld [vmem:[#allocation2 + $0x30] sm:$0xff]
      %v783 = vld [vmem:[#allocation2 + $0x38] sm:$0xff]
      %v784 = vld [vmem:[#allocation2 + $0x40] sm:$0xff]
      %v785 = vld [vmem:[#allocation2 + $0x48] sm:$0xff]
      %v786 = vld [vmem:[#allocation2 + $0x50] sm:$0xff]
      %v787 = vld [vmem:[#allocation2 + $0x58] sm:$0xff]
      %v788 = vld [vmem:[#allocation2 + $0x60] sm:$0xff]
      %v789 = vld [vmem:[#allocation2 + $0x68] sm:$0xff]
      %v790 = vld [vmem:[#allocation2 + $0x70] sm:$0xff]
      %v791 = vld [vmem:[#allocation2 + $0x78] sm:$0xff]
      %v792 = vld [vmem:[#allocation2 + $0x80] sm:$0xff]
      %v793 = vld [vmem:[#allocation2 + $0x88] sm:$0xff]
      %v794 = vld [vmem:[#allocation2 + $0x90] sm:$0xff]
      %v795 = vld [vmem:[#allocation2 + $0x98] sm:$0xff]
      %v796 = vld [vmem:[#allocation2 + $0xa0] sm:$0xff]
      %v797 = vld [vmem:[#allocation2 + $0xa8] sm:$0xff]
      %v798 = vld [vmem:[#allocation2 + $0xb0] sm:$0xff]
      %v799 = vld [vmem:[#allocation2 + $0xb8] sm:$0xff]
      %v800 = vld [vmem:[#allocation2 + $0xc0] sm:$0xff]
      %v801 = vld [vmem:[#allocation2 + $0xc8] sm:$0xff]
      %v802 = vld [vmem:[#allocation2 + $0xd0] sm:$0xff]
      %v803 = vld [vmem:[#allocation2 + $0xd8] sm:$0xff]
      %v804 = vld [vmem:[#allocation2 + $0xe0] sm:$0xff]
      %v805 = vld [vmem:[#allocation2 + $0xe8] sm:$0xff]
      %v806 = vld [vmem:[#allocation2 + $0xf0] sm:$0xff]
      %v807 = vld [vmem:[#allocation2 + $0xf8] sm:$0xff]
      %v808 = vld [vmem:[#allocation2 + $0x100] sm:$0xff]
      %v809 = vpack.c.bf16 %v778, %v777
      %v810 = vpack.c.bf16 %v780, %v779
      %v811 = vpack.c.bf16 %v782, %v781
      %v812 = vpack.c.bf16 %v784, %v783
      %v813 = vpack.c.bf16 %v786, %v785
      %v814 = vpack.c.bf16 %v788, %v787
      %v815 = vpack.c.bf16 %v790, %v789
      %v816 = vpack.c.bf16 %v792, %v791
      %v817 = vpack.c.bf16 %v794, %v793
      %v818 = vpack.c.bf16 %v796, %v795
      %v819 = vpack.c.bf16 %v798, %v797
      %v820 = vpack.c.bf16 %v800, %v799
      %v821 = vpack.c.bf16 %v802, %v801
      %v822 = vpack.c.bf16 %v804, %v803
      %v823 = vpack.c.bf16 %v806, %v805
      %v824 = vpack.c.bf16 %v808, %v807
      %s825 = scalar_lea.vmem %s3, 2
      %v826 = vld [vmem:[%s825] sm:$0x3]
      %v828 = vsel %vm465, %v809, 0
      %v831 = vsel %vm465, %v810, 0
      %v834 = vsel %vm465, %v811, 0
      %v837 = vsel %vm465, %v812, 0
      %v840 = vsel %vm465, %v813, 0
      %v843 = vsel %vm465, %v814, 0
      %v846 = vsel %vm465, %v815, 0
      %v849 = vsel %vm465, %v816, 0
      %v852 = vsel %vm465, %v817, 0
      %v855 = vsel %vm465, %v818, 0
      %v858 = vsel %vm465, %v819, 0
      %v861 = vsel %vm465, %v820, 0
      %v864 = vsel %vm465, %v821, 0
      %v867 = vsel %vm465, %v822, 0
      %v870 = vsel %vm465, %v823, 0
      %v873 = vsel %vm465, %v824, 0
      %vm875 = vcmask 1041408
      %v877 = vsel %vm875, %v826, 0
      %879 = vmatprep.subr.bf16.mxu0 0
      %880 = vmatpush1.bf16.msra.mxu0 %v877
      %881 = vmatprep.subr.bf16.mxu0 0
      %882 = vmatpush1.bf16.msra.mxu0 0
      %883 = vmatprep.subr.bf16.mxu0 0
      %884 = vmatpush1.bf16.msra.mxu0 0
      %885 = vmatprep.subr.bf16.mxu0 0
      %886 = vmatpush1.bf16.msra.mxu0 0
      %887 = vmatprep.subr.bf16.mxu0 0
      %888 = vmatpush1.bf16.msra.mxu0 0
      %889 = vmatprep.subr.bf16.mxu0 0
      %890 = vmatpush1.bf16.msra.mxu0 0
      %891 = vmatprep.subr.bf16.mxu0 0
      %892 = vmatpush1.bf16.msra.mxu0 0
      %893 = vmatprep.subr.bf16.mxu0 0
      %894 = vmatpush1.bf16.msra.mxu0 0
      %895 = vmatprep.subr.bf16.mxu0 0
      %896 = vmatpush1.bf16.msra.mxu0 0
      %897 = vmatprep.subr.bf16.mxu0 0
      %898 = vmatpush1.bf16.msra.mxu0 0
      %899 = vmatprep.subr.bf16.mxu0 0
      %900 = vmatpush1.bf16.msra.mxu0 0
      %901 = vmatprep.subr.bf16.mxu0 0
      %902 = vmatpush1.bf16.msra.mxu0 0
      %903 = vmatprep.subr.bf16.mxu0 0
      %904 = vmatpush1.bf16.msra.mxu0 0
      %905 = vmatprep.subr.bf16.mxu0 0
      %906 = vmatpush1.bf16.msra.mxu0 0
      %907 = vmatprep.subr.bf16.mxu0 0
      %908 = vmatpush1.bf16.msra.mxu0 0
      %909 = vmatprep.subr.bf16.mxu0 0
      %910 = vmatpush1.bf16.msra.mxu0 0
      %911 = vmatprep.mubr.bf16.mxu0 0
      %912 = vmatmul.mubr.bf16.gmra.mrb[0].mxu0 %v828
      %v913 = vpop.f32.mrb[0].mxu0
      %v914 = vadd.f32 0.0, %v913
      %v915 = vpop.f32.mrb[0].mxu0
      %v916 = vpop.f32.mrb[0].mxu0
      %v917 = vadd.f32 0.0, %v916
      %v918 = vpop.f32.mrb[0].mxu0
      %919 = vmatprep.mubr.bf16.mxu0 0
      %920 = vmatmul.mubr.bf16.gmra.mrb[0].mxu0 %v831
      %v921 = vpop.f32.mrb[0].mxu0
      %v922 = vadd.f32 0.0, %v921
      %v923 = vpop.f32.mrb[0].mxu0
      %v924 = vpop.f32.mrb[0].mxu0
      %v925 = vadd.f32 0.0, %v924
      %v926 = vpop.f32.mrb[0].mxu0
      %927 = vmatprep.mubr.bf16.mxu0 0
      %928 = vmatmul.mubr.bf16.gmra.mrb[0].mxu0 %v834
      %v929 = vpop.f32.mrb[0].mxu0
      %v930 = vadd.f32 0.0, %v929
      %v931 = vpop.f32.mrb[0].mxu0
      %v932 = vpop.f32.mrb[0].mxu0
      %v933 = vadd.f32 0.0, %v932
      %v934 = vpop.f32.mrb[0].mxu0
      %935 = vmatprep.mubr.bf16.mxu0 0
      %936 = vmatmul.mubr.bf16.gmra.mrb[0].mxu0 %v837
      %v937 = vpop.f32.mrb[0].mxu0
      %v938 = vadd.f32 0.0, %v937
      %v939 = vpop.f32.mrb[0].mxu0
      %v940 = vpop.f32.mrb[0].mxu0
      %v941 = vadd.f32 0.0, %v940
      %v942 = vpop.f32.mrb[0].mxu0
      %943 = vmatprep.mubr.bf16.mxu0 0
      %944 = vmatmul.mubr.bf16.gmra.mrb[0].mxu0 %v840
      %v945 = vpop.f32.mrb[0].mxu0
      %v946 = vadd.f32 0.0, %v945
      %v947 = vpop.f32.mrb[0].mxu0
      %v948 = vpop.f32.mrb[0].mxu0
      %v949 = vadd.f32 0.0, %v948
      %v950 = vpop.f32.mrb[0].mxu0
      %951 = vmatprep.mubr.bf16.mxu0 0
      %952 = vmatmul.mubr.bf16.gmra.mrb[0].mxu0 %v843
      %v953 = vpop.f32.mrb[0].mxu0
      %v954 = vadd.f32 0.0, %v953
      %v955 = vpop.f32.mrb[0].mxu0
      %v956 = vpop.f32.mrb[0].mxu0
      %v957 = vadd.f32 0.0, %v956
      %v958 = vpop.f32.mrb[0].mxu0
      %959 = vmatprep.mubr.bf16.mxu0 0
      %960 = vmatmul.mubr.bf16.gmra.mrb[0].mxu0 %v846
      %v961 = vpop.f32.mrb[0].mxu0
      %v962 = vadd.f32 0.0, %v961
      %v963 = vpop.f32.mrb[0].mxu0
      %v964 = vpop.f32.mrb[0].mxu0
      %v965 = vadd.f32 0.0, %v964
      %v966 = vpop.f32.mrb[0].mxu0
      %967 = vmatprep.mubr.bf16.mxu0 0
      %968 = vmatmul.mubr.bf16.gmra.mrb[0].mxu0 %v849
      %v969 = vpop.f32.mrb[0].mxu0
      %v970 = vadd.f32 0.0, %v969
      %v971 = vpop.f32.mrb[0].mxu0
      %v972 = vpop.f32.mrb[0].mxu0
      %v973 = vadd.f32 0.0, %v972
      %v974 = vpop.f32.mrb[0].mxu0
      %975 = vmatprep.mubr.bf16.mxu0 0
      %976 = vmatmul.mubr.bf16.gmra.mrb[0].mxu0 %v852
      %v977 = vpop.f32.mrb[0].mxu0
      %v978 = vadd.f32 0.0, %v977
      %v979 = vpop.f32.mrb[0].mxu0
      %v980 = vpop.f32.mrb[0].mxu0
      %v981 = vadd.f32 0.0, %v980
      %v982 = vpop.f32.mrb[0].mxu0
      %983 = vmatprep.mubr.bf16.mxu0 0
      %984 = vmatmul.mubr.bf16.gmra.mrb[0].mxu0 %v855
      %v985 = vpop.f32.mrb[0].mxu0
      %v986 = vadd.f32 0.0, %v985
      %v987 = vpop.f32.mrb[0].mxu0
      %v988 = vpop.f32.mrb[0].mxu0
      %v989 = vadd.f32 0.0, %v988
      %v990 = vpop.f32.mrb[0].mxu0
      %991 = vmatprep.mubr.bf16.mxu0 0
      %992 = vmatmul.mubr.bf16.gmra.mrb[0].mxu0 %v858
      %v993 = vpop.f32.mrb[0].mxu0
      %v994 = vadd.f32 0.0, %v993
      %v995 = vpop.f32.mrb[0].mxu0
      %v996 = vpop.f32.mrb[0].mxu0
      %v997 = vadd.f32 0.0, %v996
      %v998 = vpop.f32.mrb[0].mxu0
      %999 = vmatprep.mubr.bf16.mxu0 0
      %1000 = vmatmul.mubr.bf16.gmra.mrb[0].mxu0 %v861
      %v1001 = vpop.f32.mrb[0].mxu0
      %v1002 = vadd.f32 0.0, %v1001
      %v1003 = vpop.f32.mrb[0].mxu0
      %v1004 = vpop.f32.mrb[0].mxu0
      %v1005 = vadd.f32 0.0, %v1004
      %v1006 = vpop.f32.mrb[0].mxu0
      %1007 = vmatprep.mubr.bf16.mxu0 0
      %1008 = vmatmul.mubr.bf16.gmra.mrb[0].mxu0 %v864
      %v1009 = vpop.f32.mrb[0].mxu0
      %v1010 = vadd.f32 0.0, %v1009
      %v1011 = vpop.f32.mrb[0].mxu0
      %v1012 = vpop.f32.mrb[0].mxu0
      %v1013 = vadd.f32 0.0, %v1012
      %v1014 = vpop.f32.mrb[0].mxu0
      %1015 = vmatprep.mubr.bf16.mxu0 0
      %1016 = vmatmul.mubr.bf16.gmra.mrb[0].mxu0 %v867
      %v1017 = vpop.f32.mrb[0].mxu0
      %v1018 = vadd.f32 0.0, %v1017
      %v1019 = vpop.f32.mrb[0].mxu0
      %v1020 = vpop.f32.mrb[0].mxu0
      %v1021 = vadd.f32 0.0, %v1020
      %v1022 = vpop.f32.mrb[0].mxu0
      %1023 = vmatprep.mubr.bf16.mxu0 0
      %1024 = vmatmul.mubr.bf16.gmra.mrb[0].mxu0 %v870
      %v1025 = vpop.f32.mrb[0].mxu0
      %v1026 = vadd.f32 0.0, %v1025
      %v1027 = vpop.f32.mrb[0].mxu0
      %v1028 = vpop.f32.mrb[0].mxu0
      %v1029 = vadd.f32 0.0, %v1028
      %v1030 = vpop.f32.mrb[0].mxu0
      %1031 = vmatprep.mubr.bf16.mxu0 0
      %1032 = vmatmul.mubr.bf16.gmra.mrb[0].mxu0 %v873
      %v1033 = vpop.f32.mrb[0].mxu0
      %v1034 = vadd.f32 0.0, %v1033
      %v1035 = vpop.f32.mrb[0].mxu0
      %v1036 = vpop.f32.mrb[0].mxu0
      %v1037 = vadd.f32 0.0, %v1036
      %v1038 = vpop.f32.mrb[0].mxu0
      %1039 = vdwg.mxu0
      %v1041 = vsel %vm465, %v760, 0
      %v1044 = vsel %vm465, %v761, 0
      %v1047 = vsel %vm465, %v762, 0
      %v1050 = vsel %vm465, %v763, 0
      %v1053 = vsel %vm465, %v764, 0
      %v1056 = vsel %vm465, %v765, 0
      %v1059 = vsel %vm465, %v766, 0
      %v1062 = vsel %vm465, %v767, 0
      %v1065 = vsel %vm465, %v768, 0
      %v1068 = vsel %vm465, %v769, 0
      %v1071 = vsel %vm465, %v770, 0
      %v1074 = vsel %vm465, %v771, 0
      %v1077 = vsel %vm465, %v772, 0
      %v1080 = vsel %vm465, %v773, 0
      %v1083 = vsel %vm465, %v774, 0
      %v1086 = vsel %vm465, %v775, 0
      %v1089 = vsel %vm875, %v776, 0
      %1091 = vmatprep.subr.bf16.mxu0 0
      %1092 = vmatpush1.bf16.msra.mxu0 %v1089
      %1093 = vmatprep.subr.bf16.mxu0 0
      %1094 = vmatpush1.bf16.msra.mxu0 0
      %1095 = vmatprep.subr.bf16.mxu0 0
      %1096 = vmatpush1.bf16.msra.mxu0 0
      %1097 = vmatprep.subr.bf16.mxu0 0
      %1098 = vmatpush1.bf16.msra.mxu0 0
      %1099 = vmatprep.subr.bf16.mxu0 0
      %1100 = vmatpush1.bf16.msra.mxu0 0
      %1101 = vmatprep.subr.bf16.mxu0 0
      %1102 = vmatpush1.bf16.msra.mxu0 0
      %1103 = vmatprep.subr.bf16.mxu0 0
      %1104 = vmatpush1.bf16.msra.mxu0 0
      %1105 = vmatprep.subr.bf16.mxu0 0
      %1106 = vmatpush1.bf16.msra.mxu0 0
      %1107 = vmatprep.subr.bf16.mxu0 0
      %1108 = vmatpush1.bf16.msra.mxu0 0
      %1109 = vmatprep.subr.bf16.mxu0 0
      %1110 = vmatpush1.bf16.msra.mxu0 0
      %1111 = vmatprep.subr.bf16.mxu0 0
      %1112 = vmatpush1.bf16.msra.mxu0 0
      %1113 = vmatprep.subr.bf16.mxu0 0
      %1114 = vmatpush1.bf16.msra.mxu0 0
      %1115 = vmatprep.subr.bf16.mxu0 0
      %1116 = vmatpush1.bf16.msra.mxu0 0
      %1117 = vmatprep.subr.bf16.mxu0 0
      %1118 = vmatpush1.bf16.msra.mxu0 0
      %1119 = vmatprep.subr.bf16.mxu0 0
      %1120 = vmatpush1.bf16.msra.mxu0 0
      %1121 = vmatprep.subr.bf16.mxu0 0
      %1122 = vmatpush1.bf16.msra.mxu0 0
      %1123 = vmatprep.mubr.bf16.mxu0 0
      %1124 = vmatmul.mubr.bf16.gmra.mrb[0].mxu0 %v1041
      %v1125 = vpop.f32.mrb[0].mxu0
      %v1126 = vadd.f32 %v914, %v1125
      %v1127 = vpop.f32.mrb[0].mxu0
      %v1128 = vpop.f32.mrb[0].mxu0
      %v1129 = vadd.f32 %v917, %v1128
      %v1130 = vpop.f32.mrb[0].mxu0
      %1131 = vmatprep.mubr.bf16.mxu0 0
      %1132 = vmatmul.mubr.bf16.gmra.mrb[0].mxu0 %v1044
      %v1133 = vpop.f32.mrb[0].mxu0
      %v1134 = vadd.f32 %v922, %v1133
      %v1135 = vpop.f32.mrb[0].mxu0
      %v1136 = vpop.f32.mrb[0].mxu0
      %v1137 = vadd.f32 %v925, %v1136
      %v1138 = vpop.f32.mrb[0].mxu0
      %1139 = vmatprep.mubr.bf16.mxu0 0
      %1140 = vmatmul.mubr.bf16.gmra.mrb[0].mxu0 %v1047
      %v1141 = vpop.f32.mrb[0].mxu0
      %v1142 = vadd.f32 %v930, %v1141
      %v1143 = vpop.f32.mrb[0].mxu0
      %v1144 = vpop.f32.mrb[0].mxu0
      %v1145 = vadd.f32 %v933, %v1144
      %v1146 = vpop.f32.mrb[0].mxu0
      %1147 = vmatprep.mubr.bf16.mxu0 0
      %1148 = vmatmul.mubr.bf16.gmra.mrb[0].mxu0 %v1050
      %v1149 = vpop.f32.mrb[0].mxu0
      %v1150 = vadd.f32 %v938, %v1149
      %v1151 = vpop.f32.mrb[0].mxu0
      %v1152 = vpop.f32.mrb[0].mxu0
      %v1153 = vadd.f32 %v941, %v1152
      %v1154 = vpop.f32.mrb[0].mxu0
      %1155 = vmatprep.mubr.bf16.mxu0 0
      %1156 = vmatmul.mubr.bf16.gmra.mrb[0].mxu0 %v1053
      %v1157 = vpop.f32.mrb[0].mxu0
      %v1158 = vadd.f32 %v946, %v1157
      %v1159 = vpop.f32.mrb[0].mxu0
      %v1160 = vpop.f32.mrb[0].mxu0
      %v1161 = vadd.f32 %v949, %v1160
      %v1162 = vpop.f32.mrb[0].mxu0
      %1163 = vmatprep.mubr.bf16.mxu0 0
      %1164 = vmatmul.mubr.bf16.gmra.mrb[0].mxu0 %v1056
      %v1165 = vpop.f32.mrb[0].mxu0
      %v1166 = vadd.f32 %v954, %v1165
      %v1167 = vpop.f32.mrb[0].mxu0
      %v1168 = vpop.f32.mrb[0].mxu0
      %v1169 = vadd.f32 %v957, %v1168
      %v1170 = vpop.f32.mrb[0].mxu0
      %1171 = vmatprep.mubr.bf16.mxu0 0
      %1172 = vmatmul.mubr.bf16.gmra.mrb[0].mxu0 %v1059
      %v1173 = vpop.f32.mrb[0].mxu0
      %v1174 = vadd.f32 %v962, %v1173
      %v1175 = vpop.f32.mrb[0].mxu0
      %v1176 = vpop.f32.mrb[0].mxu0
      %v1177 = vadd.f32 %v965, %v1176
      %v1178 = vpop.f32.mrb[0].mxu0
      %1179 = vmatprep.mubr.bf16.mxu0 0
      %1180 = vmatmul.mubr.bf16.gmra.mrb[0].mxu0 %v1062
      %v1181 = vpop.f32.mrb[0].mxu0
      %v1182 = vadd.f32 %v970, %v1181
      %v1183 = vpop.f32.mrb[0].mxu0
      %v1184 = vpop.f32.mrb[0].mxu0
      %v1185 = vadd.f32 %v973, %v1184
      %v1186 = vpop.f32.mrb[0].mxu0
      %1187 = vmatprep.mubr.bf16.mxu0 0
      %1188 = vmatmul.mubr.bf16.gmra.mrb[0].mxu0 %v1065
      %v1189 = vpop.f32.mrb[0].mxu0
      %v1190 = vadd.f32 %v978, %v1189
      %v1191 = vpop.f32.mrb[0].mxu0
      %v1192 = vpop.f32.mrb[0].mxu0
      %v1193 = vadd.f32 %v981, %v1192
      %v1194 = vpop.f32.mrb[0].mxu0
      %1195 = vmatprep.mubr.bf16.mxu0 0
      %1196 = vmatmul.mubr.bf16.gmra.mrb[0].mxu0 %v1068
      %v1197 = vpop.f32.mrb[0].mxu0
      %v1198 = vadd.f32 %v986, %v1197
      %v1199 = vpop.f32.mrb[0].mxu0
      %v1200 = vpop.f32.mrb[0].mxu0
      %v1201 = vadd.f32 %v989, %v1200
      %v1202 = vpop.f32.mrb[0].mxu0
      %1203 = vmatprep.mubr.bf16.mxu0 0
      %1204 = vmatmul.mubr.bf16.gmra.mrb[0].mxu0 %v1071
      %v1205 = vpop.f32.mrb[0].mxu0
      %v1206 = vadd.f32 %v994, %v1205
      %v1207 = vpop.f32.mrb[0].mxu0
      %v1208 = vpop.f32.mrb[0].mxu0
      %v1209 = vadd.f32 %v997, %v1208
      %v1210 = vpop.f32.mrb[0].mxu0
      %1211 = vmatprep.mubr.bf16.mxu0 0
      %1212 = vmatmul.mubr.bf16.gmra.mrb[0].mxu0 %v1074
      %v1213 = vpop.f32.mrb[0].mxu0
      %v1214 = vadd.f32 %v1002, %v1213
      %v1215 = vpop.f32.mrb[0].mxu0
      %v1216 = vpop.f32.mrb[0].mxu0
      %v1217 = vadd.f32 %v1005, %v1216
      %v1218 = vpop.f32.mrb[0].mxu0
      %1219 = vmatprep.mubr.bf16.mxu0 0
      %1220 = vmatmul.mubr.bf16.gmra.mrb[0].mxu0 %v1077
      %v1221 = vpop.f32.mrb[0].mxu0
      %v1222 = vadd.f32 %v1010, %v1221
      %v1223 = vpop.f32.mrb[0].mxu0
      %v1224 = vpop.f32.mrb[0].mxu0
      %v1225 = vadd.f32 %v1013, %v1224
      %v1226 = vpop.f32.mrb[0].mxu0
      %1227 = vmatprep.mubr.bf16.mxu0 0
      %1228 = vmatmul.mubr.bf16.gmra.mrb[0].mxu0 %v1080
      %v1229 = vpop.f32.mrb[0].mxu0
      %v1230 = vadd.f32 %v1018, %v1229
      %v1231 = vpop.f32.mrb[0].mxu0
      %v1232 = vpop.f32.mrb[0].mxu0
      %v1233 = vadd.f32 %v1021, %v1232
      %v1234 = vpop.f32.mrb[0].mxu0
      %1235 = vmatprep.mubr.bf16.mxu0 0
      %1236 = vmatmul.mubr.bf16.gmra.mrb[0].mxu0 %v1083
      %v1237 = vpop.f32.mrb[0].mxu0
      %v1238 = vadd.f32 %v1026, %v1237
      %v1239 = vpop.f32.mrb[0].mxu0
      %v1240 = vpop.f32.mrb[0].mxu0
      %v1241 = vadd.f32 %v1029, %v1240
      %v1242 = vpop.f32.mrb[0].mxu0
      %1243 = vmatprep.mubr.bf16.mxu0 0
      %1244 = vmatmul.mubr.bf16.gmra.mrb[0].mxu0 %v1086
      %v1245 = vpop.f32.mrb[0].mxu0
      %v1246 = vadd.f32 %v1034, %v1245
      %v1247 = vpop.f32.mrb[0].mxu0
      %v1248 = vpop.f32.mrb[0].mxu0
      %v1249 = vadd.f32 %v1037, %v1248
      %v1250 = vpop.f32.mrb[0].mxu0
      %1251 = vdwg.mxu0
      %v1252 = vld [vmem:[#allocation2 + $0x9] sm:$0xff]
      %v1253 = vld [vmem:[#allocation2 + $0x11] sm:$0xff]
      %v1254 = vld [vmem:[#allocation2 + $0x19] sm:$0xff]
      %v1255 = vld [vmem:[#allocation2 + $0x21] sm:$0xff]
      %v1256 = vld [vmem:[#allocation2 + $0x29] sm:$0xff]
      %v1257 = vld [vmem:[#allocation2 + $0x31] sm:$0xff]
      %v1258 = vld [vmem:[#allocation2 + $0x39] sm:$0xff]
      %v1259 = vld [vmem:[#allocation2 + $0x41] sm:$0xff]
      %v1260 = vld [vmem:[#allocation2 + $0x49] sm:$0xff]
      %v1261 = vld [vmem:[#allocation2 + $0x51] sm:$0xff]
      %v1262 = vld [vmem:[#allocation2 + $0x59] sm:$0xff]
      %v1263 = vld [vmem:[#allocation2 + $0x61] sm:$0xff]
      %v1264 = vld [vmem:[#allocation2 + $0x69] sm:$0xff]
      %v1265 = vld [vmem:[#allocation2 + $0x71] sm:$0xff]
      %v1266 = vld [vmem:[#allocation2 + $0x79] sm:$0xff]
      %v1267 = vld [vmem:[#allocation2 + $0x81] sm:$0xff]
      %v1268 = vld [vmem:[#allocation2 + $0x89] sm:$0xff]
      %v1269 = vld [vmem:[#allocation2 + $0x91] sm:$0xff]
      %v1270 = vld [vmem:[#allocation2 + $0x99] sm:$0xff]
      %v1271 = vld [vmem:[#allocation2 + $0xa1] sm:$0xff]
      %v1272 = vld [vmem:[#allocation2 + $0xa9] sm:$0xff]
      %v1273 = vld [vmem:[#allocation2 + $0xb1] sm:$0xff]
      %v1274 = vld [vmem:[#allocation2 + $0xb9] sm:$0xff]
      %v1275 = vld [vmem:[#allocation2 + $0xc1] sm:$0xff]
      %v1276 = vld [vmem:[#allocation2 + $0xc9] sm:$0xff]
      %v1277 = vld [vmem:[#allocation2 + $0xd1] sm:$0xff]
      %v1278 = vld [vmem:[#allocation2 + $0xd9] sm:$0xff]
      %v1279 = vld [vmem:[#allocation2 + $0xe1] sm:$0xff]
      %v1280 = vld [vmem:[#allocation2 + $0xe9] sm:$0xff]
      %v1281 = vld [vmem:[#allocation2 + $0xf1] sm:$0xff]
      %v1282 = vld [vmem:[#allocation2 + $0xf9] sm:$0xff]
      %v1283 = vld [vmem:[#allocation2 + $0x101] sm:$0xff]
      %v1284 = vld [vmem:[%s5] sm:$0xff]
      %v1285 = vld [vmem:[%s5 + $0x8] sm:$0xff]
      %v1286 = vld [vmem:[%s5 + $0x10] sm:$0xff]
      %v1287 = vld [vmem:[%s5 + $0x18] sm:$0xff]
      %v1288 = vld [vmem:[%s5 + $0x20] sm:$0xff]
      %v1289 = vld [vmem:[%s5 + $0x28] sm:$0xff]
      %v1290 = vld [vmem:[%s5 + $0x30] sm:$0xff]
      %v1291 = vld [vmem:[%s5 + $0x38] sm:$0xff]
      %v1292 = vld [vmem:[%s5 + $0x40] sm:$0xff]
      %v1293 = vld [vmem:[%s5 + $0x48] sm:$0xff]
      %v1294 = vld [vmem:[%s5 + $0x50] sm:$0xff]
      %v1295 = vld [vmem:[%s5 + $0x58] sm:$0xff]
      %v1296 = vld [vmem:[%s5 + $0x60] sm:$0xff]
      %v1297 = vld [vmem:[%s5 + $0x68] sm:$0xff]
      %v1298 = vld [vmem:[%s5 + $0x70] sm:$0xff]
      %v1299 = vld [vmem:[%s5 + $0x78] sm:$0xff]
      %v1300 = vld [vmem:[%s5 + $0x80] sm:$0xff]
      %v1301 = vld [vmem:[%s5 + $0x88] sm:$0xff]
      %v1302 = vld [vmem:[%s5 + $0x90] sm:$0xff]
      %v1303 = vld [vmem:[%s5 + $0x98] sm:$0xff]
      %v1304 = vld [vmem:[%s5 + $0xa0] sm:$0xff]
      %v1305 = vld [vmem:[%s5 + $0xa8] sm:$0xff]
      %v1306 = vld [vmem:[%s5 + $0xb0] sm:$0xff]
      %v1307 = vld [vmem:[%s5 + $0xb8] sm:$0xff]
      %v1308 = vld [vmem:[%s5 + $0xc0] sm:$0xff]
      %v1309 = vld [vmem:[%s5 + $0xc8] sm:$0xff]
      %v1310 = vld [vmem:[%s5 + $0xd0] sm:$0xff]
      %v1311 = vld [vmem:[%s5 + $0xd8] sm:$0xff]
      %v1312 = vld [vmem:[%s5 + $0xe0] sm:$0xff]
      %v1313 = vld [vmem:[%s5 + $0xe8] sm:$0xff]
      %v1314 = vld [vmem:[%s5 + $0xf0] sm:$0xff]
      %v1315 = vld [vmem:[%s5 + $0xf8] sm:$0xff]
      %1317 = vset.pattern.permute.xlu0 0
      %1318 = vperm.xlu0 %1317, %v1284
      %v1319 = vpop.permute.xlu0 %1318
      %1322 = vset.pattern.permute.xlu0 0
      %1323 = vperm.xlu0 %1322, %v1285
      %v1324 = vpop.permute.xlu0 %1323
      %1327 = vset.pattern.permute.xlu0 0
      %1328 = vperm.xlu0 %1327, %v1286
      %v1329 = vpop.permute.xlu0 %1328
      %1332 = vset.pattern.permute.xlu0 0
      %1333 = vperm.xlu0 %1332, %v1287
      %v1334 = vpop.permute.xlu0 %1333
      %1337 = vset.pattern.permute.xlu0 0
      %1338 = vperm.xlu0 %1337, %v1288
      %v1339 = vpop.permute.xlu0 %1338
      %1342 = vset.pattern.permute.xlu0 0
      %1343 = vperm.xlu0 %1342, %v1289
      %v1344 = vpop.permute.xlu0 %1343
      %1347 = vset.pattern.permute.xlu0 0
      %1348 = vperm.xlu0 %1347, %v1290
      %v1349 = vpop.permute.xlu0 %1348
      %1352 = vset.pattern.permute.xlu0 0
      %1353 = vperm.xlu0 %1352, %v1291
      %v1354 = vpop.permute.xlu0 %1353
      %1357 = vset.pattern.permute.xlu0 0
      %1358 = vperm.xlu0 %1357, %v1292
      %v1359 = vpop.permute.xlu0 %1358
      %1362 = vset.pattern.permute.xlu0 0
      %1363 = vperm.xlu0 %1362, %v1293
      %v1364 = vpop.permute.xlu0 %1363
      %1367 = vset.pattern.permute.xlu0 0
      %1368 = vperm.xlu0 %1367, %v1294
      %v1369 = vpop.permute.xlu0 %1368
      %1372 = vset.pattern.permute.xlu0 0
      %1373 = vperm.xlu0 %1372, %v1295
      %v1374 = vpop.permute.xlu0 %1373
      %1377 = vset.pattern.permute.xlu0 0
      %1378 = vperm.xlu0 %1377, %v1296
      %v1379 = vpop.permute.xlu0 %1378
      %1382 = vset.pattern.permute.xlu0 0
      %1383 = vperm.xlu0 %1382, %v1297
      %v1384 = vpop.permute.xlu0 %1383
      %1387 = vset.pattern.permute.xlu0 0
      %1388 = vperm.xlu0 %1387, %v1298
      %v1389 = vpop.permute.xlu0 %1388
      %1392 = vset.pattern.permute.xlu0 0
      %1393 = vperm.xlu0 %1392, %v1299
      %v1394 = vpop.permute.xlu0 %1393
      %1397 = vset.pattern.permute.xlu0 0
      %1398 = vperm.xlu0 %1397, %v1300
      %v1399 = vpop.permute.xlu0 %1398
      %1402 = vset.pattern.permute.xlu0 0
      %1403 = vperm.xlu0 %1402, %v1301
      %v1404 = vpop.permute.xlu0 %1403
      %1407 = vset.pattern.permute.xlu0 0
      %1408 = vperm.xlu0 %1407, %v1302
      %v1409 = vpop.permute.xlu0 %1408
      %1412 = vset.pattern.permute.xlu0 0
      %1413 = vperm.xlu0 %1412, %v1303
      %v1414 = vpop.permute.xlu0 %1413
      %1417 = vset.pattern.permute.xlu0 0
      %1418 = vperm.xlu0 %1417, %v1304
      %v1419 = vpop.permute.xlu0 %1418
      %1422 = vset.pattern.permute.xlu0 0
      %1423 = vperm.xlu0 %1422, %v1305
      %v1424 = vpop.permute.xlu0 %1423
      %1427 = vset.pattern.permute.xlu0 0
      %1428 = vperm.xlu0 %1427, %v1306
      %v1429 = vpop.permute.xlu0 %1428
      %1432 = vset.pattern.permute.xlu0 0
      %1433 = vperm.xlu0 %1432, %v1307
      %v1434 = vpop.permute.xlu0 %1433
      %1437 = vset.pattern.permute.xlu0 0
      %1438 = vperm.xlu0 %1437, %v1308
      %v1439 = vpop.permute.xlu0 %1438
      %1442 = vset.pattern.permute.xlu0 0
      %1443 = vperm.xlu0 %1442, %v1309
      %v1444 = vpop.permute.xlu0 %1443
      %1447 = vset.pattern.permute.xlu0 0
      %1448 = vperm.xlu0 %1447, %v1310
      %v1449 = vpop.permute.xlu0 %1448
      %1452 = vset.pattern.permute.xlu0 0
      %1453 = vperm.xlu0 %1452, %v1311
      %v1454 = vpop.permute.xlu0 %1453
      %1457 = vset.pattern.permute.xlu0 0
      %1458 = vperm.xlu0 %1457, %v1312
      %v1459 = vpop.permute.xlu0 %1458
      %1462 = vset.pattern.permute.xlu0 0
      %1463 = vperm.xlu0 %1462, %v1313
      %v1464 = vpop.permute.xlu0 %1463
      %1467 = vset.pattern.permute.xlu0 0
      %1468 = vperm.xlu0 %1467, %v1314
      %v1469 = vpop.permute.xlu0 %1468
      %1472 = vset.pattern.permute.xlu0 0
      %1473 = vperm.xlu0 %1472, %v1315
      %v1474 = vpop.permute.xlu0 %1473
      %v1476 = vmul.f32 %v1252, %v1319
      %v1477 = vmul.f32 %v1253, %v1324
      %v1478 = vmul.f32 %v1254, %v1329
      %v1479 = vmul.f32 %v1255, %v1334
      %v1480 = vmul.f32 %v1256, %v1339
      %v1481 = vmul.f32 %v1257, %v1344
      %v1482 = vmul.f32 %v1258, %v1349
      %v1483 = vmul.f32 %v1259, %v1354
      %v1484 = vmul.f32 %v1260, %v1359
      %v1485 = vmul.f32 %v1261, %v1364
      %v1486 = vmul.f32 %v1262, %v1369
      %v1487 = vmul.f32 %v1263, %v1374
      %v1488 = vmul.f32 %v1264, %v1379
      %v1489 = vmul.f32 %v1265, %v1384
      %v1490 = vmul.f32 %v1266, %v1389
      %v1491 = vmul.f32 %v1267, %v1394
      %v1492 = vmul.f32 %v1268, %v1399
      %v1493 = vmul.f32 %v1269, %v1404
      %v1494 = vmul.f32 %v1270, %v1409
      %v1495 = vmul.f32 %v1271, %v1414
      %v1496 = vmul.f32 %v1272, %v1419
      %v1497 = vmul.f32 %v1273, %v1424
      %v1498 = vmul.f32 %v1274, %v1429
      %v1499 = vmul.f32 %v1275, %v1434
      %v1500 = vmul.f32 %v1276, %v1439
      %v1501 = vmul.f32 %v1277, %v1444
      %v1502 = vmul.f32 %v1278, %v1449
      %v1503 = vmul.f32 %v1279, %v1454
      %v1504 = vmul.f32 %v1280, %v1459
      %v1505 = vmul.f32 %v1281, %v1464
      %v1506 = vmul.f32 %v1282, %v1469
      %v1507 = vmul.f32 %v1283, %v1474
      %v1508 = vpack.c.bf16 %v1477, %v1476
      %v1509 = vpack.c.bf16 %v1479, %v1478
      %v1510 = vpack.c.bf16 %v1481, %v1480
      %v1511 = vpack.c.bf16 %v1483, %v1482
      %v1512 = vpack.c.bf16 %v1485, %v1484
      %v1513 = vpack.c.bf16 %v1487, %v1486
      %v1514 = vpack.c.bf16 %v1489, %v1488
      %v1515 = vpack.c.bf16 %v1491, %v1490
      %v1516 = vpack.c.bf16 %v1493, %v1492
      %v1517 = vpack.c.bf16 %v1495, %v1494
      %v1518 = vpack.c.bf16 %v1497, %v1496
      %v1519 = vpack.c.bf16 %v1499, %v1498
      %v1520 = vpack.c.bf16 %v1501, %v1500
      %v1521 = vpack.c.bf16 %v1503, %v1502
      %v1522 = vpack.c.bf16 %v1505, %v1504
      %v1523 = vpack.c.bf16 %v1507, %v1506
      %s1524 = scalar_lea.vmem %s3, 4
      %v1525 = vld [vmem:[%s1524] sm:$0x3]
      %v1527 = vsel %vm465, %v1508, 0
      %v1530 = vsel %vm465, %v1509, 0
      %v1533 = vsel %vm465, %v1510, 0
      %v1536 = vsel %vm465, %v1511, 0
      %v1539 = vsel %vm465, %v1512, 0
      %v1542 = vsel %vm465, %v1513, 0
      %v1545 = vsel %vm465, %v1514, 0
      %v1548 = vsel %vm465, %v1515, 0
      %v1551 = vsel %vm465, %v1516, 0
      %v1554 = vsel %vm465, %v1517, 0
      %v1557 = vsel %vm465, %v1518, 0
      %v1560 = vsel %vm465, %v1519, 0
      %v1563 = vsel %vm465, %v1520, 0
      %v1566 = vsel %vm465, %v1521, 0
      %v1569 = vsel %vm465, %v1522, 0
      %v1572 = vsel %vm465, %v1523, 0
      %v1575 = vsel %vm875, %v1525, 0
      %1577 = vmatprep.subr.bf16.mxu0 0
      %1578 = vmatpush1.bf16.msra.mxu0 %v1575
      %1579 = vmatprep.subr.bf16.mxu0 0
      %1580 = vmatpush1.bf16.msra.mxu0 0
      %1581 = vmatprep.subr.bf16.mxu0 0
      %1582 = vmatpush1.bf16.msra.mxu0 0
      %1583 = vmatprep.subr.bf16.mxu0 0
      %1584 = vmatpush1.bf16.msra.mxu0 0
      %1585 = vmatprep.subr.bf16.mxu0 0
      %1586 = vmatpush1.bf16.msra.mxu0 0
      %1587 = vmatprep.subr.bf16.mxu0 0
      %1588 = vmatpush1.bf16.msra.mxu0 0
      %1589 = vmatprep.subr.bf16.mxu0 0
      %1590 = vmatpush1.bf16.msra.mxu0 0
      %1591 = vmatprep.subr.bf16.mxu0 0
      %1592 = vmatpush1.bf16.msra.mxu0 0
      %1593 = vmatprep.subr.bf16.mxu0 0
      %1594 = vmatpush1.bf16.msra.mxu0 0
      %1595 = vmatprep.subr.bf16.mxu0 0
      %1596 = vmatpush1.bf16.msra.mxu0 0
      %1597 = vmatprep.subr.bf16.mxu0 0
      %1598 = vmatpush1.bf16.msra.mxu0 0
      %1599 = vmatprep.subr.bf16.mxu0 0
      %1600 = vmatpush1.bf16.msra.mxu0 0
      %1601 = vmatprep.subr.bf16.mxu0 0
      %1602 = vmatpush1.bf16.msra.mxu0 0
      %1603 = vmatprep.subr.bf16.mxu0 0
      %1604 = vmatpush1.bf16.msra.mxu0 0
      %1605 = vmatprep.subr.bf16.mxu0 0
      %1606 = vmatpush1.bf16.msra.mxu0 0
      %1607 = vmatprep.subr.bf16.mxu0 0
      %1608 = vmatpush1.bf16.msra.mxu0 0
      %1609 = vmatprep.mubr.bf16.mxu0 0
      %1610 = vmatmul.mubr.bf16.gmra.mrb[0].mxu0 %v1527
      %v1611 = vpop.f32.mrb[0].mxu0
      %v1612 = vadd.f32 0.0, %v1611
      %v1613 = vpop.f32.mrb[0].mxu0
      %v1614 = vpop.f32.mrb[0].mxu0
      %v1615 = vadd.f32 0.0, %v1614
      %v1616 = vpop.f32.mrb[0].mxu0
      %1617 = vmatprep.mubr.bf16.mxu0 0
      %1618 = vmatmul.mubr.bf16.gmra.mrb[0].mxu0 %v1530
      %v1619 = vpop.f32.mrb[0].mxu0
      %v1620 = vadd.f32 0.0, %v1619
      %v1621 = vpop.f32.mrb[0].mxu0
      %v1622 = vpop.f32.mrb[0].mxu0
      %v1623 = vadd.f32 0.0, %v1622
      %v1624 = vpop.f32.mrb[0].mxu0
      %1625 = vmatprep.mubr.bf16.mxu0 0
      %1626 = vmatmul.mubr.bf16.gmra.mrb[0].mxu0 %v1533
      %v1627 = vpop.f32.mrb[0].mxu0
      %v1628 = vadd.f32 0.0, %v1627
      %v1629 = vpop.f32.mrb[0].mxu0
      %v1630 = vpop.f32.mrb[0].mxu0
      %v1631 = vadd.f32 0.0, %v1630
      %v1632 = vpop.f32.mrb[0].mxu0
      %1633 = vmatprep.mubr.bf16.mxu0 0
      %1634 = vmatmul.mubr.bf16.gmra.mrb[0].mxu0 %v1536
      %v1635 = vpop.f32.mrb[0].mxu0
      %v1636 = vadd.f32 0.0, %v1635
      %v1637 = vpop.f32.mrb[0].mxu0
      %v1638 = vpop.f32.mrb[0].mxu0
      %v1639 = vadd.f32 0.0, %v1638
      %v1640 = vpop.f32.mrb[0].mxu0
      %1641 = vmatprep.mubr.bf16.mxu0 0
      %1642 = vmatmul.mubr.bf16.gmra.mrb[0].mxu0 %v1539
      %v1643 = vpop.f32.mrb[0].mxu0
      %v1644 = vadd.f32 0.0, %v1643
      %v1645 = vpop.f32.mrb[0].mxu0
      %v1646 = vpop.f32.mrb[0].mxu0
      %v1647 = vadd.f32 0.0, %v1646
      %v1648 = vpop.f32.mrb[0].mxu0
      %1649 = vmatprep.mubr.bf16.mxu0 0
      %1650 = vmatmul.mubr.bf16.gmra.mrb[0].mxu0 %v1542
      %v1651 = vpop.f32.mrb[0].mxu0
      %v1652 = vadd.f32 0.0, %v1651
      %v1653 = vpop.f32.mrb[0].mxu0
      %v1654 = vpop.f32.mrb[0].mxu0
      %v1655 = vadd.f32 0.0, %v1654
      %v1656 = vpop.f32.mrb[0].mxu0
      %1657 = vmatprep.mubr.bf16.mxu0 0
      %1658 = vmatmul.mubr.bf16.gmra.mrb[0].mxu0 %v1545
      %v1659 = vpop.f32.mrb[0].mxu0
      %v1660 = vadd.f32 0.0, %v1659
      %v1661 = vpop.f32.mrb[0].mxu0
      %v1662 = vpop.f32.mrb[0].mxu0
      %v1663 = vadd.f32 0.0, %v1662
      %v1664 = vpop.f32.mrb[0].mxu0
      %1665 = vmatprep.mubr.bf16.mxu0 0
      %1666 = vmatmul.mubr.bf16.gmra.mrb[0].mxu0 %v1548
      %v1667 = vpop.f32.mrb[0].mxu0
      %v1668 = vadd.f32 0.0, %v1667
      %v1669 = vpop.f32.mrb[0].mxu0
      %v1670 = vpop.f32.mrb[0].mxu0
      %v1671 = vadd.f32 0.0, %v1670
      %v1672 = vpop.f32.mrb[0].mxu0
      %1673 = vmatprep.mubr.bf16.mxu0 0
      %1674 = vmatmul.mubr.bf16.gmra.mrb[0].mxu0 %v1551
      %v1675 = vpop.f32.mrb[0].mxu0
      %v1676 = vadd.f32 0.0, %v1675
      %v1677 = vpop.f32.mrb[0].mxu0
      %v1678 = vpop.f32.mrb[0].mxu0
      %v1679 = vadd.f32 0.0, %v1678
      %v1680 = vpop.f32.mrb[0].mxu0
      %1681 = vmatprep.mubr.bf16.mxu0 0
      %1682 = vmatmul.mubr.bf16.gmra.mrb[0].mxu0 %v1554
      %v1683 = vpop.f32.mrb[0].mxu0
      %v1684 = vadd.f32 0.0, %v1683
      %v1685 = vpop.f32.mrb[0].mxu0
      %v1686 = vpop.f32.mrb[0].mxu0
      %v1687 = vadd.f32 0.0, %v1686
      %v1688 = vpop.f32.mrb[0].mxu0
      %1689 = vmatprep.mubr.bf16.mxu0 0
      %1690 = vmatmul.mubr.bf16.gmra.mrb[0].mxu0 %v1557
      %v1691 = vpop.f32.mrb[0].mxu0
      %v1692 = vadd.f32 0.0, %v1691
      %v1693 = vpop.f32.mrb[0].mxu0
      %v1694 = vpop.f32.mrb[0].mxu0
      %v1695 = vadd.f32 0.0, %v1694
      %v1696 = vpop.f32.mrb[0].mxu0
      %1697 = vmatprep.mubr.bf16.mxu0 0
      %1698 = vmatmul.mubr.bf16.gmra.mrb[0].mxu0 %v1560
      %v1699 = vpop.f32.mrb[0].mxu0
      %v1700 = vadd.f32 0.0, %v1699
      %v1701 = vpop.f32.mrb[0].mxu0
      %v1702 = vpop.f32.mrb[0].mxu0
      %v1703 = vadd.f32 0.0, %v1702
      %v1704 = vpop.f32.mrb[0].mxu0
      %1705 = vmatprep.mubr.bf16.mxu0 0
      %1706 = vmatmul.mubr.bf16.gmra.mrb[0].mxu0 %v1563
      %v1707 = vpop.f32.mrb[0].mxu0
      %v1708 = vadd.f32 0.0, %v1707
      %v1709 = vpop.f32.mrb[0].mxu0
      %v1710 = vpop.f32.mrb[0].mxu0
      %v1711 = vadd.f32 0.0, %v1710
      %v1712 = vpop.f32.mrb[0].mxu0
      %1713 = vmatprep.mubr.bf16.mxu0 0
      %1714 = vmatmul.mubr.bf16.gmra.mrb[0].mxu0 %v1566
      %v1715 = vpop.f32.mrb[0].mxu0
      %v1716 = vadd.f32 0.0, %v1715
      %v1717 = vpop.f32.mrb[0].mxu0
      %v1718 = vpop.f32.mrb[0].mxu0
      %v1719 = vadd.f32 0.0, %v1718
      %v1720 = vpop.f32.mrb[0].mxu0
      %1721 = vmatprep.mubr.bf16.mxu0 0
      %1722 = vmatmul.mubr.bf16.gmra.mrb[0].mxu0 %v1569
      %v1723 = vpop.f32.mrb[0].mxu0
      %v1724 = vadd.f32 0.0, %v1723
      %v1725 = vpop.f32.mrb[0].mxu0
      %v1726 = vpop.f32.mrb[0].mxu0
      %v1727 = vadd.f32 0.0, %v1726
      %v1728 = vpop.f32.mrb[0].mxu0
      %1729 = vmatprep.mubr.bf16.mxu0 0
      %1730 = vmatmul.mubr.bf16.gmra.mrb[0].mxu0 %v1572
      %v1731 = vpop.f32.mrb[0].mxu0
      %v1732 = vadd.f32 0.0, %v1731
      %v1733 = vpop.f32.mrb[0].mxu0
      %v1734 = vpop.f32.mrb[0].mxu0
      %v1735 = vadd.f32 0.0, %v1734
      %v1736 = vpop.f32.mrb[0].mxu0
      %1737 = vdwg.mxu0
      %v1738 = vadd.f32 %v1126, %v1612
      %v1739 = vadd.f32 %v1129, %v1615
      %v1740 = vadd.f32 %v1134, %v1620
      %v1741 = vadd.f32 %v1137, %v1623
      %v1742 = vadd.f32 %v1142, %v1628
      %v1743 = vadd.f32 %v1145, %v1631
      %v1744 = vadd.f32 %v1150, %v1636
      %v1745 = vadd.f32 %v1153, %v1639
      %v1746 = vadd.f32 %v1158, %v1644
      %v1747 = vadd.f32 %v1161, %v1647
      %v1748 = vadd.f32 %v1166, %v1652
      %v1749 = vadd.f32 %v1169, %v1655
      %v1750 = vadd.f32 %v1174, %v1660
      %v1751 = vadd.f32 %v1177, %v1663
      %v1752 = vadd.f32 %v1182, %v1668
      %v1753 = vadd.f32 %v1185, %v1671
      %v1754 = vadd.f32 %v1190, %v1676
      %v1755 = vadd.f32 %v1193, %v1679
      %v1756 = vadd.f32 %v1198, %v1684
      %v1757 = vadd.f32 %v1201, %v1687
      %v1758 = vadd.f32 %v1206, %v1692
      %v1759 = vadd.f32 %v1209, %v1695
      %v1760 = vadd.f32 %v1214, %v1700
      %v1761 = vadd.f32 %v1217, %v1703
      %v1762 = vadd.f32 %v1222, %v1708
      %v1763 = vadd.f32 %v1225, %v1711
      %v1764 = vadd.f32 %v1230, %v1716
      %v1765 = vadd.f32 %v1233, %v1719
      %v1766 = vadd.f32 %v1238, %v1724
      %v1767 = vadd.f32 %v1241, %v1727
      %v1768 = vadd.f32 %v1246, %v1732
      %v1769 = vadd.f32 %v1249, %v1735
      %v1770 = vld [vmem:[#allocation2 + $0x17] sm:$0xff]
      %v1771 = vld [vmem:[#allocation2 + $0x1f] sm:$0xff]
      %v1772 = vld [vmem:[#allocation2 + $0x27] sm:$0xff]
      %v1773 = vld [vmem:[#allocation2 + $0x2f] sm:$0xff]
      %v1774 = vld [vmem:[#allocation2 + $0x37] sm:$0xff]
      %v1775 = vld [vmem:[#allocation2 + $0x3f] sm:$0xff]
      %v1776 = vld [vmem:[#allocation2 + $0x47] sm:$0xff]
      %v1777 = vld [vmem:[#allocation2 + $0x4f] sm:$0xff]
      %v1778 = vld [vmem:[#allocation2 + $0x57] sm:$0xff]
      %v1779 = vld [vmem:[#allocation2 + $0x5f] sm:$0xff]
      %v1780 = vld [vmem:[#allocation2 + $0x67] sm:$0xff]
      %v1781 = vld [vmem:[#allocation2 + $0x6f] sm:$0xff]
      %v1782 = vld [vmem:[#allocation2 + $0x77] sm:$0xff]
      %v1783 = vld [vmem:[#allocation2 + $0x7f] sm:$0xff]
      %v1784 = vld [vmem:[#allocation2 + $0x87] sm:$0xff]
      %v1785 = vld [vmem:[#allocation2 + $0x8f] sm:$0xff]
      %v1786 = vld [vmem:[#allocation2 + $0x97] sm:$0xff]
      %v1787 = vld [vmem:[#allocation2 + $0x9f] sm:$0xff]
      %v1788 = vld [vmem:[#allocation2 + $0xa7] sm:$0xff]
      %v1789 = vld [vmem:[#allocation2 + $0xaf] sm:$0xff]
      %v1790 = vld [vmem:[#allocation2 + $0xb7] sm:$0xff]
      %v1791 = vld [vmem:[#allocation2 + $0xbf] sm:$0xff]
      %v1792 = vld [vmem:[#allocation2 + $0xc7] sm:$0xff]
      %v1793 = vld [vmem:[#allocation2 + $0xcf] sm:$0xff]
      %v1794 = vld [vmem:[#allocation2 + $0xd7] sm:$0xff]
      %v1795 = vld [vmem:[#allocation2 + $0xdf] sm:$0xff]
      %v1796 = vld [vmem:[#allocation2 + $0xe7] sm:$0xff]
      %v1797 = vld [vmem:[#allocation2 + $0xef] sm:$0xff]
      %v1798 = vld [vmem:[#allocation2 + $0xf7] sm:$0xff]
      %v1799 = vld [vmem:[#allocation2 + $0xff] sm:$0xff]
      %v1800 = vld [vmem:[#allocation2 + $0x107] sm:$0xff]
      %v1801 = vld [vmem:[#allocation2 + $0x10f] sm:$0xff]
      %v1802 = vmul.f32 %v1770, %v571
      %v1803 = vmul.f32 %v1771, %v576
      %v1804 = vmul.f32 %v1772, %v581
      %v1805 = vmul.f32 %v1773, %v586
      %v1806 = vmul.f32 %v1774, %v591
      %v1807 = vmul.f32 %v1775, %v596
      %v1808 = vmul.f32 %v1776, %v601
      %v1809 = vmul.f32 %v1777, %v606
      %v1810 = vmul.f32 %v1778, %v611
      %v1811 = vmul.f32 %v1779, %v616
      %v1812 = vmul.f32 %v1780, %v621
      %v1813 = vmul.f32 %v1781, %v626
      %v1814 = vmul.f32 %v1782, %v631
      %v1815 = vmul.f32 %v1783, %v636
      %v1816 = vmul.f32 %v1784, %v641
      %v1817 = vmul.f32 %v1785, %v646
      %v1818 = vmul.f32 %v1786, %v651
      %v1819 = vmul.f32 %v1787, %v656
      %v1820 = vmul.f32 %v1788, %v661
      %v1821 = vmul.f32 %v1789, %v666
      %v1822 = vmul.f32 %v1790, %v671
      %v1823 = vmul.f32 %v1791, %v676
      %v1824 = vmul.f32 %v1792, %v681
      %v1825 = vmul.f32 %v1793, %v686
      %v1826 = vmul.f32 %v1794, %v691
      %v1827 = vmul.f32 %v1795, %v696
      %v1828 = vmul.f32 %v1796, %v701
      %v1829 = vmul.f32 %v1797, %v706
      %v1830 = vmul.f32 %v1798, %v711
      %v1831 = vmul.f32 %v1799, %v716
      %v1832 = vmul.f32 %v1800, %v721
      %v1833 = vmul.f32 %v1801, %v726
      %v1834 = vpack.c.bf16 %v1803, %v1802
      %v1835 = vpack.c.bf16 %v1805, %v1804
      %v1836 = vpack.c.bf16 %v1807, %v1806
      %v1837 = vpack.c.bf16 %v1809, %v1808
      %v1838 = vpack.c.bf16 %v1811, %v1810
      %v1839 = vpack.c.bf16 %v1813, %v1812
      %v1840 = vpack.c.bf16 %v1815, %v1814
      %v1841 = vpack.c.bf16 %v1817, %v1816
      %v1842 = vpack.c.bf16 %v1819, %v1818
      %v1843 = vpack.c.bf16 %v1821, %v1820
      %v1844 = vpack.c.bf16 %v1823, %v1822
      %v1845 = vpack.c.bf16 %v1825, %v1824
      %v1846 = vpack.c.bf16 %v1827, %v1826
      %v1847 = vpack.c.bf16 %v1829, %v1828
      %v1848 = vpack.c.bf16 %v1831, %v1830
      %v1849 = vpack.c.bf16 %v1833, %v1832
      %s1850 = scalar_lea.vmem %s3, 6
      %v1851 = vld [vmem:[%s1850] sm:$0x3]
      %v1853 = vsel %vm465, %v1834, 0
      %v1856 = vsel %vm465, %v1835, 0
      %v1859 = vsel %vm465, %v1836, 0
      %v1862 = vsel %vm465, %v1837, 0
      %v1865 = vsel %vm465, %v1838, 0
      %v1868 = vsel %vm465, %v1839, 0
      %v1871 = vsel %vm465, %v1840, 0
      %v1874 = vsel %vm465, %v1841, 0
      %v1877 = vsel %vm465, %v1842, 0
      %v1880 = vsel %vm465, %v1843, 0
      %v1883 = vsel %vm465, %v1844, 0
      %v1886 = vsel %vm465, %v1845, 0
      %v1889 = vsel %vm465, %v1846, 0
      %v1892 = vsel %vm465, %v1847, 0
      %v1895 = vsel %vm465, %v1848, 0
      %v1898 = vsel %vm465, %v1849, 0
      %v1901 = vsel %vm875, %v1851, 0
      %1903 = vmatprep.subr.bf16.mxu0 0
      %1904 = vmatpush1.bf16.msra.mxu0 %v1901
      %1905 = vmatprep.subr.bf16.mxu0 0
      %1906 = vmatpush1.bf16.msra.mxu0 0
      %1907 = vmatprep.subr.bf16.mxu0 0
      %1908 = vmatpush1.bf16.msra.mxu0 0
      %1909 = vmatprep.subr.bf16.mxu0 0
      %1910 = vmatpush1.bf16.msra.mxu0 0
      %1911 = vmatprep.subr.bf16.mxu0 0
      %1912 = vmatpush1.bf16.msra.mxu0 0
      %1913 = vmatprep.subr.bf16.mxu0 0
      %1914 = vmatpush1.bf16.msra.mxu0 0
      %1915 = vmatprep.subr.bf16.mxu0 0
      %1916 = vmatpush1.bf16.msra.mxu0 0
      %1917 = vmatprep.subr.bf16.mxu0 0
      %1918 = vmatpush1.bf16.msra.mxu0 0
      %1919 = vmatprep.subr.bf16.mxu0 0
      %1920 = vmatpush1.bf16.msra.mxu0 0
      %1921 = vmatprep.subr.bf16.mxu0 0
      %1922 = vmatpush1.bf16.msra.mxu0 0
      %1923 = vmatprep.subr.bf16.mxu0 0
      %1924 = vmatpush1.bf16.msra.mxu0 0
      %1925 = vmatprep.subr.bf16.mxu0 0
      %1926 = vmatpush1.bf16.msra.mxu0 0
      %1927 = vmatprep.subr.bf16.mxu0 0
      %1928 = vmatpush1.bf16.msra.mxu0 0
      %1929 = vmatprep.subr.bf16.mxu0 0
      %1930 = vmatpush1.bf16.msra.mxu0 0
      %1931 = vmatprep.subr.bf16.mxu0 0
      %1932 = vmatpush1.bf16.msra.mxu0 0
      %1933 = vmatprep.subr.bf16.mxu0 0
      %1934 = vmatpush1.bf16.msra.mxu0 0
      %1935 = vmatprep.mubr.bf16.mxu0 0
      %1936 = vmatmul.mubr.bf16.gmra.mrb[0].mxu0 %v1853
      %v1937 = vpop.f32.mrb[0].mxu0
      %v1938 = vadd.f32 0.0, %v1937
      %v1939 = vpop.f32.mrb[0].mxu0
      %v1940 = vpop.f32.mrb[0].mxu0
      %v1941 = vadd.f32 0.0, %v1940
      %v1942 = vpop.f32.mrb[0].mxu0
      %1943 = vmatprep.mubr.bf16.mxu0 0
      %1944 = vmatmul.mubr.bf16.gmra.mrb[0].mxu0 %v1856
      %v1945 = vpop.f32.mrb[0].mxu0
      %v1946 = vadd.f32 0.0, %v1945
      %v1947 = vpop.f32.mrb[0].mxu0
      %v1948 = vpop.f32.mrb[0].mxu0
      %v1949 = vadd.f32 0.0, %v1948
      %v1950 = vpop.f32.mrb[0].mxu0
      %1951 = vmatprep.mubr.bf16.mxu0 0
      %1952 = vmatmul.mubr.bf16.gmra.mrb[0].mxu0 %v1859
      %v1953 = vpop.f32.mrb[0].mxu0
      %v1954 = vadd.f32 0.0, %v1953
      %v1955 = vpop.f32.mrb[0].mxu0
      %v1956 = vpop.f32.mrb[0].mxu0
      %v1957 = vadd.f32 0.0, %v1956
      %v1958 = vpop.f32.mrb[0].mxu0
      %1959 = vmatprep.mubr.bf16.mxu0 0
      %1960 = vmatmul.mubr.bf16.gmra.mrb[0].mxu0 %v1862
      %v1961 = vpop.f32.mrb[0].mxu0
      %v1962 = vadd.f32 0.0, %v1961
      %v1963 = vpop.f32.mrb[0].mxu0
      %v1964 = vpop.f32.mrb[0].mxu0
      %v1965 = vadd.f32 0.0, %v1964
      %v1966 = vpop.f32.mrb[0].mxu0
      %1967 = vmatprep.mubr.bf16.mxu0 0
      %1968 = vmatmul.mubr.bf16.gmra.mrb[0].mxu0 %v1865
      %v1969 = vpop.f32.mrb[0].mxu0
      %v1970 = vadd.f32 0.0, %v1969
      %v1971 = vpop.f32.mrb[0].mxu0
      %v1972 = vpop.f32.mrb[0].mxu0
      %v1973 = vadd.f32 0.0, %v1972
      %v1974 = vpop.f32.mrb[0].mxu0
      %1975 = vmatprep.mubr.bf16.mxu0 0
      %1976 = vmatmul.mubr.bf16.gmra.mrb[0].mxu0 %v1868
      %v1977 = vpop.f32.mrb[0].mxu0
      %v1978 = vadd.f32 0.0, %v1977
      %v1979 = vpop.f32.mrb[0].mxu0
      %v1980 = vpop.f32.mrb[0].mxu0
      %v1981 = vadd.f32 0.0, %v1980
      %v1982 = vpop.f32.mrb[0].mxu0
      %1983 = vmatprep.mubr.bf16.mxu0 0
      %1984 = vmatmul.mubr.bf16.gmra.mrb[0].mxu0 %v1871
      %v1985 = vpop.f32.mrb[0].mxu0
      %v1986 = vadd.f32 0.0, %v1985
      %v1987 = vpop.f32.mrb[0].mxu0
      %v1988 = vpop.f32.mrb[0].mxu0
      %v1989 = vadd.f32 0.0, %v1988
      %v1990 = vpop.f32.mrb[0].mxu0
      %1991 = vmatprep.mubr.bf16.mxu0 0
      %1992 = vmatmul.mubr.bf16.gmra.mrb[0].mxu0 %v1874
      %v1993 = vpop.f32.mrb[0].mxu0
      %v1994 = vadd.f32 0.0, %v1993
      %v1995 = vpop.f32.mrb[0].mxu0
      %v1996 = vpop.f32.mrb[0].mxu0
      %v1997 = vadd.f32 0.0, %v1996
      %v1998 = vpop.f32.mrb[0].mxu0
      %1999 = vmatprep.mubr.bf16.mxu0 0
      %2000 = vmatmul.mubr.bf16.gmra.mrb[0].mxu0 %v1877
      %v2001 = vpop.f32.mrb[0].mxu0
      %v2002 = vadd.f32 0.0, %v2001
      %v2003 = vpop.f32.mrb[0].mxu0
      %v2004 = vpop.f32.mrb[0].mxu0
      %v2005 = vadd.f32 0.0, %v2004
      %v2006 = vpop.f32.mrb[0].mxu0
      %2007 = vmatprep.mubr.bf16.mxu0 0
      %2008 = vmatmul.mubr.bf16.gmra.mrb[0].mxu0 %v1880
      %v2009 = vpop.f32.mrb[0].mxu0
      %v2010 = vadd.f32 0.0, %v2009
      %v2011 = vpop.f32.mrb[0].mxu0
      %v2012 = vpop.f32.mrb[0].mxu0
      %v2013 = vadd.f32 0.0, %v2012
      %v2014 = vpop.f32.mrb[0].mxu0
      %2015 = vmatprep.mubr.bf16.mxu0 0
      %2016 = vmatmul.mubr.bf16.gmra.mrb[0].mxu0 %v1883
      %v2017 = vpop.f32.mrb[0].mxu0
      %v2018 = vadd.f32 0.0, %v2017
      %v2019 = vpop.f32.mrb[0].mxu0
      %v2020 = vpop.f32.mrb[0].mxu0
      %v2021 = vadd.f32 0.0, %v2020
      %v2022 = vpop.f32.mrb[0].mxu0
      %2023 = vmatprep.mubr.bf16.mxu0 0
      %2024 = vmatmul.mubr.bf16.gmra.mrb[0].mxu0 %v1886
      %v2025 = vpop.f32.mrb[0].mxu0
      %v2026 = vadd.f32 0.0, %v2025
      %v2027 = vpop.f32.mrb[0].mxu0
      %v2028 = vpop.f32.mrb[0].mxu0
      %v2029 = vadd.f32 0.0, %v2028
      %v2030 = vpop.f32.mrb[0].mxu0
      %2031 = vmatprep.mubr.bf16.mxu0 0
      %2032 = vmatmul.mubr.bf16.gmra.mrb[0].mxu0 %v1889
      %v2033 = vpop.f32.mrb[0].mxu0
      %v2034 = vadd.f32 0.0, %v2033
      %v2035 = vpop.f32.mrb[0].mxu0
      %v2036 = vpop.f32.mrb[0].mxu0
      %v2037 = vadd.f32 0.0, %v2036
      %v2038 = vpop.f32.mrb[0].mxu0
      %2039 = vmatprep.mubr.bf16.mxu0 0
      %2040 = vmatmul.mubr.bf16.gmra.mrb[0].mxu0 %v1892
      %v2041 = vpop.f32.mrb[0].mxu0
      %v2042 = vadd.f32 0.0, %v2041
      %v2043 = vpop.f32.mrb[0].mxu0
      %v2044 = vpop.f32.mrb[0].mxu0
      %v2045 = vadd.f32 0.0, %v2044
      %v2046 = vpop.f32.mrb[0].mxu0
      %2047 = vmatprep.mubr.bf16.mxu0 0
      %2048 = vmatmul.mubr.bf16.gmra.mrb[0].mxu0 %v1895
      %v2049 = vpop.f32.mrb[0].mxu0
      %v2050 = vadd.f32 0.0, %v2049
      %v2051 = vpop.f32.mrb[0].mxu0
      %v2052 = vpop.f32.mrb[0].mxu0
      %v2053 = vadd.f32 0.0, %v2052
      %v2054 = vpop.f32.mrb[0].mxu0
      %2055 = vmatprep.mubr.bf16.mxu0 0
      %2056 = vmatmul.mubr.bf16.gmra.mrb[0].mxu0 %v1898
      %v2057 = vpop.f32.mrb[0].mxu0
      %v2058 = vadd.f32 0.0, %v2057
      %v2059 = vpop.f32.mrb[0].mxu0
      %v2060 = vpop.f32.mrb[0].mxu0
      %v2061 = vadd.f32 0.0, %v2060
      %v2062 = vpop.f32.mrb[0].mxu0
      %2063 = vdwg.mxu0
      %v2064 = vadd.f32 %v1738, %v1938
      %v2065 = vadd.f32 %v1739, %v1941
      %v2066 = vadd.f32 %v1740, %v1946
      %v2067 = vadd.f32 %v1741, %v1949
      %v2068 = vadd.f32 %v1742, %v1954
      %v2069 = vadd.f32 %v1743, %v1957
      %v2070 = vadd.f32 %v1744, %v1962
      %v2071 = vadd.f32 %v1745, %v1965
      %v2072 = vadd.f32 %v1746, %v1970
      %v2073 = vadd.f32 %v1747, %v1973
      %v2074 = vadd.f32 %v1748, %v1978
      %v2075 = vadd.f32 %v1749, %v1981
      %v2076 = vadd.f32 %v1750, %v1986
      %v2077 = vadd.f32 %v1751, %v1989
      %v2078 = vadd.f32 %v1752, %v1994
      %v2079 = vadd.f32 %v1753, %v1997
      %v2080 = vadd.f32 %v1754, %v2002
      %v2081 = vadd.f32 %v1755, %v2005
      %v2082 = vadd.f32 %v1756, %v2010
      %v2083 = vadd.f32 %v1757, %v2013
      %v2084 = vadd.f32 %v1758, %v2018
      %v2085 = vadd.f32 %v1759, %v2021
      %v2086 = vadd.f32 %v1760, %v2026
      %v2087 = vadd.f32 %v1761, %v2029
      %v2088 = vadd.f32 %v1762, %v2034
      %v2089 = vadd.f32 %v1763, %v2037
      %v2090 = vadd.f32 %v1764, %v2042
      %v2091 = vadd.f32 %v1765, %v2045
      %v2092 = vadd.f32 %v1766, %v2050
      %v2093 = vadd.f32 %v1767, %v2053
      %v2094 = vadd.f32 %v1768, %v2058
      %v2095 = vadd.f32 %v1769, %v2061
      %v2096 = vld [vmem:[#allocation2 + $0x18] sm:$0xff]
      %v2097 = vld [vmem:[#allocation2 + $0x20] sm:$0xff]
      %v2098 = vld [vmem:[#allocation2 + $0x28] sm:$0xff]
      %v2099 = vld [vmem:[#allocation2 + $0x30] sm:$0xff]
      %v2100 = vld [vmem:[#allocation2 + $0x38] sm:$0xff]
      %v2101 = vld [vmem:[#allocation2 + $0x40] sm:$0xff]
      %v2102 = vld [vmem:[#allocation2 + $0x48] sm:$0xff]
      %v2103 = vld [vmem:[#allocation2 + $0x50] sm:$0xff]
      %v2104 = vld [vmem:[#allocation2 + $0x58] sm:$0xff]
      %v2105 = vld [vmem:[#allocation2 + $0x60] sm:$0xff]
      %v2106 = vld [vmem:[#allocation2 + $0x68] sm:$0xff]
      %v2107 = vld [vmem:[#allocation2 + $0x70] sm:$0xff]
      %v2108 = vld [vmem:[#allocation2 + $0x78] sm:$0xff]
      %v2109 = vld [vmem:[#allocation2 + $0x80] sm:$0xff]
      %v2110 = vld [vmem:[#allocation2 + $0x88] sm:$0xff]
      %v2111 = vld [vmem:[#allocation2 + $0x90] sm:$0xff]
      %v2112 = vld [vmem:[#allocation2 + $0x98] sm:$0xff]
      %v2113 = vld [vmem:[#allocation2 + $0xa0] sm:$0xff]
      %v2114 = vld [vmem:[#allocation2 + $0xa8] sm:$0xff]
      %v2115 = vld [vmem:[#allocation2 + $0xb0] sm:$0xff]
      %v2116 = vld [vmem:[#allocation2 + $0xb8] sm:$0xff]
      %v2117 = vld [vmem:[#allocation2 + $0xc0] sm:$0xff]
      %v2118 = vld [vmem:[#allocation2 + $0xc8] sm:$0xff]
      %v2119 = vld [vmem:[#allocation2 + $0xd0] sm:$0xff]
      %v2120 = vld [vmem:[#allocation2 + $0xd8] sm:$0xff]
      %v2121 = vld [vmem:[#allocation2 + $0xe0] sm:$0xff]
      %v2122 = vld [vmem:[#allocation2 + $0xe8] sm:$0xff]
      %v2123 = vld [vmem:[#allocation2 + $0xf0] sm:$0xff]
      %v2124 = vld [vmem:[#allocation2 + $0xf8] sm:$0xff]
      %v2125 = vld [vmem:[#allocation2 + $0x100] sm:$0xff]
      %v2126 = vld [vmem:[#allocation2 + $0x108] sm:$0xff]
      %v2127 = vld [vmem:[#allocation2 + $0x110] sm:$0xff]
      %v2128 = vpack.c.bf16 %v2097, %v2096
      %v2129 = vpack.c.bf16 %v2099, %v2098
      %v2130 = vpack.c.bf16 %v2101, %v2100
      %v2131 = vpack.c.bf16 %v2103, %v2102
      %v2132 = vpack.c.bf16 %v2105, %v2104
      %v2133 = vpack.c.bf16 %v2107, %v2106
      %v2134 = vpack.c.bf16 %v2109, %v2108
      %v2135 = vpack.c.bf16 %v2111, %v2110
      %v2136 = vpack.c.bf16 %v2113, %v2112
      %v2137 = vpack.c.bf16 %v2115, %v2114
      %v2138 = vpack.c.bf16 %v2117, %v2116
      %v2139 = vpack.c.bf16 %v2119, %v2118
      %v2140 = vpack.c.bf16 %v2121, %v2120
      %v2141 = vpack.c.bf16 %v2123, %v2122
      %v2142 = vpack.c.bf16 %v2125, %v2124
      %v2143 = vpack.c.bf16 %v2127, %v2126
      %s2144 = scalar_lea.vmem %s3, 8
      %v2145 = vld [vmem:[%s2144] sm:$0x3]
      %v2147 = vsel %vm465, %v2128, 0
      %v2150 = vsel %vm465, %v2129, 0
      %v2153 = vsel %vm465, %v2130, 0
      %v2156 = vsel %vm465, %v2131, 0
      %v2159 = vsel %vm465, %v2132, 0
      %v2162 = vsel %vm465, %v2133, 0
      %v2165 = vsel %vm465, %v2134, 0
      %v2168 = vsel %vm465, %v2135, 0
      %v2171 = vsel %vm465, %v2136, 0
      %v2174 = vsel %vm465, %v2137, 0
      %v2177 = vsel %vm465, %v2138, 0
      %v2180 = vsel %vm465, %v2139, 0
      %v2183 = vsel %vm465, %v2140, 0
      %v2186 = vsel %vm465, %v2141, 0
      %v2189 = vsel %vm465, %v2142, 0
      %v2192 = vsel %vm465, %v2143, 0
      %v2195 = vsel %vm875, %v2145, 0
      %2197 = vmatprep.subr.bf16.mxu0 0
      %2198 = vmatpush1.bf16.msra.mxu0 %v2195
      %2199 = vmatprep.subr.bf16.mxu0 0
      %2200 = vmatpush1.bf16.msra.mxu0 0
      %2201 = vmatprep.subr.bf16.mxu0 0
      %2202 = vmatpush1.bf16.msra.mxu0 0
      %2203 = vmatprep.subr.bf16.mxu0 0
      %2204 = vmatpush1.bf16.msra.mxu0 0
      %2205 = vmatprep.subr.bf16.mxu0 0
      %2206 = vmatpush1.bf16.msra.mxu0 0
      %2207 = vmatprep.subr.bf16.mxu0 0
      %2208 = vmatpush1.bf16.msra.mxu0 0
      %2209 = vmatprep.subr.bf16.mxu0 0
      %2210 = vmatpush1.bf16.msra.mxu0 0
      %2211 = vmatprep.subr.bf16.mxu0 0
      %2212 = vmatpush1.bf16.msra.mxu0 0
      %2213 = vmatprep.subr.bf16.mxu0 0
      %2214 = vmatpush1.bf16.msra.mxu0 0
      %2215 = vmatprep.subr.bf16.mxu0 0
      %2216 = vmatpush1.bf16.msra.mxu0 0
      %2217 = vmatprep.subr.bf16.mxu0 0
      %2218 = vmatpush1.bf16.msra.mxu0 0
      %2219 = vmatprep.subr.bf16.mxu0 0
      %2220 = vmatpush1.bf16.msra.mxu0 0
      %2221 = vmatprep.subr.bf16.mxu0 0
      %2222 = vmatpush1.bf16.msra.mxu0 0
      %2223 = vmatprep.subr.bf16.mxu0 0
      %2224 = vmatpush1.bf16.msra.mxu0 0
      %2225 = vmatprep.subr.bf16.mxu0 0
      %2226 = vmatpush1.bf16.msra.mxu0 0
      %2227 = vmatprep.subr.bf16.mxu0 0
      %2228 = vmatpush1.bf16.msra.mxu0 0
      %2229 = vmatprep.mubr.bf16.mxu0 0
      %2230 = vmatmul.mubr.bf16.gmra.mrb[0].mxu0 %v2147
      %v2231 = vpop.f32.mrb[0].mxu0
      %v2232 = vadd.f32 0.0, %v2231
      %v2233 = vpop.f32.mrb[0].mxu0
      %v2234 = vpop.f32.mrb[0].mxu0
      %v2235 = vadd.f32 0.0, %v2234
      %v2236 = vpop.f32.mrb[0].mxu0
      %2237 = vmatprep.mubr.bf16.mxu0 0
      %2238 = vmatmul.mubr.bf16.gmra.mrb[0].mxu0 %v2150
      %v2239 = vpop.f32.mrb[0].mxu0
      %v2240 = vadd.f32 0.0, %v2239
      %v2241 = vpop.f32.mrb[0].mxu0
      %v2242 = vpop.f32.mrb[0].mxu0
      %v2243 = vadd.f32 0.0, %v2242
      %v2244 = vpop.f32.mrb[0].mxu0
      %2245 = vmatprep.mubr.bf16.mxu0 0
      %2246 = vmatmul.mubr.bf16.gmra.mrb[0].mxu0 %v2153
      %v2247 = vpop.f32.mrb[0].mxu0
      %v2248 = vadd.f32 0.0, %v2247
      %v2249 = vpop.f32.mrb[0].mxu0
      %v2250 = vpop.f32.mrb[0].mxu0
      %v2251 = vadd.f32 0.0, %v2250
      %v2252 = vpop.f32.mrb[0].mxu0
      %2253 = vmatprep.mubr.bf16.mxu0 0
      %2254 = vmatmul.mubr.bf16.gmra.mrb[0].mxu0 %v2156
      %v2255 = vpop.f32.mrb[0].mxu0
      %v2256 = vadd.f32 0.0, %v2255
      %v2257 = vpop.f32.mrb[0].mxu0
      %v2258 = vpop.f32.mrb[0].mxu0
      %v2259 = vadd.f32 0.0, %v2258
      %v2260 = vpop.f32.mrb[0].mxu0
      %2261 = vmatprep.mubr.bf16.mxu0 0
      %2262 = vmatmul.mubr.bf16.gmra.mrb[0].mxu0 %v2159
      %v2263 = vpop.f32.mrb[0].mxu0
      %v2264 = vadd.f32 0.0, %v2263
      %v2265 = vpop.f32.mrb[0].mxu0
      %v2266 = vpop.f32.mrb[0].mxu0
      %v2267 = vadd.f32 0.0, %v2266
      %v2268 = vpop.f32.mrb[0].mxu0
      %2269 = vmatprep.mubr.bf16.mxu0 0
      %2270 = vmatmul.mubr.bf16.gmra.mrb[0].mxu0 %v2162
      %v2271 = vpop.f32.mrb[0].mxu0
      %v2272 = vadd.f32 0.0, %v2271
      %v2273 = vpop.f32.mrb[0].mxu0
      %v2274 = vpop.f32.mrb[0].mxu0
      %v2275 = vadd.f32 0.0, %v2274
      %v2276 = vpop.f32.mrb[0].mxu0
      %2277 = vmatprep.mubr.bf16.mxu0 0
      %2278 = vmatmul.mubr.bf16.gmra.mrb[0].mxu0 %v2165
      %v2279 = vpop.f32.mrb[0].mxu0
      %v2280 = vadd.f32 0.0, %v2279
      %v2281 = vpop.f32.mrb[0].mxu0
      %v2282 = vpop.f32.mrb[0].mxu0
      %v2283 = vadd.f32 0.0, %v2282
      %v2284 = vpop.f32.mrb[0].mxu0
      %2285 = vmatprep.mubr.bf16.mxu0 0
      %2286 = vmatmul.mubr.bf16.gmra.mrb[0].mxu0 %v2168
      %v2287 = vpop.f32.mrb[0].mxu0
      %v2288 = vadd.f32 0.0, %v2287
      %v2289 = vpop.f32.mrb[0].mxu0
      %v2290 = vpop.f32.mrb[0].mxu0
      %v2291 = vadd.f32 0.0, %v2290
      %v2292 = vpop.f32.mrb[0].mxu0
      %2293 = vmatprep.mubr.bf16.mxu0 0
      %2294 = vmatmul.mubr.bf16.gmra.mrb[0].mxu0 %v2171
      %v2295 = vpop.f32.mrb[0].mxu0
      %v2296 = vadd.f32 0.0, %v2295
      %v2297 = vpop.f32.mrb[0].mxu0
      %v2298 = vpop.f32.mrb[0].mxu0
      %v2299 = vadd.f32 0.0, %v2298
      %v2300 = vpop.f32.mrb[0].mxu0
      %2301 = vmatprep.mubr.bf16.mxu0 0
      %2302 = vmatmul.mubr.bf16.gmra.mrb[0].mxu0 %v2174
      %v2303 = vpop.f32.mrb[0].mxu0
      %v2304 = vadd.f32 0.0, %v2303
      %v2305 = vpop.f32.mrb[0].mxu0
      %v2306 = vpop.f32.mrb[0].mxu0
      %v2307 = vadd.f32 0.0, %v2306
      %v2308 = vpop.f32.mrb[0].mxu0
      %2309 = vmatprep.mubr.bf16.mxu0 0
      %2310 = vmatmul.mubr.bf16.gmra.mrb[0].mxu0 %v2177
      %v2311 = vpop.f32.mrb[0].mxu0
      %v2312 = vadd.f32 0.0, %v2311
      %v2313 = vpop.f32.mrb[0].mxu0
      %v2314 = vpop.f32.mrb[0].mxu0
      %v2315 = vadd.f32 0.0, %v2314
      %v2316 = vpop.f32.mrb[0].mxu0
      %2317 = vmatprep.mubr.bf16.mxu0 0
      %2318 = vmatmul.mubr.bf16.gmra.mrb[0].mxu0 %v2180
      %v2319 = vpop.f32.mrb[0].mxu0
      %v2320 = vadd.f32 0.0, %v2319
      %v2321 = vpop.f32.mrb[0].mxu0
      %v2322 = vpop.f32.mrb[0].mxu0
      %v2323 = vadd.f32 0.0, %v2322
      %v2324 = vpop.f32.mrb[0].mxu0
      %2325 = vmatprep.mubr.bf16.mxu0 0
      %2326 = vmatmul.mubr.bf16.gmra.mrb[0].mxu0 %v2183
      %v2327 = vpop.f32.mrb[0].mxu0
      %v2328 = vadd.f32 0.0, %v2327
      %v2329 = vpop.f32.mrb[0].mxu0
      %v2330 = vpop.f32.mrb[0].mxu0
      %v2331 = vadd.f32 0.0, %v2330
      %v2332 = vpop.f32.mrb[0].mxu0
      %2333 = vmatprep.mubr.bf16.mxu0 0
      %2334 = vmatmul.mubr.bf16.gmra.mrb[0].mxu0 %v2186
      %v2335 = vpop.f32.mrb[0].mxu0
      %v2336 = vadd.f32 0.0, %v2335
      %v2337 = vpop.f32.mrb[0].mxu0
      %v2338 = vpop.f32.mrb[0].mxu0
      %v2339 = vadd.f32 0.0, %v2338
      %v2340 = vpop.f32.mrb[0].mxu0
      %2341 = vmatprep.mubr.bf16.mxu0 0
      %2342 = vmatmul.mubr.bf16.gmra.mrb[0].mxu0 %v2189
      %v2343 = vpop.f32.mrb[0].mxu0
      %v2344 = vadd.f32 0.0, %v2343
      %v2345 = vpop.f32.mrb[0].mxu0
      %v2346 = vpop.f32.mrb[0].mxu0
      %v2347 = vadd.f32 0.0, %v2346
      %v2348 = vpop.f32.mrb[0].mxu0
      %2349 = vmatprep.mubr.bf16.mxu0 0
      %2350 = vmatmul.mubr.bf16.gmra.mrb[0].mxu0 %v2192
      %v2351 = vpop.f32.mrb[0].mxu0
      %v2352 = vadd.f32 0.0, %v2351
      %v2353 = vpop.f32.mrb[0].mxu0
      %v2354 = vpop.f32.mrb[0].mxu0
      %v2355 = vadd.f32 0.0, %v2354
      %v2356 = vpop.f32.mrb[0].mxu0
      %2357 = vdwg.mxu0
      %v2358 = vadd.f32 %v2064, %v2232
      %v2359 = vadd.f32 %v2065, %v2235
      %v2360 = vadd.f32 %v2066, %v2240
      %v2361 = vadd.f32 %v2067, %v2243
      %v2362 = vadd.f32 %v2068, %v2248
      %v2363 = vadd.f32 %v2069, %v2251
      %v2364 = vadd.f32 %v2070, %v2256
      %v2365 = vadd.f32 %v2071, %v2259
      %v2366 = vadd.f32 %v2072, %v2264
      %v2367 = vadd.f32 %v2073, %v2267
      %v2368 = vadd.f32 %v2074, %v2272
      %v2369 = vadd.f32 %v2075, %v2275
      %v2370 = vadd.f32 %v2076, %v2280
      %v2371 = vadd.f32 %v2077, %v2283
      %v2372 = vadd.f32 %v2078, %v2288
      %v2373 = vadd.f32 %v2079, %v2291
      %v2374 = vadd.f32 %v2080, %v2296
      %v2375 = vadd.f32 %v2081, %v2299
      %v2376 = vadd.f32 %v2082, %v2304
      %v2377 = vadd.f32 %v2083, %v2307
      %v2378 = vadd.f32 %v2084, %v2312
      %v2379 = vadd.f32 %v2085, %v2315
      %v2380 = vadd.f32 %v2086, %v2320
      %v2381 = vadd.f32 %v2087, %v2323
      %v2382 = vadd.f32 %v2088, %v2328
      %v2383 = vadd.f32 %v2089, %v2331
      %v2384 = vadd.f32 %v2090, %v2336
      %v2385 = vadd.f32 %v2091, %v2339
      %v2386 = vadd.f32 %v2092, %v2344
      %v2387 = vadd.f32 %v2093, %v2347
      %v2388 = vadd.f32 %v2094, %v2352
      %v2389 = vadd.f32 %v2095, %v2355
      %v2390 = vld [vmem:[#allocation2 + $0x19] sm:$0xff]
      %v2391 = vld [vmem:[#allocation2 + $0x21] sm:$0xff]
      %v2392 = vld [vmem:[#allocation2 + $0x29] sm:$0xff]
      %v2393 = vld [vmem:[#allocation2 + $0x31] sm:$0xff]
      %v2394 = vld [vmem:[#allocation2 + $0x39] sm:$0xff]
      %v2395 = vld [vmem:[#allocation2 + $0x41] sm:$0xff]
      %v2396 = vld [vmem:[#allocation2 + $0x49] sm:$0xff]
      %v2397 = vld [vmem:[#allocation2 + $0x51] sm:$0xff]
      %v2398 = vld [vmem:[#allocation2 + $0x59] sm:$0xff]
      %v2399 = vld [vmem:[#allocation2 + $0x61] sm:$0xff]
      %v2400 = vld [vmem:[#allocation2 + $0x69] sm:$0xff]
      %v2401 = vld [vmem:[#allocation2 + $0x71] sm:$0xff]
      %v2402 = vld [vmem:[#allocation2 + $0x79] sm:$0xff]
      %v2403 = vld [vmem:[#allocation2 + $0x81] sm:$0xff]
      %v2404 = vld [vmem:[#allocation2 + $0x89] sm:$0xff]
      %v2405 = vld [vmem:[#allocation2 + $0x91] sm:$0xff]
      %v2406 = vld [vmem:[#allocation2 + $0x99] sm:$0xff]
      %v2407 = vld [vmem:[#allocation2 + $0xa1] sm:$0xff]
      %v2408 = vld [vmem:[#allocation2 + $0xa9] sm:$0xff]
      %v2409 = vld [vmem:[#allocation2 + $0xb1] sm:$0xff]
      %v2410 = vld [vmem:[#allocation2 + $0xb9] sm:$0xff]
      %v2411 = vld [vmem:[#allocation2 + $0xc1] sm:$0xff]
      %v2412 = vld [vmem:[#allocation2 + $0xc9] sm:$0xff]
      %v2413 = vld [vmem:[#allocation2 + $0xd1] sm:$0xff]
      %v2414 = vld [vmem:[#allocation2 + $0xd9] sm:$0xff]
      %v2415 = vld [vmem:[#allocation2 + $0xe1] sm:$0xff]
      %v2416 = vld [vmem:[#allocation2 + $0xe9] sm:$0xff]
      %v2417 = vld [vmem:[#allocation2 + $0xf1] sm:$0xff]
      %v2418 = vld [vmem:[#allocation2 + $0xf9] sm:$0xff]
      %v2419 = vld [vmem:[#allocation2 + $0x101] sm:$0xff]
      %v2420 = vld [vmem:[#allocation2 + $0x109] sm:$0xff]
      %v2421 = vld [vmem:[#allocation2 + $0x111] sm:$0xff]
      %v2422 = vmul.f32 %v2390, %v1319
      %v2423 = vmul.f32 %v2391, %v1324
      %v2424 = vmul.f32 %v2392, %v1329
      %v2425 = vmul.f32 %v2393, %v1334
      %v2426 = vmul.f32 %v2394, %v1339
      %v2427 = vmul.f32 %v2395, %v1344
      %v2428 = vmul.f32 %v2396, %v1349
      %v2429 = vmul.f32 %v2397, %v1354
      %v2430 = vmul.f32 %v2398, %v1359
      %v2431 = vmul.f32 %v2399, %v1364
      %v2432 = vmul.f32 %v2400, %v1369
      %v2433 = vmul.f32 %v2401, %v1374
      %v2434 = vmul.f32 %v2402, %v1379
      %v2435 = vmul.f32 %v2403, %v1384
      %v2436 = vmul.f32 %v2404, %v1389
      %v2437 = vmul.f32 %v2405, %v1394
      %v2438 = vmul.f32 %v2406, %v1399
      %v2439 = vmul.f32 %v2407, %v1404
      %v2440 = vmul.f32 %v2408, %v1409
      %v2441 = vmul.f32 %v2409, %v1414
      %v2442 = vmul.f32 %v2410, %v1419
      %v2443 = vmul.f32 %v2411, %v1424
      %v2444 = vmul.f32 %v2412, %v1429
      %v2445 = vmul.f32 %v2413, %v1434
      %v2446 = vmul.f32 %v2414, %v1439
      %v2447 = vmul.f32 %v2415, %v1444
      %v2448 = vmul.f32 %v2416, %v1449
      %v2449 = vmul.f32 %v2417, %v1454
      %v2450 = vmul.f32 %v2418, %v1459
      %v2451 = vmul.f32 %v2419, %v1464
      %v2452 = vmul.f32 %v2420, %v1469
      %v2453 = vmul.f32 %v2421, %v1474
      %v2454 = vpack.c.bf16 %v2423, %v2422
      %v2455 = vpack.c.bf16 %v2425, %v2424
      %v2456 = vpack.c.bf16 %v2427, %v2426
      %v2457 = vpack.c.bf16 %v2429, %v2428
      %v2458 = vpack.c.bf16 %v2431, %v2430
      %v2459 = vpack.c.bf16 %v2433, %v2432
      %v2460 = vpack.c.bf16 %v2435, %v2434
      %v2461 = vpack.c.bf16 %v2437, %v2436
      %v2462 = vpack.c.bf16 %v2439, %v2438
      %v2463 = vpack.c.bf16 %v2441, %v2440
      %v2464 = vpack.c.bf16 %v2443, %v2442
      %v2465 = vpack.c.bf16 %v2445, %v2444
      %v2466 = vpack.c.bf16 %v2447, %v2446
      %v2467 = vpack.c.bf16 %v2449, %v2448
      %v2468 = vpack.c.bf16 %v2451, %v2450
      %v2469 = vpack.c.bf16 %v2453, %v2452
      %s2470 = scalar_lea.vmem %s3, 10
      %v2471 = vld [vmem:[%s2470] sm:$0x3]
      %v2473 = vsel %vm465, %v2454, 0
      %v2476 = vsel %vm465, %v2455, 0
      %v2479 = vsel %vm465, %v2456, 0
      %v2482 = vsel %vm465, %v2457, 0
      %v2485 = vsel %vm465, %v2458, 0
      %v2488 = vsel %vm465, %v2459, 0
      %v2491 = vsel %vm465, %v2460, 0
      %v2494 = vsel %vm465, %v2461, 0
      %v2497 = vsel %vm465, %v2462, 0
      %v2500 = vsel %vm465, %v2463, 0
      %v2503 = vsel %vm465, %v2464, 0
      %v2506 = vsel %vm465, %v2465, 0
      %v2509 = vsel %vm465, %v2466, 0
      %v2512 = vsel %vm465, %v2467, 0
      %v2515 = vsel %vm465, %v2468, 0
      %v2518 = vsel %vm465, %v2469, 0
      %v2521 = vsel %vm875, %v2471, 0
      %2523 = vmatprep.subr.bf16.mxu0 0
      %2524 = vmatpush1.bf16.msra.mxu0 %v2521
      %2525 = vmatprep.subr.bf16.mxu0 0
      %2526 = vmatpush1.bf16.msra.mxu0 0
      %2527 = vmatprep.subr.bf16.mxu0 0
      %2528 = vmatpush1.bf16.msra.mxu0 0
      %2529 = vmatprep.subr.bf16.mxu0 0
      %2530 = vmatpush1.bf16.msra.mxu0 0
      %2531 = vmatprep.subr.bf16.mxu0 0
      %2532 = vmatpush1.bf16.msra.mxu0 0
      %2533 = vmatprep.subr.bf16.mxu0 0
      %2534 = vmatpush1.bf16.msra.mxu0 0
      %2535 = vmatprep.subr.bf16.mxu0 0
      %2536 = vmatpush1.bf16.msra.mxu0 0
      %2537 = vmatprep.subr.bf16.mxu0 0
      %2538 = vmatpush1.bf16.msra.mxu0 0
      %2539 = vmatprep.subr.bf16.mxu0 0
      %2540 = vmatpush1.bf16.msra.mxu0 0
      %2541 = vmatprep.subr.bf16.mxu0 0
      %2542 = vmatpush1.bf16.msra.mxu0 0
      %2543 = vmatprep.subr.bf16.mxu0 0
      %2544 = vmatpush1.bf16.msra.mxu0 0
      %2545 = vmatprep.subr.bf16.mxu0 0
      %2546 = vmatpush1.bf16.msra.mxu0 0
      %2547 = vmatprep.subr.bf16.mxu0 0
      %2548 = vmatpush1.bf16.msra.mxu0 0
      %2549 = vmatprep.subr.bf16.mxu0 0
      %2550 = vmatpush1.bf16.msra.mxu0 0
      %2551 = vmatprep.subr.bf16.mxu0 0
      %2552 = vmatpush1.bf16.msra.mxu0 0
      %2553 = vmatprep.subr.bf16.mxu0 0
      %2554 = vmatpush1.bf16.msra.mxu0 0
      %2555 = vmatprep.mubr.bf16.mxu0 0
      %2556 = vmatmul.mubr.bf16.gmra.mrb[0].mxu0 %v2473
      %v2557 = vpop.f32.mrb[0].mxu0
      %v2558 = vadd.f32 0.0, %v2557
      %v2559 = vpop.f32.mrb[0].mxu0
      %v2560 = vpop.f32.mrb[0].mxu0
      %v2561 = vadd.f32 0.0, %v2560
      %v2562 = vpop.f32.mrb[0].mxu0
      %2563 = vmatprep.mubr.bf16.mxu0 0
      %2564 = vmatmul.mubr.bf16.gmra.mrb[0].mxu0 %v2476
      %v2565 = vpop.f32.mrb[0].mxu0
      %v2566 = vadd.f32 0.0, %v2565
      %v2567 = vpop.f32.mrb[0].mxu0
      %v2568 = vpop.f32.mrb[0].mxu0
      %v2569 = vadd.f32 0.0, %v2568
      %v2570 = vpop.f32.mrb[0].mxu0
      %2571 = vmatprep.mubr.bf16.mxu0 0
      %2572 = vmatmul.mubr.bf16.gmra.mrb[0].mxu0 %v2479
      %v2573 = vpop.f32.mrb[0].mxu0
      %v2574 = vadd.f32 0.0, %v2573
      %v2575 = vpop.f32.mrb[0].mxu0
      %v2576 = vpop.f32.mrb[0].mxu0
      %v2577 = vadd.f32 0.0, %v2576
      %v2578 = vpop.f32.mrb[0].mxu0
      %2579 = vmatprep.mubr.bf16.mxu0 0
      %2580 = vmatmul.mubr.bf16.gmra.mrb[0].mxu0 %v2482
      %v2581 = vpop.f32.mrb[0].mxu0
      %v2582 = vadd.f32 0.0, %v2581
      %v2583 = vpop.f32.mrb[0].mxu0
      %v2584 = vpop.f32.mrb[0].mxu0
      %v2585 = vadd.f32 0.0, %v2584
      %v2586 = vpop.f32.mrb[0].mxu0
      %2587 = vmatprep.mubr.bf16.mxu0 0
      %2588 = vmatmul.mubr.bf16.gmra.mrb[0].mxu0 %v2485
      %v2589 = vpop.f32.mrb[0].mxu0
      %v2590 = vadd.f32 0.0, %v2589
      %v2591 = vpop.f32.mrb[0].mxu0
      %v2592 = vpop.f32.mrb[0].mxu0
      %v2593 = vadd.f32 0.0, %v2592
      %v2594 = vpop.f32.mrb[0].mxu0
      %2595 = vmatprep.mubr.bf16.mxu0 0
      %2596 = vmatmul.mubr.bf16.gmra.mrb[0].mxu0 %v2488
      %v2597 = vpop.f32.mrb[0].mxu0
      %v2598 = vadd.f32 0.0, %v2597
      %v2599 = vpop.f32.mrb[0].mxu0
      %v2600 = vpop.f32.mrb[0].mxu0
      %v2601 = vadd.f32 0.0, %v2600
      %v2602 = vpop.f32.mrb[0].mxu0
      %2603 = vmatprep.mubr.bf16.mxu0 0
      %2604 = vmatmul.mubr.bf16.gmra.mrb[0].mxu0 %v2491
      %v2605 = vpop.f32.mrb[0].mxu0
      %v2606 = vadd.f32 0.0, %v2605
      %v2607 = vpop.f32.mrb[0].mxu0
      %v2608 = vpop.f32.mrb[0].mxu0
      %v2609 = vadd.f32 0.0, %v2608
      %v2610 = vpop.f32.mrb[0].mxu0
      %2611 = vmatprep.mubr.bf16.mxu0 0
      %2612 = vmatmul.mubr.bf16.gmra.mrb[0].mxu0 %v2494
      %v2613 = vpop.f32.mrb[0].mxu0
      %v2614 = vadd.f32 0.0, %v2613
      %v2615 = vpop.f32.mrb[0].mxu0
      %v2616 = vpop.f32.mrb[0].mxu0
      %v2617 = vadd.f32 0.0, %v2616
      %v2618 = vpop.f32.mrb[0].mxu0
      %2619 = vmatprep.mubr.bf16.mxu0 0
      %2620 = vmatmul.mubr.bf16.gmra.mrb[0].mxu0 %v2497
      %v2621 = vpop.f32.mrb[0].mxu0
      %v2622 = vadd.f32 0.0, %v2621
      %v2623 = vpop.f32.mrb[0].mxu0
      %v2624 = vpop.f32.mrb[0].mxu0
      %v2625 = vadd.f32 0.0, %v2624
      %v2626 = vpop.f32.mrb[0].mxu0
      %2627 = vmatprep.mubr.bf16.mxu0 0
      %2628 = vmatmul.mubr.bf16.gmra.mrb[0].mxu0 %v2500
      %v2629 = vpop.f32.mrb[0].mxu0
      %v2630 = vadd.f32 0.0, %v2629
      %v2631 = vpop.f32.mrb[0].mxu0
      %v2632 = vpop.f32.mrb[0].mxu0
      %v2633 = vadd.f32 0.0, %v2632
      %v2634 = vpop.f32.mrb[0].mxu0
      %2635 = vmatprep.mubr.bf16.mxu0 0
      %2636 = vmatmul.mubr.bf16.gmra.mrb[0].mxu0 %v2503
      %v2637 = vpop.f32.mrb[0].mxu0
      %v2638 = vadd.f32 0.0, %v2637
      %v2639 = vpop.f32.mrb[0].mxu0
      %v2640 = vpop.f32.mrb[0].mxu0
      %v2641 = vadd.f32 0.0, %v2640
      %v2642 = vpop.f32.mrb[0].mxu0
      %2643 = vmatprep.mubr.bf16.mxu0 0
      %2644 = vmatmul.mubr.bf16.gmra.mrb[0].mxu0 %v2506
      %v2645 = vpop.f32.mrb[0].mxu0
      %v2646 = vadd.f32 0.0, %v2645
      %v2647 = vpop.f32.mrb[0].mxu0
      %v2648 = vpop.f32.mrb[0].mxu0
      %v2649 = vadd.f32 0.0, %v2648
      %v2650 = vpop.f32.mrb[0].mxu0
      %2651 = vmatprep.mubr.bf16.mxu0 0
      %2652 = vmatmul.mubr.bf16.gmra.mrb[0].mxu0 %v2509
      %v2653 = vpop.f32.mrb[0].mxu0
      %v2654 = vadd.f32 0.0, %v2653
      %v2655 = vpop.f32.mrb[0].mxu0
      %v2656 = vpop.f32.mrb[0].mxu0
      %v2657 = vadd.f32 0.0, %v2656
      %v2658 = vpop.f32.mrb[0].mxu0
      %2659 = vmatprep.mubr.bf16.mxu0 0
      %2660 = vmatmul.mubr.bf16.gmra.mrb[0].mxu0 %v2512
      %v2661 = vpop.f32.mrb[0].mxu0
      %v2662 = vadd.f32 0.0, %v2661
      %v2663 = vpop.f32.mrb[0].mxu0
      %v2664 = vpop.f32.mrb[0].mxu0
      %v2665 = vadd.f32 0.0, %v2664
      %v2666 = vpop.f32.mrb[0].mxu0
      %2667 = vmatprep.mubr.bf16.mxu0 0
      %2668 = vmatmul.mubr.bf16.gmra.mrb[0].mxu0 %v2515
      %v2669 = vpop.f32.mrb[0].mxu0
      %v2670 = vadd.f32 0.0, %v2669
      %v2671 = vpop.f32.mrb[0].mxu0
      %v2672 = vpop.f32.mrb[0].mxu0
      %v2673 = vadd.f32 0.0, %v2672
      %v2674 = vpop.f32.mrb[0].mxu0
      %2675 = vmatprep.mubr.bf16.mxu0 0
      %2676 = vmatmul.mubr.bf16.gmra.mrb[0].mxu0 %v2518
      %v2677 = vpop.f32.mrb[0].mxu0
      %v2678 = vadd.f32 0.0, %v2677
      %v2679 = vpop.f32.mrb[0].mxu0
      %v2680 = vpop.f32.mrb[0].mxu0
      %v2681 = vadd.f32 0.0, %v2680
      %v2682 = vpop.f32.mrb[0].mxu0
      %2683 = vdwg.mxu0
      %v2684 = vadd.f32 %v2358, %v2558
      %v2685 = vadd.f32 %v2359, %v2561
      %v2686 = vadd.f32 %v2360, %v2566
      %v2687 = vadd.f32 %v2361, %v2569
      %v2688 = vadd.f32 %v2362, %v2574
      %v2689 = vadd.f32 %v2363, %v2577
      %v2690 = vadd.f32 %v2364, %v2582
      %v2691 = vadd.f32 %v2365, %v2585
      %v2692 = vadd.f32 %v2366, %v2590
      %v2693 = vadd.f32 %v2367, %v2593
      %v2694 = vadd.f32 %v2368, %v2598
      %v2695 = vadd.f32 %v2369, %v2601
      %v2696 = vadd.f32 %v2370, %v2606
      %v2697 = vadd.f32 %v2371, %v2609
      %v2698 = vadd.f32 %v2372, %v2614
      %v2699 = vadd.f32 %v2373, %v2617
      %v2700 = vadd.f32 %v2374, %v2622
      %v2701 = vadd.f32 %v2375, %v2625
      %v2702 = vadd.f32 %v2376, %v2630
      %v2703 = vadd.f32 %v2377, %v2633
      %v2704 = vadd.f32 %v2378, %v2638
      %v2705 = vadd.f32 %v2379, %v2641
      %v2706 = vadd.f32 %v2380, %v2646
      %v2707 = vadd.f32 %v2381, %v2649
      %v2708 = vadd.f32 %v2382, %v2654
      %v2709 = vadd.f32 %v2383, %v2657
      %v2710 = vadd.f32 %v2384, %v2662
      %v2711 = vadd.f32 %v2385, %v2665
      %v2712 = vadd.f32 %v2386, %v2670
      %v2713 = vadd.f32 %v2387, %v2673
      %v2714 = vadd.f32 %v2388, %v2678
      %v2715 = vadd.f32 %v2389, %v2681
      %v2716 = vld [vmem:[#allocation2 + $0x27] sm:$0xff]
      %v2717 = vld [vmem:[#allocation2 + $0x2f] sm:$0xff]
      %v2718 = vld [vmem:[#allocation2 + $0x37] sm:$0xff]
      %v2719 = vld [vmem:[#allocation2 + $0x3f] sm:$0xff]
      %v2720 = vld [vmem:[#allocation2 + $0x47] sm:$0xff]
      %v2721 = vld [vmem:[#allocation2 + $0x4f] sm:$0xff]
      %v2722 = vld [vmem:[#allocation2 + $0x57] sm:$0xff]
      %v2723 = vld [vmem:[#allocation2 + $0x5f] sm:$0xff]
      %v2724 = vld [vmem:[#allocation2 + $0x67] sm:$0xff]
      %v2725 = vld [vmem:[#allocation2 + $0x6f] sm:$0xff]
      %v2726 = vld [vmem:[#allocation2 + $0x77] sm:$0xff]
      %v2727 = vld [vmem:[#allocation2 + $0x7f] sm:$0xff]
      %v2728 = vld [vmem:[#allocation2 + $0x87] sm:$0xff]
      %v2729 = vld [vmem:[#allocation2 + $0x8f] sm:$0xff]
      %v2730 = vld [vmem:[#allocation2 + $0x97] sm:$0xff]
      %v2731 = vld [vmem:[#allocation2 + $0x9f] sm:$0xff]
      %v2732 = vld [vmem:[#allocation2 + $0xa7] sm:$0xff]
      %v2733 = vld [vmem:[#allocation2 + $0xaf] sm:$0xff]
      %v2734 = vld [vmem:[#allocation2 + $0xb7] sm:$0xff]
      %v2735 = vld [vmem:[#allocation2 + $0xbf] sm:$0xff]
      %v2736 = vld [vmem:[#allocation2 + $0xc7] sm:$0xff]
      %v2737 = vld [vmem:[#allocation2 + $0xcf] sm:$0xff]
      %v2738 = vld [vmem:[#allocation2 + $0xd7] sm:$0xff]
      %v2739 = vld [vmem:[#allocation2 + $0xdf] sm:$0xff]
      %v2740 = vld [vmem:[#allocation2 + $0xe7] sm:$0xff]
      %v2741 = vld [vmem:[#allocation2 + $0xef] sm:$0xff]
      %v2742 = vld [vmem:[#allocation2 + $0xf7] sm:$0xff]
      %v2743 = vld [vmem:[#allocation2 + $0xff] sm:$0xff]
      %v2744 = vld [vmem:[#allocation2 + $0x107] sm:$0xff]
      %v2745 = vld [vmem:[#allocation2 + $0x10f] sm:$0xff]
      %v2746 = vld [vmem:[#allocation2 + $0x117] sm:$0xff]
      %v2747 = vld [vmem:[#allocation2 + $0x11f] sm:$0xff]
      %v2748 = vmul.f32 %v2716, %v571
      %v2749 = vmul.f32 %v2717, %v576
      %v2750 = vmul.f32 %v2718, %v581
      %v2751 = vmul.f32 %v2719, %v586
      %v2752 = vmul.f32 %v2720, %v591
      %v2753 = vmul.f32 %v2721, %v596
      %v2754 = vmul.f32 %v2722, %v601
      %v2755 = vmul.f32 %v2723, %v606
      %v2756 = vmul.f32 %v2724, %v611
      %v2757 = vmul.f32 %v2725, %v616
      %v2758 = vmul.f32 %v2726, %v621
      %v2759 = vmul.f32 %v2727, %v626
      %v2760 = vmul.f32 %v2728, %v631
      %v2761 = vmul.f32 %v2729, %v636
      %v2762 = vmul.f32 %v2730, %v641
      %v2763 = vmul.f32 %v2731, %v646
      %v2764 = vmul.f32 %v2732, %v651
      %v2765 = vmul.f32 %v2733, %v656
      %v2766 = vmul.f32 %v2734, %v661
      %v2767 = vmul.f32 %v2735, %v666
      %v2768 = vmul.f32 %v2736, %v671
      %v2769 = vmul.f32 %v2737, %v676
      %v2770 = vmul.f32 %v2738, %v681
      %v2771 = vmul.f32 %v2739, %v686
      %v2772 = vmul.f32 %v2740, %v691
      %v2773 = vmul.f32 %v2741, %v696
      %v2774 = vmul.f32 %v2742, %v701
      %v2775 = vmul.f32 %v2743, %v706
      %v2776 = vmul.f32 %v2744, %v711
      %v2777 = vmul.f32 %v2745, %v716
      %v2778 = vmul.f32 %v2746, %v721
      %v2779 = vmul.f32 %v2747, %v726
      %v2780 = vpack.c.bf16 %v2749, %v2748
      %v2781 = vpack.c.bf16 %v2751, %v2750
      %v2782 = vpack.c.bf16 %v2753, %v2752
      %v2783 = vpack.c.bf16 %v2755, %v2754
      %v2784 = vpack.c.bf16 %v2757, %v2756
      %v2785 = vpack.c.bf16 %v2759, %v2758
      %v2786 = vpack.c.bf16 %v2761, %v2760
      %v2787 = vpack.c.bf16 %v2763, %v2762
      %v2788 = vpack.c.bf16 %v2765, %v2764
      %v2789 = vpack.c.bf16 %v2767, %v2766
      %v2790 = vpack.c.bf16 %v2769, %v2768
      %v2791 = vpack.c.bf16 %v2771, %v2770
      %v2792 = vpack.c.bf16 %v2773, %v2772
      %v2793 = vpack.c.bf16 %v2775, %v2774
      %v2794 = vpack.c.bf16 %v2777, %v2776
      %v2795 = vpack.c.bf16 %v2779, %v2778
      %s2796 = scalar_lea.vmem %s3, 12
      %v2797 = vld [vmem:[%s2796] sm:$0x3]
      %v2799 = vsel %vm465, %v2780, 0
      %v2802 = vsel %vm465, %v2781, 0
      %v2805 = vsel %vm465, %v2782, 0
      %v2808 = vsel %vm465, %v2783, 0
      %v2811 = vsel %vm465, %v2784, 0
      %v2814 = vsel %vm465, %v2785, 0
      %v2817 = vsel %vm465, %v2786, 0
      %v2820 = vsel %vm465, %v2787, 0
      %v2823 = vsel %vm465, %v2788, 0
      %v2826 = vsel %vm465, %v2789, 0
      %v2829 = vsel %vm465, %v2790, 0
      %v2832 = vsel %vm465, %v2791, 0
      %v2835 = vsel %vm465, %v2792, 0
      %v2838 = vsel %vm465, %v2793, 0
      %v2841 = vsel %vm465, %v2794, 0
      %v2844 = vsel %vm465, %v2795, 0
      %v2847 = vsel %vm875, %v2797, 0
      %2849 = vmatprep.subr.bf16.mxu0 0
      %2850 = vmatpush1.bf16.msra.mxu0 %v2847
      %2851 = vmatprep.subr.bf16.mxu0 0
      %2852 = vmatpush1.bf16.msra.mxu0 0
      %2853 = vmatprep.subr.bf16.mxu0 0
      %2854 = vmatpush1.bf16.msra.mxu0 0
      %2855 = vmatprep.subr.bf16.mxu0 0
      %2856 = vmatpush1.bf16.msra.mxu0 0
      %2857 = vmatprep.subr.bf16.mxu0 0
      %2858 = vmatpush1.bf16.msra.mxu0 0
      %2859 = vmatprep.subr.bf16.mxu0 0
      %2860 = vmatpush1.bf16.msra.mxu0 0
      %2861 = vmatprep.subr.bf16.mxu0 0
      %2862 = vmatpush1.bf16.msra.mxu0 0
      %2863 = vmatprep.subr.bf16.mxu0 0
      %2864 = vmatpush1.bf16.msra.mxu0 0
      %2865 = vmatprep.subr.bf16.mxu0 0
      %2866 = vmatpush1.bf16.msra.mxu0 0
      %2867 = vmatprep.subr.bf16.mxu0 0
      %2868 = vmatpush1.bf16.msra.mxu0 0
      %2869 = vmatprep.subr.bf16.mxu0 0
      %2870 = vmatpush1.bf16.msra.mxu0 0
      %2871 = vmatprep.subr.bf16.mxu0 0
      %2872 = vmatpush1.bf16.msra.mxu0 0
      %2873 = vmatprep.subr.bf16.mxu0 0
      %2874 = vmatpush1.bf16.msra.mxu0 0
      %2875 = vmatprep.subr.bf16.mxu0 0
      %2876 = vmatpush1.bf16.msra.mxu0 0
      %2877 = vmatprep.subr.bf16.mxu0 0
      %2878 = vmatpush1.bf16.msra.mxu0 0
      %2879 = vmatprep.subr.bf16.mxu0 0
      %2880 = vmatpush1.bf16.msra.mxu0 0
      %2881 = vmatprep.mubr.bf16.mxu0 0
      %2882 = vmatmul.mubr.bf16.gmra.mrb[0].mxu0 %v2799
      %v2883 = vpop.f32.mrb[0].mxu0
      %v2884 = vadd.f32 0.0, %v2883
      %v2885 = vpop.f32.mrb[0].mxu0
      %v2886 = vpop.f32.mrb[0].mxu0
      %v2887 = vadd.f32 0.0, %v2886
      %v2888 = vpop.f32.mrb[0].mxu0
      %2889 = vmatprep.mubr.bf16.mxu0 0
      %2890 = vmatmul.mubr.bf16.gmra.mrb[0].mxu0 %v2802
      %v2891 = vpop.f32.mrb[0].mxu0
      %v2892 = vadd.f32 0.0, %v2891
      %v2893 = vpop.f32.mrb[0].mxu0
      %v2894 = vpop.f32.mrb[0].mxu0
      %v2895 = vadd.f32 0.0, %v2894
      %v2896 = vpop.f32.mrb[0].mxu0
      %2897 = vmatprep.mubr.bf16.mxu0 0
      %2898 = vmatmul.mubr.bf16.gmra.mrb[0].mxu0 %v2805
      %v2899 = vpop.f32.mrb[0].mxu0
      %v2900 = vadd.f32 0.0, %v2899
      %v2901 = vpop.f32.mrb[0].mxu0
      %v2902 = vpop.f32.mrb[0].mxu0
      %v2903 = vadd.f32 0.0, %v2902
      %v2904 = vpop.f32.mrb[0].mxu0
      %2905 = vmatprep.mubr.bf16.mxu0 0
      %2906 = vmatmul.mubr.bf16.gmra.mrb[0].mxu0 %v2808
      %v2907 = vpop.f32.mrb[0].mxu0
      %v2908 = vadd.f32 0.0, %v2907
      %v2909 = vpop.f32.mrb[0].mxu0
      %v2910 = vpop.f32.mrb[0].mxu0
      %v2911 = vadd.f32 0.0, %v2910
      %v2912 = vpop.f32.mrb[0].mxu0
      %2913 = vmatprep.mubr.bf16.mxu0 0
      %2914 = vmatmul.mubr.bf16.gmra.mrb[0].mxu0 %v2811
      %v2915 = vpop.f32.mrb[0].mxu0
      %v2916 = vadd.f32 0.0, %v2915
      %v2917 = vpop.f32.mrb[0].mxu0
      %v2918 = vpop.f32.mrb[0].mxu0
      %v2919 = vadd.f32 0.0, %v2918
      %v2920 = vpop.f32.mrb[0].mxu0
      %2921 = vmatprep.mubr.bf16.mxu0 0
      %2922 = vmatmul.mubr.bf16.gmra.mrb[0].mxu0 %v2814
      %v2923 = vpop.f32.mrb[0].mxu0
      %v2924 = vadd.f32 0.0, %v2923
      %v2925 = vpop.f32.mrb[0].mxu0
      %v2926 = vpop.f32.mrb[0].mxu0
      %v2927 = vadd.f32 0.0, %v2926
      %v2928 = vpop.f32.mrb[0].mxu0
      %2929 = vmatprep.mubr.bf16.mxu0 0
      %2930 = vmatmul.mubr.bf16.gmra.mrb[0].mxu0 %v2817
      %v2931 = vpop.f32.mrb[0].mxu0
      %v2932 = vadd.f32 0.0, %v2931
      %v2933 = vpop.f32.mrb[0].mxu0
      %v2934 = vpop.f32.mrb[0].mxu0
      %v2935 = vadd.f32 0.0, %v2934
      %v2936 = vpop.f32.mrb[0].mxu0
      %2937 = vmatprep.mubr.bf16.mxu0 0
      %2938 = vmatmul.mubr.bf16.gmra.mrb[0].mxu0 %v2820
      %v2939 = vpop.f32.mrb[0].mxu0
      %v2940 = vadd.f32 0.0, %v2939
      %v2941 = vpop.f32.mrb[0].mxu0
      %v2942 = vpop.f32.mrb[0].mxu0
      %v2943 = vadd.f32 0.0, %v2942
      %v2944 = vpop.f32.mrb[0].mxu0
      %2945 = vmatprep.mubr.bf16.mxu0 0
      %2946 = vmatmul.mubr.bf16.gmra.mrb[0].mxu0 %v2823
      %v2947 = vpop.f32.mrb[0].mxu0
      %v2948 = vadd.f32 0.0, %v2947
      %v2949 = vpop.f32.mrb[0].mxu0
      %v2950 = vpop.f32.mrb[0].mxu0
      %v2951 = vadd.f32 0.0, %v2950
      %v2952 = vpop.f32.mrb[0].mxu0
      %2953 = vmatprep.mubr.bf16.mxu0 0
      %2954 = vmatmul.mubr.bf16.gmra.mrb[0].mxu0 %v2826
      %v2955 = vpop.f32.mrb[0].mxu0
      %v2956 = vadd.f32 0.0, %v2955
      %v2957 = vpop.f32.mrb[0].mxu0
      %v2958 = vpop.f32.mrb[0].mxu0
      %v2959 = vadd.f32 0.0, %v2958
      %v2960 = vpop.f32.mrb[0].mxu0
      %2961 = vmatprep.mubr.bf16.mxu0 0
      %2962 = vmatmul.mubr.bf16.gmra.mrb[0].mxu0 %v2829
      %v2963 = vpop.f32.mrb[0].mxu0
      %v2964 = vadd.f32 0.0, %v2963
      %v2965 = vpop.f32.mrb[0].mxu0
      %v2966 = vpop.f32.mrb[0].mxu0
      %v2967 = vadd.f32 0.0, %v2966
      %v2968 = vpop.f32.mrb[0].mxu0
      %2969 = vmatprep.mubr.bf16.mxu0 0
      %2970 = vmatmul.mubr.bf16.gmra.mrb[0].mxu0 %v2832
      %v2971 = vpop.f32.mrb[0].mxu0
      %v2972 = vadd.f32 0.0, %v2971
      %v2973 = vpop.f32.mrb[0].mxu0
      %v2974 = vpop.f32.mrb[0].mxu0
      %v2975 = vadd.f32 0.0, %v2974
      %v2976 = vpop.f32.mrb[0].mxu0
      %2977 = vmatprep.mubr.bf16.mxu0 0
      %2978 = vmatmul.mubr.bf16.gmra.mrb[0].mxu0 %v2835
      %v2979 = vpop.f32.mrb[0].mxu0
      %v2980 = vadd.f32 0.0, %v2979
      %v2981 = vpop.f32.mrb[0].mxu0
      %v2982 = vpop.f32.mrb[0].mxu0
      %v2983 = vadd.f32 0.0, %v2982
      %v2984 = vpop.f32.mrb[0].mxu0
      %2985 = vmatprep.mubr.bf16.mxu0 0
      %2986 = vmatmul.mubr.bf16.gmra.mrb[0].mxu0 %v2838
      %v2987 = vpop.f32.mrb[0].mxu0
      %v2988 = vadd.f32 0.0, %v2987
      %v2989 = vpop.f32.mrb[0].mxu0
      %v2990 = vpop.f32.mrb[0].mxu0
      %v2991 = vadd.f32 0.0, %v2990
      %v2992 = vpop.f32.mrb[0].mxu0
      %2993 = vmatprep.mubr.bf16.mxu0 0
      %2994 = vmatmul.mubr.bf16.gmra.mrb[0].mxu0 %v2841
      %v2995 = vpop.f32.mrb[0].mxu0
      %v2996 = vadd.f32 0.0, %v2995
      %v2997 = vpop.f32.mrb[0].mxu0
      %v2998 = vpop.f32.mrb[0].mxu0
      %v2999 = vadd.f32 0.0, %v2998
      %v3000 = vpop.f32.mrb[0].mxu0
      %3001 = vmatprep.mubr.bf16.mxu0 0
      %3002 = vmatmul.mubr.bf16.gmra.mrb[0].mxu0 %v2844
      %v3003 = vpop.f32.mrb[0].mxu0
      %v3004 = vadd.f32 0.0, %v3003
      %v3005 = vpop.f32.mrb[0].mxu0
      %v3006 = vpop.f32.mrb[0].mxu0
      %v3007 = vadd.f32 0.0, %v3006
      %v3008 = vpop.f32.mrb[0].mxu0
      %3009 = vdwg.mxu0
      %v3010 = vadd.f32 %v2684, %v2884
      %v3011 = vadd.f32 %v2685, %v2887
      %v3012 = vadd.f32 %v2686, %v2892
      %v3013 = vadd.f32 %v2687, %v2895
      %v3014 = vadd.f32 %v2688, %v2900
      %v3015 = vadd.f32 %v2689, %v2903
      %v3016 = vadd.f32 %v2690, %v2908
      %v3017 = vadd.f32 %v2691, %v2911
      %v3018 = vadd.f32 %v2692, %v2916
      %v3019 = vadd.f32 %v2693, %v2919
      %v3020 = vadd.f32 %v2694, %v2924
      %v3021 = vadd.f32 %v2695, %v2927
      %v3022 = vadd.f32 %v2696, %v2932
      %v3023 = vadd.f32 %v2697, %v2935
      %v3024 = vadd.f32 %v2698, %v2940
      %v3025 = vadd.f32 %v2699, %v2943
      %v3026 = vadd.f32 %v2700, %v2948
      %v3027 = vadd.f32 %v2701, %v2951
      %v3028 = vadd.f32 %v2702, %v2956
      %v3029 = vadd.f32 %v2703, %v2959
      %v3030 = vadd.f32 %v2704, %v2964
      %v3031 = vadd.f32 %v2705, %v2967
      %v3032 = vadd.f32 %v2706, %v2972
      %v3033 = vadd.f32 %v2707, %v2975
      %v3034 = vadd.f32 %v2708, %v2980
      %v3035 = vadd.f32 %v2709, %v2983
      %v3036 = vadd.f32 %v2710, %v2988
      %v3037 = vadd.f32 %v2711, %v2991
      %v3038 = vadd.f32 %v2712, %v2996
      %v3039 = vadd.f32 %v2713, %v2999
      %v3040 = vadd.f32 %v2714, %v3004
      %v3041 = vadd.f32 %v2715, %v3007
      %v3042 = vld [vmem:[#allocation2 + $0x28] sm:$0xff]
      %v3043 = vld [vmem:[#allocation2 + $0x30] sm:$0xff]
      %v3044 = vld [vmem:[#allocation2 + $0x38] sm:$0xff]
      %v3045 = vld [vmem:[#allocation2 + $0x40] sm:$0xff]
      %v3046 = vld [vmem:[#allocation2 + $0x48] sm:$0xff]
      %v3047 = vld [vmem:[#allocation2 + $0x50] sm:$0xff]
      %v3048 = vld [vmem:[#allocation2 + $0x58] sm:$0xff]
      %v3049 = vld [vmem:[#allocation2 + $0x60] sm:$0xff]
      %v3050 = vld [vmem:[#allocation2 + $0x68] sm:$0xff]
      %v3051 = vld [vmem:[#allocation2 + $0x70] sm:$0xff]
      %v3052 = vld [vmem:[#allocation2 + $0x78] sm:$0xff]
      %v3053 = vld [vmem:[#allocation2 + $0x80] sm:$0xff]
      %v3054 = vld [vmem:[#allocation2 + $0x88] sm:$0xff]
      %v3055 = vld [vmem:[#allocation2 + $0x90] sm:$0xff]
      %v3056 = vld [vmem:[#allocation2 + $0x98] sm:$0xff]
      %v3057 = vld [vmem:[#allocation2 + $0xa0] sm:$0xff]
      %v3058 = vld [vmem:[#allocation2 + $0xa8] sm:$0xff]
      %v3059 = vld [vmem:[#allocation2 + $0xb0] sm:$0xff]
      %v3060 = vld [vmem:[#allocation2 + $0xb8] sm:$0xff]
      %v3061 = vld [vmem:[#allocation2 + $0xc0] sm:$0xff]
      %v3062 = vld [vmem:[#allocation2 + $0xc8] sm:$0xff]
      %v3063 = vld [vmem:[#allocation2 + $0xd0] sm:$0xff]
      %v3064 = vld [vmem:[#allocation2 + $0xd8] sm:$0xff]
      %v3065 = vld [vmem:[#allocation2 + $0xe0] sm:$0xff]
      %v3066 = vld [vmem:[#allocation2 + $0xe8] sm:$0xff]
      %v3067 = vld [vmem:[#allocation2 + $0xf0] sm:$0xff]
      %v3068 = vld [vmem:[#allocation2 + $0xf8] sm:$0xff]
      %v3069 = vld [vmem:[#allocation2 + $0x100] sm:$0xff]
      %v3070 = vld [vmem:[#allocation2 + $0x108] sm:$0xff]
      %v3071 = vld [vmem:[#allocation2 + $0x110] sm:$0xff]
      %v3072 = vld [vmem:[#allocation2 + $0x118] sm:$0xff]
      %v3073 = vld [vmem:[#allocation2 + $0x120] sm:$0xff]
      %v3074 = vpack.c.bf16 %v3043, %v3042
      %v3075 = vpack.c.bf16 %v3045, %v3044
      %v3076 = vpack.c.bf16 %v3047, %v3046
      %v3077 = vpack.c.bf16 %v3049, %v3048
      %v3078 = vpack.c.bf16 %v3051, %v3050
      %v3079 = vpack.c.bf16 %v3053, %v3052
      %v3080 = vpack.c.bf16 %v3055, %v3054
      %v3081 = vpack.c.bf16 %v3057, %v3056
      %v3082 = vpack.c.bf16 %v3059, %v3058
      %v3083 = vpack.c.bf16 %v3061, %v3060
      %v3084 = vpack.c.bf16 %v3063, %v3062
      %v3085 = vpack.c.bf16 %v3065, %v3064
      %v3086 = vpack.c.bf16 %v3067, %v3066
      %v3087 = vpack.c.bf16 %v3069, %v3068
      %v3088 = vpack.c.bf16 %v3071, %v3070
      %v3089 = vpack.c.bf16 %v3073, %v3072
      %s3090 = scalar_lea.vmem %s3, 14
      %v3091 = vld [vmem:[%s3090] sm:$0x3]
      %v3093 = vsel %vm465, %v3074, 0
      %v3096 = vsel %vm465, %v3075, 0
      %v3099 = vsel %vm465, %v3076, 0
      %v3102 = vsel %vm465, %v3077, 0
      %v3105 = vsel %vm465, %v3078, 0
      %v3108 = vsel %vm465, %v3079, 0
      %v3111 = vsel %vm465, %v3080, 0
      %v3114 = vsel %vm465, %v3081, 0
      %v3117 = vsel %vm465, %v3082, 0
      %v3120 = vsel %vm465, %v3083, 0
      %v3123 = vsel %vm465, %v3084, 0
      %v3126 = vsel %vm465, %v3085, 0
      %v3129 = vsel %vm465, %v3086, 0
      %v3132 = vsel %vm465, %v3087, 0
      %v3135 = vsel %vm465, %v3088, 0
      %v3138 = vsel %vm465, %v3089, 0
      %v3141 = vsel %vm875, %v3091, 0
      %3143 = vmatprep.subr.bf16.mxu0 0
      %3144 = vmatpush1.bf16.msra.mxu0 %v3141
      %3145 = vmatprep.subr.bf16.mxu0 0
      %3146 = vmatpush1.bf16.msra.mxu0 0
      %3147 = vmatprep.subr.bf16.mxu0 0
      %3148 = vmatpush1.bf16.msra.mxu0 0
      %3149 = vmatprep.subr.bf16.mxu0 0
      %3150 = vmatpush1.bf16.msra.mxu0 0
      %3151 = vmatprep.subr.bf16.mxu0 0
      %3152 = vmatpush1.bf16.msra.mxu0 0
      %3153 = vmatprep.subr.bf16.mxu0 0
      %3154 = vmatpush1.bf16.msra.mxu0 0
      %3155 = vmatprep.subr.bf16.mxu0 0
      %3156 = vmatpush1.bf16.msra.mxu0 0
      %3157 = vmatprep.subr.bf16.mxu0 0
      %3158 = vmatpush1.bf16.msra.mxu0 0
      %3159 = vmatprep.subr.bf16.mxu0 0
      %3160 = vmatpush1.bf16.msra.mxu0 0
      %3161 = vmatprep.subr.bf16.mxu0 0
      %3162 = vmatpush1.bf16.msra.mxu0 0
      %3163 = vmatprep.subr.bf16.mxu0 0
      %3164 = vmatpush1.bf16.msra.mxu0 0
      %3165 = vmatprep.subr.bf16.mxu0 0
      %3166 = vmatpush1.bf16.msra.mxu0 0
      %3167 = vmatprep.subr.bf16.mxu0 0
      %3168 = vmatpush1.bf16.msra.mxu0 0
      %3169 = vmatprep.subr.bf16.mxu0 0
      %3170 = vmatpush1.bf16.msra.mxu0 0
      %3171 = vmatprep.subr.bf16.mxu0 0
      %3172 = vmatpush1.bf16.msra.mxu0 0
      %3173 = vmatprep.subr.bf16.mxu0 0
      %3174 = vmatpush1.bf16.msra.mxu0 0
      %3175 = vmatprep.mubr.bf16.mxu0 0
      %3176 = vmatmul.mubr.bf16.gmra.mrb[0].mxu0 %v3093
      %v3177 = vpop.f32.mrb[0].mxu0
      %v3178 = vadd.f32 0.0, %v3177
      %v3179 = vpop.f32.mrb[0].mxu0
      %v3180 = vpop.f32.mrb[0].mxu0
      %v3181 = vadd.f32 0.0, %v3180
      %v3182 = vpop.f32.mrb[0].mxu0
      %3183 = vmatprep.mubr.bf16.mxu0 0
      %3184 = vmatmul.mubr.bf16.gmra.mrb[0].mxu0 %v3096
      %v3185 = vpop.f32.mrb[0].mxu0
      %v3186 = vadd.f32 0.0, %v3185
      %v3187 = vpop.f32.mrb[0].mxu0
      %v3188 = vpop.f32.mrb[0].mxu0
      %v3189 = vadd.f32 0.0, %v3188
      %v3190 = vpop.f32.mrb[0].mxu0
      %3191 = vmatprep.mubr.bf16.mxu0 0
      %3192 = vmatmul.mubr.bf16.gmra.mrb[0].mxu0 %v3099
      %v3193 = vpop.f32.mrb[0].mxu0
      %v3194 = vadd.f32 0.0, %v3193
      %v3195 = vpop.f32.mrb[0].mxu0
      %v3196 = vpop.f32.mrb[0].mxu0
      %v3197 = vadd.f32 0.0, %v3196
      %v3198 = vpop.f32.mrb[0].mxu0
      %3199 = vmatprep.mubr.bf16.mxu0 0
      %3200 = vmatmul.mubr.bf16.gmra.mrb[0].mxu0 %v3102
      %v3201 = vpop.f32.mrb[0].mxu0
      %v3202 = vadd.f32 0.0, %v3201
      %v3203 = vpop.f32.mrb[0].mxu0
      %v3204 = vpop.f32.mrb[0].mxu0
      %v3205 = vadd.f32 0.0, %v3204
      %v3206 = vpop.f32.mrb[0].mxu0
      %3207 = vmatprep.mubr.bf16.mxu0 0
      %3208 = vmatmul.mubr.bf16.gmra.mrb[0].mxu0 %v3105
      %v3209 = vpop.f32.mrb[0].mxu0
      %v3210 = vadd.f32 0.0, %v3209
      %v3211 = vpop.f32.mrb[0].mxu0
      %v3212 = vpop.f32.mrb[0].mxu0
      %v3213 = vadd.f32 0.0, %v3212
      %v3214 = vpop.f32.mrb[0].mxu0
      %3215 = vmatprep.mubr.bf16.mxu0 0
      %3216 = vmatmul.mubr.bf16.gmra.mrb[0].mxu0 %v3108
      %v3217 = vpop.f32.mrb[0].mxu0
      %v3218 = vadd.f32 0.0, %v3217
      %v3219 = vpop.f32.mrb[0].mxu0
      %v3220 = vpop.f32.mrb[0].mxu0
      %v3221 = vadd.f32 0.0, %v3220
      %v3222 = vpop.f32.mrb[0].mxu0
      %3223 = vmatprep.mubr.bf16.mxu0 0
      %3224 = vmatmul.mubr.bf16.gmra.mrb[0].mxu0 %v3111
      %v3225 = vpop.f32.mrb[0].mxu0
      %v3226 = vadd.f32 0.0, %v3225
      %v3227 = vpop.f32.mrb[0].mxu0
      %v3228 = vpop.f32.mrb[0].mxu0
      %v3229 = vadd.f32 0.0, %v3228
      %v3230 = vpop.f32.mrb[0].mxu0
      %3231 = vmatprep.mubr.bf16.mxu0 0
      %3232 = vmatmul.mubr.bf16.gmra.mrb[0].mxu0 %v3114
      %v3233 = vpop.f32.mrb[0].mxu0
      %v3234 = vadd.f32 0.0, %v3233
      %v3235 = vpop.f32.mrb[0].mxu0
      %v3236 = vpop.f32.mrb[0].mxu0
      %v3237 = vadd.f32 0.0, %v3236
      %v3238 = vpop.f32.mrb[0].mxu0
      %3239 = vmatprep.mubr.bf16.mxu0 0
      %3240 = vmatmul.mubr.bf16.gmra.mrb[0].mxu0 %v3117
      %v3241 = vpop.f32.mrb[0].mxu0
      %v3242 = vadd.f32 0.0, %v3241
      %v3243 = vpop.f32.mrb[0].mxu0
      %v3244 = vpop.f32.mrb[0].mxu0
      %v3245 = vadd.f32 0.0, %v3244
      %v3246 = vpop.f32.mrb[0].mxu0
      %3247 = vmatprep.mubr.bf16.mxu0 0
      %3248 = vmatmul.mubr.bf16.gmra.mrb[0].mxu0 %v3120
      %v3249 = vpop.f32.mrb[0].mxu0
      %v3250 = vadd.f32 0.0, %v3249
      %v3251 = vpop.f32.mrb[0].mxu0
      %v3252 = vpop.f32.mrb[0].mxu0
      %v3253 = vadd.f32 0.0, %v3252
      %v3254 = vpop.f32.mrb[0].mxu0
      %3255 = vmatprep.mubr.bf16.mxu0 0
      %3256 = vmatmul.mubr.bf16.gmra.mrb[0].mxu0 %v3123
      %v3257 = vpop.f32.mrb[0].mxu0
      %v3258 = vadd.f32 0.0, %v3257
      %v3259 = vpop.f32.mrb[0].mxu0
      %v3260 = vpop.f32.mrb[0].mxu0
      %v3261 = vadd.f32 0.0, %v3260
      %v3262 = vpop.f32.mrb[0].mxu0
      %3263 = vmatprep.mubr.bf16.mxu0 0
      %3264 = vmatmul.mubr.bf16.gmra.mrb[0].mxu0 %v3126
      %v3265 = vpop.f32.mrb[0].mxu0
      %v3266 = vadd.f32 0.0, %v3265
      %v3267 = vpop.f32.mrb[0].mxu0
      %v3268 = vpop.f32.mrb[0].mxu0
      %v3269 = vadd.f32 0.0, %v3268
      %v3270 = vpop.f32.mrb[0].mxu0
      %3271 = vmatprep.mubr.bf16.mxu0 0
      %3272 = vmatmul.mubr.bf16.gmra.mrb[0].mxu0 %v3129
      %v3273 = vpop.f32.mrb[0].mxu0
      %v3274 = vadd.f32 0.0, %v3273
      %v3275 = vpop.f32.mrb[0].mxu0
      %v3276 = vpop.f32.mrb[0].mxu0
      %v3277 = vadd.f32 0.0, %v3276
      %v3278 = vpop.f32.mrb[0].mxu0
      %3279 = vmatprep.mubr.bf16.mxu0 0
      %3280 = vmatmul.mubr.bf16.gmra.mrb[0].mxu0 %v3132
      %v3281 = vpop.f32.mrb[0].mxu0
      %v3282 = vadd.f32 0.0, %v3281
      %v3283 = vpop.f32.mrb[0].mxu0
      %v3284 = vpop.f32.mrb[0].mxu0
      %v3285 = vadd.f32 0.0, %v3284
      %v3286 = vpop.f32.mrb[0].mxu0
      %3287 = vmatprep.mubr.bf16.mxu0 0
      %3288 = vmatmul.mubr.bf16.gmra.mrb[0].mxu0 %v3135
      %v3289 = vpop.f32.mrb[0].mxu0
      %v3290 = vadd.f32 0.0, %v3289
      %v3291 = vpop.f32.mrb[0].mxu0
      %v3292 = vpop.f32.mrb[0].mxu0
      %v3293 = vadd.f32 0.0, %v3292
      %v3294 = vpop.f32.mrb[0].mxu0
      %3295 = vmatprep.mubr.bf16.mxu0 0
      %3296 = vmatmul.mubr.bf16.gmra.mrb[0].mxu0 %v3138
      %v3297 = vpop.f32.mrb[0].mxu0
      %v3298 = vadd.f32 0.0, %v3297
      %v3299 = vpop.f32.mrb[0].mxu0
      %v3300 = vpop.f32.mrb[0].mxu0
      %v3301 = vadd.f32 0.0, %v3300
      %v3302 = vpop.f32.mrb[0].mxu0
      %3303 = vdwg.mxu0
      %v3304 = vadd.f32 %v3010, %v3178
      %v3305 = vadd.f32 %v3011, %v3181
      %v3306 = vadd.f32 %v3012, %v3186
      %v3307 = vadd.f32 %v3013, %v3189
      %v3308 = vadd.f32 %v3014, %v3194
      %v3309 = vadd.f32 %v3015, %v3197
      %v3310 = vadd.f32 %v3016, %v3202
      %v3311 = vadd.f32 %v3017, %v3205
      %v3312 = vadd.f32 %v3018, %v3210
      %v3313 = vadd.f32 %v3019, %v3213
      %v3314 = vadd.f32 %v3020, %v3218
      %v3315 = vadd.f32 %v3021, %v3221
      %v3316 = vadd.f32 %v3022, %v3226
      %v3317 = vadd.f32 %v3023, %v3229
      %v3318 = vadd.f32 %v3024, %v3234
      %v3319 = vadd.f32 %v3025, %v3237
      %v3320 = vadd.f32 %v3026, %v3242
      %v3321 = vadd.f32 %v3027, %v3245
      %v3322 = vadd.f32 %v3028, %v3250
      %v3323 = vadd.f32 %v3029, %v3253
      %v3324 = vadd.f32 %v3030, %v3258
      %v3325 = vadd.f32 %v3031, %v3261
      %v3326 = vadd.f32 %v3032, %v3266
      %v3327 = vadd.f32 %v3033, %v3269
      %v3328 = vadd.f32 %v3034, %v3274
      %v3329 = vadd.f32 %v3035, %v3277
      %v3330 = vadd.f32 %v3036, %v3282
      %v3331 = vadd.f32 %v3037, %v3285
      %v3332 = vadd.f32 %v3038, %v3290
      %v3333 = vadd.f32 %v3039, %v3293
      %v3334 = vadd.f32 %v3040, %v3298
      %v3335 = vadd.f32 %v3041, %v3301
      %v3336 = vld [vmem:[#allocation2 + $0x29] sm:$0xff]
      %v3337 = vld [vmem:[#allocation2 + $0x31] sm:$0xff]
      %v3338 = vld [vmem:[#allocation2 + $0x39] sm:$0xff]
      %v3339 = vld [vmem:[#allocation2 + $0x41] sm:$0xff]
      %v3340 = vld [vmem:[#allocation2 + $0x49] sm:$0xff]
      %v3341 = vld [vmem:[#allocation2 + $0x51] sm:$0xff]
      %v3342 = vld [vmem:[#allocation2 + $0x59] sm:$0xff]
      %v3343 = vld [vmem:[#allocation2 + $0x61] sm:$0xff]
      %v3344 = vld [vmem:[#allocation2 + $0x69] sm:$0xff]
      %v3345 = vld [vmem:[#allocation2 + $0x71] sm:$0xff]
      %v3346 = vld [vmem:[#allocation2 + $0x79] sm:$0xff]
      %v3347 = vld [vmem:[#allocation2 + $0x81] sm:$0xff]
      %v3348 = vld [vmem:[#allocation2 + $0x89] sm:$0xff]
      %v3349 = vld [vmem:[#allocation2 + $0x91] sm:$0xff]
      %v3350 = vld [vmem:[#allocation2 + $0x99] sm:$0xff]
      %v3351 = vld [vmem:[#allocation2 + $0xa1] sm:$0xff]
      %v3352 = vld [vmem:[#allocation2 + $0xa9] sm:$0xff]
      %v3353 = vld [vmem:[#allocation2 + $0xb1] sm:$0xff]
      %v3354 = vld [vmem:[#allocation2 + $0xb9] sm:$0xff]
      %v3355 = vld [vmem:[#allocation2 + $0xc1] sm:$0xff]
      %v3356 = vld [vmem:[#allocation2 + $0xc9] sm:$0xff]
      %v3357 = vld [vmem:[#allocation2 + $0xd1] sm:$0xff]
      %v3358 = vld [vmem:[#allocation2 + $0xd9] sm:$0xff]
      %v3359 = vld [vmem:[#allocation2 + $0xe1] sm:$0xff]
      %v3360 = vld [vmem:[#allocation2 + $0xe9] sm:$0xff]
      %v3361 = vld [vmem:[#allocation2 + $0xf1] sm:$0xff]
      %v3362 = vld [vmem:[#allocation2 + $0xf9] sm:$0xff]
      %v3363 = vld [vmem:[#allocation2 + $0x101] sm:$0xff]
      %v3364 = vld [vmem:[#allocation2 + $0x109] sm:$0xff]
      %v3365 = vld [vmem:[#allocation2 + $0x111] sm:$0xff]
      %v3366 = vld [vmem:[#allocation2 + $0x119] sm:$0xff]
      %v3367 = vld [vmem:[#allocation2 + $0x121] sm:$0xff]
      %v3368 = vmul.f32 %v3336, %v1319
      %v3369 = vmul.f32 %v3337, %v1324
      %v3370 = vmul.f32 %v3338, %v1329
      %v3371 = vmul.f32 %v3339, %v1334
      %v3372 = vmul.f32 %v3340, %v1339
      %v3373 = vmul.f32 %v3341, %v1344
      %v3374 = vmul.f32 %v3342, %v1349
      %v3375 = vmul.f32 %v3343, %v1354
      %v3376 = vmul.f32 %v3344, %v1359
      %v3377 = vmul.f32 %v3345, %v1364
      %v3378 = vmul.f32 %v3346, %v1369
      %v3379 = vmul.f32 %v3347, %v1374
      %v3380 = vmul.f32 %v3348, %v1379
      %v3381 = vmul.f32 %v3349, %v1384
      %v3382 = vmul.f32 %v3350, %v1389
      %v3383 = vmul.f32 %v3351, %v1394
      %v3384 = vmul.f32 %v3352, %v1399
      %v3385 = vmul.f32 %v3353, %v1404
      %v3386 = vmul.f32 %v3354, %v1409
      %v3387 = vmul.f32 %v3355, %v1414
      %v3388 = vmul.f32 %v3356, %v1419
      %v3389 = vmul.f32 %v3357, %v1424
      %v3390 = vmul.f32 %v3358, %v1429
      %v3391 = vmul.f32 %v3359, %v1434
      %v3392 = vmul.f32 %v3360, %v1439
      %v3393 = vmul.f32 %v3361, %v1444
      %v3394 = vmul.f32 %v3362, %v1449
      %v3395 = vmul.f32 %v3363, %v1454
      %v3396 = vmul.f32 %v3364, %v1459
      %v3397 = vmul.f32 %v3365, %v1464
      %v3398 = vmul.f32 %v3366, %v1469
      %v3399 = vmul.f32 %v3367, %v1474
      %v3400 = vpack.c.bf16 %v3369, %v3368
      %v3401 = vpack.c.bf16 %v3371, %v3370
      %v3402 = vpack.c.bf16 %v3373, %v3372
      %v3403 = vpack.c.bf16 %v3375, %v3374
      %v3404 = vpack.c.bf16 %v3377, %v3376
      %v3405 = vpack.c.bf16 %v3379, %v3378
      %v3406 = vpack.c.bf16 %v3381, %v3380
      %v3407 = vpack.c.bf16 %v3383, %v3382
      %v3408 = vpack.c.bf16 %v3385, %v3384
      %v3409 = vpack.c.bf16 %v3387, %v3386
      %v3410 = vpack.c.bf16 %v3389, %v3388
      %v3411 = vpack.c.bf16 %v3391, %v3390
      %v3412 = vpack.c.bf16 %v3393, %v3392
      %v3413 = vpack.c.bf16 %v3395, %v3394
      %v3414 = vpack.c.bf16 %v3397, %v3396
      %v3415 = vpack.c.bf16 %v3399, %v3398
      %s3416 = scalar_lea.vmem %s3, 16
      %v3417 = vld [vmem:[%s3416] sm:$0x3]
      %v3419 = vsel %vm465, %v3400, 0
      %v3422 = vsel %vm465, %v3401, 0
      %v3425 = vsel %vm465, %v3402, 0
      %v3428 = vsel %vm465, %v3403, 0
      %v3431 = vsel %vm465, %v3404, 0
      %v3434 = vsel %vm465, %v3405, 0
      %v3437 = vsel %vm465, %v3406, 0
      %v3440 = vsel %vm465, %v3407, 0
      %v3443 = vsel %vm465, %v3408, 0
      %v3446 = vsel %vm465, %v3409, 0
      %v3449 = vsel %vm465, %v3410, 0
      %v3452 = vsel %vm465, %v3411, 0
      %v3455 = vsel %vm465, %v3412, 0
      %v3458 = vsel %vm465, %v3413, 0
      %v3461 = vsel %vm465, %v3414, 0
      %v3464 = vsel %vm465, %v3415, 0
      %v3467 = vsel %vm875, %v3417, 0
      %3469 = vmatprep.subr.bf16.mxu0 0
      %3470 = vmatpush1.bf16.msra.mxu0 %v3467
      %3471 = vmatprep.subr.bf16.mxu0 0
      %3472 = vmatpush1.bf16.msra.mxu0 0
      %3473 = vmatprep.subr.bf16.mxu0 0
      %3474 = vmatpush1.bf16.msra.mxu0 0
      %3475 = vmatprep.subr.bf16.mxu0 0
      %3476 = vmatpush1.bf16.msra.mxu0 0
      %3477 = vmatprep.subr.bf16.mxu0 0
      %3478 = vmatpush1.bf16.msra.mxu0 0
      %3479 = vmatprep.subr.bf16.mxu0 0
      %3480 = vmatpush1.bf16.msra.mxu0 0
      %3481 = vmatprep.subr.bf16.mxu0 0
      %3482 = vmatpush1.bf16.msra.mxu0 0
      %3483 = vmatprep.subr.bf16.mxu0 0
      %3484 = vmatpush1.bf16.msra.mxu0 0
      %3485 = vmatprep.subr.bf16.mxu0 0
      %3486 = vmatpush1.bf16.msra.mxu0 0
      %3487 = vmatprep.subr.bf16.mxu0 0
      %3488 = vmatpush1.bf16.msra.mxu0 0
      %3489 = vmatprep.subr.bf16.mxu0 0
      %3490 = vmatpush1.bf16.msra.mxu0 0
      %3491 = vmatprep.subr.bf16.mxu0 0
      %3492 = vmatpush1.bf16.msra.mxu0 0
      %3493 = vmatprep.subr.bf16.mxu0 0
      %3494 = vmatpush1.bf16.msra.mxu0 0
      %3495 = vmatprep.subr.bf16.mxu0 0
      %3496 = vmatpush1.bf16.msra.mxu0 0
      %3497 = vmatprep.subr.bf16.mxu0 0
      %3498 = vmatpush1.bf16.msra.mxu0 0
      %3499 = vmatprep.subr.bf16.mxu0 0
      %3500 = vmatpush1.bf16.msra.mxu0 0
      %3501 = vmatprep.mubr.bf16.mxu0 0
      %3502 = vmatmul.mubr.bf16.gmra.mrb[0].mxu0 %v3419
      %v3503 = vpop.f32.mrb[0].mxu0
      %v3504 = vadd.f32 0.0, %v3503
      %v3505 = vpop.f32.mrb[0].mxu0
      %v3506 = vpop.f32.mrb[0].mxu0
      %v3507 = vadd.f32 0.0, %v3506
      %v3508 = vpop.f32.mrb[0].mxu0
      %3509 = vmatprep.mubr.bf16.mxu0 0
      %3510 = vmatmul.mubr.bf16.gmra.mrb[0].mxu0 %v3422
      %v3511 = vpop.f32.mrb[0].mxu0
      %v3512 = vadd.f32 0.0, %v3511
      %v3513 = vpop.f32.mrb[0].mxu0
      %v3514 = vpop.f32.mrb[0].mxu0
      %v3515 = vadd.f32 0.0, %v3514
      %v3516 = vpop.f32.mrb[0].mxu0
      %3517 = vmatprep.mubr.bf16.mxu0 0
      %3518 = vmatmul.mubr.bf16.gmra.mrb[0].mxu0 %v3425
      %v3519 = vpop.f32.mrb[0].mxu0
      %v3520 = vadd.f32 0.0, %v3519
      %v3521 = vpop.f32.mrb[0].mxu0
      %v3522 = vpop.f32.mrb[0].mxu0
      %v3523 = vadd.f32 0.0, %v3522
      %v3524 = vpop.f32.mrb[0].mxu0
      %3525 = vmatprep.mubr.bf16.mxu0 0
      %3526 = vmatmul.mubr.bf16.gmra.mrb[0].mxu0 %v3428
      %v3527 = vpop.f32.mrb[0].mxu0
      %v3528 = vadd.f32 0.0, %v3527
      %v3529 = vpop.f32.mrb[0].mxu0
      %v3530 = vpop.f32.mrb[0].mxu0
      %v3531 = vadd.f32 0.0, %v3530
      %v3532 = vpop.f32.mrb[0].mxu0
      %3533 = vmatprep.mubr.bf16.mxu0 0
      %3534 = vmatmul.mubr.bf16.gmra.mrb[0].mxu0 %v3431
      %v3535 = vpop.f32.mrb[0].mxu0
      %v3536 = vadd.f32 0.0, %v3535
      %v3537 = vpop.f32.mrb[0].mxu0
      %v3538 = vpop.f32.mrb[0].mxu0
      %v3539 = vadd.f32 0.0, %v3538
      %v3540 = vpop.f32.mrb[0].mxu0
      %3541 = vmatprep.mubr.bf16.mxu0 0
      %3542 = vmatmul.mubr.bf16.gmra.mrb[0].mxu0 %v3434
      %v3543 = vpop.f32.mrb[0].mxu0
      %v3544 = vadd.f32 0.0, %v3543
      %v3545 = vpop.f32.mrb[0].mxu0
      %v3546 = vpop.f32.mrb[0].mxu0
      %v3547 = vadd.f32 0.0, %v3546
      %v3548 = vpop.f32.mrb[0].mxu0
      %3549 = vmatprep.mubr.bf16.mxu0 0
      %3550 = vmatmul.mubr.bf16.gmra.mrb[0].mxu0 %v3437
      %v3551 = vpop.f32.mrb[0].mxu0
      %v3552 = vadd.f32 0.0, %v3551
      %v3553 = vpop.f32.mrb[0].mxu0
      %v3554 = vpop.f32.mrb[0].mxu0
      %v3555 = vadd.f32 0.0, %v3554
      %v3556 = vpop.f32.mrb[0].mxu0
      %3557 = vmatprep.mubr.bf16.mxu0 0
      %3558 = vmatmul.mubr.bf16.gmra.mrb[0].mxu0 %v3440
      %v3559 = vpop.f32.mrb[0].mxu0
      %v3560 = vadd.f32 0.0, %v3559
      %v3561 = vpop.f32.mrb[0].mxu0
      %v3562 = vpop.f32.mrb[0].mxu0
      %v3563 = vadd.f32 0.0, %v3562
      %v3564 = vpop.f32.mrb[0].mxu0
      %3565 = vmatprep.mubr.bf16.mxu0 0
      %3566 = vmatmul.mubr.bf16.gmra.mrb[0].mxu0 %v3443
      %v3567 = vpop.f32.mrb[0].mxu0
      %v3568 = vadd.f32 0.0, %v3567
      %v3569 = vpop.f32.mrb[0].mxu0
      %v3570 = vpop.f32.mrb[0].mxu0
      %v3571 = vadd.f32 0.0, %v3570
      %v3572 = vpop.f32.mrb[0].mxu0
      %3573 = vmatprep.mubr.bf16.mxu0 0
      %3574 = vmatmul.mubr.bf16.gmra.mrb[0].mxu0 %v3446
      %v3575 = vpop.f32.mrb[0].mxu0
      %v3576 = vadd.f32 0.0, %v3575
      %v3577 = vpop.f32.mrb[0].mxu0
      %v3578 = vpop.f32.mrb[0].mxu0
      %v3579 = vadd.f32 0.0, %v3578
      %v3580 = vpop.f32.mrb[0].mxu0
      %3581 = vmatprep.mubr.bf16.mxu0 0
      %3582 = vmatmul.mubr.bf16.gmra.mrb[0].mxu0 %v3449
      %v3583 = vpop.f32.mrb[0].mxu0
      %v3584 = vadd.f32 0.0, %v3583
      %v3585 = vpop.f32.mrb[0].mxu0
      %v3586 = vpop.f32.mrb[0].mxu0
      %v3587 = vadd.f32 0.0, %v3586
      %v3588 = vpop.f32.mrb[0].mxu0
      %3589 = vmatprep.mubr.bf16.mxu0 0
      %3590 = vmatmul.mubr.bf16.gmra.mrb[0].mxu0 %v3452
      %v3591 = vpop.f32.mrb[0].mxu0
      %v3592 = vadd.f32 0.0, %v3591
      %v3593 = vpop.f32.mrb[0].mxu0
      %v3594 = vpop.f32.mrb[0].mxu0
      %v3595 = vadd.f32 0.0, %v3594
      %v3596 = vpop.f32.mrb[0].mxu0
      %3597 = vmatprep.mubr.bf16.mxu0 0
      %3598 = vmatmul.mubr.bf16.gmra.mrb[0].mxu0 %v3455
      %v3599 = vpop.f32.mrb[0].mxu0
      %v3600 = vadd.f32 0.0, %v3599
      %v3601 = vpop.f32.mrb[0].mxu0
      %v3602 = vpop.f32.mrb[0].mxu0
      %v3603 = vadd.f32 0.0, %v3602
      %v3604 = vpop.f32.mrb[0].mxu0
      %3605 = vmatprep.mubr.bf16.mxu0 0
      %3606 = vmatmul.mubr.bf16.gmra.mrb[0].mxu0 %v3458
      %v3607 = vpop.f32.mrb[0].mxu0
      %v3608 = vadd.f32 0.0, %v3607
      %v3609 = vpop.f32.mrb[0].mxu0
      %v3610 = vpop.f32.mrb[0].mxu0
      %v3611 = vadd.f32 0.0, %v3610
      %v3612 = vpop.f32.mrb[0].mxu0
      %3613 = vmatprep.mubr.bf16.mxu0 0
      %3614 = vmatmul.mubr.bf16.gmra.mrb[0].mxu0 %v3461
      %v3615 = vpop.f32.mrb[0].mxu0
      %v3616 = vadd.f32 0.0, %v3615
      %v3617 = vpop.f32.mrb[0].mxu0
      %v3618 = vpop.f32.mrb[0].mxu0
      %v3619 = vadd.f32 0.0, %v3618
      %v3620 = vpop.f32.mrb[0].mxu0
      %3621 = vmatprep.mubr.bf16.mxu0 0
      %3622 = vmatmul.mubr.bf16.gmra.mrb[0].mxu0 %v3464
      %v3623 = vpop.f32.mrb[0].mxu0
      %v3624 = vadd.f32 0.0, %v3623
      %v3625 = vpop.f32.mrb[0].mxu0
      %v3626 = vpop.f32.mrb[0].mxu0
      %v3627 = vadd.f32 0.0, %v3626
      %v3628 = vpop.f32.mrb[0].mxu0
      %3629 = vdwg.mxu0
      %v3630 = vadd.f32 %v3304, %v3504
      %v3631 = vadd.f32 %v3305, %v3507
      %v3632 = vadd.f32 %v3306, %v3512
      %v3633 = vadd.f32 %v3307, %v3515
      %v3634 = vadd.f32 %v3308, %v3520
      %v3635 = vadd.f32 %v3309, %v3523
      %v3636 = vadd.f32 %v3310, %v3528
      %v3637 = vadd.f32 %v3311, %v3531
      %v3638 = vadd.f32 %v3312, %v3536
      %v3639 = vadd.f32 %v3313, %v3539
      %v3640 = vadd.f32 %v3314, %v3544
      %v3641 = vadd.f32 %v3315, %v3547
      %v3642 = vadd.f32 %v3316, %v3552
      %v3643 = vadd.f32 %v3317, %v3555
      %v3644 = vadd.f32 %v3318, %v3560
      %v3645 = vadd.f32 %v3319, %v3563
      %v3646 = vadd.f32 %v3320, %v3568
      %v3647 = vadd.f32 %v3321, %v3571
      %v3648 = vadd.f32 %v3322, %v3576
      %v3649 = vadd.f32 %v3323, %v3579
      %v3650 = vadd.f32 %v3324, %v3584
      %v3651 = vadd.f32 %v3325, %v3587
      %v3652 = vadd.f32 %v3326, %v3592
      %v3653 = vadd.f32 %v3327, %v3595
      %v3654 = vadd.f32 %v3328, %v3600
      %v3655 = vadd.f32 %v3329, %v3603
      %v3656 = vadd.f32 %v3330, %v3608
      %v3657 = vadd.f32 %v3331, %v3611
      %v3658 = vadd.f32 %v3332, %v3616
      %v3659 = vadd.f32 %v3333, %v3619
      %v3660 = vadd.f32 %v3334, %v3624
      %v3661 = vadd.f32 %v3335, %v3627
      %v3662 = vpack.c.bf16 %v3631, %v3630
      %v3663 = vpack.c.bf16 %v3633, %v3632
      %v3664 = vpack.c.bf16 %v3635, %v3634
      %v3665 = vpack.c.bf16 %v3637, %v3636
      %v3666 = vpack.c.bf16 %v3639, %v3638
      %v3667 = vpack.c.bf16 %v3641, %v3640
      %v3668 = vpack.c.bf16 %v3643, %v3642
      %v3669 = vpack.c.bf16 %v3645, %v3644
      %v3670 = vpack.c.bf16 %v3647, %v3646
      %v3671 = vpack.c.bf16 %v3649, %v3648
      %v3672 = vpack.c.bf16 %v3651, %v3650
      %v3673 = vpack.c.bf16 %v3653, %v3652
      %v3674 = vpack.c.bf16 %v3655, %v3654
      %v3675 = vpack.c.bf16 %v3657, %v3656
      %v3676 = vpack.c.bf16 %v3659, %v3658
      %v3677 = vpack.c.bf16 %v3661, %v3660
      %v3694 = vunpack.c.l.b16 %v3662
      %v3695 = vunpack.c.h.b16 %v3662
      %v3696 = vunpack.c.l.b16 %v3663
      %v3697 = vunpack.c.h.b16 %v3663
      %v3698 = vunpack.c.l.b16 %v3664
      %v3699 = vunpack.c.h.b16 %v3664
      %v3700 = vunpack.c.l.b16 %v3665
      %v3701 = vunpack.c.h.b16 %v3665
      %v3702 = vunpack.c.l.b16 %v3666
      %v3703 = vunpack.c.h.b16 %v3666
      %v3704 = vunpack.c.l.b16 %v3667
      %v3705 = vunpack.c.h.b16 %v3667
      %v3706 = vunpack.c.l.b16 %v3668
      %v3707 = vunpack.c.h.b16 %v3668
      %v3708 = vunpack.c.l.b16 %v3669
      %v3709 = vunpack.c.h.b16 %v3669
      %v3710 = vunpack.c.l.b16 %v3670
      %v3711 = vunpack.c.h.b16 %v3670
      %v3712 = vunpack.c.l.b16 %v3671
      %v3713 = vunpack.c.h.b16 %v3671
      %v3714 = vunpack.c.l.b16 %v3672
      %v3715 = vunpack.c.h.b16 %v3672
      %v3716 = vunpack.c.l.b16 %v3673
      %v3717 = vunpack.c.h.b16 %v3673
      %v3718 = vunpack.c.l.b16 %v3674
      %v3719 = vunpack.c.h.b16 %v3674
      %v3720 = vunpack.c.l.b16 %v3675
      %v3721 = vunpack.c.h.b16 %v3675
      %v3722 = vunpack.c.l.b16 %v3676
      %v3723 = vunpack.c.h.b16 %v3676
      %v3724 = vunpack.c.l.b16 %v3677
      %v3725 = vunpack.c.h.b16 %v3677
      %v3726 = vpack.c.b16 %v3694, %v3694
      %v3727 = vpack.c.b16 %v3695, %v3695
      %v3728 = vpack.c.b16 %v3696, %v3696
      %v3729 = vpack.c.b16 %v3697, %v3697
      %v3730 = vpack.c.b16 %v3698, %v3698
      %v3731 = vpack.c.b16 %v3699, %v3699
      %v3732 = vpack.c.b16 %v3700, %v3700
      %v3733 = vpack.c.b16 %v3701, %v3701
      %v3734 = vpack.c.b16 %v3702, %v3702
      %v3735 = vpack.c.b16 %v3703, %v3703
      %v3736 = vpack.c.b16 %v3704, %v3704
      %v3737 = vpack.c.b16 %v3705, %v3705
      %v3738 = vpack.c.b16 %v3706, %v3706
      %v3739 = vpack.c.b16 %v3707, %v3707
      %v3740 = vpack.c.b16 %v3708, %v3708
      %v3741 = vpack.c.b16 %v3709, %v3709
      %v3742 = vpack.c.b16 %v3710, %v3710
      %v3743 = vpack.c.b16 %v3711, %v3711
      %v3744 = vpack.c.b16 %v3712, %v3712
      %v3745 = vpack.c.b16 %v3713, %v3713
      %v3746 = vpack.c.b16 %v3714, %v3714
      %v3747 = vpack.c.b16 %v3715, %v3715
      %v3748 = vpack.c.b16 %v3716, %v3716
      %v3749 = vpack.c.b16 %v3717, %v3717
      %v3750 = vpack.c.b16 %v3718, %v3718
      %v3751 = vpack.c.b16 %v3719, %v3719
      %v3752 = vpack.c.b16 %v3720, %v3720
      %v3753 = vpack.c.b16 %v3721, %v3721
      %v3754 = vpack.c.b16 %v3722, %v3722
      %v3755 = vpack.c.b16 %v3723, %v3723
      %v3756 = vpack.c.b16 %v3724, %v3724
      %v3757 = vpack.c.b16 %v3725, %v3725
      %vm3790 = vcmask 27648
      %3791 = vst.msk [vmem:[%s285] sm:$0xf] %vm3790, %v3726
      %3792 = vst.msk [vmem:[%s285 + $0x4] sm:$0xf] %vm3790, %v3727
      %3793 = vst.msk [vmem:[%s285 + $0x8] sm:$0xf] %vm3790, %v3728
      %3794 = vst.msk [vmem:[%s285 + $0xc] sm:$0xf] %vm3790, %v3729
      %3795 = vst.msk [vmem:[%s285 + $0x10] sm:$0xf] %vm3790, %v3730
      %3796 = vst.msk [vmem:[%s285 + $0x14] sm:$0xf] %vm3790, %v3731
      %3797 = vst.msk [vmem:[%s285 + $0x18] sm:$0xf] %vm3790, %v3732
      %3798 = vst.msk [vmem:[%s285 + $0x1c] sm:$0xf] %vm3790, %v3733
      %3799 = vst.msk [vmem:[%s285 + $0x20] sm:$0xf] %vm3790, %v3734
      %3800 = vst.msk [vmem:[%s285 + $0x24] sm:$0xf] %vm3790, %v3735
      %3801 = vst.msk [vmem:[%s285 + $0x28] sm:$0xf] %vm3790, %v3736
      %3802 = vst.msk [vmem:[%s285 + $0x2c] sm:$0xf] %vm3790, %v3737
      %3803 = vst.msk [vmem:[%s285 + $0x30] sm:$0xf] %vm3790, %v3738
      %3804 = vst.msk [vmem:[%s285 + $0x34] sm:$0xf] %vm3790, %v3739
      %3805 = vst.msk [vmem:[%s285 + $0x38] sm:$0xf] %vm3790, %v3740
      %3806 = vst.msk [vmem:[%s285 + $0x3c] sm:$0xf] %vm3790, %v3741
      %3807 = vst.msk [vmem:[%s285 + $0x40] sm:$0xf] %vm3790, %v3742
      %3808 = vst.msk [vmem:[%s285 + $0x44] sm:$0xf] %vm3790, %v3743
      %3809 = vst.msk [vmem:[%s285 + $0x48] sm:$0xf] %vm3790, %v3744
      %3810 = vst.msk [vmem:[%s285 + $0x4c] sm:$0xf] %vm3790, %v3745
      %3811 = vst.msk [vmem:[%s285 + $0x50] sm:$0xf] %vm3790, %v3746
      %3812 = vst.msk [vmem:[%s285 + $0x54] sm:$0xf] %vm3790, %v3747
      %3813 = vst.msk [vmem:[%s285 + $0x58] sm:$0xf] %vm3790, %v3748
      %3814 = vst.msk [vmem:[%s285 + $0x5c] sm:$0xf] %vm3790, %v3749
      %3815 = vst.msk [vmem:[%s285 + $0x60] sm:$0xf] %vm3790, %v3750
      %3816 = vst.msk [vmem:[%s285 + $0x64] sm:$0xf] %vm3790, %v3751
      %3817 = vst.msk [vmem:[%s285 + $0x68] sm:$0xf] %vm3790, %v3752
      %3818 = vst.msk [vmem:[%s285 + $0x6c] sm:$0xf] %vm3790, %v3753
      %3819 = vst.msk [vmem:[%s285 + $0x70] sm:$0xf] %vm3790, %v3754
      %3820 = vst.msk [vmem:[%s285 + $0x74] sm:$0xf] %vm3790, %v3755
      %3821 = vst.msk [vmem:[%s285 + $0x78] sm:$0xf] %vm3790, %v3756
      %3822 = vst.msk [vmem:[%s285 + $0x7c] sm:$0xf] %vm3790, %v3757
      %v3823 = vunpack.c.l.bf16 %v3662
      %v3824 = vunpack.c.h.bf16 %v3662
      %v3825 = vunpack.c.l.bf16 %v3663
      %v3826 = vunpack.c.h.bf16 %v3663
      %v3827 = vunpack.c.l.bf16 %v3664
      %v3828 = vunpack.c.h.bf16 %v3664
      %v3829 = vunpack.c.l.bf16 %v3665
      %v3830 = vunpack.c.h.bf16 %v3665
      %v3831 = vunpack.c.l.bf16 %v3666
      %v3832 = vunpack.c.h.bf16 %v3666
      %v3833 = vunpack.c.l.bf16 %v3667
      %v3834 = vunpack.c.h.bf16 %v3667
      %v3835 = vunpack.c.l.bf16 %v3668
      %v3836 = vunpack.c.h.bf16 %v3668
      %v3837 = vunpack.c.l.bf16 %v3669
      %v3838 = vunpack.c.h.bf16 %v3669
      %v3839 = vunpack.c.l.bf16 %v3670
      %v3840 = vunpack.c.h.bf16 %v3670
      %v3841 = vunpack.c.l.bf16 %v3671
      %v3842 = vunpack.c.h.bf16 %v3671
      %v3843 = vunpack.c.l.bf16 %v3672
      %v3844 = vunpack.c.h.bf16 %v3672
      %v3845 = vunpack.c.l.bf16 %v3673
      %v3846 = vunpack.c.h.bf16 %v3673
      %v3847 = vunpack.c.l.bf16 %v3674
      %v3848 = vunpack.c.h.bf16 %v3674
      %v3849 = vunpack.c.l.bf16 %v3675
      %v3850 = vunpack.c.h.bf16 %v3675
      %v3851 = vunpack.c.l.bf16 %v3676
      %v3852 = vunpack.c.h.bf16 %v3676
      %v3853 = vunpack.c.l.bf16 %v3677
      %v3854 = vunpack.c.h.bf16 %v3677
      %v3855 = vsel %vm465, %v3823, 0.0
      %v3856 = vsel %vm465, %v3824, 0.0
      %v3857 = vadd.f32 %v3855, %v3856
      %v3858 = vsel %vm465, %v3825, 0.0
      %v3859 = vadd.f32 %v3857, %v3858
      %v3860 = vsel %vm465, %v3826, 0.0
      %v3861 = vadd.f32 %v3859, %v3860
      %v3862 = vsel %vm465, %v3827, 0.0
      %v3863 = vadd.f32 %v3861, %v3862
      %v3864 = vsel %vm465, %v3828, 0.0
      %v3865 = vadd.f32 %v3863, %v3864
      %v3866 = vsel %vm465, %v3829, 0.0
      %v3867 = vadd.f32 %v3865, %v3866
      %v3868 = vsel %vm465, %v3830, 0.0
      %v3869 = vadd.f32 %v3867, %v3868
      %v3870 = vsel %vm465, %v3831, 0.0
      %v3871 = vadd.f32 %v3869, %v3870
      %v3872 = vsel %vm465, %v3832, 0.0
      %v3873 = vadd.f32 %v3871, %v3872
      %v3874 = vsel %vm465, %v3833, 0.0
      %v3875 = vadd.f32 %v3873, %v3874
      %v3876 = vsel %vm465, %v3834, 0.0
      %v3877 = vadd.f32 %v3875, %v3876
      %v3878 = vsel %vm465, %v3835, 0.0
      %v3879 = vadd.f32 %v3877, %v3878
      %v3880 = vsel %vm465, %v3836, 0.0
      %v3881 = vadd.f32 %v3879, %v3880
      %v3882 = vsel %vm465, %v3837, 0.0
      %v3883 = vadd.f32 %v3881, %v3882
      %v3884 = vsel %vm465, %v3838, 0.0
      %v3885 = vadd.f32 %v3883, %v3884
      %v3886 = vsel %vm465, %v3839, 0.0
      %v3887 = vadd.f32 %v3885, %v3886
      %v3888 = vsel %vm465, %v3840, 0.0
      %v3889 = vadd.f32 %v3887, %v3888
      %v3890 = vsel %vm465, %v3841, 0.0
      %v3891 = vadd.f32 %v3889, %v3890
      %v3892 = vsel %vm465, %v3842, 0.0
      %v3893 = vadd.f32 %v3891, %v3892
      %v3894 = vsel %vm465, %v3843, 0.0
      %v3895 = vadd.f32 %v3893, %v3894
      %v3896 = vsel %vm465, %v3844, 0.0
      %v3897 = vadd.f32 %v3895, %v3896
      %v3898 = vsel %vm465, %v3845, 0.0
      %v3899 = vadd.f32 %v3897, %v3898
      %v3900 = vsel %vm465, %v3846, 0.0
      %v3901 = vadd.f32 %v3899, %v3900
      %v3902 = vsel %vm465, %v3847, 0.0
      %v3903 = vadd.f32 %v3901, %v3902
      %v3904 = vsel %vm465, %v3848, 0.0
      %v3905 = vadd.f32 %v3903, %v3904
      %v3906 = vsel %vm465, %v3849, 0.0
      %v3907 = vadd.f32 %v3905, %v3906
      %v3908 = vsel %vm465, %v3850, 0.0
      %v3909 = vadd.f32 %v3907, %v3908
      %v3910 = vsel %vm465, %v3851, 0.0
      %v3911 = vadd.f32 %v3909, %v3910
      %v3912 = vsel %vm465, %v3852, 0.0
      %v3913 = vadd.f32 %v3911, %v3912
      %v3914 = vsel %vm465, %v3853, 0.0
      %v3915 = vadd.f32 %v3913, %v3914
      %v3916 = vsel %vm465, %v3854, 0.0
      %v3917 = vadd.f32 %v3915, %v3916
      %v3918 = vrot.slane %v3917, 4
      %v3919 = vadd.f32 %v3917, %v3918
      %v3920 = vrot.slane %v3919, 2
      %v3921 = vadd.f32 %v3919, %v3920
      %v3922 = vrot.slane %v3921, 1
      %v3923 = vadd.f32 %v3921, %v3922
      %vm3924 = vcmask 24576
      %3925 = vst.msk [vmem:[%s289] sm:$0x1] %vm3924, %v3923
      %v3926 = vmul.f32 %v3823, %v3823
      %v3927 = vmul.f32 %v3824, %v3824
      %v3928 = vmul.f32 %v3825, %v3825
      %v3929 = vmul.f32 %v3826, %v3826
      %v3930 = vmul.f32 %v3827, %v3827
      %v3931 = vmul.f32 %v3828, %v3828
      %v3932 = vmul.f32 %v3829, %v3829
      %v3933 = vmul.f32 %v3830, %v3830
      %v3934 = vmul.f32 %v3831, %v3831
      %v3935 = vmul.f32 %v3832, %v3832
      %v3936 = vmul.f32 %v3833, %v3833
      %v3937 = vmul.f32 %v3834, %v3834
      %v3938 = vmul.f32 %v3835, %v3835
      %v3939 = vmul.f32 %v3836, %v3836
      %v3940 = vmul.f32 %v3837, %v3837
      %v3941 = vmul.f32 %v3838, %v3838
      %v3942 = vmul.f32 %v3839, %v3839
      %v3943 = vmul.f32 %v3840, %v3840
      %v3944 = vmul.f32 %v3841, %v3841
      %v3945 = vmul.f32 %v3842, %v3842
      %v3946 = vmul.f32 %v3843, %v3843
      %v3947 = vmul.f32 %v3844, %v3844
      %v3948 = vmul.f32 %v3845, %v3845
      %v3949 = vmul.f32 %v3846, %v3846
      %v3950 = vmul.f32 %v3847, %v3847
      %v3951 = vmul.f32 %v3848, %v3848
      %v3952 = vmul.f32 %v3849, %v3849
      %v3953 = vmul.f32 %v3850, %v3850
      %v3954 = vmul.f32 %v3851, %v3851
      %v3955 = vmul.f32 %v3852, %v3852
      %v3956 = vmul.f32 %v3853, %v3853
      %v3957 = vmul.f32 %v3854, %v3854
      %v3958 = vsel %vm465, %v3926, 0.0
      %v3959 = vsel %vm465, %v3927, 0.0
      %v3960 = vadd.f32 %v3958, %v3959
      %v3961 = vsel %vm465, %v3928, 0.0
      %v3962 = vadd.f32 %v3960, %v3961
      %v3963 = vsel %vm465, %v3929, 0.0
      %v3964 = vadd.f32 %v3962, %v3963
      %v3965 = vsel %vm465, %v3930, 0.0
      %v3966 = vadd.f32 %v3964, %v3965
      %v3967 = vsel %vm465, %v3931, 0.0
      %v3968 = vadd.f32 %v3966, %v3967
      %v3969 = vsel %vm465, %v3932, 0.0
      %v3970 = vadd.f32 %v3968, %v3969
      %v3971 = vsel %vm465, %v3933, 0.0
      %v3972 = vadd.f32 %v3970, %v3971
      %v3973 = vsel %vm465, %v3934, 0.0
      %v3974 = vadd.f32 %v3972, %v3973
      %v3975 = vsel %vm465, %v3935, 0.0
      %v3976 = vadd.f32 %v3974, %v3975
      %v3977 = vsel %vm465, %v3936, 0.0
      %v3978 = vadd.f32 %v3976, %v3977
      %v3979 = vsel %vm465, %v3937, 0.0
      %v3980 = vadd.f32 %v3978, %v3979
      %v3981 = vsel %vm465, %v3938, 0.0
      %v3982 = vadd.f32 %v3980, %v3981
      %v3983 = vsel %vm465, %v3939, 0.0
      %v3984 = vadd.f32 %v3982, %v3983
      %v3985 = vsel %vm465, %v3940, 0.0
      %v3986 = vadd.f32 %v3984, %v3985
      %v3987 = vsel %vm465, %v3941, 0.0
      %v3988 = vadd.f32 %v3986, %v3987
      %v3989 = vsel %vm465, %v3942, 0.0
      %v3990 = vadd.f32 %v3988, %v3989
      %v3991 = vsel %vm465, %v3943, 0.0
      %v3992 = vadd.f32 %v3990, %v3991
      %v3993 = vsel %vm465, %v3944, 0.0
      %v3994 = vadd.f32 %v3992, %v3993
      %v3995 = vsel %vm465, %v3945, 0.0
      %v3996 = vadd.f32 %v3994, %v3995
      %v3997 = vsel %vm465, %v3946, 0.0
      %v3998 = vadd.f32 %v3996, %v3997
      %v3999 = vsel %vm465, %v3947, 0.0
      %v4000 = vadd.f32 %v3998, %v3999
      %v4001 = vsel %vm465, %v3948, 0.0
      %v4002 = vadd.f32 %v4000, %v4001
      %v4003 = vsel %vm465, %v3949, 0.0
      %v4004 = vadd.f32 %v4002, %v4003
      %v4005 = vsel %vm465, %v3950, 0.0
      %v4006 = vadd.f32 %v4004, %v4005
      %v4007 = vsel %vm465, %v3951, 0.0
      %v4008 = vadd.f32 %v4006, %v4007
      %v4009 = vsel %vm465, %v3952, 0.0
      %v4010 = vadd.f32 %v4008, %v4009
      %v4011 = vsel %vm465, %v3953, 0.0
      %v4012 = vadd.f32 %v4010, %v4011
      %v4013 = vsel %vm465, %v3954, 0.0
      %v4014 = vadd.f32 %v4012, %v4013
      %v4015 = vsel %vm465, %v3955, 0.0
      %v4016 = vadd.f32 %v4014, %v4015
      %v4017 = vsel %vm465, %v3956, 0.0
      %v4018 = vadd.f32 %v4016, %v4017
      %v4019 = vsel %vm465, %v3957, 0.0
      %v4020 = vadd.f32 %v4018, %v4019
      %v4021 = vrot.slane %v4020, 4
      %v4022 = vadd.f32 %v4020, %v4021
      %v4023 = vrot.slane %v4022, 2
      %v4024 = vadd.f32 %v4022, %v4023
      %v4025 = vrot.slane %v4024, 1
      %v4026 = vadd.f32 %v4024, %v4025
      %4027 = vst.msk [vmem:[%s289 + $0x1] sm:$0x1] %vm3924, %v4026
      %p4028 = scmp.lt.s32.totalorder %s19, 1
      %s4029 = scalar_select %p4028, %s19, 1
      %s4030 = smul.addr %s4029, 32
      %s4031 = smul.addr %s4030, 4
      %s4032 = scalar_lea.vmem %s6, %s4031
      %p4033 = scmp.lt.s32.totalorder %s19, 1
      %s4034 = scalar_select %p4033, %s19, 1
      %s4035 = smul.addr %s4034, 2
      %s4036 = scalar_lea.vmem %s7, %s4035
      // Predicated region
      $region45: #{residual_bottleneck_block.6} parent=43 // pred_check
        %p4037 = pneg %p168
      $region46: #{residual_bottleneck_block.6} parent=43 // pred_check_branch
        %4039 = sbr.rel (%p4037) target = $region48
      $region47: #{residual_bottleneck_block.6} parent=43 // pred_region
        _
      $region48: #{residual_bottleneck_block.6} parent=43 // pred_fallthru
        _
      // Predicated region
      $region49: #{residual_bottleneck_block.6} parent=43 // pred_check
        %p4040 = pneg %p194
      $region50: #{residual_bottleneck_block.6} parent=43 // pred_check_branch
        %4042 = sbr.rel (%p4040) target = $region52
      $region51: #{residual_bottleneck_block.6} parent=43 // pred_region
        _
      $region52: #{residual_bottleneck_block.6} parent=43 // pred_fallthru
        _
    $region44: #{residual_bottleneck_block.6} parent=5 // pred_fallthru
      _
    %p4043 = scmp.le.s32.totalorder 2, %s14
    // Predicated region
    $region53: #{residual_bottleneck_block.6} parent=5 // pred_check
      %p4044 = pneg %p4043
    $region54: #{residual_bottleneck_block.6} parent=5 // pred_check_branch
      %4046 = sbr.rel (%p4044) target = $region56
    $region55: #{residual_bottleneck_block.6} parent=5 // pred_region
      %s4047 = ssub.s32 %s14, 2
      // Predicated region
      $region57: #{residual_bottleneck_block.6} parent=55 // pred_check
        %p4048 = pneg %p174
      $region58: #{residual_bottleneck_block.6} parent=55 // pred_check_branch
        %4050 = sbr.rel (%p4048) target = $region60
      $region59: #{residual_bottleneck_block.6} parent=55 // pred_region
        %p4051 = scmp.lt.s32.totalorder %s20, 1
        %s4052 = scalar_select %p4051, %s20, 1
        %s4053 = smul.addr %s4052, 32
        %s4054 = smul.addr %s4053, 4
        %s4055 = scalar_lea.vmem %s6, %s4054
      $region60: #{residual_bottleneck_block.6} parent=55 // pred_fallthru
        _
      // Predicated region
      $region61: #{residual_bottleneck_block.6} parent=55 // pred_check
        %p4056 = pneg %p200
      $region62: #{residual_bottleneck_block.6} parent=55 // pred_check_branch
        %4058 = sbr.rel (%p4056) target = $region64
      $region63: #{residual_bottleneck_block.6} parent=55 // pred_region
        %p4059 = scmp.lt.s32.totalorder %s20, 1
        %s4060 = scalar_select %p4059, %s20, 1
        %s4061 = smul.addr %s4060, 2
        %s4062 = scalar_lea.vmem %s7, %s4061
      $region64: #{residual_bottleneck_block.6} parent=55 // pred_fallthru
        _
    $region56: #{residual_bottleneck_block.6} parent=5 // pred_fallthru
      _
  $region6: #{residual_bottleneck_block.6} parent=0 // loop_footer
    %s18 = sadd.s32 1, %s14
  $region7: #{residual_bottleneck_block.6} parent=0 // loop_footer_branch
    %13 = sbr.rel target = $region3
  $region8: #{residual_bottleneck_block.6} parent=0 // loop_exit
    _

</llo_original>
